<compile_context>
chip_gen: v6e
topology: v6e:2x2x1
jax: 0.10.0
libtpu: 0.0.40
codegen_flags: <defaults>
</compile_context>

<pallas_src>
import functools

import jax
import jax.numpy as jnp
from jax.experimental import pallas as pl
from jax.experimental.pallas import tpu as pltpu


def _conv_relu_pool_fc_kernel(xpad_ref, wconv_ref, bconv_ref, wfc_ref, bfc_ref,
                              out_ref, *, B, H, W, KH, KW):
    """One grid step = one batch tile of B images.

    xpad_ref : (B, H+KH-1, W+KW-1, Cin) bf16  spatially zero-padded NHWC images
    wconv_ref: (KH*KW, Cin, Cout)       bf16  conv taps (HWIO flattened over KH*KW)
    bconv_ref: (1, Cout)                f32   conv bias
    wfc_ref  : (Cout, Lp)               f32   fc weights, zero-padded to Lp lanes
    bfc_ref  : (1, Lp)                  f32   fc bias, zero-padded
    out_ref  : (B, Lp)                  f32   logits block (disjoint per program)
    """
    HW = H * W
    Cout = wconv_ref.shape[-1]

    # 3x3 "same" conv as KH*KW accumulating matmuls over in-kernel shifted
    # windows (static slices of the padded tile; no HBM im2col, no pool matmul).
    acc = jnp.zeros((B * HW, Cout), jnp.float32)
    for kh in range(KH):
        for kw in range(KW):
            win = xpad_ref[:, kh:kh + H, kw:kw + W, :]          # (B, H, W, Cin) bf16
            win2d = win.reshape(B * HW, win.shape[-1])          # (B*HW, Cin)
            acc = acc + jnp.dot(win2d, wconv_ref[kh * KW + kw],
                                preferred_element_type=jnp.float32)

    # bias + ReLU (VPU), all f32
    act = jnp.maximum(acc + bconv_ref[...], 0.0)                # (B*HW, Cout)

    # global average pool: per-image sublane reduce (no B^2 pooling matmul)
    feat = act.reshape(B, HW, Cout).sum(axis=1) * (1.0 / HW)    # (B, Cout) f32

    # fc head (tiny matmul), lane-dense (B, Lp) store
    logits = jnp.dot(feat, wfc_ref[...],
                     preferred_element_type=jnp.float32) + bfc_ref[...]
    out_ref[...] = logits.astype(out_ref.dtype)


def baseline_classification_forward(x_nchw, params, *, batch_tile=None):
    """Forward pass of BaselineClassificationModel on NCHW input."""
    wconv = params["wconv"]   # (KH, KW, Cin, Cout)  HWIO
    bconv = params["bconv"]   # (1, Cout)
    wfc = params["wfc"]       # (Cout, L)
    bfc = params["bfc"]       # (1, L)

    N, Cin, H, W = x_nchw.shape
    KH, KW, _, Cout = wconv.shape
    L = wfc.shape[1]
    HW = H * W
    ph, pw = KH // 2, KW // 2
    Hp, Wp = H + 2 * ph, W + 2 * pw

    # --- batch tile size -----------------------------------------------------
    # Large batches: tiles of 32 (amortizes the ~0.35us/step grid overhead,
    # ~15 MB VMEM working set, fits every generation's limit below).
    # Medium batches: multiple-of-8 tiles chosen so n_tiles >= 2, so the
    # "parallel" batch axis shards across v7x's two TensorCores.
    # Tiny batches: one tile = whole batch (keeps blocks == full dims).
    if batch_tile is None:
        if N >= 64:
            batch_tile = 32
        elif N >= 16:
            batch_tile = max(8, ((N // 2) // 8) * 8)
        else:
            batch_tile = N
    B = batch_tile
    n_tiles = pl.cdiv(N, B)
    N_pad = n_tiles * B

    # --- wrapper-side layout plumbing (single small pad, no im2col) ----------
    # NCHW -> NHWC, bf16, zero-pad spatially + pad batch to a tile multiple.
    x = jnp.transpose(x_nchw, (0, 2, 3, 1)).astype(jnp.bfloat16)
    xpad = jnp.pad(x, ((0, N_pad - N), (ph, ph), (pw, pw), (0, 0)))  # (N_pad,Hp,Wp,Cin)

    wconv_mat = wconv.reshape(KH * KW, Cin, Cout).astype(jnp.bfloat16)
    bconv_f = bconv.reshape(1, Cout).astype(jnp.float32)

    # lane-dense logits: pad label dim up to a multiple of 128
    Lp = max(128, pl.cdiv(L, 128) * 128)
    wfc_p = jnp.pad(wfc.astype(jnp.float32), ((0, 0), (0, Lp - L)))   # (Cout, Lp)
    bfc_p = jnp.pad(bfc.astype(jnp.float32), ((0, 0), (0, Lp - L)))   # (1, Lp)

    kernel = functools.partial(_conv_relu_pool_fc_kernel,
                               B=B, H=H, W=W, KH=KH, KW=KW)

    out = pl.pallas_call(
        kernel,
        out_shape=jax.ShapeDtypeStruct((N_pad, Lp), jnp.float32),
        grid_spec=pltpu.PrefetchScalarGridSpec(
            num_scalar_prefetch=0,
            grid=(n_tiles,),
            in_specs=[
                pl.BlockSpec((B, Hp, Wp, Cin), lambda b: (b, 0, 0, 0)),   # image tile
                pl.BlockSpec((KH * KW, Cin, Cout), lambda b: (0, 0, 0)),  # conv weights
                pl.BlockSpec((1, Cout), lambda b: (0, 0)),                # conv bias
                pl.BlockSpec((Cout, Lp), lambda b: (0, 0)),               # fc weights
                pl.BlockSpec((1, Lp), lambda b: (0, 0)),                  # fc bias
            ],
            out_specs=pl.BlockSpec((B, Lp), lambda b: (b, 0)),  # disjoint per program
        ),
        compiler_params=pltpu.CompilerParams(
            dimension_semantics=("parallel",),       # megacore sharding on v7x
            vmem_limit_bytes=32 * 1024 * 1024),      # explicit, safe on v5e/v6e/v7x
    )(xpad, wconv_mat, bconv_f, wfc_p, bfc_p)

    # padded tail images (if any) produce bias-only logits; sliced away here.
    return out[:N, :L]


def init_params(key, cin=4, cout=32, kh=3, kw=3, label_num=10):
    """Deterministic synthetic parameters matching the module's shapes."""
    k1, k2, k3, k4 = jax.random.split(key, 4)
    # PyTorch Conv2d weight is (Cout, Cin, KH, KW) -> store as HWIO for the kernel.
    wconv_oihw = jax.random.normal(k1, (cout, cin, kh, kw), jnp.float32) * 0.1
    wconv = jnp.transpose(wconv_oihw, (2, 3, 1, 0))                  # (KH, KW, Cin, Cout)
    bconv = jax.random.normal(k2, (1, cout), jnp.float32) * 0.1
    # PyTorch Linear weight is (label_num, final_feature_num) -> store transposed.
    wfc_lc = jax.random.normal(k3, (label_num, cout), jnp.float32) * 0.1
    wfc = jnp.transpose(wfc_lc, (1, 0))                              # (Cout, L)
    bfc = jax.random.normal(k4, (1, label_num), jnp.float32) * 0.1
    return {"wconv": wconv, "bconv": bconv, "wfc": wfc, "bfc": bfc}


def _reference_forward(x_nchw, params):
    """Pure-JAX reference of the same forward pass (bf16 conv inputs, f32 accum)."""
    x = jnp.transpose(x_nchw, (0, 2, 3, 1)).astype(jnp.bfloat16)     # NHWC bf16
    conv = jax.lax.conv_general_dilated(
        x, params["wconv"].astype(jnp.bfloat16),
        window_strides=(1, 1), padding="SAME",
        dimension_numbers=("NHWC", "HWIO", "NHWC"),
        preferred_element_type=jnp.float32)
    act = jnp.maximum(conv + params["bconv"].astype(jnp.float32), 0.0)
    feat = jnp.mean(act, axis=(1, 2))                                # (N, Cout) f32
    return feat @ params["wfc"] + params["bfc"]


if __name__ == "__main__":
    key = jax.random.PRNGKey(0)
    kx, kp = jax.random.split(key)

    N, Cin, H, W = 2, 4, 16, 16
    label_num = 10
    final_feature_num = 32

    x = jax.random.normal(kx, (N, Cin, H, W), jnp.float32)
    params = init_params(kp, cin=Cin, cout=final_feature_num,
                         kh=3, kw=3, label_num=label_num)

    out = baseline_classification_forward(x, params)
    out = jax.block_until_ready(out)

    ref = _reference_forward(x, params)
    assert out.shape == (N, label_num)
    assert jnp.allclose(out, ref, rtol=1e-3, atol=1e-3), (out, ref)

    print("KERNEL_OK")
</pallas_src>

<mosaic_0001>
module attributes {stable_mosaic.version = 11 : i64} {
  func.func @_conv_relu_pool_fc_kernel(%arg0: i32, %arg1: memref<2x18x18x4xbf16, #tpu.memory_space<vmem>>, %arg2: memref<9x4x32xbf16, #tpu.memory_space<vmem>>, %arg3: memref<1x32xf32, #tpu.memory_space<vmem>>, %arg4: memref<32x128xf32, #tpu.memory_space<vmem>>, %arg5: memref<1x128xf32, #tpu.memory_space<vmem>>, %arg6: memref<2x128xf32, #tpu.memory_space<vmem>>) attributes {dimension_semantics = [#tpu.dimension_semantics<parallel>], iteration_bounds = array<i64: 1>, scalar_prefetch = 0 : i64, scratch_operands = 0 : i64, tpu.core_type = #tpu.core_type<tc>, window_params = [{transform_indices = @transform_0, window_bounds = array<i64: 2, 18, 18, 4>}, {pipeline_mode = #tpu.pipeline_mode<synchronous>, transform_indices = @transform_1, window_bounds = array<i64: 9, 4, 32>}, {pipeline_mode = #tpu.pipeline_mode<synchronous>, transform_indices = @transform_2, window_bounds = array<i64: 1, 32>}, {pipeline_mode = #tpu.pipeline_mode<synchronous>, transform_indices = @transform_3, window_bounds = array<i64: 32, 128>}, {pipeline_mode = #tpu.pipeline_mode<synchronous>, transform_indices = @transform_4, window_bounds = array<i64: 1, 128>}, {transform_indices = @transform_5, window_bounds = array<i64: 2, 128>}]} {
    %cst = arith.constant 0.000000e+00 : f32
    %0 = vector.broadcast %cst : f32 to vector<512x32xf32>
    %c0 = arith.constant 0 : index
    %c0_0 = arith.constant 0 : index
    %c0_1 = arith.constant 0 : index
    %c0_2 = arith.constant 0 : index
    %1 = vector.load %arg1[%c0, %c0_0, %c0_1, %c0_2] : memref<2x18x18x4xbf16, #tpu.memory_space<vmem>>, vector<2x16x16x4xbf16>
    %2 = vector.shape_cast %1 : vector<2x16x16x4xbf16> to vector<512x4xbf16>
    %c0_3 = arith.constant 0 : index
    %c0_4 = arith.constant 0 : index
    %c0_5 = arith.constant 0 : index
    %3 = vector.load %arg2[%c0_3, %c0_4, %c0_5] : memref<9x4x32xbf16, #tpu.memory_space<vmem>>, vector<1x4x32xbf16>
    %4 = vector.shape_cast %3 : vector<1x4x32xbf16> to vector<4x32xbf16>
    %cst_6 = arith.constant dense<0.000000e+00> : vector<512x32xf32>
    %5 = tpu.matmul %2, %4, %cst_6 {dimension_numbers = #tpu.dot_dimension_numbers<[1], [0], [0], [1], [0, 0, 1, 1], [], []>} : vector<512x4xbf16>, vector<4x32xbf16>, vector<512x32xf32> -> vector<512x32xf32>
    %6 = arith.addf %0, %5 : vector<512x32xf32>
    %c0_7 = arith.constant 0 : index
    %c0_8 = arith.constant 0 : index
    %c1 = arith.constant 1 : index
    %c0_9 = arith.constant 0 : index
    %7 = vector.load %arg1[%c0_7, %c0_8, %c1, %c0_9] : memref<2x18x18x4xbf16, #tpu.memory_space<vmem>>, vector<2x16x16x4xbf16>
    %8 = vector.shape_cast %7 : vector<2x16x16x4xbf16> to vector<512x4xbf16>
    %c1_10 = arith.constant 1 : index
    %c0_11 = arith.constant 0 : index
    %c0_12 = arith.constant 0 : index
    %9 = vector.load %arg2[%c1_10, %c0_11, %c0_12] : memref<9x4x32xbf16, #tpu.memory_space<vmem>>, vector<1x4x32xbf16>
    %10 = vector.shape_cast %9 : vector<1x4x32xbf16> to vector<4x32xbf16>
    %cst_13 = arith.constant dense<0.000000e+00> : vector<512x32xf32>
    %11 = tpu.matmul %8, %10, %cst_13 {dimension_numbers = #tpu.dot_dimension_numbers<[1], [0], [0], [1], [0, 0, 1, 1], [], []>} : vector<512x4xbf16>, vector<4x32xbf16>, vector<512x32xf32> -> vector<512x32xf32>
    %12 = arith.addf %6, %11 : vector<512x32xf32>
    %c0_14 = arith.constant 0 : index
    %c0_15 = arith.constant 0 : index
    %c2 = arith.constant 2 : index
    %c0_16 = arith.constant 0 : index
    %13 = vector.load %arg1[%c0_14, %c0_15, %c2, %c0_16] : memref<2x18x18x4xbf16, #tpu.memory_space<vmem>>, vector<2x16x16x4xbf16>
    %14 = vector.shape_cast %13 : vector<2x16x16x4xbf16> to vector<512x4xbf16>
    %c2_17 = arith.constant 2 : index
    %c0_18 = arith.constant 0 : index
    %c0_19 = arith.constant 0 : index
    %15 = vector.load %arg2[%c2_17, %c0_18, %c0_19] : memref<9x4x32xbf16, #tpu.memory_space<vmem>>, vector<1x4x32xbf16>
    %16 = vector.shape_cast %15 : vector<1x4x32xbf16> to vector<4x32xbf16>
    %cst_20 = arith.constant dense<0.000000e+00> : vector<512x32xf32>
    %17 = tpu.matmul %14, %16, %cst_20 {dimension_numbers = #tpu.dot_dimension_numbers<[1], [0], [0], [1], [0, 0, 1, 1], [], []>} : vector<512x4xbf16>, vector<4x32xbf16>, vector<512x32xf32> -> vector<512x32xf32>
    %18 = arith.addf %12, %17 : vector<512x32xf32>
    %c0_21 = arith.constant 0 : index
    %c1_22 = arith.constant 1 : index
    %c0_23 = arith.constant 0 : index
    %c0_24 = arith.constant 0 : index
    %19 = vector.load %arg1[%c0_21, %c1_22, %c0_23, %c0_24] : memref<2x18x18x4xbf16, #tpu.memory_space<vmem>>, vector<2x16x16x4xbf16>
    %20 = vector.shape_cast %19 : vector<2x16x16x4xbf16> to vector<512x4xbf16>
    %c3 = arith.constant 3 : index
    %c0_25 = arith.constant 0 : index
    %c0_26 = arith.constant 0 : index
    %21 = vector.load %arg2[%c3, %c0_25, %c0_26] : memref<9x4x32xbf16, #tpu.memory_space<vmem>>, vector<1x4x32xbf16>
    %22 = vector.shape_cast %21 : vector<1x4x32xbf16> to vector<4x32xbf16>
    %cst_27 = arith.constant dense<0.000000e+00> : vector<512x32xf32>
    %23 = tpu.matmul %20, %22, %cst_27 {dimension_numbers = #tpu.dot_dimension_numbers<[1], [0], [0], [1], [0, 0, 1, 1], [], []>} : vector<512x4xbf16>, vector<4x32xbf16>, vector<512x32xf32> -> vector<512x32xf32>
    %24 = arith.addf %18, %23 : vector<512x32xf32>
    %c0_28 = arith.constant 0 : index
    %c1_29 = arith.constant 1 : index
    %c1_30 = arith.constant 1 : index
    %c0_31 = arith.constant 0 : index
    %25 = vector.load %arg1[%c0_28, %c1_29, %c1_30, %c0_31] : memref<2x18x18x4xbf16, #tpu.memory_space<vmem>>, vector<2x16x16x4xbf16>
    %26 = vector.shape_cast %25 : vector<2x16x16x4xbf16> to vector<512x4xbf16>
    %c4 = arith.constant 4 : index
    %c0_32 = arith.constant 0 : index
    %c0_33 = arith.constant 0 : index
    %27 = vector.load %arg2[%c4, %c0_32, %c0_33] : memref<9x4x32xbf16, #tpu.memory_space<vmem>>, vector<1x4x32xbf16>
    %28 = vector.shape_cast %27 : vector<1x4x32xbf16> to vector<4x32xbf16>
    %cst_34 = arith.constant dense<0.000000e+00> : vector<512x32xf32>
    %29 = tpu.matmul %26, %28, %cst_34 {dimension_numbers = #tpu.dot_dimension_numbers<[1], [0], [0], [1], [0, 0, 1, 1], [], []>} : vector<512x4xbf16>, vector<4x32xbf16>, vector<512x32xf32> -> vector<512x32xf32>
    %30 = arith.addf %24, %29 : vector<512x32xf32>
    %c0_35 = arith.constant 0 : index
    %c1_36 = arith.constant 1 : index
    %c2_37 = arith.constant 2 : index
    %c0_38 = arith.constant 0 : index
    %31 = vector.load %arg1[%c0_35, %c1_36, %c2_37, %c0_38] : memref<2x18x18x4xbf16, #tpu.memory_space<vmem>>, vector<2x16x16x4xbf16>
    %32 = vector.shape_cast %31 : vector<2x16x16x4xbf16> to vector<512x4xbf16>
    %c5 = arith.constant 5 : index
    %c0_39 = arith.constant 0 : index
    %c0_40 = arith.constant 0 : index
    %33 = vector.load %arg2[%c5, %c0_39, %c0_40] : memref<9x4x32xbf16, #tpu.memory_space<vmem>>, vector<1x4x32xbf16>
    %34 = vector.shape_cast %33 : vector<1x4x32xbf16> to vector<4x32xbf16>
    %cst_41 = arith.constant dense<0.000000e+00> : vector<512x32xf32>
    %35 = tpu.matmul %32, %34, %cst_41 {dimension_numbers = #tpu.dot_dimension_numbers<[1], [0], [0], [1], [0, 0, 1, 1], [], []>} : vector<512x4xbf16>, vector<4x32xbf16>, vector<512x32xf32> -> vector<512x32xf32>
    %36 = arith.addf %30, %35 : vector<512x32xf32>
    %c0_42 = arith.constant 0 : index
    %c2_43 = arith.constant 2 : index
    %c0_44 = arith.constant 0 : index
    %c0_45 = arith.constant 0 : index
    %37 = vector.load %arg1[%c0_42, %c2_43, %c0_44, %c0_45] : memref<2x18x18x4xbf16, #tpu.memory_space<vmem>>, vector<2x16x16x4xbf16>
    %38 = vector.shape_cast %37 : vector<2x16x16x4xbf16> to vector<512x4xbf16>
    %c6 = arith.constant 6 : index
    %c0_46 = arith.constant 0 : index
    %c0_47 = arith.constant 0 : index
    %39 = vector.load %arg2[%c6, %c0_46, %c0_47] : memref<9x4x32xbf16, #tpu.memory_space<vmem>>, vector<1x4x32xbf16>
    %40 = vector.shape_cast %39 : vector<1x4x32xbf16> to vector<4x32xbf16>
    %cst_48 = arith.constant dense<0.000000e+00> : vector<512x32xf32>
    %41 = tpu.matmul %38, %40, %cst_48 {dimension_numbers = #tpu.dot_dimension_numbers<[1], [0], [0], [1], [0, 0, 1, 1], [], []>} : vector<512x4xbf16>, vector<4x32xbf16>, vector<512x32xf32> -> vector<512x32xf32>
    %42 = arith.addf %36, %41 : vector<512x32xf32>
    %c0_49 = arith.constant 0 : index
    %c2_50 = arith.constant 2 : index
    %c1_51 = arith.constant 1 : index
    %c0_52 = arith.constant 0 : index
    %43 = vector.load %arg1[%c0_49, %c2_50, %c1_51, %c0_52] : memref<2x18x18x4xbf16, #tpu.memory_space<vmem>>, vector<2x16x16x4xbf16>
    %44 = vector.shape_cast %43 : vector<2x16x16x4xbf16> to vector<512x4xbf16>
    %c7 = arith.constant 7 : index
    %c0_53 = arith.constant 0 : index
    %c0_54 = arith.constant 0 : index
    %45 = vector.load %arg2[%c7, %c0_53, %c0_54] : memref<9x4x32xbf16, #tpu.memory_space<vmem>>, vector<1x4x32xbf16>
    %46 = vector.shape_cast %45 : vector<1x4x32xbf16> to vector<4x32xbf16>
    %cst_55 = arith.constant dense<0.000000e+00> : vector<512x32xf32>
    %47 = tpu.matmul %44, %46, %cst_55 {dimension_numbers = #tpu.dot_dimension_numbers<[1], [0], [0], [1], [0, 0, 1, 1], [], []>} : vector<512x4xbf16>, vector<4x32xbf16>, vector<512x32xf32> -> vector<512x32xf32>
    %48 = arith.addf %42, %47 : vector<512x32xf32>
    %c0_56 = arith.constant 0 : index
    %c2_57 = arith.constant 2 : index
    %c2_58 = arith.constant 2 : index
    %c0_59 = arith.constant 0 : index
    %49 = vector.load %arg1[%c0_56, %c2_57, %c2_58, %c0_59] : memref<2x18x18x4xbf16, #tpu.memory_space<vmem>>, vector<2x16x16x4xbf16>
    %50 = vector.shape_cast %49 : vector<2x16x16x4xbf16> to vector<512x4xbf16>
    %c8 = arith.constant 8 : index
    %c0_60 = arith.constant 0 : index
    %c0_61 = arith.constant 0 : index
    %51 = vector.load %arg2[%c8, %c0_60, %c0_61] : memref<9x4x32xbf16, #tpu.memory_space<vmem>>, vector<1x4x32xbf16>
    %52 = vector.shape_cast %51 : vector<1x4x32xbf16> to vector<4x32xbf16>
    %cst_62 = arith.constant dense<0.000000e+00> : vector<512x32xf32>
    %53 = tpu.matmul %50, %52, %cst_62 {dimension_numbers = #tpu.dot_dimension_numbers<[1], [0], [0], [1], [0, 0, 1, 1], [], []>} : vector<512x4xbf16>, vector<4x32xbf16>, vector<512x32xf32> -> vector<512x32xf32>
    %54 = arith.addf %48, %53 : vector<512x32xf32>
    %c0_63 = arith.constant 0 : index
    %c0_64 = arith.constant 0 : index
    %55 = vector.load %arg3[%c0_63, %c0_64] : memref<1x32xf32, #tpu.memory_space<vmem>>, vector<1x32xf32>
    %56 = vector.broadcast %55 : vector<1x32xf32> to vector<512x32xf32>
    %57 = arith.addf %54, %56 : vector<512x32xf32>
    %cst_65 = arith.constant 0.000000e+00 : f32
    %58 = vector.broadcast %cst_65 : f32 to vector<512x32xf32>
    %59 = arith.maximumf %57, %58 : vector<512x32xf32>
    %60 = vector.shape_cast %59 : vector<512x32xf32> to vector<2x256x32xf32>
    %cst_66 = arith.constant dense<0.000000e+00> : vector<2x32xf32>
    %61 = vector.multi_reduction <add>, %60, %cst_66 [1] : vector<2x256x32xf32> to vector<2x32xf32>
    %cst_67 = arith.constant 3.906250e-03 : f32
    %62 = vector.broadcast %cst_67 : f32 to vector<2x32xf32>
    %63 = arith.mulf %61, %62 : vector<2x32xf32>
    %c0_68 = arith.constant 0 : index
    %c0_69 = arith.constant 0 : index
    %64 = vector.load %arg4[%c0_68, %c0_69] : memref<32x128xf32, #tpu.memory_space<vmem>>, vector<32x128xf32>
    %cst_70 = arith.constant dense<0.000000e+00> : vector<2x128xf32>
    %65 = tpu.matmul %63, %64, %cst_70 {dimension_numbers = #tpu.dot_dimension_numbers<[1], [0], [0], [1], [0, 0, 1, 1], [], []>} : vector<2x32xf32>, vector<32x128xf32>, vector<2x128xf32> -> vector<2x128xf32>
    %c0_71 = arith.constant 0 : index
    %c0_72 = arith.constant 0 : index
    %66 = vector.load %arg5[%c0_71, %c0_72] : memref<1x128xf32, #tpu.memory_space<vmem>>, vector<1x128xf32>
    %67 = vector.broadcast %66 : vector<1x128xf32> to vector<2x128xf32>
    %68 = arith.addf %65, %67 : vector<2x128xf32>
    %c0_73 = arith.constant 0 : index
    %c0_74 = arith.constant 0 : index
    %69 = vector.load %arg6[%c0_73, %c0_74] : memref<2x128xf32, #tpu.memory_space<vmem>>, vector<2x128xf32>
    tpu.vector_store %arg6[%c0_73, %c0_74], %68 {strides = array<i32>} : memref<2x128xf32, #tpu.memory_space<vmem>>, vector<2x128xf32>,
    return
  }
  func.func @transform_0(%arg0: i32) -> (i32, i32, i32, i32) {
    %c0_i32 = arith.constant 0 : i32
    %c0_i32_0 = arith.constant 0 : i32
    %c0_i32_1 = arith.constant 0 : i32
    %c0_i32_2 = arith.constant 0 : i32
    return %arg0, %c0_i32, %c0_i32_0, %c0_i32_1 : i32, i32, i32, i32
  }
  func.func @transform_1(%arg0: i32) -> (i32, i32, i32) {
    %c0_i32 = arith.constant 0 : i32
    %c0_i32_0 = arith.constant 0 : i32
    %c0_i32_1 = arith.constant 0 : i32
    %c0_i32_2 = arith.constant 0 : i32
    return %c0_i32, %c0_i32_0, %c0_i32_1 : i32, i32, i32
  }
  func.func @transform_2(%arg0: i32) -> (i32, i32) {
    %c0_i32 = arith.constant 0 : i32
    %c0_i32_0 = arith.constant 0 : i32
    %c0_i32_1 = arith.constant 0 : i32
    return %c0_i32, %c0_i32_0 : i32, i32
  }
  func.func @transform_3(%arg0: i32) -> (i32, i32) {
    %c0_i32 = arith.constant 0 : i32
    %c0_i32_0 = arith.constant 0 : i32
    %c0_i32_1 = arith.constant 0 : i32
    return %c0_i32, %c0_i32_0 : i32, i32
  }
  func.func @transform_4(%arg0: i32) -> (i32, i32) {
    %c0_i32 = arith.constant 0 : i32
    %c0_i32_0 = arith.constant 0 : i32
    %c0_i32_1 = arith.constant 0 : i32
    return %c0_i32, %c0_i32_0 : i32, i32
  }
  func.func @transform_5(%arg0: i32) -> (i32, i32) {
    %c0_i32 = arith.constant 0 : i32
    %c0_i32_0 = arith.constant 0 : i32
    return %arg0, %c0_i32 : i32, i32
  }
}

</mosaic_0001>

<llo_original>
// kernel: tpu_custom_call.1
$region0: #{tpu_custom_call.1}
  #allocation0 [shape = 'u32[]', space=smem, size = 0x4, offset = 0x4, fixed_abs, tag = 'smem constant byte address 0x4 - core index']
  #allocation1 [shape = 'u32[144,128]{1,0:T(1,128)}', space=vmem, size = 0x12000, scoped, tag = 'internal scratch']
  %s0 = inlined_call_operand.vmem [shape: bf16[2,18,18,4], index: 0, kind: input, shape index: {}]
  %s1 = inlined_call_operand.vmem [shape: bf16[9,4,32], index: 1, kind: input, shape index: {}]
  %s2 = inlined_call_operand.vmem [shape: f32[1,32], index: 2, kind: input, shape index: {}]
  %s3 = inlined_call_operand.vmem [shape: f32[32,128], index: 3, kind: input, shape index: {}]
  %s4 = inlined_call_operand.vmem [shape: f32[1,128], index: 4, kind: input, shape index: {}]
  %s5 = inlined_call_operand.hbm [shape: f32[2,128], index: 5, kind: output, shape index: {}]
  %s6 = sld [smem:[#allocation0]]
  $region30: #{tpu_custom_call.1} parent=0
    _
  %s8 = ssub.s32 1, %s6
  %s9 = scalar_select 0, %s8, %s6
  $region1: #{tpu_custom_call.1} parent=0
    #allocation2 [shape = 'u8[1024]{0}', space=vmem, size = 0x400, scoped, tag = 'output window, operand 0, single buffered']
    #allocation3 [shape = 's32[1]{0}', space=sflag, size = 0x4, scoped, tag = 'scoped memory for tpu_custom_call.1']
    %10 = vsyncpa [#allocation3], 0
    // Predicated region
    $region2: #{tpu_custom_call.1} parent=1 // pred_check
      _
    $region3: #{tpu_custom_call.1} parent=1 // pred_check_branch
      %12 = sbr.rel (0) target = $region5
    $region4: #{tpu_custom_call.1} parent=1 // pred_region
      _
    $region5: #{tpu_custom_call.1} parent=1 // pred_fallthru
      _
    // Predicated region
    $region6: #{tpu_custom_call.1} parent=1 // pred_check
      _
    $region7: #{tpu_custom_call.1} parent=1 // pred_check_branch
      %14 = sbr.rel (0) target = $region9
    $region8: #{tpu_custom_call.1} parent=1 // pred_region
      _
    $region9: #{tpu_custom_call.1} parent=1 // pred_fallthru
      _
    // Predicated region
    $region10: #{tpu_custom_call.1} parent=1 // pred_check
      _
    $region11: #{tpu_custom_call.1} parent=1 // pred_check_branch
      %16 = sbr.rel (0) target = $region13
    $region12: #{tpu_custom_call.1} parent=1 // pred_region
      _
    $region13: #{tpu_custom_call.1} parent=1 // pred_fallthru
      _
    // Predicated region
    $region14: #{tpu_custom_call.1} parent=1 // pred_check
      _
    $region15: #{tpu_custom_call.1} parent=1 // pred_check_branch
      %18 = sbr.rel (0) target = $region17
    $region16: #{tpu_custom_call.1} parent=1 // pred_region
      _
    $region17: #{tpu_custom_call.1} parent=1 // pred_fallthru
      _
    // Predicated region
    $region18: #{tpu_custom_call.1} parent=1 // pred_check
      _
    $region19: #{tpu_custom_call.1} parent=1 // pred_check_branch
      %20 = sbr.rel (0) target = $region21
    $region20: #{tpu_custom_call.1} parent=1 // pred_region
      _
    $region21: #{tpu_custom_call.1} parent=1 // pred_fallthru
      _
    %v22 = vld [vmem:[%s0] sm:$0xf]
    %v23 = vld [vmem:[%s0 + $0x4] sm:$0xf]
    %v24 = vld [vmem:[%s0 + $0xc] sm:$0xf]
    %v25 = vld [vmem:[%s0 + $0x10] sm:$0xf]
    %v26 = vld [vmem:[%s0 + $0x18] sm:$0xf]
    %v27 = vld [vmem:[%s0 + $0x1c] sm:$0xf]
    %v28 = vld [vmem:[%s0 + $0x24] sm:$0xf]
    %v29 = vld [vmem:[%s0 + $0x28] sm:$0xf]
    %v30 = vld [vmem:[%s0 + $0x30] sm:$0xf]
    %v31 = vld [vmem:[%s0 + $0x34] sm:$0xf]
    %v32 = vld [vmem:[%s0 + $0x3c] sm:$0xf]
    %v33 = vld [vmem:[%s0 + $0x40] sm:$0xf]
    %v34 = vld [vmem:[%s0 + $0x48] sm:$0xf]
    %v35 = vld [vmem:[%s0 + $0x4c] sm:$0xf]
    %v36 = vld [vmem:[%s0 + $0x54] sm:$0xf]
    %v37 = vld [vmem:[%s0 + $0x58] sm:$0xf]
    %v38 = vld [vmem:[%s0 + $0x60] sm:$0xf]
    %v39 = vld [vmem:[%s0 + $0x64] sm:$0xf]
    %v40 = vld [vmem:[%s0 + $0x6c] sm:$0xf]
    %v41 = vld [vmem:[%s0 + $0x70] sm:$0xf]
    %v42 = vld [vmem:[%s0 + $0x78] sm:$0xf]
    %v43 = vld [vmem:[%s0 + $0x7c] sm:$0xf]
    %v44 = vld [vmem:[%s0 + $0x84] sm:$0xf]
    %v45 = vld [vmem:[%s0 + $0x88] sm:$0xf]
    %v46 = vld [vmem:[%s0 + $0x90] sm:$0xf]
    %v47 = vld [vmem:[%s0 + $0x94] sm:$0xf]
    %v48 = vld [vmem:[%s0 + $0x9c] sm:$0xf]
    %v49 = vld [vmem:[%s0 + $0xa0] sm:$0xf]
    %v50 = vld [vmem:[%s0 + $0xa8] sm:$0xf]
    %v51 = vld [vmem:[%s0 + $0xac] sm:$0xf]
    %v52 = vld [vmem:[%s0 + $0xb4] sm:$0xf]
    %v53 = vld [vmem:[%s0 + $0xb8] sm:$0xf]
    %v54 = vld [vmem:[%s0 + $0xd8] sm:$0xf]
    %v55 = vld [vmem:[%s0 + $0xdc] sm:$0xf]
    %v56 = vld [vmem:[%s0 + $0xe4] sm:$0xf]
    %v57 = vld [vmem:[%s0 + $0xe8] sm:$0xf]
    %v58 = vld [vmem:[%s0 + $0xf0] sm:$0xf]
    %v59 = vld [vmem:[%s0 + $0xf4] sm:$0xf]
    %v60 = vld [vmem:[%s0 + $0xfc] sm:$0xf]
    %v61 = vld [vmem:[%s0 + $0x100] sm:$0xf]
    %v62 = vld [vmem:[%s0 + $0x108] sm:$0xf]
    %v63 = vld [vmem:[%s0 + $0x10c] sm:$0xf]
    %v64 = vld [vmem:[%s0 + $0x114] sm:$0xf]
    %v65 = vld [vmem:[%s0 + $0x118] sm:$0xf]
    %v66 = vld [vmem:[%s0 + $0x120] sm:$0xf]
    %v67 = vld [vmem:[%s0 + $0x124] sm:$0xf]
    %v68 = vld [vmem:[%s0 + $0x12c] sm:$0xf]
    %v69 = vld [vmem:[%s0 + $0x130] sm:$0xf]
    %v70 = vld [vmem:[%s0 + $0x138] sm:$0xf]
    %v71 = vld [vmem:[%s0 + $0x13c] sm:$0xf]
    %v72 = vld [vmem:[%s0 + $0x144] sm:$0xf]
    %v73 = vld [vmem:[%s0 + $0x148] sm:$0xf]
    %v74 = vld [vmem:[%s0 + $0x150] sm:$0xf]
    %v75 = vld [vmem:[%s0 + $0x154] sm:$0xf]
    %v76 = vld [vmem:[%s0 + $0x15c] sm:$0xf]
    %v77 = vld [vmem:[%s0 + $0x160] sm:$0xf]
    %v78 = vld [vmem:[%s0 + $0x168] sm:$0xf]
    %v79 = vld [vmem:[%s0 + $0x16c] sm:$0xf]
    %v80 = vld [vmem:[%s0 + $0x174] sm:$0xf]
    %v81 = vld [vmem:[%s0 + $0x178] sm:$0xf]
    %v82 = vld [vmem:[%s0 + $0x180] sm:$0xf]
    %v83 = vld [vmem:[%s0 + $0x184] sm:$0xf]
    %v84 = vld [vmem:[%s0 + $0x18c] sm:$0xf]
    %v85 = vld [vmem:[%s0 + $0x190] sm:$0xf]
    %v86 = vld [vmem:[%s1] sm:$0x3]
    %v87 = vld [vmem:[%s0 + $0x8] sm:$0x1]
    %v88 = vld [vmem:[%s0 + $0x14] sm:$0x1]
    %v89 = vld [vmem:[%s0 + $0x20] sm:$0x1]
    %v90 = vld [vmem:[%s0 + $0x2c] sm:$0x1]
    %v91 = vld [vmem:[%s0 + $0x38] sm:$0x1]
    %v92 = vld [vmem:[%s0 + $0x44] sm:$0x1]
    %v93 = vld [vmem:[%s0 + $0x50] sm:$0x1]
    %v94 = vld [vmem:[%s0 + $0x5c] sm:$0x1]
    %v95 = vld [vmem:[%s0 + $0x68] sm:$0x1]
    %v96 = vld [vmem:[%s0 + $0x74] sm:$0x1]
    %v97 = vld [vmem:[%s0 + $0x80] sm:$0x1]
    %v98 = vld [vmem:[%s0 + $0x8c] sm:$0x1]
    %v99 = vld [vmem:[%s0 + $0x98] sm:$0x1]
    %v100 = vld [vmem:[%s0 + $0xa4] sm:$0x1]
    %v101 = vld [vmem:[%s0 + $0xb0] sm:$0x1]
    %v102 = vld [vmem:[%s0 + $0xbc] sm:$0x1]
    %v103 = vld [vmem:[%s0 + $0xe0] sm:$0x1]
    %v104 = vld [vmem:[%s0 + $0xec] sm:$0x1]
    %v105 = vld [vmem:[%s0 + $0xf8] sm:$0x1]
    %v106 = vld [vmem:[%s0 + $0x104] sm:$0x1]
    %v107 = vld [vmem:[%s0 + $0x110] sm:$0x1]
    %v108 = vld [vmem:[%s0 + $0x11c] sm:$0x1]
    %v109 = vld [vmem:[%s0 + $0x128] sm:$0x1]
    %v110 = vld [vmem:[%s0 + $0x134] sm:$0x1]
    %v111 = vld [vmem:[%s0 + $0x140] sm:$0x1]
    %v112 = vld [vmem:[%s0 + $0x14c] sm:$0x1]
    %v113 = vld [vmem:[%s0 + $0x158] sm:$0x1]
    %v114 = vld [vmem:[%s0 + $0x164] sm:$0x1]
    %v115 = vld [vmem:[%s0 + $0x170] sm:$0x1]
    %v116 = vld [vmem:[%s0 + $0x17c] sm:$0x1]
    %v117 = vld [vmem:[%s0 + $0x188] sm:$0x1]
    %v118 = vld [vmem:[%s0 + $0x194] sm:$0x1]
    %vm119 = vsmask.f32 3328
    %vm120 = vsmask.f32 7440
    %vm121 = vmor %vm119, %vm120
    %v123 = vshrl.u32 %v22, 16
    %v125 = vrot.slane %v123, 4
    %v126 = vshll.u32 %v22, 16
    %v128 = vrot.slane %v126, 5
    %v129 = vor.u32 %v125, %v128
    %v130 = vrot.slane %v129, 4
    %v132 = vshll.u32 %v23, 16
    %v134 = vrot.slane %v132, 5
    %v135 = vsel %vm121, %v130, %v134
    %v136 = vshrl.u32 %v23, 16
    %v138 = vrot.slane %v136, 4
    %v139 = vor.u32 %v138, %v134
    %v140 = vrot.slane %v139, 4
    %v142 = vshll.u32 %v87, 16
    %v144 = vrot.slane %v142, 5
    %v145 = vsel %vm121, %v140, %v144
    %v147 = vshrl.u32 %v24, 16
    %v149 = vrot.slane %v147, 4
    %v150 = vshll.u32 %v24, 16
    %v152 = vrot.slane %v150, 5
    %v153 = vor.u32 %v149, %v152
    %v154 = vrot.slane %v153, 4
    %v156 = vshll.u32 %v25, 16
    %v158 = vrot.slane %v156, 5
    %v159 = vsel %vm121, %v154, %v158
    %v160 = vshrl.u32 %v25, 16
    %v162 = vrot.slane %v160, 4
    %v163 = vor.u32 %v162, %v158
    %v164 = vrot.slane %v163, 4
    %v166 = vshll.u32 %v88, 16
    %v168 = vrot.slane %v166, 5
    %v169 = vsel %vm121, %v164, %v168
    %v171 = vshrl.u32 %v26, 16
    %v173 = vrot.slane %v171, 4
    %v174 = vshll.u32 %v26, 16
    %v176 = vrot.slane %v174, 5
    %v177 = vor.u32 %v173, %v176
    %v178 = vrot.slane %v177, 4
    %v180 = vshll.u32 %v27, 16
    %v182 = vrot.slane %v180, 5
    %v183 = vsel %vm121, %v178, %v182
    %v184 = vshrl.u32 %v27, 16
    %v186 = vrot.slane %v184, 4
    %v187 = vor.u32 %v186, %v182
    %v188 = vrot.slane %v187, 4
    %v190 = vshll.u32 %v89, 16
    %v192 = vrot.slane %v190, 5
    %v193 = vsel %vm121, %v188, %v192
    %v195 = vshrl.u32 %v28, 16
    %v197 = vrot.slane %v195, 4
    %v198 = vshll.u32 %v28, 16
    %v200 = vrot.slane %v198, 5
    %v201 = vor.u32 %v197, %v200
    %v202 = vrot.slane %v201, 4
    %v204 = vshll.u32 %v29, 16
    %v206 = vrot.slane %v204, 5
    %v207 = vsel %vm121, %v202, %v206
    %v208 = vshrl.u32 %v29, 16
    %v210 = vrot.slane %v208, 4
    %v211 = vor.u32 %v210, %v206
    %v212 = vrot.slane %v211, 4
    %v214 = vshll.u32 %v90, 16
    %v216 = vrot.slane %v214, 5
    %v217 = vsel %vm121, %v212, %v216
    %v219 = vshrl.u32 %v30, 16
    %v221 = vrot.slane %v219, 4
    %v222 = vshll.u32 %v30, 16
    %v224 = vrot.slane %v222, 5
    %v225 = vor.u32 %v221, %v224
    %v226 = vrot.slane %v225, 4
    %v228 = vshll.u32 %v31, 16
    %v230 = vrot.slane %v228, 5
    %v231 = vsel %vm121, %v226, %v230
    %v232 = vshrl.u32 %v31, 16
    %v234 = vrot.slane %v232, 4
    %v235 = vor.u32 %v234, %v230
    %v236 = vrot.slane %v235, 4
    %v238 = vshll.u32 %v91, 16
    %v240 = vrot.slane %v238, 5
    %v241 = vsel %vm121, %v236, %v240
    %v243 = vshrl.u32 %v32, 16
    %v245 = vrot.slane %v243, 4
    %v246 = vshll.u32 %v32, 16
    %v248 = vrot.slane %v246, 5
    %v249 = vor.u32 %v245, %v248
    %v250 = vrot.slane %v249, 4
    %v252 = vshll.u32 %v33, 16
    %v254 = vrot.slane %v252, 5
    %v255 = vsel %vm121, %v250, %v254
    %v256 = vshrl.u32 %v33, 16
    %v258 = vrot.slane %v256, 4
    %v259 = vor.u32 %v258, %v254
    %v260 = vrot.slane %v259, 4
    %v262 = vshll.u32 %v92, 16
    %v264 = vrot.slane %v262, 5
    %v265 = vsel %vm121, %v260, %v264
    %v267 = vshrl.u32 %v34, 16
    %v269 = vrot.slane %v267, 4
    %v270 = vshll.u32 %v34, 16
    %v272 = vrot.slane %v270, 5
    %v273 = vor.u32 %v269, %v272
    %v274 = vrot.slane %v273, 4
    %v276 = vshll.u32 %v35, 16
    %v278 = vrot.slane %v276, 5
    %v279 = vsel %vm121, %v274, %v278
    %v280 = vshrl.u32 %v35, 16
    %v282 = vrot.slane %v280, 4
    %v283 = vor.u32 %v282, %v278
    %v284 = vrot.slane %v283, 4
    %v286 = vshll.u32 %v93, 16
    %v288 = vrot.slane %v286, 5
    %v289 = vsel %vm121, %v284, %v288
    %v291 = vshrl.u32 %v36, 16
    %v293 = vrot.slane %v291, 4
    %v294 = vshll.u32 %v36, 16
    %v296 = vrot.slane %v294, 5
    %v297 = vor.u32 %v293, %v296
    %v298 = vrot.slane %v297, 4
    %v300 = vshll.u32 %v37, 16
    %v302 = vrot.slane %v300, 5
    %v303 = vsel %vm121, %v298, %v302
    %v304 = vshrl.u32 %v37, 16
    %v306 = vrot.slane %v304, 4
    %v307 = vor.u32 %v306, %v302
    %v308 = vrot.slane %v307, 4
    %v310 = vshll.u32 %v94, 16
    %v312 = vrot.slane %v310, 5
    %v313 = vsel %vm121, %v308, %v312
    %v315 = vshrl.u32 %v38, 16
    %v317 = vrot.slane %v315, 4
    %v318 = vshll.u32 %v38, 16
    %v320 = vrot.slane %v318, 5
    %v321 = vor.u32 %v317, %v320
    %v322 = vrot.slane %v321, 4
    %v324 = vshll.u32 %v39, 16
    %v326 = vrot.slane %v324, 5
    %v327 = vsel %vm121, %v322, %v326
    %v328 = vshrl.u32 %v39, 16
    %v330 = vrot.slane %v328, 4
    %v331 = vor.u32 %v330, %v326
    %v332 = vrot.slane %v331, 4
    %v334 = vshll.u32 %v95, 16
    %v336 = vrot.slane %v334, 5
    %v337 = vsel %vm121, %v332, %v336
    %v339 = vshrl.u32 %v40, 16
    %v341 = vrot.slane %v339, 4
    %v342 = vshll.u32 %v40, 16
    %v344 = vrot.slane %v342, 5
    %v345 = vor.u32 %v341, %v344
    %v346 = vrot.slane %v345, 4
    %v348 = vshll.u32 %v41, 16
    %v350 = vrot.slane %v348, 5
    %v351 = vsel %vm121, %v346, %v350
    %v352 = vshrl.u32 %v41, 16
    %v354 = vrot.slane %v352, 4
    %v355 = vor.u32 %v354, %v350
    %v356 = vrot.slane %v355, 4
    %v358 = vshll.u32 %v96, 16
    %v360 = vrot.slane %v358, 5
    %v361 = vsel %vm121, %v356, %v360
    %v363 = vshrl.u32 %v42, 16
    %v365 = vrot.slane %v363, 4
    %v366 = vshll.u32 %v42, 16
    %v368 = vrot.slane %v366, 5
    %v369 = vor.u32 %v365, %v368
    %v370 = vrot.slane %v369, 4
    %v372 = vshll.u32 %v43, 16
    %v374 = vrot.slane %v372, 5
    %v375 = vsel %vm121, %v370, %v374
    %v376 = vshrl.u32 %v43, 16
    %v378 = vrot.slane %v376, 4
    %v379 = vor.u32 %v378, %v374
    %v380 = vrot.slane %v379, 4
    %v382 = vshll.u32 %v97, 16
    %v384 = vrot.slane %v382, 5
    %v385 = vsel %vm121, %v380, %v384
    %v387 = vshrl.u32 %v44, 16
    %v389 = vrot.slane %v387, 4
    %v390 = vshll.u32 %v44, 16
    %v392 = vrot.slane %v390, 5
    %v393 = vor.u32 %v389, %v392
    %v394 = vrot.slane %v393, 4
    %v396 = vshll.u32 %v45, 16
    %v398 = vrot.slane %v396, 5
    %v399 = vsel %vm121, %v394, %v398
    %v400 = vshrl.u32 %v45, 16
    %v402 = vrot.slane %v400, 4
    %v403 = vor.u32 %v402, %v398
    %v404 = vrot.slane %v403, 4
    %v406 = vshll.u32 %v98, 16
    %v408 = vrot.slane %v406, 5
    %v409 = vsel %vm121, %v404, %v408
    %v411 = vshrl.u32 %v46, 16
    %v413 = vrot.slane %v411, 4
    %v414 = vshll.u32 %v46, 16
    %v416 = vrot.slane %v414, 5
    %v417 = vor.u32 %v413, %v416
    %v418 = vrot.slane %v417, 4
    %v420 = vshll.u32 %v47, 16
    %v422 = vrot.slane %v420, 5
    %v423 = vsel %vm121, %v418, %v422
    %v424 = vshrl.u32 %v47, 16
    %v426 = vrot.slane %v424, 4
    %v427 = vor.u32 %v426, %v422
    %v428 = vrot.slane %v427, 4
    %v430 = vshll.u32 %v99, 16
    %v432 = vrot.slane %v430, 5
    %v433 = vsel %vm121, %v428, %v432
    %v435 = vshrl.u32 %v48, 16
    %v437 = vrot.slane %v435, 4
    %v438 = vshll.u32 %v48, 16
    %v440 = vrot.slane %v438, 5
    %v441 = vor.u32 %v437, %v440
    %v442 = vrot.slane %v441, 4
    %v444 = vshll.u32 %v49, 16
    %v446 = vrot.slane %v444, 5
    %v447 = vsel %vm121, %v442, %v446
    %v448 = vshrl.u32 %v49, 16
    %v450 = vrot.slane %v448, 4
    %v451 = vor.u32 %v450, %v446
    %v452 = vrot.slane %v451, 4
    %v454 = vshll.u32 %v100, 16
    %v456 = vrot.slane %v454, 5
    %v457 = vsel %vm121, %v452, %v456
    %v459 = vshrl.u32 %v50, 16
    %v461 = vrot.slane %v459, 4
    %v462 = vshll.u32 %v50, 16
    %v464 = vrot.slane %v462, 5
    %v465 = vor.u32 %v461, %v464
    %v466 = vrot.slane %v465, 4
    %v468 = vshll.u32 %v51, 16
    %v470 = vrot.slane %v468, 5
    %v471 = vsel %vm121, %v466, %v470
    %v472 = vshrl.u32 %v51, 16
    %v474 = vrot.slane %v472, 4
    %v475 = vor.u32 %v474, %v470
    %v476 = vrot.slane %v475, 4
    %v478 = vshll.u32 %v101, 16
    %v480 = vrot.slane %v478, 5
    %v481 = vsel %vm121, %v476, %v480
    %v483 = vshrl.u32 %v52, 16
    %v485 = vrot.slane %v483, 4
    %v486 = vshll.u32 %v52, 16
    %v488 = vrot.slane %v486, 5
    %v489 = vor.u32 %v485, %v488
    %v490 = vrot.slane %v489, 4
    %v492 = vshll.u32 %v53, 16
    %v494 = vrot.slane %v492, 5
    %v495 = vsel %vm121, %v490, %v494
    %v496 = vshrl.u32 %v53, 16
    %v498 = vrot.slane %v496, 4
    %v499 = vor.u32 %v498, %v494
    %v500 = vrot.slane %v499, 4
    %v502 = vshll.u32 %v102, 16
    %v504 = vrot.slane %v502, 5
    %v505 = vsel %vm121, %v500, %v504
    %v507 = vshrl.u32 %v54, 16
    %v509 = vrot.slane %v507, 4
    %v510 = vshll.u32 %v54, 16
    %v512 = vrot.slane %v510, 5
    %v513 = vor.u32 %v509, %v512
    %v514 = vrot.slane %v513, 4
    %v516 = vshll.u32 %v55, 16
    %v518 = vrot.slane %v516, 5
    %v519 = vsel %vm121, %v514, %v518
    %v520 = vshrl.u32 %v55, 16
    %v522 = vrot.slane %v520, 4
    %v523 = vor.u32 %v522, %v518
    %v524 = vrot.slane %v523, 4
    %v526 = vshll.u32 %v103, 16
    %v528 = vrot.slane %v526, 5
    %v529 = vsel %vm121, %v524, %v528
    %v531 = vshrl.u32 %v56, 16
    %v533 = vrot.slane %v531, 4
    %v534 = vshll.u32 %v56, 16
    %v536 = vrot.slane %v534, 5
    %v537 = vor.u32 %v533, %v536
    %v538 = vrot.slane %v537, 4
    %v540 = vshll.u32 %v57, 16
    %v542 = vrot.slane %v540, 5
    %v543 = vsel %vm121, %v538, %v542
    %v544 = vshrl.u32 %v57, 16
    %v546 = vrot.slane %v544, 4
    %v547 = vor.u32 %v546, %v542
    %v548 = vrot.slane %v547, 4
    %v550 = vshll.u32 %v104, 16
    %v552 = vrot.slane %v550, 5
    %v553 = vsel %vm121, %v548, %v552
    %v555 = vshrl.u32 %v58, 16
    %v557 = vrot.slane %v555, 4
    %v558 = vshll.u32 %v58, 16
    %v560 = vrot.slane %v558, 5
    %v561 = vor.u32 %v557, %v560
    %v562 = vrot.slane %v561, 4
    %v564 = vshll.u32 %v59, 16
    %v566 = vrot.slane %v564, 5
    %v567 = vsel %vm121, %v562, %v566
    %v568 = vshrl.u32 %v59, 16
    %v570 = vrot.slane %v568, 4
    %v571 = vor.u32 %v570, %v566
    %v572 = vrot.slane %v571, 4
    %v574 = vshll.u32 %v105, 16
    %v576 = vrot.slane %v574, 5
    %v577 = vsel %vm121, %v572, %v576
    %v579 = vshrl.u32 %v60, 16
    %v581 = vrot.slane %v579, 4
    %v582 = vshll.u32 %v60, 16
    %v584 = vrot.slane %v582, 5
    %v585 = vor.u32 %v581, %v584
    %v586 = vrot.slane %v585, 4
    %v588 = vshll.u32 %v61, 16
    %v590 = vrot.slane %v588, 5
    %v591 = vsel %vm121, %v586, %v590
    %v592 = vshrl.u32 %v61, 16
    %v594 = vrot.slane %v592, 4
    %v595 = vor.u32 %v594, %v590
    %v596 = vrot.slane %v595, 4
    %v598 = vshll.u32 %v106, 16
    %v600 = vrot.slane %v598, 5
    %v601 = vsel %vm121, %v596, %v600
    %v603 = vshrl.u32 %v62, 16
    %v605 = vrot.slane %v603, 4
    %v606 = vshll.u32 %v62, 16
    %v608 = vrot.slane %v606, 5
    %v609 = vor.u32 %v605, %v608
    %v610 = vrot.slane %v609, 4
    %v612 = vshll.u32 %v63, 16
    %v614 = vrot.slane %v612, 5
    %v615 = vsel %vm121, %v610, %v614
    %v616 = vshrl.u32 %v63, 16
    %v618 = vrot.slane %v616, 4
    %v619 = vor.u32 %v618, %v614
    %v620 = vrot.slane %v619, 4
    %v622 = vshll.u32 %v107, 16
    %v624 = vrot.slane %v622, 5
    %v625 = vsel %vm121, %v620, %v624
    %v627 = vshrl.u32 %v64, 16
    %v629 = vrot.slane %v627, 4
    %v630 = vshll.u32 %v64, 16
    %v632 = vrot.slane %v630, 5
    %v633 = vor.u32 %v629, %v632
    %v634 = vrot.slane %v633, 4
    %v636 = vshll.u32 %v65, 16
    %v638 = vrot.slane %v636, 5
    %v639 = vsel %vm121, %v634, %v638
    %v640 = vshrl.u32 %v65, 16
    %v642 = vrot.slane %v640, 4
    %v643 = vor.u32 %v642, %v638
    %v644 = vrot.slane %v643, 4
    %v646 = vshll.u32 %v108, 16
    %v648 = vrot.slane %v646, 5
    %v649 = vsel %vm121, %v644, %v648
    %v651 = vshrl.u32 %v66, 16
    %v653 = vrot.slane %v651, 4
    %v654 = vshll.u32 %v66, 16
    %v656 = vrot.slane %v654, 5
    %v657 = vor.u32 %v653, %v656
    %v658 = vrot.slane %v657, 4
    %v660 = vshll.u32 %v67, 16
    %v662 = vrot.slane %v660, 5
    %v663 = vsel %vm121, %v658, %v662
    %v664 = vshrl.u32 %v67, 16
    %v666 = vrot.slane %v664, 4
    %v667 = vor.u32 %v666, %v662
    %v668 = vrot.slane %v667, 4
    %v670 = vshll.u32 %v109, 16
    %v672 = vrot.slane %v670, 5
    %v673 = vsel %vm121, %v668, %v672
    %v675 = vshrl.u32 %v68, 16
    %v677 = vrot.slane %v675, 4
    %v678 = vshll.u32 %v68, 16
    %v680 = vrot.slane %v678, 5
    %v681 = vor.u32 %v677, %v680
    %v682 = vrot.slane %v681, 4
    %v684 = vshll.u32 %v69, 16
    %v686 = vrot.slane %v684, 5
    %v687 = vsel %vm121, %v682, %v686
    %v688 = vshrl.u32 %v69, 16
    %v690 = vrot.slane %v688, 4
    %v691 = vor.u32 %v690, %v686
    %v692 = vrot.slane %v691, 4
    %v694 = vshll.u32 %v110, 16
    %v696 = vrot.slane %v694, 5
    %v697 = vsel %vm121, %v692, %v696
    %v699 = vshrl.u32 %v70, 16
    %v701 = vrot.slane %v699, 4
    %v702 = vshll.u32 %v70, 16
    %v704 = vrot.slane %v702, 5
    %v705 = vor.u32 %v701, %v704
    %v706 = vrot.slane %v705, 4
    %v708 = vshll.u32 %v71, 16
    %v710 = vrot.slane %v708, 5
    %v711 = vsel %vm121, %v706, %v710
    %v712 = vshrl.u32 %v71, 16
    %v714 = vrot.slane %v712, 4
    %v715 = vor.u32 %v714, %v710
    %v716 = vrot.slane %v715, 4
    %v718 = vshll.u32 %v111, 16
    %v720 = vrot.slane %v718, 5
    %v721 = vsel %vm121, %v716, %v720
    %v723 = vshrl.u32 %v72, 16
    %v725 = vrot.slane %v723, 4
    %v726 = vshll.u32 %v72, 16
    %v728 = vrot.slane %v726, 5
    %v729 = vor.u32 %v725, %v728
    %v730 = vrot.slane %v729, 4
    %v732 = vshll.u32 %v73, 16
    %v734 = vrot.slane %v732, 5
    %v735 = vsel %vm121, %v730, %v734
    %v736 = vshrl.u32 %v73, 16
    %v738 = vrot.slane %v736, 4
    %v739 = vor.u32 %v738, %v734
    %v740 = vrot.slane %v739, 4
    %v742 = vshll.u32 %v112, 16
    %v744 = vrot.slane %v742, 5
    %v745 = vsel %vm121, %v740, %v744
    %v747 = vshrl.u32 %v74, 16
    %v749 = vrot.slane %v747, 4
    %v750 = vshll.u32 %v74, 16
    %v752 = vrot.slane %v750, 5
    %v753 = vor.u32 %v749, %v752
    %v754 = vrot.slane %v753, 4
    %v756 = vshll.u32 %v75, 16
    %v758 = vrot.slane %v756, 5
    %v759 = vsel %vm121, %v754, %v758
    %v760 = vshrl.u32 %v75, 16
    %v762 = vrot.slane %v760, 4
    %v763 = vor.u32 %v762, %v758
    %v764 = vrot.slane %v763, 4
    %v766 = vshll.u32 %v113, 16
    %v768 = vrot.slane %v766, 5
    %v769 = vsel %vm121, %v764, %v768
    %v771 = vshrl.u32 %v76, 16
    %v773 = vrot.slane %v771, 4
    %v774 = vshll.u32 %v76, 16
    %v776 = vrot.slane %v774, 5
    %v777 = vor.u32 %v773, %v776
    %v778 = vrot.slane %v777, 4
    %v780 = vshll.u32 %v77, 16
    %v782 = vrot.slane %v780, 5
    %v783 = vsel %vm121, %v778, %v782
    %v784 = vshrl.u32 %v77, 16
    %v786 = vrot.slane %v784, 4
    %v787 = vor.u32 %v786, %v782
    %v788 = vrot.slane %v787, 4
    %v790 = vshll.u32 %v114, 16
    %v792 = vrot.slane %v790, 5
    %v793 = vsel %vm121, %v788, %v792
    %v795 = vshrl.u32 %v78, 16
    %v797 = vrot.slane %v795, 4
    %v798 = vshll.u32 %v78, 16
    %v800 = vrot.slane %v798, 5
    %v801 = vor.u32 %v797, %v800
    %v802 = vrot.slane %v801, 4
    %v804 = vshll.u32 %v79, 16
    %v806 = vrot.slane %v804, 5
    %v807 = vsel %vm121, %v802, %v806
    %v808 = vshrl.u32 %v79, 16
    %v810 = vrot.slane %v808, 4
    %v811 = vor.u32 %v810, %v806
    %v812 = vrot.slane %v811, 4
    %v814 = vshll.u32 %v115, 16
    %v816 = vrot.slane %v814, 5
    %v817 = vsel %vm121, %v812, %v816
    %v819 = vshrl.u32 %v80, 16
    %v821 = vrot.slane %v819, 4
    %v822 = vshll.u32 %v80, 16
    %v824 = vrot.slane %v822, 5
    %v825 = vor.u32 %v821, %v824
    %v826 = vrot.slane %v825, 4
    %v828 = vshll.u32 %v81, 16
    %v830 = vrot.slane %v828, 5
    %v831 = vsel %vm121, %v826, %v830
    %v832 = vshrl.u32 %v81, 16
    %v834 = vrot.slane %v832, 4
    %v835 = vor.u32 %v834, %v830
    %v836 = vrot.slane %v835, 4
    %v838 = vshll.u32 %v116, 16
    %v840 = vrot.slane %v838, 5
    %v841 = vsel %vm121, %v836, %v840
    %v843 = vshrl.u32 %v82, 16
    %v845 = vrot.slane %v843, 4
    %v846 = vshll.u32 %v82, 16
    %v848 = vrot.slane %v846, 5
    %v849 = vor.u32 %v845, %v848
    %v850 = vrot.slane %v849, 4
    %v852 = vshll.u32 %v83, 16
    %v854 = vrot.slane %v852, 5
    %v855 = vsel %vm121, %v850, %v854
    %v856 = vshrl.u32 %v83, 16
    %v858 = vrot.slane %v856, 4
    %v859 = vor.u32 %v858, %v854
    %v860 = vrot.slane %v859, 4
    %v862 = vshll.u32 %v117, 16
    %v864 = vrot.slane %v862, 5
    %v865 = vsel %vm121, %v860, %v864
    %v867 = vshrl.u32 %v84, 16
    %v869 = vrot.slane %v867, 4
    %v870 = vshll.u32 %v84, 16
    %v872 = vrot.slane %v870, 5
    %v873 = vor.u32 %v869, %v872
    %v874 = vrot.slane %v873, 4
    %v876 = vshll.u32 %v85, 16
    %v878 = vrot.slane %v876, 5
    %v879 = vsel %vm121, %v874, %v878
    %v880 = vshrl.u32 %v85, 16
    %v882 = vrot.slane %v880, 4
    %v883 = vor.u32 %v882, %v878
    %v884 = vrot.slane %v883, 4
    %v886 = vshll.u32 %v118, 16
    %v888 = vrot.slane %v886, 5
    %v889 = vsel %vm121, %v884, %v888
    %s890 = scalar_lea.vmem %s1, 2
    %v891 = vld [vmem:[%s890] sm:$0x3]
    %v892 = vunpack.c.l.b16 %v135
    %v893 = vunpack.c.l.b16 %v145
    %v894 = vunpack.c.l.b16 %v159
    %v895 = vunpack.c.l.b16 %v169
    %v896 = vunpack.c.l.b16 %v183
    %v897 = vunpack.c.l.b16 %v193
    %v898 = vunpack.c.l.b16 %v207
    %v899 = vunpack.c.l.b16 %v217
    %v900 = vunpack.c.l.b16 %v231
    %v901 = vunpack.c.l.b16 %v241
    %v902 = vunpack.c.l.b16 %v255
    %v903 = vunpack.c.l.b16 %v265
    %v904 = vunpack.c.l.b16 %v279
    %v905 = vunpack.c.l.b16 %v289
    %v906 = vunpack.c.l.b16 %v303
    %v907 = vunpack.c.l.b16 %v313
    %v908 = vunpack.c.l.b16 %v327
    %v909 = vunpack.c.l.b16 %v337
    %v910 = vunpack.c.l.b16 %v351
    %v911 = vunpack.c.l.b16 %v361
    %v912 = vunpack.c.l.b16 %v375
    %v913 = vunpack.c.l.b16 %v385
    %v914 = vunpack.c.l.b16 %v399
    %v915 = vunpack.c.l.b16 %v409
    %v916 = vunpack.c.l.b16 %v423
    %v917 = vunpack.c.l.b16 %v433
    %v918 = vunpack.c.l.b16 %v447
    %v919 = vunpack.c.l.b16 %v457
    %v920 = vunpack.c.l.b16 %v471
    %v921 = vunpack.c.l.b16 %v481
    %v922 = vunpack.c.l.b16 %v495
    %v923 = vunpack.c.l.b16 %v505
    %v924 = vunpack.c.l.b16 %v519
    %v925 = vunpack.c.l.b16 %v529
    %v926 = vunpack.c.l.b16 %v543
    %v927 = vunpack.c.l.b16 %v553
    %v928 = vunpack.c.l.b16 %v567
    %v929 = vunpack.c.l.b16 %v577
    %v930 = vunpack.c.l.b16 %v591
    %v931 = vunpack.c.l.b16 %v601
    %v932 = vunpack.c.l.b16 %v615
    %v933 = vunpack.c.l.b16 %v625
    %v934 = vunpack.c.l.b16 %v639
    %v935 = vunpack.c.l.b16 %v649
    %v936 = vunpack.c.l.b16 %v663
    %v937 = vunpack.c.l.b16 %v673
    %v938 = vunpack.c.l.b16 %v687
    %v939 = vunpack.c.l.b16 %v697
    %v940 = vunpack.c.l.b16 %v711
    %v941 = vunpack.c.l.b16 %v721
    %v942 = vunpack.c.l.b16 %v735
    %v943 = vunpack.c.l.b16 %v745
    %v944 = vunpack.c.l.b16 %v759
    %v945 = vunpack.c.l.b16 %v769
    %v946 = vunpack.c.l.b16 %v783
    %v947 = vunpack.c.l.b16 %v793
    %v948 = vunpack.c.l.b16 %v807
    %v949 = vunpack.c.l.b16 %v817
    %v950 = vunpack.c.l.b16 %v831
    %v951 = vunpack.c.l.b16 %v841
    %v952 = vunpack.c.l.b16 %v855
    %v953 = vunpack.c.l.b16 %v865
    %v954 = vunpack.c.l.b16 %v879
    %v955 = vunpack.c.l.b16 %v889
    %v956 = vpack.c.b16 %v893, %v892
    %v957 = vpack.c.b16 %v895, %v894
    %v958 = vpack.c.b16 %v897, %v896
    %v959 = vpack.c.b16 %v899, %v898
    %v960 = vpack.c.b16 %v901, %v900
    %v961 = vpack.c.b16 %v903, %v902
    %v962 = vpack.c.b16 %v905, %v904
    %v963 = vpack.c.b16 %v907, %v906
    %v964 = vpack.c.b16 %v909, %v908
    %v965 = vpack.c.b16 %v911, %v910
    %v966 = vpack.c.b16 %v913, %v912
    %v967 = vpack.c.b16 %v915, %v914
    %v968 = vpack.c.b16 %v917, %v916
    %v969 = vpack.c.b16 %v919, %v918
    %v970 = vpack.c.b16 %v921, %v920
    %v971 = vpack.c.b16 %v923, %v922
    %v972 = vpack.c.b16 %v925, %v924
    %v973 = vpack.c.b16 %v927, %v926
    %v974 = vpack.c.b16 %v929, %v928
    %v975 = vpack.c.b16 %v931, %v930
    %v976 = vpack.c.b16 %v933, %v932
    %v977 = vpack.c.b16 %v935, %v934
    %v978 = vpack.c.b16 %v937, %v936
    %v979 = vpack.c.b16 %v939, %v938
    %v980 = vpack.c.b16 %v941, %v940
    %v981 = vpack.c.b16 %v943, %v942
    %v982 = vpack.c.b16 %v945, %v944
    %v983 = vpack.c.b16 %v947, %v946
    %v984 = vpack.c.b16 %v949, %v948
    %v985 = vpack.c.b16 %v951, %v950
    %v986 = vpack.c.b16 %v953, %v952
    %v987 = vpack.c.b16 %v955, %v954
    %vm988 = vcmask 31744
    %v990 = vsel %vm988, %v956, 0
    %v993 = vsel %vm988, %v957, 0
    %v996 = vsel %vm988, %v958, 0
    %v999 = vsel %vm988, %v959, 0
    %v1002 = vsel %vm988, %v960, 0
    %v1005 = vsel %vm988, %v961, 0
    %v1008 = vsel %vm988, %v962, 0
    %v1011 = vsel %vm988, %v963, 0
    %v1014 = vsel %vm988, %v964, 0
    %v1017 = vsel %vm988, %v965, 0
    %v1020 = vsel %vm988, %v966, 0
    %v1023 = vsel %vm988, %v967, 0
    %v1026 = vsel %vm988, %v968, 0
    %v1029 = vsel %vm988, %v969, 0
    %v1032 = vsel %vm988, %v970, 0
    %v1035 = vsel %vm988, %v971, 0
    %v1038 = vsel %vm988, %v972, 0
    %v1041 = vsel %vm988, %v973, 0
    %v1044 = vsel %vm988, %v974, 0
    %v1047 = vsel %vm988, %v975, 0
    %v1050 = vsel %vm988, %v976, 0
    %v1053 = vsel %vm988, %v977, 0
    %v1056 = vsel %vm988, %v978, 0
    %v1059 = vsel %vm988, %v979, 0
    %v1062 = vsel %vm988, %v980, 0
    %v1065 = vsel %vm988, %v981, 0
    %v1068 = vsel %vm988, %v982, 0
    %v1071 = vsel %vm988, %v983, 0
    %v1074 = vsel %vm988, %v984, 0
    %v1077 = vsel %vm988, %v985, 0
    %v1080 = vsel %vm988, %v986, 0
    %v1083 = vsel %vm988, %v987, 0
    %vm1085 = vcmask 1041408
    %v1087 = vsel %vm1085, %v891, 0
    %1089 = vmatprep.subr.bf16.mxu0 0
    %1090 = vmatpush1.bf16.msra.mxu0 0
    %1091 = vmatprep.subr.bf16.mxu0 0
    %1092 = vmatpush1.bf16.msra.mxu0 0
    %1093 = vmatprep.subr.bf16.mxu0 0
    %1094 = vmatpush1.bf16.msra.mxu0 0
    %1095 = vmatprep.subr.bf16.mxu0 0
    %1096 = vmatpush1.bf16.msra.mxu0 0
    %1097 = vmatprep.subr.bf16.mxu0 0
    %1098 = vmatpush1.bf16.msra.mxu0 0
    %1099 = vmatprep.subr.bf16.mxu0 0
    %1100 = vmatpush1.bf16.msra.mxu0 0
    %1101 = vmatprep.subr.bf16.mxu0 0
    %1102 = vmatpush1.bf16.msra.mxu0 0
    %1103 = vmatprep.subr.bf16.mxu0 0
    %1104 = vmatpush1.bf16.msra.mxu0 %v1087
    %1105 = vmatprep.subr.bf16.mxu0 0
    %1106 = vmatpush2.bf16.msra.mxu0 0
    %1107 = vmatprep.subr.bf16.mxu0 0
    %1108 = vmatpush2.bf16.msra.mxu0 0
    %1109 = vmatprep.subr.bf16.mxu0 0
    %1110 = vmatpush2.bf16.msra.mxu0 0
    %1111 = vmatprep.subr.bf16.mxu0 0
    %1112 = vmatpush2.bf16.msra.mxu0 0
    %1113 = vmatprep.subr.bf16.mxu0 0
    %1114 = vmatpush2.bf16.msra.mxu0 0
    %1115 = vmatprep.subr.bf16.mxu0 0
    %1116 = vmatpush2.bf16.msra.mxu0 0
    %1117 = vmatprep.subr.bf16.mxu0 0
    %1118 = vmatpush2.bf16.msra.mxu0 0
    %1119 = vmatprep.subr.bf16.mxu0 0
    %1120 = vmatpush2.bf16.msra.mxu0 0
    %1121 = vmatprep.mubr.bf16.mxu0 0
    %1122 = vmatmul.mubr.bf16.gmra.mxu0 %v990
    %v1123 = vpop.f32.mrf.mxu0
    %v1124 = vadd.f32 0.0, %v1123
    %v1125 = vpop.f32.mrf.mxu0
    %v1126 = vpop.f32.mrf.mxu0
    %v1127 = vadd.f32 0.0, %v1126
    %v1128 = vpop.f32.mrf.mxu0
    %1129 = vmatprep.mubr.bf16.mxu0 0
    %1130 = vmatmul.mubr.bf16.gmra.mxu0 %v993
    %v1131 = vpop.f32.mrf.mxu0
    %v1132 = vadd.f32 0.0, %v1131
    %v1133 = vpop.f32.mrf.mxu0
    %v1134 = vpop.f32.mrf.mxu0
    %v1135 = vadd.f32 0.0, %v1134
    %v1136 = vpop.f32.mrf.mxu0
    %1137 = vmatprep.mubr.bf16.mxu0 0
    %1138 = vmatmul.mubr.bf16.gmra.mxu0 %v996
    %v1139 = vpop.f32.mrf.mxu0
    %v1140 = vadd.f32 0.0, %v1139
    %v1141 = vpop.f32.mrf.mxu0
    %v1142 = vpop.f32.mrf.mxu0
    %v1143 = vadd.f32 0.0, %v1142
    %v1144 = vpop.f32.mrf.mxu0
    %1145 = vmatprep.mubr.bf16.mxu0 0
    %1146 = vmatmul.mubr.bf16.gmra.mxu0 %v999
    %v1147 = vpop.f32.mrf.mxu0
    %v1148 = vadd.f32 0.0, %v1147
    %v1149 = vpop.f32.mrf.mxu0
    %v1150 = vpop.f32.mrf.mxu0
    %v1151 = vadd.f32 0.0, %v1150
    %v1152 = vpop.f32.mrf.mxu0
    %1153 = vmatprep.mubr.bf16.mxu0 0
    %1154 = vmatmul.mubr.bf16.gmra.mxu0 %v1002
    %v1155 = vpop.f32.mrf.mxu0
    %v1156 = vadd.f32 0.0, %v1155
    %v1157 = vpop.f32.mrf.mxu0
    %v1158 = vpop.f32.mrf.mxu0
    %v1159 = vadd.f32 0.0, %v1158
    %v1160 = vpop.f32.mrf.mxu0
    %1161 = vmatprep.mubr.bf16.mxu0 0
    %1162 = vmatmul.mubr.bf16.gmra.mxu0 %v1005
    %v1163 = vpop.f32.mrf.mxu0
    %v1164 = vadd.f32 0.0, %v1163
    %v1165 = vpop.f32.mrf.mxu0
    %v1166 = vpop.f32.mrf.mxu0
    %v1167 = vadd.f32 0.0, %v1166
    %v1168 = vpop.f32.mrf.mxu0
    %1169 = vmatprep.mubr.bf16.mxu0 0
    %1170 = vmatmul.mubr.bf16.gmra.mxu0 %v1008
    %v1171 = vpop.f32.mrf.mxu0
    %v1172 = vadd.f32 0.0, %v1171
    %v1173 = vpop.f32.mrf.mxu0
    %v1174 = vpop.f32.mrf.mxu0
    %v1175 = vadd.f32 0.0, %v1174
    %v1176 = vpop.f32.mrf.mxu0
    %1177 = vmatprep.mubr.bf16.mxu0 0
    %1178 = vmatmul.mubr.bf16.gmra.mxu0 %v1011
    %v1179 = vpop.f32.mrf.mxu0
    %v1180 = vadd.f32 0.0, %v1179
    %v1181 = vpop.f32.mrf.mxu0
    %v1182 = vpop.f32.mrf.mxu0
    %v1183 = vadd.f32 0.0, %v1182
    %v1184 = vpop.f32.mrf.mxu0
    %1185 = vmatprep.mubr.bf16.mxu0 0
    %1186 = vmatmul.mubr.bf16.gmra.mxu0 %v1014
    %v1187 = vpop.f32.mrf.mxu0
    %v1188 = vadd.f32 0.0, %v1187
    %v1189 = vpop.f32.mrf.mxu0
    %v1190 = vpop.f32.mrf.mxu0
    %v1191 = vadd.f32 0.0, %v1190
    %v1192 = vpop.f32.mrf.mxu0
    %1193 = vmatprep.mubr.bf16.mxu0 0
    %1194 = vmatmul.mubr.bf16.gmra.mxu0 %v1017
    %v1195 = vpop.f32.mrf.mxu0
    %v1196 = vadd.f32 0.0, %v1195
    %v1197 = vpop.f32.mrf.mxu0
    %v1198 = vpop.f32.mrf.mxu0
    %v1199 = vadd.f32 0.0, %v1198
    %v1200 = vpop.f32.mrf.mxu0
    %1201 = vmatprep.mubr.bf16.mxu0 0
    %1202 = vmatmul.mubr.bf16.gmra.mxu0 %v1020
    %v1203 = vpop.f32.mrf.mxu0
    %v1204 = vadd.f32 0.0, %v1203
    %v1205 = vpop.f32.mrf.mxu0
    %v1206 = vpop.f32.mrf.mxu0
    %v1207 = vadd.f32 0.0, %v1206
    %v1208 = vpop.f32.mrf.mxu0
    %1209 = vmatprep.mubr.bf16.mxu0 0
    %1210 = vmatmul.mubr.bf16.gmra.mxu0 %v1023
    %v1211 = vpop.f32.mrf.mxu0
    %v1212 = vadd.f32 0.0, %v1211
    %v1213 = vpop.f32.mrf.mxu0
    %v1214 = vpop.f32.mrf.mxu0
    %v1215 = vadd.f32 0.0, %v1214
    %v1216 = vpop.f32.mrf.mxu0
    %1217 = vmatprep.mubr.bf16.mxu0 0
    %1218 = vmatmul.mubr.bf16.gmra.mxu0 %v1026
    %v1219 = vpop.f32.mrf.mxu0
    %v1220 = vadd.f32 0.0, %v1219
    %v1221 = vpop.f32.mrf.mxu0
    %v1222 = vpop.f32.mrf.mxu0
    %v1223 = vadd.f32 0.0, %v1222
    %v1224 = vpop.f32.mrf.mxu0
    %1225 = vmatprep.mubr.bf16.mxu0 0
    %1226 = vmatmul.mubr.bf16.gmra.mxu0 %v1029
    %v1227 = vpop.f32.mrf.mxu0
    %v1228 = vadd.f32 0.0, %v1227
    %v1229 = vpop.f32.mrf.mxu0
    %v1230 = vpop.f32.mrf.mxu0
    %v1231 = vadd.f32 0.0, %v1230
    %v1232 = vpop.f32.mrf.mxu0
    %1233 = vmatprep.mubr.bf16.mxu0 0
    %1234 = vmatmul.mubr.bf16.gmra.mxu0 %v1032
    %v1235 = vpop.f32.mrf.mxu0
    %v1236 = vadd.f32 0.0, %v1235
    %v1237 = vpop.f32.mrf.mxu0
    %v1238 = vpop.f32.mrf.mxu0
    %v1239 = vadd.f32 0.0, %v1238
    %v1240 = vpop.f32.mrf.mxu0
    %1241 = vmatprep.mubr.bf16.mxu0 0
    %1242 = vmatmul.mubr.bf16.gmra.mxu0 %v1035
    %v1243 = vpop.f32.mrf.mxu0
    %v1244 = vadd.f32 0.0, %v1243
    %v1245 = vpop.f32.mrf.mxu0
    %v1246 = vpop.f32.mrf.mxu0
    %v1247 = vadd.f32 0.0, %v1246
    %v1248 = vpop.f32.mrf.mxu0
    %1249 = vmatprep.mubr.bf16.mxu0 0
    %1250 = vmatmul.mubr.bf16.gmra.mxu0 %v1038
    %v1251 = vpop.f32.mrf.mxu0
    %v1252 = vadd.f32 0.0, %v1251
    %v1253 = vpop.f32.mrf.mxu0
    %v1254 = vpop.f32.mrf.mxu0
    %v1255 = vadd.f32 0.0, %v1254
    %v1256 = vpop.f32.mrf.mxu0
    %1257 = vmatprep.mubr.bf16.mxu0 0
    %1258 = vmatmul.mubr.bf16.gmra.mxu0 %v1041
    %v1259 = vpop.f32.mrf.mxu0
    %v1260 = vadd.f32 0.0, %v1259
    %v1261 = vpop.f32.mrf.mxu0
    %v1262 = vpop.f32.mrf.mxu0
    %v1263 = vadd.f32 0.0, %v1262
    %v1264 = vpop.f32.mrf.mxu0
    %1265 = vmatprep.mubr.bf16.mxu0 0
    %1266 = vmatmul.mubr.bf16.gmra.mxu0 %v1044
    %v1267 = vpop.f32.mrf.mxu0
    %v1268 = vadd.f32 0.0, %v1267
    %v1269 = vpop.f32.mrf.mxu0
    %v1270 = vpop.f32.mrf.mxu0
    %v1271 = vadd.f32 0.0, %v1270
    %v1272 = vpop.f32.mrf.mxu0
    %1273 = vmatprep.mubr.bf16.mxu0 0
    %1274 = vmatmul.mubr.bf16.gmra.mxu0 %v1047
    %v1275 = vpop.f32.mrf.mxu0
    %v1276 = vadd.f32 0.0, %v1275
    %v1277 = vpop.f32.mrf.mxu0
    %v1278 = vpop.f32.mrf.mxu0
    %v1279 = vadd.f32 0.0, %v1278
    %v1280 = vpop.f32.mrf.mxu0
    %1281 = vmatprep.mubr.bf16.mxu0 0
    %1282 = vmatmul.mubr.bf16.gmra.mxu0 %v1050
    %v1283 = vpop.f32.mrf.mxu0
    %v1284 = vadd.f32 0.0, %v1283
    %v1285 = vpop.f32.mrf.mxu0
    %v1286 = vpop.f32.mrf.mxu0
    %v1287 = vadd.f32 0.0, %v1286
    %v1288 = vpop.f32.mrf.mxu0
    %1289 = vmatprep.mubr.bf16.mxu0 0
    %1290 = vmatmul.mubr.bf16.gmra.mxu0 %v1053
    %v1291 = vpop.f32.mrf.mxu0
    %v1292 = vadd.f32 0.0, %v1291
    %v1293 = vpop.f32.mrf.mxu0
    %v1294 = vpop.f32.mrf.mxu0
    %v1295 = vadd.f32 0.0, %v1294
    %v1296 = vpop.f32.mrf.mxu0
    %1297 = vmatprep.mubr.bf16.mxu0 0
    %1298 = vmatmul.mubr.bf16.gmra.mxu0 %v1056
    %v1299 = vpop.f32.mrf.mxu0
    %v1300 = vadd.f32 0.0, %v1299
    %v1301 = vpop.f32.mrf.mxu0
    %v1302 = vpop.f32.mrf.mxu0
    %v1303 = vadd.f32 0.0, %v1302
    %v1304 = vpop.f32.mrf.mxu0
    %1305 = vmatprep.mubr.bf16.mxu0 0
    %1306 = vmatmul.mubr.bf16.gmra.mxu0 %v1059
    %v1307 = vpop.f32.mrf.mxu0
    %v1308 = vadd.f32 0.0, %v1307
    %v1309 = vpop.f32.mrf.mxu0
    %v1310 = vpop.f32.mrf.mxu0
    %v1311 = vadd.f32 0.0, %v1310
    %v1312 = vpop.f32.mrf.mxu0
    %1313 = vmatprep.mubr.bf16.mxu0 0
    %1314 = vmatmul.mubr.bf16.gmra.mxu0 %v1062
    %v1315 = vpop.f32.mrf.mxu0
    %v1316 = vadd.f32 0.0, %v1315
    %v1317 = vpop.f32.mrf.mxu0
    %v1318 = vpop.f32.mrf.mxu0
    %v1319 = vadd.f32 0.0, %v1318
    %v1320 = vpop.f32.mrf.mxu0
    %1321 = vmatprep.mubr.bf16.mxu0 0
    %1322 = vmatmul.mubr.bf16.gmra.mxu0 %v1065
    %v1323 = vpop.f32.mrf.mxu0
    %v1324 = vadd.f32 0.0, %v1323
    %v1325 = vpop.f32.mrf.mxu0
    %v1326 = vpop.f32.mrf.mxu0
    %v1327 = vadd.f32 0.0, %v1326
    %v1328 = vpop.f32.mrf.mxu0
    %1329 = vmatprep.mubr.bf16.mxu0 0
    %1330 = vmatmul.mubr.bf16.gmra.mxu0 %v1068
    %v1331 = vpop.f32.mrf.mxu0
    %v1332 = vadd.f32 0.0, %v1331
    %v1333 = vpop.f32.mrf.mxu0
    %v1334 = vpop.f32.mrf.mxu0
    %v1335 = vadd.f32 0.0, %v1334
    %v1336 = vpop.f32.mrf.mxu0
    %1337 = vmatprep.mubr.bf16.mxu0 0
    %1338 = vmatmul.mubr.bf16.gmra.mxu0 %v1071
    %v1339 = vpop.f32.mrf.mxu0
    %v1340 = vadd.f32 0.0, %v1339
    %v1341 = vpop.f32.mrf.mxu0
    %v1342 = vpop.f32.mrf.mxu0
    %v1343 = vadd.f32 0.0, %v1342
    %v1344 = vpop.f32.mrf.mxu0
    %1345 = vmatprep.mubr.bf16.mxu0 0
    %1346 = vmatmul.mubr.bf16.gmra.mxu0 %v1074
    %v1347 = vpop.f32.mrf.mxu0
    %v1348 = vadd.f32 0.0, %v1347
    %v1349 = vpop.f32.mrf.mxu0
    %v1350 = vpop.f32.mrf.mxu0
    %v1351 = vadd.f32 0.0, %v1350
    %v1352 = vpop.f32.mrf.mxu0
    %1353 = vmatprep.mubr.bf16.mxu0 0
    %1354 = vmatmul.mubr.bf16.gmra.mxu0 %v1077
    %v1355 = vpop.f32.mrf.mxu0
    %v1356 = vadd.f32 0.0, %v1355
    %v1357 = vpop.f32.mrf.mxu0
    %v1358 = vpop.f32.mrf.mxu0
    %v1359 = vadd.f32 0.0, %v1358
    %v1360 = vpop.f32.mrf.mxu0
    %1361 = vmatprep.mubr.bf16.mxu0 0
    %1362 = vmatmul.mubr.bf16.gmra.mxu0 %v1080
    %v1363 = vpop.f32.mrf.mxu0
    %v1364 = vadd.f32 0.0, %v1363
    %v1365 = vpop.f32.mrf.mxu0
    %v1366 = vpop.f32.mrf.mxu0
    %v1367 = vadd.f32 0.0, %v1366
    %v1368 = vpop.f32.mrf.mxu0
    %1369 = vmatprep.mubr.bf16.mxu0 0
    %1370 = vmatmul.mubr.bf16.gmra.mxu0 %v1083
    %v1371 = vpop.f32.mrf.mxu0
    %v1372 = vadd.f32 0.0, %v1371
    %v1373 = vpop.f32.mrf.mxu0
    %v1374 = vpop.f32.mrf.mxu0
    %v1375 = vadd.f32 0.0, %v1374
    %v1376 = vpop.f32.mrf.mxu0
    %1377 = vdwg.mxu0
    %v1442 = vunpack.c.l.b16 %v22
    %v1443 = vunpack.c.l.b16 %v23
    %v1444 = vunpack.c.l.b16 %v24
    %v1445 = vunpack.c.l.b16 %v25
    %v1446 = vunpack.c.l.b16 %v26
    %v1447 = vunpack.c.l.b16 %v27
    %v1448 = vunpack.c.l.b16 %v28
    %v1449 = vunpack.c.l.b16 %v29
    %v1450 = vunpack.c.l.b16 %v30
    %v1451 = vunpack.c.l.b16 %v31
    %v1452 = vunpack.c.l.b16 %v32
    %v1453 = vunpack.c.l.b16 %v33
    %v1454 = vunpack.c.l.b16 %v34
    %v1455 = vunpack.c.l.b16 %v35
    %v1456 = vunpack.c.l.b16 %v36
    %v1457 = vunpack.c.l.b16 %v37
    %v1458 = vunpack.c.l.b16 %v38
    %v1459 = vunpack.c.l.b16 %v39
    %v1460 = vunpack.c.l.b16 %v40
    %v1461 = vunpack.c.l.b16 %v41
    %v1462 = vunpack.c.l.b16 %v42
    %v1463 = vunpack.c.l.b16 %v43
    %v1464 = vunpack.c.l.b16 %v44
    %v1465 = vunpack.c.l.b16 %v45
    %v1466 = vunpack.c.l.b16 %v46
    %v1467 = vunpack.c.l.b16 %v47
    %v1468 = vunpack.c.l.b16 %v48
    %v1469 = vunpack.c.l.b16 %v49
    %v1470 = vunpack.c.l.b16 %v50
    %v1471 = vunpack.c.l.b16 %v51
    %v1472 = vunpack.c.l.b16 %v52
    %v1473 = vunpack.c.l.b16 %v53
    %v1474 = vunpack.c.l.b16 %v54
    %v1475 = vunpack.c.l.b16 %v55
    %v1476 = vunpack.c.l.b16 %v56
    %v1477 = vunpack.c.l.b16 %v57
    %v1478 = vunpack.c.l.b16 %v58
    %v1479 = vunpack.c.l.b16 %v59
    %v1480 = vunpack.c.l.b16 %v60
    %v1481 = vunpack.c.l.b16 %v61
    %v1482 = vunpack.c.l.b16 %v62
    %v1483 = vunpack.c.l.b16 %v63
    %v1484 = vunpack.c.l.b16 %v64
    %v1485 = vunpack.c.l.b16 %v65
    %v1486 = vunpack.c.l.b16 %v66
    %v1487 = vunpack.c.l.b16 %v67
    %v1488 = vunpack.c.l.b16 %v68
    %v1489 = vunpack.c.l.b16 %v69
    %v1490 = vunpack.c.l.b16 %v70
    %v1491 = vunpack.c.l.b16 %v71
    %v1492 = vunpack.c.l.b16 %v72
    %v1493 = vunpack.c.l.b16 %v73
    %v1494 = vunpack.c.l.b16 %v74
    %v1495 = vunpack.c.l.b16 %v75
    %v1496 = vunpack.c.l.b16 %v76
    %v1497 = vunpack.c.l.b16 %v77
    %v1498 = vunpack.c.l.b16 %v78
    %v1499 = vunpack.c.l.b16 %v79
    %v1500 = vunpack.c.l.b16 %v80
    %v1501 = vunpack.c.l.b16 %v81
    %v1502 = vunpack.c.l.b16 %v82
    %v1503 = vunpack.c.l.b16 %v83
    %v1504 = vunpack.c.l.b16 %v84
    %v1505 = vunpack.c.l.b16 %v85
    %v1506 = vpack.c.b16 %v1443, %v1442
    %v1507 = vpack.c.b16 %v1445, %v1444
    %v1508 = vpack.c.b16 %v1447, %v1446
    %v1509 = vpack.c.b16 %v1449, %v1448
    %v1510 = vpack.c.b16 %v1451, %v1450
    %v1511 = vpack.c.b16 %v1453, %v1452
    %v1512 = vpack.c.b16 %v1455, %v1454
    %v1513 = vpack.c.b16 %v1457, %v1456
    %v1514 = vpack.c.b16 %v1459, %v1458
    %v1515 = vpack.c.b16 %v1461, %v1460
    %v1516 = vpack.c.b16 %v1463, %v1462
    %v1517 = vpack.c.b16 %v1465, %v1464
    %v1518 = vpack.c.b16 %v1467, %v1466
    %v1519 = vpack.c.b16 %v1469, %v1468
    %v1520 = vpack.c.b16 %v1471, %v1470
    %v1521 = vpack.c.b16 %v1473, %v1472
    %v1522 = vpack.c.b16 %v1475, %v1474
    %v1523 = vpack.c.b16 %v1477, %v1476
    %v1524 = vpack.c.b16 %v1479, %v1478
    %v1525 = vpack.c.b16 %v1481, %v1480
    %v1526 = vpack.c.b16 %v1483, %v1482
    %v1527 = vpack.c.b16 %v1485, %v1484
    %v1528 = vpack.c.b16 %v1487, %v1486
    %v1529 = vpack.c.b16 %v1489, %v1488
    %v1530 = vpack.c.b16 %v1491, %v1490
    %v1531 = vpack.c.b16 %v1493, %v1492
    %v1532 = vpack.c.b16 %v1495, %v1494
    %v1533 = vpack.c.b16 %v1497, %v1496
    %v1534 = vpack.c.b16 %v1499, %v1498
    %v1535 = vpack.c.b16 %v1501, %v1500
    %v1536 = vpack.c.b16 %v1503, %v1502
    %v1537 = vpack.c.b16 %v1505, %v1504
    %v1539 = vsel %vm988, %v1506, 0
    %v1542 = vsel %vm988, %v1507, 0
    %v1545 = vsel %vm988, %v1508, 0
    %v1548 = vsel %vm988, %v1509, 0
    %v1551 = vsel %vm988, %v1510, 0
    %v1554 = vsel %vm988, %v1511, 0
    %v1557 = vsel %vm988, %v1512, 0
    %v1560 = vsel %vm988, %v1513, 0
    %v1563 = vsel %vm988, %v1514, 0
    %v1566 = vsel %vm988, %v1515, 0
    %v1569 = vsel %vm988, %v1516, 0
    %v1572 = vsel %vm988, %v1517, 0
    %v1575 = vsel %vm988, %v1518, 0
    %v1578 = vsel %vm988, %v1519, 0
    %v1581 = vsel %vm988, %v1520, 0
    %v1584 = vsel %vm988, %v1521, 0
    %v1587 = vsel %vm988, %v1522, 0
    %v1590 = vsel %vm988, %v1523, 0
    %v1593 = vsel %vm988, %v1524, 0
    %v1596 = vsel %vm988, %v1525, 0
    %v1599 = vsel %vm988, %v1526, 0
    %v1602 = vsel %vm988, %v1527, 0
    %v1605 = vsel %vm988, %v1528, 0
    %v1608 = vsel %vm988, %v1529, 0
    %v1611 = vsel %vm988, %v1530, 0
    %v1614 = vsel %vm988, %v1531, 0
    %v1617 = vsel %vm988, %v1532, 0
    %v1620 = vsel %vm988, %v1533, 0
    %v1623 = vsel %vm988, %v1534, 0
    %v1626 = vsel %vm988, %v1535, 0
    %v1629 = vsel %vm988, %v1536, 0
    %v1632 = vsel %vm988, %v1537, 0
    %v1635 = vsel %vm1085, %v86, 0
    %1637 = vmatprep.subr.bf16.mxu0 0
    %1638 = vmatpush1.bf16.msra.mxu0 0
    %1639 = vmatprep.subr.bf16.mxu0 0
    %1640 = vmatpush1.bf16.msra.mxu0 0
    %1641 = vmatprep.subr.bf16.mxu0 0
    %1642 = vmatpush1.bf16.msra.mxu0 0
    %1643 = vmatprep.subr.bf16.mxu0 0
    %1644 = vmatpush1.bf16.msra.mxu0 0
    %1645 = vmatprep.subr.bf16.mxu0 0
    %1646 = vmatpush1.bf16.msra.mxu0 0
    %1647 = vmatprep.subr.bf16.mxu0 0
    %1648 = vmatpush1.bf16.msra.mxu0 0
    %1649 = vmatprep.subr.bf16.mxu0 0
    %1650 = vmatpush1.bf16.msra.mxu0 0
    %1651 = vmatprep.subr.bf16.mxu0 0
    %1652 = vmatpush1.bf16.msra.mxu0 %v1635
    %1653 = vmatprep.subr.bf16.mxu0 0
    %1654 = vmatpush2.bf16.msra.mxu0 0
    %1655 = vmatprep.subr.bf16.mxu0 0
    %1656 = vmatpush2.bf16.msra.mxu0 0
    %1657 = vmatprep.subr.bf16.mxu0 0
    %1658 = vmatpush2.bf16.msra.mxu0 0
    %1659 = vmatprep.subr.bf16.mxu0 0
    %1660 = vmatpush2.bf16.msra.mxu0 0
    %1661 = vmatprep.subr.bf16.mxu0 0
    %1662 = vmatpush2.bf16.msra.mxu0 0
    %1663 = vmatprep.subr.bf16.mxu0 0
    %1664 = vmatpush2.bf16.msra.mxu0 0
    %1665 = vmatprep.subr.bf16.mxu0 0
    %1666 = vmatpush2.bf16.msra.mxu0 0
    %1667 = vmatprep.subr.bf16.mxu0 0
    %1668 = vmatpush2.bf16.msra.mxu0 0
    %1669 = vmatprep.mubr.bf16.mxu0 0
    %1670 = vmatmul.mubr.bf16.gmra.mxu0 %v1539
    %v1671 = vpop.f32.mrf.mxu0
    %v1672 = vadd.f32 %v1124, %v1671
    %v1673 = vpop.f32.mrf.mxu0
    %v1674 = vpop.f32.mrf.mxu0
    %v1675 = vadd.f32 %v1127, %v1674
    %v1676 = vpop.f32.mrf.mxu0
    %1677 = vmatprep.mubr.bf16.mxu0 0
    %1678 = vmatmul.mubr.bf16.gmra.mxu0 %v1542
    %v1679 = vpop.f32.mrf.mxu0
    %v1680 = vadd.f32 %v1132, %v1679
    %v1681 = vpop.f32.mrf.mxu0
    %v1682 = vpop.f32.mrf.mxu0
    %v1683 = vadd.f32 %v1135, %v1682
    %v1684 = vpop.f32.mrf.mxu0
    %1685 = vmatprep.mubr.bf16.mxu0 0
    %1686 = vmatmul.mubr.bf16.gmra.mxu0 %v1545
    %v1687 = vpop.f32.mrf.mxu0
    %v1688 = vadd.f32 %v1140, %v1687
    %v1689 = vpop.f32.mrf.mxu0
    %v1690 = vpop.f32.mrf.mxu0
    %v1691 = vadd.f32 %v1143, %v1690
    %v1692 = vpop.f32.mrf.mxu0
    %1693 = vmatprep.mubr.bf16.mxu0 0
    %1694 = vmatmul.mubr.bf16.gmra.mxu0 %v1548
    %v1695 = vpop.f32.mrf.mxu0
    %v1696 = vadd.f32 %v1148, %v1695
    %v1697 = vpop.f32.mrf.mxu0
    %v1698 = vpop.f32.mrf.mxu0
    %v1699 = vadd.f32 %v1151, %v1698
    %v1700 = vpop.f32.mrf.mxu0
    %1701 = vmatprep.mubr.bf16.mxu0 0
    %1702 = vmatmul.mubr.bf16.gmra.mxu0 %v1551
    %v1703 = vpop.f32.mrf.mxu0
    %v1704 = vadd.f32 %v1156, %v1703
    %v1705 = vpop.f32.mrf.mxu0
    %v1706 = vpop.f32.mrf.mxu0
    %v1707 = vadd.f32 %v1159, %v1706
    %v1708 = vpop.f32.mrf.mxu0
    %1709 = vmatprep.mubr.bf16.mxu0 0
    %1710 = vmatmul.mubr.bf16.gmra.mxu0 %v1554
    %v1711 = vpop.f32.mrf.mxu0
    %v1712 = vadd.f32 %v1164, %v1711
    %v1713 = vpop.f32.mrf.mxu0
    %v1714 = vpop.f32.mrf.mxu0
    %v1715 = vadd.f32 %v1167, %v1714
    %v1716 = vpop.f32.mrf.mxu0
    %1717 = vmatprep.mubr.bf16.mxu0 0
    %1718 = vmatmul.mubr.bf16.gmra.mxu0 %v1557
    %v1719 = vpop.f32.mrf.mxu0
    %v1720 = vadd.f32 %v1172, %v1719
    %v1721 = vpop.f32.mrf.mxu0
    %v1722 = vpop.f32.mrf.mxu0
    %v1723 = vadd.f32 %v1175, %v1722
    %v1724 = vpop.f32.mrf.mxu0
    %1725 = vmatprep.mubr.bf16.mxu0 0
    %1726 = vmatmul.mubr.bf16.gmra.mxu0 %v1560
    %v1727 = vpop.f32.mrf.mxu0
    %v1728 = vadd.f32 %v1180, %v1727
    %v1729 = vpop.f32.mrf.mxu0
    %v1730 = vpop.f32.mrf.mxu0
    %v1731 = vadd.f32 %v1183, %v1730
    %v1732 = vpop.f32.mrf.mxu0
    %1733 = vmatprep.mubr.bf16.mxu0 0
    %1734 = vmatmul.mubr.bf16.gmra.mxu0 %v1563
    %v1735 = vpop.f32.mrf.mxu0
    %v1736 = vadd.f32 %v1188, %v1735
    %v1737 = vpop.f32.mrf.mxu0
    %v1738 = vpop.f32.mrf.mxu0
    %v1739 = vadd.f32 %v1191, %v1738
    %v1740 = vpop.f32.mrf.mxu0
    %1741 = vmatprep.mubr.bf16.mxu0 0
    %1742 = vmatmul.mubr.bf16.gmra.mxu0 %v1566
    %v1743 = vpop.f32.mrf.mxu0
    %v1744 = vadd.f32 %v1196, %v1743
    %v1745 = vpop.f32.mrf.mxu0
    %v1746 = vpop.f32.mrf.mxu0
    %v1747 = vadd.f32 %v1199, %v1746
    %v1748 = vpop.f32.mrf.mxu0
    %1749 = vmatprep.mubr.bf16.mxu0 0
    %1750 = vmatmul.mubr.bf16.gmra.mxu0 %v1569
    %v1751 = vpop.f32.mrf.mxu0
    %v1752 = vadd.f32 %v1204, %v1751
    %v1753 = vpop.f32.mrf.mxu0
    %v1754 = vpop.f32.mrf.mxu0
    %v1755 = vadd.f32 %v1207, %v1754
    %v1756 = vpop.f32.mrf.mxu0
    %1757 = vmatprep.mubr.bf16.mxu0 0
    %1758 = vmatmul.mubr.bf16.gmra.mxu0 %v1572
    %v1759 = vpop.f32.mrf.mxu0
    %v1760 = vadd.f32 %v1212, %v1759
    %v1761 = vpop.f32.mrf.mxu0
    %v1762 = vpop.f32.mrf.mxu0
    %v1763 = vadd.f32 %v1215, %v1762
    %v1764 = vpop.f32.mrf.mxu0
    %1765 = vmatprep.mubr.bf16.mxu0 0
    %1766 = vmatmul.mubr.bf16.gmra.mxu0 %v1575
    %v1767 = vpop.f32.mrf.mxu0
    %v1768 = vadd.f32 %v1220, %v1767
    %v1769 = vpop.f32.mrf.mxu0
    %v1770 = vpop.f32.mrf.mxu0
    %v1771 = vadd.f32 %v1223, %v1770
    %v1772 = vpop.f32.mrf.mxu0
    %1773 = vmatprep.mubr.bf16.mxu0 0
    %1774 = vmatmul.mubr.bf16.gmra.mxu0 %v1578
    %v1775 = vpop.f32.mrf.mxu0
    %v1776 = vadd.f32 %v1228, %v1775
    %v1777 = vpop.f32.mrf.mxu0
    %v1778 = vpop.f32.mrf.mxu0
    %v1779 = vadd.f32 %v1231, %v1778
    %v1780 = vpop.f32.mrf.mxu0
    %1781 = vmatprep.mubr.bf16.mxu0 0
    %1782 = vmatmul.mubr.bf16.gmra.mxu0 %v1581
    %v1783 = vpop.f32.mrf.mxu0
    %v1784 = vadd.f32 %v1236, %v1783
    %v1785 = vpop.f32.mrf.mxu0
    %v1786 = vpop.f32.mrf.mxu0
    %v1787 = vadd.f32 %v1239, %v1786
    %v1788 = vpop.f32.mrf.mxu0
    %1789 = vmatprep.mubr.bf16.mxu0 0
    %1790 = vmatmul.mubr.bf16.gmra.mxu0 %v1584
    %v1791 = vpop.f32.mrf.mxu0
    %v1792 = vadd.f32 %v1244, %v1791
    %v1793 = vpop.f32.mrf.mxu0
    %v1794 = vpop.f32.mrf.mxu0
    %v1795 = vadd.f32 %v1247, %v1794
    %v1796 = vpop.f32.mrf.mxu0
    %1797 = vmatprep.mubr.bf16.mxu0 0
    %1798 = vmatmul.mubr.bf16.gmra.mxu0 %v1587
    %v1799 = vpop.f32.mrf.mxu0
    %v1800 = vadd.f32 %v1252, %v1799
    %v1801 = vpop.f32.mrf.mxu0
    %v1802 = vpop.f32.mrf.mxu0
    %v1803 = vadd.f32 %v1255, %v1802
    %v1804 = vpop.f32.mrf.mxu0
    %1805 = vmatprep.mubr.bf16.mxu0 0
    %1806 = vmatmul.mubr.bf16.gmra.mxu0 %v1590
    %v1807 = vpop.f32.mrf.mxu0
    %v1808 = vadd.f32 %v1260, %v1807
    %v1809 = vpop.f32.mrf.mxu0
    %v1810 = vpop.f32.mrf.mxu0
    %v1811 = vadd.f32 %v1263, %v1810
    %v1812 = vpop.f32.mrf.mxu0
    %1813 = vmatprep.mubr.bf16.mxu0 0
    %1814 = vmatmul.mubr.bf16.gmra.mxu0 %v1593
    %v1815 = vpop.f32.mrf.mxu0
    %v1816 = vadd.f32 %v1268, %v1815
    %v1817 = vpop.f32.mrf.mxu0
    %v1818 = vpop.f32.mrf.mxu0
    %v1819 = vadd.f32 %v1271, %v1818
    %v1820 = vpop.f32.mrf.mxu0
    %1821 = vmatprep.mubr.bf16.mxu0 0
    %1822 = vmatmul.mubr.bf16.gmra.mxu0 %v1596
    %v1823 = vpop.f32.mrf.mxu0
    %v1824 = vadd.f32 %v1276, %v1823
    %v1825 = vpop.f32.mrf.mxu0
    %v1826 = vpop.f32.mrf.mxu0
    %v1827 = vadd.f32 %v1279, %v1826
    %v1828 = vpop.f32.mrf.mxu0
    %1829 = vmatprep.mubr.bf16.mxu0 0
    %1830 = vmatmul.mubr.bf16.gmra.mxu0 %v1599
    %v1831 = vpop.f32.mrf.mxu0
    %v1832 = vadd.f32 %v1284, %v1831
    %v1833 = vpop.f32.mrf.mxu0
    %v1834 = vpop.f32.mrf.mxu0
    %v1835 = vadd.f32 %v1287, %v1834
    %v1836 = vpop.f32.mrf.mxu0
    %1837 = vmatprep.mubr.bf16.mxu0 0
    %1838 = vmatmul.mubr.bf16.gmra.mxu0 %v1602
    %v1839 = vpop.f32.mrf.mxu0
    %v1840 = vadd.f32 %v1292, %v1839
    %v1841 = vpop.f32.mrf.mxu0
    %v1842 = vpop.f32.mrf.mxu0
    %v1843 = vadd.f32 %v1295, %v1842
    %v1844 = vpop.f32.mrf.mxu0
    %1845 = vmatprep.mubr.bf16.mxu0 0
    %1846 = vmatmul.mubr.bf16.gmra.mxu0 %v1605
    %v1847 = vpop.f32.mrf.mxu0
    %v1848 = vadd.f32 %v1300, %v1847
    %v1849 = vpop.f32.mrf.mxu0
    %v1850 = vpop.f32.mrf.mxu0
    %v1851 = vadd.f32 %v1303, %v1850
    %v1852 = vpop.f32.mrf.mxu0
    %1853 = vmatprep.mubr.bf16.mxu0 0
    %1854 = vmatmul.mubr.bf16.gmra.mxu0 %v1608
    %v1855 = vpop.f32.mrf.mxu0
    %v1856 = vadd.f32 %v1308, %v1855
    %v1857 = vpop.f32.mrf.mxu0
    %v1858 = vpop.f32.mrf.mxu0
    %v1859 = vadd.f32 %v1311, %v1858
    %v1860 = vpop.f32.mrf.mxu0
    %1861 = vmatprep.mubr.bf16.mxu0 0
    %1862 = vmatmul.mubr.bf16.gmra.mxu0 %v1611
    %v1863 = vpop.f32.mrf.mxu0
    %v1864 = vadd.f32 %v1316, %v1863
    %v1865 = vpop.f32.mrf.mxu0
    %v1866 = vpop.f32.mrf.mxu0
    %v1867 = vadd.f32 %v1319, %v1866
    %v1868 = vpop.f32.mrf.mxu0
    %1869 = vmatprep.mubr.bf16.mxu0 0
    %1870 = vmatmul.mubr.bf16.gmra.mxu0 %v1614
    %v1871 = vpop.f32.mrf.mxu0
    %v1872 = vadd.f32 %v1324, %v1871
    %v1873 = vpop.f32.mrf.mxu0
    %v1874 = vpop.f32.mrf.mxu0
    %v1875 = vadd.f32 %v1327, %v1874
    %v1876 = vpop.f32.mrf.mxu0
    %1877 = vmatprep.mubr.bf16.mxu0 0
    %1878 = vmatmul.mubr.bf16.gmra.mxu0 %v1617
    %v1879 = vpop.f32.mrf.mxu0
    %v1880 = vadd.f32 %v1332, %v1879
    %v1881 = vpop.f32.mrf.mxu0
    %v1882 = vpop.f32.mrf.mxu0
    %v1883 = vadd.f32 %v1335, %v1882
    %v1884 = vpop.f32.mrf.mxu0
    %1885 = vmatprep.mubr.bf16.mxu0 0
    %1886 = vmatmul.mubr.bf16.gmra.mxu0 %v1620
    %v1887 = vpop.f32.mrf.mxu0
    %v1888 = vadd.f32 %v1340, %v1887
    %v1889 = vpop.f32.mrf.mxu0
    %v1890 = vpop.f32.mrf.mxu0
    %v1891 = vadd.f32 %v1343, %v1890
    %v1892 = vpop.f32.mrf.mxu0
    %1893 = vmatprep.mubr.bf16.mxu0 0
    %1894 = vmatmul.mubr.bf16.gmra.mxu0 %v1623
    %v1895 = vpop.f32.mrf.mxu0
    %v1896 = vadd.f32 %v1348, %v1895
    %v1897 = vpop.f32.mrf.mxu0
    %v1898 = vpop.f32.mrf.mxu0
    %v1899 = vadd.f32 %v1351, %v1898
    %v1900 = vpop.f32.mrf.mxu0
    %1901 = vmatprep.mubr.bf16.mxu0 0
    %1902 = vmatmul.mubr.bf16.gmra.mxu0 %v1626
    %v1903 = vpop.f32.mrf.mxu0
    %v1904 = vadd.f32 %v1356, %v1903
    %v1905 = vpop.f32.mrf.mxu0
    %v1906 = vpop.f32.mrf.mxu0
    %v1907 = vadd.f32 %v1359, %v1906
    %v1908 = vpop.f32.mrf.mxu0
    %1909 = vmatprep.mubr.bf16.mxu0 0
    %1910 = vmatmul.mubr.bf16.gmra.mxu0 %v1629
    %v1911 = vpop.f32.mrf.mxu0
    %v1912 = vadd.f32 %v1364, %v1911
    %v1913 = vpop.f32.mrf.mxu0
    %v1914 = vpop.f32.mrf.mxu0
    %v1915 = vadd.f32 %v1367, %v1914
    %v1916 = vpop.f32.mrf.mxu0
    %1917 = vmatprep.mubr.bf16.mxu0 0
    %1918 = vmatmul.mubr.bf16.gmra.mxu0 %v1632
    %v1919 = vpop.f32.mrf.mxu0
    %v1920 = vadd.f32 %v1372, %v1919
    %v1921 = vpop.f32.mrf.mxu0
    %v1922 = vpop.f32.mrf.mxu0
    %v1923 = vadd.f32 %v1375, %v1922
    %v1924 = vpop.f32.mrf.mxu0
    %1925 = vdwg.mxu0
    %v1926 = vld [vmem:[%s0] sm:$0xe]
    %v1927 = vld [vmem:[%s0 + $0xc] sm:$0xe]
    %v1928 = vld [vmem:[%s0 + $0x18] sm:$0xe]
    %v1929 = vld [vmem:[%s0 + $0x24] sm:$0xe]
    %v1930 = vld [vmem:[%s0 + $0x30] sm:$0xe]
    %v1931 = vld [vmem:[%s0 + $0x3c] sm:$0xe]
    %v1932 = vld [vmem:[%s0 + $0x48] sm:$0xe]
    %v1933 = vld [vmem:[%s0 + $0x54] sm:$0xe]
    %v1934 = vld [vmem:[%s0 + $0x60] sm:$0xe]
    %v1935 = vld [vmem:[%s0 + $0x6c] sm:$0xe]
    %v1936 = vld [vmem:[%s0 + $0x78] sm:$0xe]
    %v1937 = vld [vmem:[%s0 + $0x84] sm:$0xe]
    %v1938 = vld [vmem:[%s0 + $0x90] sm:$0xe]
    %v1939 = vld [vmem:[%s0 + $0x9c] sm:$0xe]
    %v1940 = vld [vmem:[%s0 + $0xa8] sm:$0xe]
    %v1941 = vld [vmem:[%s0 + $0xb4] sm:$0xe]
    %v1942 = vld [vmem:[%s0 + $0xd8] sm:$0xe]
    %v1943 = vld [vmem:[%s0 + $0xe4] sm:$0xe]
    %v1944 = vld [vmem:[%s0 + $0xf0] sm:$0xe]
    %v1945 = vld [vmem:[%s0 + $0xfc] sm:$0xe]
    %v1946 = vld [vmem:[%s0 + $0x108] sm:$0xe]
    %v1947 = vld [vmem:[%s0 + $0x114] sm:$0xe]
    %v1948 = vld [vmem:[%s0 + $0x120] sm:$0xe]
    %v1949 = vld [vmem:[%s0 + $0x12c] sm:$0xe]
    %v1950 = vld [vmem:[%s0 + $0x138] sm:$0xe]
    %v1951 = vld [vmem:[%s0 + $0x144] sm:$0xe]
    %v1952 = vld [vmem:[%s0 + $0x150] sm:$0xe]
    %v1953 = vld [vmem:[%s0 + $0x15c] sm:$0xe]
    %v1954 = vld [vmem:[%s0 + $0x168] sm:$0xe]
    %v1955 = vld [vmem:[%s0 + $0x174] sm:$0xe]
    %v1956 = vld [vmem:[%s0 + $0x180] sm:$0xe]
    %v1957 = vld [vmem:[%s0 + $0x18c] sm:$0xe]
    %vm2022 = vcmask 1042432
    %vm2023 = vcmask 1046532
    %vm2024 = vmor %vm2022, %vm2023
    %v2025 = vrot.slane %v1926, 5
    %v2026 = vrot.slane %v2025, 4
    %v2027 = vrot.slane %v23, 5
    %v2028 = vsel %vm2024, %v2026, %v2027
    %v2029 = vrot.slane %v2027, 4
    %v2030 = vrot.slane %v87, 5
    %v2031 = vsel %vm2024, %v2029, %v2030
    %v2032 = vrot.slane %v1927, 5
    %v2033 = vrot.slane %v2032, 4
    %v2034 = vrot.slane %v25, 5
    %v2035 = vsel %vm2024, %v2033, %v2034
    %v2036 = vrot.slane %v2034, 4
    %v2037 = vrot.slane %v88, 5
    %v2038 = vsel %vm2024, %v2036, %v2037
    %v2039 = vrot.slane %v1928, 5
    %v2040 = vrot.slane %v2039, 4
    %v2041 = vrot.slane %v27, 5
    %v2042 = vsel %vm2024, %v2040, %v2041
    %v2043 = vrot.slane %v2041, 4
    %v2044 = vrot.slane %v89, 5
    %v2045 = vsel %vm2024, %v2043, %v2044
    %v2046 = vrot.slane %v1929, 5
    %v2047 = vrot.slane %v2046, 4
    %v2048 = vrot.slane %v29, 5
    %v2049 = vsel %vm2024, %v2047, %v2048
    %v2050 = vrot.slane %v2048, 4
    %v2051 = vrot.slane %v90, 5
    %v2052 = vsel %vm2024, %v2050, %v2051
    %v2053 = vrot.slane %v1930, 5
    %v2054 = vrot.slane %v2053, 4
    %v2055 = vrot.slane %v31, 5
    %v2056 = vsel %vm2024, %v2054, %v2055
    %v2057 = vrot.slane %v2055, 4
    %v2058 = vrot.slane %v91, 5
    %v2059 = vsel %vm2024, %v2057, %v2058
    %v2060 = vrot.slane %v1931, 5
    %v2061 = vrot.slane %v2060, 4
    %v2062 = vrot.slane %v33, 5
    %v2063 = vsel %vm2024, %v2061, %v2062
    %v2064 = vrot.slane %v2062, 4
    %v2065 = vrot.slane %v92, 5
    %v2066 = vsel %vm2024, %v2064, %v2065
    %v2067 = vrot.slane %v1932, 5
    %v2068 = vrot.slane %v2067, 4
    %v2069 = vrot.slane %v35, 5
    %v2070 = vsel %vm2024, %v2068, %v2069
    %v2071 = vrot.slane %v2069, 4
    %v2072 = vrot.slane %v93, 5
    %v2073 = vsel %vm2024, %v2071, %v2072
    %v2074 = vrot.slane %v1933, 5
    %v2075 = vrot.slane %v2074, 4
    %v2076 = vrot.slane %v37, 5
    %v2077 = vsel %vm2024, %v2075, %v2076
    %v2078 = vrot.slane %v2076, 4
    %v2079 = vrot.slane %v94, 5
    %v2080 = vsel %vm2024, %v2078, %v2079
    %v2081 = vrot.slane %v1934, 5
    %v2082 = vrot.slane %v2081, 4
    %v2083 = vrot.slane %v39, 5
    %v2084 = vsel %vm2024, %v2082, %v2083
    %v2085 = vrot.slane %v2083, 4
    %v2086 = vrot.slane %v95, 5
    %v2087 = vsel %vm2024, %v2085, %v2086
    %v2088 = vrot.slane %v1935, 5
    %v2089 = vrot.slane %v2088, 4
    %v2090 = vrot.slane %v41, 5
    %v2091 = vsel %vm2024, %v2089, %v2090
    %v2092 = vrot.slane %v2090, 4
    %v2093 = vrot.slane %v96, 5
    %v2094 = vsel %vm2024, %v2092, %v2093
    %v2095 = vrot.slane %v1936, 5
    %v2096 = vrot.slane %v2095, 4
    %v2097 = vrot.slane %v43, 5
    %v2098 = vsel %vm2024, %v2096, %v2097
    %v2099 = vrot.slane %v2097, 4
    %v2100 = vrot.slane %v97, 5
    %v2101 = vsel %vm2024, %v2099, %v2100
    %v2102 = vrot.slane %v1937, 5
    %v2103 = vrot.slane %v2102, 4
    %v2104 = vrot.slane %v45, 5
    %v2105 = vsel %vm2024, %v2103, %v2104
    %v2106 = vrot.slane %v2104, 4
    %v2107 = vrot.slane %v98, 5
    %v2108 = vsel %vm2024, %v2106, %v2107
    %v2109 = vrot.slane %v1938, 5
    %v2110 = vrot.slane %v2109, 4
    %v2111 = vrot.slane %v47, 5
    %v2112 = vsel %vm2024, %v2110, %v2111
    %v2113 = vrot.slane %v2111, 4
    %v2114 = vrot.slane %v99, 5
    %v2115 = vsel %vm2024, %v2113, %v2114
    %v2116 = vrot.slane %v1939, 5
    %v2117 = vrot.slane %v2116, 4
    %v2118 = vrot.slane %v49, 5
    %v2119 = vsel %vm2024, %v2117, %v2118
    %v2120 = vrot.slane %v2118, 4
    %v2121 = vrot.slane %v100, 5
    %v2122 = vsel %vm2024, %v2120, %v2121
    %v2123 = vrot.slane %v1940, 5
    %v2124 = vrot.slane %v2123, 4
    %v2125 = vrot.slane %v51, 5
    %v2126 = vsel %vm2024, %v2124, %v2125
    %v2127 = vrot.slane %v2125, 4
    %v2128 = vrot.slane %v101, 5
    %v2129 = vsel %vm2024, %v2127, %v2128
    %v2130 = vrot.slane %v1941, 5
    %v2131 = vrot.slane %v2130, 4
    %v2132 = vrot.slane %v53, 5
    %v2133 = vsel %vm2024, %v2131, %v2132
    %v2134 = vrot.slane %v2132, 4
    %v2135 = vrot.slane %v102, 5
    %v2136 = vsel %vm2024, %v2134, %v2135
    %v2137 = vrot.slane %v1942, 5
    %v2138 = vrot.slane %v2137, 4
    %v2139 = vrot.slane %v55, 5
    %v2140 = vsel %vm2024, %v2138, %v2139
    %v2141 = vrot.slane %v2139, 4
    %v2142 = vrot.slane %v103, 5
    %v2143 = vsel %vm2024, %v2141, %v2142
    %v2144 = vrot.slane %v1943, 5
    %v2145 = vrot.slane %v2144, 4
    %v2146 = vrot.slane %v57, 5
    %v2147 = vsel %vm2024, %v2145, %v2146
    %v2148 = vrot.slane %v2146, 4
    %v2149 = vrot.slane %v104, 5
    %v2150 = vsel %vm2024, %v2148, %v2149
    %v2151 = vrot.slane %v1944, 5
    %v2152 = vrot.slane %v2151, 4
    %v2153 = vrot.slane %v59, 5
    %v2154 = vsel %vm2024, %v2152, %v2153
    %v2155 = vrot.slane %v2153, 4
    %v2156 = vrot.slane %v105, 5
    %v2157 = vsel %vm2024, %v2155, %v2156
    %v2158 = vrot.slane %v1945, 5
    %v2159 = vrot.slane %v2158, 4
    %v2160 = vrot.slane %v61, 5
    %v2161 = vsel %vm2024, %v2159, %v2160
    %v2162 = vrot.slane %v2160, 4
    %v2163 = vrot.slane %v106, 5
    %v2164 = vsel %vm2024, %v2162, %v2163
    %v2165 = vrot.slane %v1946, 5
    %v2166 = vrot.slane %v2165, 4
    %v2167 = vrot.slane %v63, 5
    %v2168 = vsel %vm2024, %v2166, %v2167
    %v2169 = vrot.slane %v2167, 4
    %v2170 = vrot.slane %v107, 5
    %v2171 = vsel %vm2024, %v2169, %v2170
    %v2172 = vrot.slane %v1947, 5
    %v2173 = vrot.slane %v2172, 4
    %v2174 = vrot.slane %v65, 5
    %v2175 = vsel %vm2024, %v2173, %v2174
    %v2176 = vrot.slane %v2174, 4
    %v2177 = vrot.slane %v108, 5
    %v2178 = vsel %vm2024, %v2176, %v2177
    %v2179 = vrot.slane %v1948, 5
    %v2180 = vrot.slane %v2179, 4
    %v2181 = vrot.slane %v67, 5
    %v2182 = vsel %vm2024, %v2180, %v2181
    %v2183 = vrot.slane %v2181, 4
    %v2184 = vrot.slane %v109, 5
    %v2185 = vsel %vm2024, %v2183, %v2184
    %v2186 = vrot.slane %v1949, 5
    %v2187 = vrot.slane %v2186, 4
    %v2188 = vrot.slane %v69, 5
    %v2189 = vsel %vm2024, %v2187, %v2188
    %v2190 = vrot.slane %v2188, 4
    %v2191 = vrot.slane %v110, 5
    %v2192 = vsel %vm2024, %v2190, %v2191
    %v2193 = vrot.slane %v1950, 5
    %v2194 = vrot.slane %v2193, 4
    %v2195 = vrot.slane %v71, 5
    %v2196 = vsel %vm2024, %v2194, %v2195
    %v2197 = vrot.slane %v2195, 4
    %v2198 = vrot.slane %v111, 5
    %v2199 = vsel %vm2024, %v2197, %v2198
    %v2200 = vrot.slane %v1951, 5
    %v2201 = vrot.slane %v2200, 4
    %v2202 = vrot.slane %v73, 5
    %v2203 = vsel %vm2024, %v2201, %v2202
    %v2204 = vrot.slane %v2202, 4
    %v2205 = vrot.slane %v112, 5
    %v2206 = vsel %vm2024, %v2204, %v2205
    %v2207 = vrot.slane %v1952, 5
    %v2208 = vrot.slane %v2207, 4
    %v2209 = vrot.slane %v75, 5
    %v2210 = vsel %vm2024, %v2208, %v2209
    %v2211 = vrot.slane %v2209, 4
    %v2212 = vrot.slane %v113, 5
    %v2213 = vsel %vm2024, %v2211, %v2212
    %v2214 = vrot.slane %v1953, 5
    %v2215 = vrot.slane %v2214, 4
    %v2216 = vrot.slane %v77, 5
    %v2217 = vsel %vm2024, %v2215, %v2216
    %v2218 = vrot.slane %v2216, 4
    %v2219 = vrot.slane %v114, 5
    %v2220 = vsel %vm2024, %v2218, %v2219
    %v2221 = vrot.slane %v1954, 5
    %v2222 = vrot.slane %v2221, 4
    %v2223 = vrot.slane %v79, 5
    %v2224 = vsel %vm2024, %v2222, %v2223
    %v2225 = vrot.slane %v2223, 4
    %v2226 = vrot.slane %v115, 5
    %v2227 = vsel %vm2024, %v2225, %v2226
    %v2228 = vrot.slane %v1955, 5
    %v2229 = vrot.slane %v2228, 4
    %v2230 = vrot.slane %v81, 5
    %v2231 = vsel %vm2024, %v2229, %v2230
    %v2232 = vrot.slane %v2230, 4
    %v2233 = vrot.slane %v116, 5
    %v2234 = vsel %vm2024, %v2232, %v2233
    %v2235 = vrot.slane %v1956, 5
    %v2236 = vrot.slane %v2235, 4
    %v2237 = vrot.slane %v83, 5
    %v2238 = vsel %vm2024, %v2236, %v2237
    %v2239 = vrot.slane %v2237, 4
    %v2240 = vrot.slane %v117, 5
    %v2241 = vsel %vm2024, %v2239, %v2240
    %v2242 = vrot.slane %v1957, 5
    %v2243 = vrot.slane %v2242, 4
    %v2244 = vrot.slane %v85, 5
    %v2245 = vsel %vm2024, %v2243, %v2244
    %v2246 = vrot.slane %v2244, 4
    %v2247 = vrot.slane %v118, 5
    %v2248 = vsel %vm2024, %v2246, %v2247
    %s2249 = scalar_lea.vmem %s1, 4
    %v2250 = vld [vmem:[%s2249] sm:$0x3]
    %v2251 = vunpack.c.l.b16 %v2028
    %v2252 = vunpack.c.l.b16 %v2031
    %v2253 = vunpack.c.l.b16 %v2035
    %v2254 = vunpack.c.l.b16 %v2038
    %v2255 = vunpack.c.l.b16 %v2042
    %v2256 = vunpack.c.l.b16 %v2045
    %v2257 = vunpack.c.l.b16 %v2049
    %v2258 = vunpack.c.l.b16 %v2052
    %v2259 = vunpack.c.l.b16 %v2056
    %v2260 = vunpack.c.l.b16 %v2059
    %v2261 = vunpack.c.l.b16 %v2063
    %v2262 = vunpack.c.l.b16 %v2066
    %v2263 = vunpack.c.l.b16 %v2070
    %v2264 = vunpack.c.l.b16 %v2073
    %v2265 = vunpack.c.l.b16 %v2077
    %v2266 = vunpack.c.l.b16 %v2080
    %v2267 = vunpack.c.l.b16 %v2084
    %v2268 = vunpack.c.l.b16 %v2087
    %v2269 = vunpack.c.l.b16 %v2091
    %v2270 = vunpack.c.l.b16 %v2094
    %v2271 = vunpack.c.l.b16 %v2098
    %v2272 = vunpack.c.l.b16 %v2101
    %v2273 = vunpack.c.l.b16 %v2105
    %v2274 = vunpack.c.l.b16 %v2108
    %v2275 = vunpack.c.l.b16 %v2112
    %v2276 = vunpack.c.l.b16 %v2115
    %v2277 = vunpack.c.l.b16 %v2119
    %v2278 = vunpack.c.l.b16 %v2122
    %v2279 = vunpack.c.l.b16 %v2126
    %v2280 = vunpack.c.l.b16 %v2129
    %v2281 = vunpack.c.l.b16 %v2133
    %v2282 = vunpack.c.l.b16 %v2136
    %v2283 = vunpack.c.l.b16 %v2140
    %v2284 = vunpack.c.l.b16 %v2143
    %v2285 = vunpack.c.l.b16 %v2147
    %v2286 = vunpack.c.l.b16 %v2150
    %v2287 = vunpack.c.l.b16 %v2154
    %v2288 = vunpack.c.l.b16 %v2157
    %v2289 = vunpack.c.l.b16 %v2161
    %v2290 = vunpack.c.l.b16 %v2164
    %v2291 = vunpack.c.l.b16 %v2168
    %v2292 = vunpack.c.l.b16 %v2171
    %v2293 = vunpack.c.l.b16 %v2175
    %v2294 = vunpack.c.l.b16 %v2178
    %v2295 = vunpack.c.l.b16 %v2182
    %v2296 = vunpack.c.l.b16 %v2185
    %v2297 = vunpack.c.l.b16 %v2189
    %v2298 = vunpack.c.l.b16 %v2192
    %v2299 = vunpack.c.l.b16 %v2196
    %v2300 = vunpack.c.l.b16 %v2199
    %v2301 = vunpack.c.l.b16 %v2203
    %v2302 = vunpack.c.l.b16 %v2206
    %v2303 = vunpack.c.l.b16 %v2210
    %v2304 = vunpack.c.l.b16 %v2213
    %v2305 = vunpack.c.l.b16 %v2217
    %v2306 = vunpack.c.l.b16 %v2220
    %v2307 = vunpack.c.l.b16 %v2224
    %v2308 = vunpack.c.l.b16 %v2227
    %v2309 = vunpack.c.l.b16 %v2231
    %v2310 = vunpack.c.l.b16 %v2234
    %v2311 = vunpack.c.l.b16 %v2238
    %v2312 = vunpack.c.l.b16 %v2241
    %v2313 = vunpack.c.l.b16 %v2245
    %v2314 = vunpack.c.l.b16 %v2248
    %v2315 = vpack.c.b16 %v2252, %v2251
    %v2316 = vpack.c.b16 %v2254, %v2253
    %v2317 = vpack.c.b16 %v2256, %v2255
    %v2318 = vpack.c.b16 %v2258, %v2257
    %v2319 = vpack.c.b16 %v2260, %v2259
    %v2320 = vpack.c.b16 %v2262, %v2261
    %v2321 = vpack.c.b16 %v2264, %v2263
    %v2322 = vpack.c.b16 %v2266, %v2265
    %v2323 = vpack.c.b16 %v2268, %v2267
    %v2324 = vpack.c.b16 %v2270, %v2269
    %v2325 = vpack.c.b16 %v2272, %v2271
    %v2326 = vpack.c.b16 %v2274, %v2273
    %v2327 = vpack.c.b16 %v2276, %v2275
    %v2328 = vpack.c.b16 %v2278, %v2277
    %v2329 = vpack.c.b16 %v2280, %v2279
    %v2330 = vpack.c.b16 %v2282, %v2281
    %v2331 = vpack.c.b16 %v2284, %v2283
    %v2332 = vpack.c.b16 %v2286, %v2285
    %v2333 = vpack.c.b16 %v2288, %v2287
    %v2334 = vpack.c.b16 %v2290, %v2289
    %v2335 = vpack.c.b16 %v2292, %v2291
    %v2336 = vpack.c.b16 %v2294, %v2293
    %v2337 = vpack.c.b16 %v2296, %v2295
    %v2338 = vpack.c.b16 %v2298, %v2297
    %v2339 = vpack.c.b16 %v2300, %v2299
    %v2340 = vpack.c.b16 %v2302, %v2301
    %v2341 = vpack.c.b16 %v2304, %v2303
    %v2342 = vpack.c.b16 %v2306, %v2305
    %v2343 = vpack.c.b16 %v2308, %v2307
    %v2344 = vpack.c.b16 %v2310, %v2309
    %v2345 = vpack.c.b16 %v2312, %v2311
    %v2346 = vpack.c.b16 %v2314, %v2313
    %v2348 = vsel %vm988, %v2315, 0
    %v2351 = vsel %vm988, %v2316, 0
    %v2354 = vsel %vm988, %v2317, 0
    %v2357 = vsel %vm988, %v2318, 0
    %v2360 = vsel %vm988, %v2319, 0
    %v2363 = vsel %vm988, %v2320, 0
    %v2366 = vsel %vm988, %v2321, 0
    %v2369 = vsel %vm988, %v2322, 0
    %v2372 = vsel %vm988, %v2323, 0
    %v2375 = vsel %vm988, %v2324, 0
    %v2378 = vsel %vm988, %v2325, 0
    %v2381 = vsel %vm988, %v2326, 0
    %v2384 = vsel %vm988, %v2327, 0
    %v2387 = vsel %vm988, %v2328, 0
    %v2390 = vsel %vm988, %v2329, 0
    %v2393 = vsel %vm988, %v2330, 0
    %v2396 = vsel %vm988, %v2331, 0
    %v2399 = vsel %vm988, %v2332, 0
    %v2402 = vsel %vm988, %v2333, 0
    %v2405 = vsel %vm988, %v2334, 0
    %v2408 = vsel %vm988, %v2335, 0
    %v2411 = vsel %vm988, %v2336, 0
    %v2414 = vsel %vm988, %v2337, 0
    %v2417 = vsel %vm988, %v2338, 0
    %v2420 = vsel %vm988, %v2339, 0
    %v2423 = vsel %vm988, %v2340, 0
    %v2426 = vsel %vm988, %v2341, 0
    %v2429 = vsel %vm988, %v2342, 0
    %v2432 = vsel %vm988, %v2343, 0
    %v2435 = vsel %vm988, %v2344, 0
    %v2438 = vsel %vm988, %v2345, 0
    %v2441 = vsel %vm988, %v2346, 0
    %v2444 = vsel %vm1085, %v2250, 0
    %2446 = vmatprep.subr.bf16.mxu0 0
    %2447 = vmatpush1.bf16.msra.mxu0 0
    %2448 = vmatprep.subr.bf16.mxu0 0
    %2449 = vmatpush1.bf16.msra.mxu0 0
    %2450 = vmatprep.subr.bf16.mxu0 0
    %2451 = vmatpush1.bf16.msra.mxu0 0
    %2452 = vmatprep.subr.bf16.mxu0 0
    %2453 = vmatpush1.bf16.msra.mxu0 0
    %2454 = vmatprep.subr.bf16.mxu0 0
    %2455 = vmatpush1.bf16.msra.mxu0 0
    %2456 = vmatprep.subr.bf16.mxu0 0
    %2457 = vmatpush1.bf16.msra.mxu0 0
    %2458 = vmatprep.subr.bf16.mxu0 0
    %2459 = vmatpush1.bf16.msra.mxu0 0
    %2460 = vmatprep.subr.bf16.mxu0 0
    %2461 = vmatpush1.bf16.msra.mxu0 %v2444
    %2462 = vmatprep.subr.bf16.mxu0 0
    %2463 = vmatpush2.bf16.msra.mxu0 0
    %2464 = vmatprep.subr.bf16.mxu0 0
    %2465 = vmatpush2.bf16.msra.mxu0 0
    %2466 = vmatprep.subr.bf16.mxu0 0
    %2467 = vmatpush2.bf16.msra.mxu0 0
    %2468 = vmatprep.subr.bf16.mxu0 0
    %2469 = vmatpush2.bf16.msra.mxu0 0
    %2470 = vmatprep.subr.bf16.mxu0 0
    %2471 = vmatpush2.bf16.msra.mxu0 0
    %2472 = vmatprep.subr.bf16.mxu0 0
    %2473 = vmatpush2.bf16.msra.mxu0 0
    %2474 = vmatprep.subr.bf16.mxu0 0
    %2475 = vmatpush2.bf16.msra.mxu0 0
    %2476 = vmatprep.subr.bf16.mxu0 0
    %2477 = vmatpush2.bf16.msra.mxu0 0
    %2478 = vmatprep.mubr.bf16.mxu0 0
    %2479 = vmatmul.mubr.bf16.gmra.mxu0 %v2348
    %v2480 = vpop.f32.mrf.mxu0
    %v2481 = vadd.f32 0.0, %v2480
    %v2482 = vpop.f32.mrf.mxu0
    %v2483 = vpop.f32.mrf.mxu0
    %v2484 = vadd.f32 0.0, %v2483
    %v2485 = vpop.f32.mrf.mxu0
    %2486 = vmatprep.mubr.bf16.mxu0 0
    %2487 = vmatmul.mubr.bf16.gmra.mxu0 %v2351
    %v2488 = vpop.f32.mrf.mxu0
    %v2489 = vadd.f32 0.0, %v2488
    %v2490 = vpop.f32.mrf.mxu0
    %v2491 = vpop.f32.mrf.mxu0
    %v2492 = vadd.f32 0.0, %v2491
    %v2493 = vpop.f32.mrf.mxu0
    %2494 = vmatprep.mubr.bf16.mxu0 0
    %2495 = vmatmul.mubr.bf16.gmra.mxu0 %v2354
    %v2496 = vpop.f32.mrf.mxu0
    %v2497 = vadd.f32 0.0, %v2496
    %v2498 = vpop.f32.mrf.mxu0
    %v2499 = vpop.f32.mrf.mxu0
    %v2500 = vadd.f32 0.0, %v2499
    %v2501 = vpop.f32.mrf.mxu0
    %2502 = vmatprep.mubr.bf16.mxu0 0
    %2503 = vmatmul.mubr.bf16.gmra.mxu0 %v2357
    %v2504 = vpop.f32.mrf.mxu0
    %v2505 = vadd.f32 0.0, %v2504
    %v2506 = vpop.f32.mrf.mxu0
    %v2507 = vpop.f32.mrf.mxu0
    %v2508 = vadd.f32 0.0, %v2507
    %v2509 = vpop.f32.mrf.mxu0
    %2510 = vmatprep.mubr.bf16.mxu0 0
    %2511 = vmatmul.mubr.bf16.gmra.mxu0 %v2360
    %v2512 = vpop.f32.mrf.mxu0
    %v2513 = vadd.f32 0.0, %v2512
    %v2514 = vpop.f32.mrf.mxu0
    %v2515 = vpop.f32.mrf.mxu0
    %v2516 = vadd.f32 0.0, %v2515
    %v2517 = vpop.f32.mrf.mxu0
    %2518 = vmatprep.mubr.bf16.mxu0 0
    %2519 = vmatmul.mubr.bf16.gmra.mxu0 %v2363
    %v2520 = vpop.f32.mrf.mxu0
    %v2521 = vadd.f32 0.0, %v2520
    %v2522 = vpop.f32.mrf.mxu0
    %v2523 = vpop.f32.mrf.mxu0
    %v2524 = vadd.f32 0.0, %v2523
    %v2525 = vpop.f32.mrf.mxu0
    %2526 = vmatprep.mubr.bf16.mxu0 0
    %2527 = vmatmul.mubr.bf16.gmra.mxu0 %v2366
    %v2528 = vpop.f32.mrf.mxu0
    %v2529 = vadd.f32 0.0, %v2528
    %v2530 = vpop.f32.mrf.mxu0
    %v2531 = vpop.f32.mrf.mxu0
    %v2532 = vadd.f32 0.0, %v2531
    %v2533 = vpop.f32.mrf.mxu0
    %2534 = vmatprep.mubr.bf16.mxu0 0
    %2535 = vmatmul.mubr.bf16.gmra.mxu0 %v2369
    %v2536 = vpop.f32.mrf.mxu0
    %v2537 = vadd.f32 0.0, %v2536
    %v2538 = vpop.f32.mrf.mxu0
    %v2539 = vpop.f32.mrf.mxu0
    %v2540 = vadd.f32 0.0, %v2539
    %v2541 = vpop.f32.mrf.mxu0
    %2542 = vmatprep.mubr.bf16.mxu0 0
    %2543 = vmatmul.mubr.bf16.gmra.mxu0 %v2372
    %v2544 = vpop.f32.mrf.mxu0
    %v2545 = vadd.f32 0.0, %v2544
    %v2546 = vpop.f32.mrf.mxu0
    %v2547 = vpop.f32.mrf.mxu0
    %v2548 = vadd.f32 0.0, %v2547
    %v2549 = vpop.f32.mrf.mxu0
    %2550 = vmatprep.mubr.bf16.mxu0 0
    %2551 = vmatmul.mubr.bf16.gmra.mxu0 %v2375
    %v2552 = vpop.f32.mrf.mxu0
    %v2553 = vadd.f32 0.0, %v2552
    %v2554 = vpop.f32.mrf.mxu0
    %v2555 = vpop.f32.mrf.mxu0
    %v2556 = vadd.f32 0.0, %v2555
    %v2557 = vpop.f32.mrf.mxu0
    %2558 = vmatprep.mubr.bf16.mxu0 0
    %2559 = vmatmul.mubr.bf16.gmra.mxu0 %v2378
    %v2560 = vpop.f32.mrf.mxu0
    %v2561 = vadd.f32 0.0, %v2560
    %v2562 = vpop.f32.mrf.mxu0
    %v2563 = vpop.f32.mrf.mxu0
    %v2564 = vadd.f32 0.0, %v2563
    %v2565 = vpop.f32.mrf.mxu0
    %2566 = vmatprep.mubr.bf16.mxu0 0
    %2567 = vmatmul.mubr.bf16.gmra.mxu0 %v2381
    %v2568 = vpop.f32.mrf.mxu0
    %v2569 = vadd.f32 0.0, %v2568
    %v2570 = vpop.f32.mrf.mxu0
    %v2571 = vpop.f32.mrf.mxu0
    %v2572 = vadd.f32 0.0, %v2571
    %v2573 = vpop.f32.mrf.mxu0
    %2574 = vmatprep.mubr.bf16.mxu0 0
    %2575 = vmatmul.mubr.bf16.gmra.mxu0 %v2384
    %v2576 = vpop.f32.mrf.mxu0
    %v2577 = vadd.f32 0.0, %v2576
    %v2578 = vpop.f32.mrf.mxu0
    %v2579 = vpop.f32.mrf.mxu0
    %v2580 = vadd.f32 0.0, %v2579
    %v2581 = vpop.f32.mrf.mxu0
    %2582 = vmatprep.mubr.bf16.mxu0 0
    %2583 = vmatmul.mubr.bf16.gmra.mxu0 %v2387
    %v2584 = vpop.f32.mrf.mxu0
    %v2585 = vadd.f32 0.0, %v2584
    %v2586 = vpop.f32.mrf.mxu0
    %v2587 = vpop.f32.mrf.mxu0
    %v2588 = vadd.f32 0.0, %v2587
    %v2589 = vpop.f32.mrf.mxu0
    %2590 = vmatprep.mubr.bf16.mxu0 0
    %2591 = vmatmul.mubr.bf16.gmra.mxu0 %v2390
    %v2592 = vpop.f32.mrf.mxu0
    %v2593 = vadd.f32 0.0, %v2592
    %v2594 = vpop.f32.mrf.mxu0
    %v2595 = vpop.f32.mrf.mxu0
    %v2596 = vadd.f32 0.0, %v2595
    %v2597 = vpop.f32.mrf.mxu0
    %2598 = vmatprep.mubr.bf16.mxu0 0
    %2599 = vmatmul.mubr.bf16.gmra.mxu0 %v2393
    %v2600 = vpop.f32.mrf.mxu0
    %v2601 = vadd.f32 0.0, %v2600
    %v2602 = vpop.f32.mrf.mxu0
    %v2603 = vpop.f32.mrf.mxu0
    %v2604 = vadd.f32 0.0, %v2603
    %v2605 = vpop.f32.mrf.mxu0
    %2606 = vmatprep.mubr.bf16.mxu0 0
    %2607 = vmatmul.mubr.bf16.gmra.mxu0 %v2396
    %v2608 = vpop.f32.mrf.mxu0
    %v2609 = vadd.f32 0.0, %v2608
    %v2610 = vpop.f32.mrf.mxu0
    %v2611 = vpop.f32.mrf.mxu0
    %v2612 = vadd.f32 0.0, %v2611
    %v2613 = vpop.f32.mrf.mxu0
    %2614 = vmatprep.mubr.bf16.mxu0 0
    %2615 = vmatmul.mubr.bf16.gmra.mxu0 %v2399
    %v2616 = vpop.f32.mrf.mxu0
    %v2617 = vadd.f32 0.0, %v2616
    %v2618 = vpop.f32.mrf.mxu0
    %v2619 = vpop.f32.mrf.mxu0
    %v2620 = vadd.f32 0.0, %v2619
    %v2621 = vpop.f32.mrf.mxu0
    %2622 = vmatprep.mubr.bf16.mxu0 0
    %2623 = vmatmul.mubr.bf16.gmra.mxu0 %v2402
    %v2624 = vpop.f32.mrf.mxu0
    %v2625 = vadd.f32 0.0, %v2624
    %v2626 = vpop.f32.mrf.mxu0
    %v2627 = vpop.f32.mrf.mxu0
    %v2628 = vadd.f32 0.0, %v2627
    %v2629 = vpop.f32.mrf.mxu0
    %2630 = vmatprep.mubr.bf16.mxu0 0
    %2631 = vmatmul.mubr.bf16.gmra.mxu0 %v2405
    %v2632 = vpop.f32.mrf.mxu0
    %v2633 = vadd.f32 0.0, %v2632
    %v2634 = vpop.f32.mrf.mxu0
    %v2635 = vpop.f32.mrf.mxu0
    %v2636 = vadd.f32 0.0, %v2635
    %v2637 = vpop.f32.mrf.mxu0
    %2638 = vmatprep.mubr.bf16.mxu0 0
    %2639 = vmatmul.mubr.bf16.gmra.mxu0 %v2408
    %v2640 = vpop.f32.mrf.mxu0
    %v2641 = vadd.f32 0.0, %v2640
    %v2642 = vpop.f32.mrf.mxu0
    %v2643 = vpop.f32.mrf.mxu0
    %v2644 = vadd.f32 0.0, %v2643
    %v2645 = vpop.f32.mrf.mxu0
    %2646 = vmatprep.mubr.bf16.mxu0 0
    %2647 = vmatmul.mubr.bf16.gmra.mxu0 %v2411
    %v2648 = vpop.f32.mrf.mxu0
    %v2649 = vadd.f32 0.0, %v2648
    %v2650 = vpop.f32.mrf.mxu0
    %v2651 = vpop.f32.mrf.mxu0
    %v2652 = vadd.f32 0.0, %v2651
    %v2653 = vpop.f32.mrf.mxu0
    %2654 = vmatprep.mubr.bf16.mxu0 0
    %2655 = vmatmul.mubr.bf16.gmra.mxu0 %v2414
    %v2656 = vpop.f32.mrf.mxu0
    %v2657 = vadd.f32 0.0, %v2656
    %v2658 = vpop.f32.mrf.mxu0
    %v2659 = vpop.f32.mrf.mxu0
    %v2660 = vadd.f32 0.0, %v2659
    %v2661 = vpop.f32.mrf.mxu0
    %2662 = vmatprep.mubr.bf16.mxu0 0
    %2663 = vmatmul.mubr.bf16.gmra.mxu0 %v2417
    %v2664 = vpop.f32.mrf.mxu0
    %v2665 = vadd.f32 0.0, %v2664
    %v2666 = vpop.f32.mrf.mxu0
    %v2667 = vpop.f32.mrf.mxu0
    %v2668 = vadd.f32 0.0, %v2667
    %v2669 = vpop.f32.mrf.mxu0
    %2670 = vmatprep.mubr.bf16.mxu0 0
    %2671 = vmatmul.mubr.bf16.gmra.mxu0 %v2420
    %v2672 = vpop.f32.mrf.mxu0
    %v2673 = vadd.f32 0.0, %v2672
    %v2674 = vpop.f32.mrf.mxu0
    %v2675 = vpop.f32.mrf.mxu0
    %v2676 = vadd.f32 0.0, %v2675
    %v2677 = vpop.f32.mrf.mxu0
    %2678 = vmatprep.mubr.bf16.mxu0 0
    %2679 = vmatmul.mubr.bf16.gmra.mxu0 %v2423
    %v2680 = vpop.f32.mrf.mxu0
    %v2681 = vadd.f32 0.0, %v2680
    %v2682 = vpop.f32.mrf.mxu0
    %v2683 = vpop.f32.mrf.mxu0
    %v2684 = vadd.f32 0.0, %v2683
    %v2685 = vpop.f32.mrf.mxu0
    %2686 = vmatprep.mubr.bf16.mxu0 0
    %2687 = vmatmul.mubr.bf16.gmra.mxu0 %v2426
    %v2688 = vpop.f32.mrf.mxu0
    %v2689 = vadd.f32 0.0, %v2688
    %v2690 = vpop.f32.mrf.mxu0
    %v2691 = vpop.f32.mrf.mxu0
    %v2692 = vadd.f32 0.0, %v2691
    %v2693 = vpop.f32.mrf.mxu0
    %2694 = vmatprep.mubr.bf16.mxu0 0
    %2695 = vmatmul.mubr.bf16.gmra.mxu0 %v2429
    %v2696 = vpop.f32.mrf.mxu0
    %v2697 = vadd.f32 0.0, %v2696
    %v2698 = vpop.f32.mrf.mxu0
    %v2699 = vpop.f32.mrf.mxu0
    %v2700 = vadd.f32 0.0, %v2699
    %v2701 = vpop.f32.mrf.mxu0
    %2702 = vmatprep.mubr.bf16.mxu0 0
    %2703 = vmatmul.mubr.bf16.gmra.mxu0 %v2432
    %v2704 = vpop.f32.mrf.mxu0
    %v2705 = vadd.f32 0.0, %v2704
    %v2706 = vpop.f32.mrf.mxu0
    %v2707 = vpop.f32.mrf.mxu0
    %v2708 = vadd.f32 0.0, %v2707
    %v2709 = vpop.f32.mrf.mxu0
    %2710 = vmatprep.mubr.bf16.mxu0 0
    %2711 = vmatmul.mubr.bf16.gmra.mxu0 %v2435
    %v2712 = vpop.f32.mrf.mxu0
    %v2713 = vadd.f32 0.0, %v2712
    %v2714 = vpop.f32.mrf.mxu0
    %v2715 = vpop.f32.mrf.mxu0
    %v2716 = vadd.f32 0.0, %v2715
    %v2717 = vpop.f32.mrf.mxu0
    %2718 = vmatprep.mubr.bf16.mxu0 0
    %2719 = vmatmul.mubr.bf16.gmra.mxu0 %v2438
    %v2720 = vpop.f32.mrf.mxu0
    %v2721 = vadd.f32 0.0, %v2720
    %v2722 = vpop.f32.mrf.mxu0
    %v2723 = vpop.f32.mrf.mxu0
    %v2724 = vadd.f32 0.0, %v2723
    %v2725 = vpop.f32.mrf.mxu0
    %2726 = vmatprep.mubr.bf16.mxu0 0
    %2727 = vmatmul.mubr.bf16.gmra.mxu0 %v2441
    %v2728 = vpop.f32.mrf.mxu0
    %v2729 = vadd.f32 0.0, %v2728
    %v2730 = vpop.f32.mrf.mxu0
    %v2731 = vpop.f32.mrf.mxu0
    %v2732 = vadd.f32 0.0, %v2731
    %v2733 = vpop.f32.mrf.mxu0
    %2734 = vdwg.mxu0
    %v2735 = vadd.f32 %v1672, %v2481
    %v2736 = vadd.f32 %v1675, %v2484
    %v2737 = vadd.f32 %v1680, %v2489
    %v2738 = vadd.f32 %v1683, %v2492
    %v2739 = vadd.f32 %v1688, %v2497
    %v2740 = vadd.f32 %v1691, %v2500
    %v2741 = vadd.f32 %v1696, %v2505
    %v2742 = vadd.f32 %v1699, %v2508
    %v2743 = vadd.f32 %v1704, %v2513
    %v2744 = vadd.f32 %v1707, %v2516
    %v2745 = vadd.f32 %v1712, %v2521
    %v2746 = vadd.f32 %v1715, %v2524
    %v2747 = vadd.f32 %v1720, %v2529
    %v2748 = vadd.f32 %v1723, %v2532
    %v2749 = vadd.f32 %v1728, %v2537
    %v2750 = vadd.f32 %v1731, %v2540
    %v2751 = vadd.f32 %v1736, %v2545
    %v2752 = vadd.f32 %v1739, %v2548
    %v2753 = vadd.f32 %v1744, %v2553
    %v2754 = vadd.f32 %v1747, %v2556
    %v2755 = vadd.f32 %v1752, %v2561
    %v2756 = vadd.f32 %v1755, %v2564
    %v2757 = vadd.f32 %v1760, %v2569
    %v2758 = vadd.f32 %v1763, %v2572
    %v2759 = vadd.f32 %v1768, %v2577
    %v2760 = vadd.f32 %v1771, %v2580
    %v2761 = vadd.f32 %v1776, %v2585
    %v2762 = vadd.f32 %v1779, %v2588
    %v2763 = vadd.f32 %v1784, %v2593
    %v2764 = vadd.f32 %v1787, %v2596
    %v2765 = vadd.f32 %v1792, %v2601
    %v2766 = vadd.f32 %v1795, %v2604
    %v2767 = vadd.f32 %v1800, %v2609
    %v2768 = vadd.f32 %v1803, %v2612
    %v2769 = vadd.f32 %v1808, %v2617
    %v2770 = vadd.f32 %v1811, %v2620
    %v2771 = vadd.f32 %v1816, %v2625
    %v2772 = vadd.f32 %v1819, %v2628
    %v2773 = vadd.f32 %v1824, %v2633
    %v2774 = vadd.f32 %v1827, %v2636
    %v2775 = vadd.f32 %v1832, %v2641
    %v2776 = vadd.f32 %v1835, %v2644
    %v2777 = vadd.f32 %v1840, %v2649
    %v2778 = vadd.f32 %v1843, %v2652
    %v2779 = vadd.f32 %v1848, %v2657
    %v2780 = vadd.f32 %v1851, %v2660
    %v2781 = vadd.f32 %v1856, %v2665
    %v2782 = vadd.f32 %v1859, %v2668
    %v2783 = vadd.f32 %v1864, %v2673
    %v2784 = vadd.f32 %v1867, %v2676
    %v2785 = vadd.f32 %v1872, %v2681
    %v2786 = vadd.f32 %v1875, %v2684
    %v2787 = vadd.f32 %v1880, %v2689
    %v2788 = vadd.f32 %v1883, %v2692
    %v2789 = vadd.f32 %v1888, %v2697
    %v2790 = vadd.f32 %v1891, %v2700
    %v2791 = vadd.f32 %v1896, %v2705
    %v2792 = vadd.f32 %v1899, %v2708
    %v2793 = vadd.f32 %v1904, %v2713
    %v2794 = vadd.f32 %v1907, %v2716
    %v2795 = vadd.f32 %v1912, %v2721
    %v2796 = vadd.f32 %v1915, %v2724
    %v2797 = vadd.f32 %v1920, %v2729
    %v2798 = vadd.f32 %v1923, %v2732
    %s2799 = scalar_lea.vmem %s0, 12
    %v2800 = vld [vmem:[%s2799] sm:$0xf]
    %v2801 = vld [vmem:[%s2799 + $0x4] sm:$0xf]
    %v2802 = vld [vmem:[%s2799 + $0xc] sm:$0xf]
    %v2803 = vld [vmem:[%s2799 + $0x10] sm:$0xf]
    %v2804 = vld [vmem:[%s2799 + $0x18] sm:$0xf]
    %v2805 = vld [vmem:[%s2799 + $0x1c] sm:$0xf]
    %v2806 = vld [vmem:[%s2799 + $0x24] sm:$0xf]
    %v2807 = vld [vmem:[%s2799 + $0x28] sm:$0xf]
    %v2808 = vld [vmem:[%s2799 + $0x30] sm:$0xf]
    %v2809 = vld [vmem:[%s2799 + $0x34] sm:$0xf]
    %v2810 = vld [vmem:[%s2799 + $0x3c] sm:$0xf]
    %v2811 = vld [vmem:[%s2799 + $0x40] sm:$0xf]
    %v2812 = vld [vmem:[%s2799 + $0x48] sm:$0xf]
    %v2813 = vld [vmem:[%s2799 + $0x4c] sm:$0xf]
    %v2814 = vld [vmem:[%s2799 + $0x54] sm:$0xf]
    %v2815 = vld [vmem:[%s2799 + $0x58] sm:$0xf]
    %v2816 = vld [vmem:[%s2799 + $0x60] sm:$0xf]
    %v2817 = vld [vmem:[%s2799 + $0x64] sm:$0xf]
    %v2818 = vld [vmem:[%s2799 + $0x6c] sm:$0xf]
    %v2819 = vld [vmem:[%s2799 + $0x70] sm:$0xf]
    %v2820 = vld [vmem:[%s2799 + $0x78] sm:$0xf]
    %v2821 = vld [vmem:[%s2799 + $0x7c] sm:$0xf]
    %v2822 = vld [vmem:[%s2799 + $0x84] sm:$0xf]
    %v2823 = vld [vmem:[%s2799 + $0x88] sm:$0xf]
    %v2824 = vld [vmem:[%s2799 + $0x90] sm:$0xf]
    %v2825 = vld [vmem:[%s2799 + $0x94] sm:$0xf]
    %v2826 = vld [vmem:[%s2799 + $0x9c] sm:$0xf]
    %v2827 = vld [vmem:[%s2799 + $0xa0] sm:$0xf]
    %v2828 = vld [vmem:[%s2799 + $0xa8] sm:$0xf]
    %v2829 = vld [vmem:[%s2799 + $0xac] sm:$0xf]
    %v2830 = vld [vmem:[%s2799 + $0xb4] sm:$0xf]
    %v2831 = vld [vmem:[%s2799 + $0xb8] sm:$0xf]
    %v2832 = vld [vmem:[%s2799 + $0xd8] sm:$0xf]
    %v2833 = vld [vmem:[%s2799 + $0xdc] sm:$0xf]
    %v2834 = vld [vmem:[%s2799 + $0xe4] sm:$0xf]
    %v2835 = vld [vmem:[%s2799 + $0xe8] sm:$0xf]
    %v2836 = vld [vmem:[%s2799 + $0xf0] sm:$0xf]
    %v2837 = vld [vmem:[%s2799 + $0xf4] sm:$0xf]
    %v2838 = vld [vmem:[%s2799 + $0xfc] sm:$0xf]
    %v2839 = vld [vmem:[%s2799 + $0x100] sm:$0xf]
    %v2840 = vld [vmem:[%s2799 + $0x108] sm:$0xf]
    %v2841 = vld [vmem:[%s2799 + $0x10c] sm:$0xf]
    %v2842 = vld [vmem:[%s2799 + $0x114] sm:$0xf]
    %v2843 = vld [vmem:[%s2799 + $0x118] sm:$0xf]
    %v2844 = vld [vmem:[%s2799 + $0x120] sm:$0xf]
    %v2845 = vld [vmem:[%s2799 + $0x124] sm:$0xf]
    %v2846 = vld [vmem:[%s2799 + $0x12c] sm:$0xf]
    %v2847 = vld [vmem:[%s2799 + $0x130] sm:$0xf]
    %v2848 = vld [vmem:[%s2799 + $0x138] sm:$0xf]
    %v2849 = vld [vmem:[%s2799 + $0x13c] sm:$0xf]
    %v2850 = vld [vmem:[%s2799 + $0x144] sm:$0xf]
    %v2851 = vld [vmem:[%s2799 + $0x148] sm:$0xf]
    %v2852 = vld [vmem:[%s2799 + $0x150] sm:$0xf]
    %v2853 = vld [vmem:[%s2799 + $0x154] sm:$0xf]
    %v2854 = vld [vmem:[%s2799 + $0x15c] sm:$0xf]
    %v2855 = vld [vmem:[%s2799 + $0x160] sm:$0xf]
    %v2856 = vld [vmem:[%s2799 + $0x168] sm:$0xf]
    %v2857 = vld [vmem:[%s2799 + $0x16c] sm:$0xf]
    %v2858 = vld [vmem:[%s2799 + $0x174] sm:$0xf]
    %v2859 = vld [vmem:[%s2799 + $0x178] sm:$0xf]
    %v2860 = vld [vmem:[%s2799 + $0x180] sm:$0xf]
    %v2861 = vld [vmem:[%s2799 + $0x184] sm:$0xf]
    %v2862 = vld [vmem:[%s2799 + $0x18c] sm:$0xf]
    %v2863 = vld [vmem:[%s2799 + $0x190] sm:$0xf]
    %s2864 = scalar_lea.vmem %s1, 6
    %v2865 = vld [vmem:[%s2864] sm:$0x3]
    %v2930 = vunpack.c.l.b16 %v2800
    %v2931 = vunpack.c.l.b16 %v2801
    %v2932 = vunpack.c.l.b16 %v2802
    %v2933 = vunpack.c.l.b16 %v2803
    %v2934 = vunpack.c.l.b16 %v2804
    %v2935 = vunpack.c.l.b16 %v2805
    %v2936 = vunpack.c.l.b16 %v2806
    %v2937 = vunpack.c.l.b16 %v2807
    %v2938 = vunpack.c.l.b16 %v2808
    %v2939 = vunpack.c.l.b16 %v2809
    %v2940 = vunpack.c.l.b16 %v2810
    %v2941 = vunpack.c.l.b16 %v2811
    %v2942 = vunpack.c.l.b16 %v2812
    %v2943 = vunpack.c.l.b16 %v2813
    %v2944 = vunpack.c.l.b16 %v2814
    %v2945 = vunpack.c.l.b16 %v2815
    %v2946 = vunpack.c.l.b16 %v2816
    %v2947 = vunpack.c.l.b16 %v2817
    %v2948 = vunpack.c.l.b16 %v2818
    %v2949 = vunpack.c.l.b16 %v2819
    %v2950 = vunpack.c.l.b16 %v2820
    %v2951 = vunpack.c.l.b16 %v2821
    %v2952 = vunpack.c.l.b16 %v2822
    %v2953 = vunpack.c.l.b16 %v2823
    %v2954 = vunpack.c.l.b16 %v2824
    %v2955 = vunpack.c.l.b16 %v2825
    %v2956 = vunpack.c.l.b16 %v2826
    %v2957 = vunpack.c.l.b16 %v2827
    %v2958 = vunpack.c.l.b16 %v2828
    %v2959 = vunpack.c.l.b16 %v2829
    %v2960 = vunpack.c.l.b16 %v2830
    %v2961 = vunpack.c.l.b16 %v2831
    %v2962 = vunpack.c.l.b16 %v2832
    %v2963 = vunpack.c.l.b16 %v2833
    %v2964 = vunpack.c.l.b16 %v2834
    %v2965 = vunpack.c.l.b16 %v2835
    %v2966 = vunpack.c.l.b16 %v2836
    %v2967 = vunpack.c.l.b16 %v2837
    %v2968 = vunpack.c.l.b16 %v2838
    %v2969 = vunpack.c.l.b16 %v2839
    %v2970 = vunpack.c.l.b16 %v2840
    %v2971 = vunpack.c.l.b16 %v2841
    %v2972 = vunpack.c.l.b16 %v2842
    %v2973 = vunpack.c.l.b16 %v2843
    %v2974 = vunpack.c.l.b16 %v2844
    %v2975 = vunpack.c.l.b16 %v2845
    %v2976 = vunpack.c.l.b16 %v2846
    %v2977 = vunpack.c.l.b16 %v2847
    %v2978 = vunpack.c.l.b16 %v2848
    %v2979 = vunpack.c.l.b16 %v2849
    %v2980 = vunpack.c.l.b16 %v2850
    %v2981 = vunpack.c.l.b16 %v2851
    %v2982 = vunpack.c.l.b16 %v2852
    %v2983 = vunpack.c.l.b16 %v2853
    %v2984 = vunpack.c.l.b16 %v2854
    %v2985 = vunpack.c.l.b16 %v2855
    %v2986 = vunpack.c.l.b16 %v2856
    %v2987 = vunpack.c.l.b16 %v2857
    %v2988 = vunpack.c.l.b16 %v2858
    %v2989 = vunpack.c.l.b16 %v2859
    %v2990 = vunpack.c.l.b16 %v2860
    %v2991 = vunpack.c.l.b16 %v2861
    %v2992 = vunpack.c.l.b16 %v2862
    %v2993 = vunpack.c.l.b16 %v2863
    %v2994 = vpack.c.b16 %v2931, %v2930
    %v2995 = vpack.c.b16 %v2933, %v2932
    %v2996 = vpack.c.b16 %v2935, %v2934
    %v2997 = vpack.c.b16 %v2937, %v2936
    %v2998 = vpack.c.b16 %v2939, %v2938
    %v2999 = vpack.c.b16 %v2941, %v2940
    %v3000 = vpack.c.b16 %v2943, %v2942
    %v3001 = vpack.c.b16 %v2945, %v2944
    %v3002 = vpack.c.b16 %v2947, %v2946
    %v3003 = vpack.c.b16 %v2949, %v2948
    %v3004 = vpack.c.b16 %v2951, %v2950
    %v3005 = vpack.c.b16 %v2953, %v2952
    %v3006 = vpack.c.b16 %v2955, %v2954
    %v3007 = vpack.c.b16 %v2957, %v2956
    %v3008 = vpack.c.b16 %v2959, %v2958
    %v3009 = vpack.c.b16 %v2961, %v2960
    %v3010 = vpack.c.b16 %v2963, %v2962
    %v3011 = vpack.c.b16 %v2965, %v2964
    %v3012 = vpack.c.b16 %v2967, %v2966
    %v3013 = vpack.c.b16 %v2969, %v2968
    %v3014 = vpack.c.b16 %v2971, %v2970
    %v3015 = vpack.c.b16 %v2973, %v2972
    %v3016 = vpack.c.b16 %v2975, %v2974
    %v3017 = vpack.c.b16 %v2977, %v2976
    %v3018 = vpack.c.b16 %v2979, %v2978
    %v3019 = vpack.c.b16 %v2981, %v2980
    %v3020 = vpack.c.b16 %v2983, %v2982
    %v3021 = vpack.c.b16 %v2985, %v2984
    %v3022 = vpack.c.b16 %v2987, %v2986
    %v3023 = vpack.c.b16 %v2989, %v2988
    %v3024 = vpack.c.b16 %v2991, %v2990
    %v3025 = vpack.c.b16 %v2993, %v2992
    %v3027 = vsel %vm988, %v2994, 0
    %v3030 = vsel %vm988, %v2995, 0
    %v3033 = vsel %vm988, %v2996, 0
    %v3036 = vsel %vm988, %v2997, 0
    %v3039 = vsel %vm988, %v2998, 0
    %v3042 = vsel %vm988, %v2999, 0
    %v3045 = vsel %vm988, %v3000, 0
    %v3048 = vsel %vm988, %v3001, 0
    %v3051 = vsel %vm988, %v3002, 0
    %v3054 = vsel %vm988, %v3003, 0
    %v3057 = vsel %vm988, %v3004, 0
    %v3060 = vsel %vm988, %v3005, 0
    %v3063 = vsel %vm988, %v3006, 0
    %v3066 = vsel %vm988, %v3007, 0
    %v3069 = vsel %vm988, %v3008, 0
    %v3072 = vsel %vm988, %v3009, 0
    %v3075 = vsel %vm988, %v3010, 0
    %v3078 = vsel %vm988, %v3011, 0
    %v3081 = vsel %vm988, %v3012, 0
    %v3084 = vsel %vm988, %v3013, 0
    %v3087 = vsel %vm988, %v3014, 0
    %v3090 = vsel %vm988, %v3015, 0
    %v3093 = vsel %vm988, %v3016, 0
    %v3096 = vsel %vm988, %v3017, 0
    %v3099 = vsel %vm988, %v3018, 0
    %v3102 = vsel %vm988, %v3019, 0
    %v3105 = vsel %vm988, %v3020, 0
    %v3108 = vsel %vm988, %v3021, 0
    %v3111 = vsel %vm988, %v3022, 0
    %v3114 = vsel %vm988, %v3023, 0
    %v3117 = vsel %vm988, %v3024, 0
    %v3120 = vsel %vm988, %v3025, 0
    %v3123 = vsel %vm1085, %v2865, 0
    %3125 = vmatprep.subr.bf16.mxu0 0
    %3126 = vmatpush1.bf16.msra.mxu0 0
    %3127 = vmatprep.subr.bf16.mxu0 0
    %3128 = vmatpush1.bf16.msra.mxu0 0
    %3129 = vmatprep.subr.bf16.mxu0 0
    %3130 = vmatpush1.bf16.msra.mxu0 0
    %3131 = vmatprep.subr.bf16.mxu0 0
    %3132 = vmatpush1.bf16.msra.mxu0 0
    %3133 = vmatprep.subr.bf16.mxu0 0
    %3134 = vmatpush1.bf16.msra.mxu0 0
    %3135 = vmatprep.subr.bf16.mxu0 0
    %3136 = vmatpush1.bf16.msra.mxu0 0
    %3137 = vmatprep.subr.bf16.mxu0 0
    %3138 = vmatpush1.bf16.msra.mxu0 0
    %3139 = vmatprep.subr.bf16.mxu0 0
    %3140 = vmatpush1.bf16.msra.mxu0 %v3123
    %3141 = vmatprep.subr.bf16.mxu0 0
    %3142 = vmatpush2.bf16.msra.mxu0 0
    %3143 = vmatprep.subr.bf16.mxu0 0
    %3144 = vmatpush2.bf16.msra.mxu0 0
    %3145 = vmatprep.subr.bf16.mxu0 0
    %3146 = vmatpush2.bf16.msra.mxu0 0
    %3147 = vmatprep.subr.bf16.mxu0 0
    %3148 = vmatpush2.bf16.msra.mxu0 0
    %3149 = vmatprep.subr.bf16.mxu0 0
    %3150 = vmatpush2.bf16.msra.mxu0 0
    %3151 = vmatprep.subr.bf16.mxu0 0
    %3152 = vmatpush2.bf16.msra.mxu0 0
    %3153 = vmatprep.subr.bf16.mxu0 0
    %3154 = vmatpush2.bf16.msra.mxu0 0
    %3155 = vmatprep.subr.bf16.mxu0 0
    %3156 = vmatpush2.bf16.msra.mxu0 0
    %3157 = vmatprep.mubr.bf16.mxu0 0
    %3158 = vmatmul.mubr.bf16.gmra.mxu0 %v3027
    %v3159 = vpop.f32.mrf.mxu0
    %v3160 = vadd.f32 0.0, %v3159
    %v3161 = vpop.f32.mrf.mxu0
    %v3162 = vpop.f32.mrf.mxu0
    %v3163 = vadd.f32 0.0, %v3162
    %v3164 = vpop.f32.mrf.mxu0
    %3165 = vmatprep.mubr.bf16.mxu0 0
    %3166 = vmatmul.mubr.bf16.gmra.mxu0 %v3030
    %v3167 = vpop.f32.mrf.mxu0
    %v3168 = vadd.f32 0.0, %v3167
    %v3169 = vpop.f32.mrf.mxu0
    %v3170 = vpop.f32.mrf.mxu0
    %v3171 = vadd.f32 0.0, %v3170
    %v3172 = vpop.f32.mrf.mxu0
    %3173 = vmatprep.mubr.bf16.mxu0 0
    %3174 = vmatmul.mubr.bf16.gmra.mxu0 %v3033
    %v3175 = vpop.f32.mrf.mxu0
    %v3176 = vadd.f32 0.0, %v3175
    %v3177 = vpop.f32.mrf.mxu0
    %v3178 = vpop.f32.mrf.mxu0
    %v3179 = vadd.f32 0.0, %v3178
    %v3180 = vpop.f32.mrf.mxu0
    %3181 = vmatprep.mubr.bf16.mxu0 0
    %3182 = vmatmul.mubr.bf16.gmra.mxu0 %v3036
    %v3183 = vpop.f32.mrf.mxu0
    %v3184 = vadd.f32 0.0, %v3183
    %v3185 = vpop.f32.mrf.mxu0
    %v3186 = vpop.f32.mrf.mxu0
    %v3187 = vadd.f32 0.0, %v3186
    %v3188 = vpop.f32.mrf.mxu0
    %3189 = vmatprep.mubr.bf16.mxu0 0
    %3190 = vmatmul.mubr.bf16.gmra.mxu0 %v3039
    %v3191 = vpop.f32.mrf.mxu0
    %v3192 = vadd.f32 0.0, %v3191
    %v3193 = vpop.f32.mrf.mxu0
    %v3194 = vpop.f32.mrf.mxu0
    %v3195 = vadd.f32 0.0, %v3194
    %v3196 = vpop.f32.mrf.mxu0
    %3197 = vmatprep.mubr.bf16.mxu0 0
    %3198 = vmatmul.mubr.bf16.gmra.mxu0 %v3042
    %v3199 = vpop.f32.mrf.mxu0
    %v3200 = vadd.f32 0.0, %v3199
    %v3201 = vpop.f32.mrf.mxu0
    %v3202 = vpop.f32.mrf.mxu0
    %v3203 = vadd.f32 0.0, %v3202
    %v3204 = vpop.f32.mrf.mxu0
    %3205 = vmatprep.mubr.bf16.mxu0 0
    %3206 = vmatmul.mubr.bf16.gmra.mxu0 %v3045
    %v3207 = vpop.f32.mrf.mxu0
    %v3208 = vadd.f32 0.0, %v3207
    %v3209 = vpop.f32.mrf.mxu0
    %v3210 = vpop.f32.mrf.mxu0
    %v3211 = vadd.f32 0.0, %v3210
    %v3212 = vpop.f32.mrf.mxu0
    %3213 = vmatprep.mubr.bf16.mxu0 0
    %3214 = vmatmul.mubr.bf16.gmra.mxu0 %v3048
    %v3215 = vpop.f32.mrf.mxu0
    %v3216 = vadd.f32 0.0, %v3215
    %v3217 = vpop.f32.mrf.mxu0
    %v3218 = vpop.f32.mrf.mxu0
    %v3219 = vadd.f32 0.0, %v3218
    %v3220 = vpop.f32.mrf.mxu0
    %3221 = vmatprep.mubr.bf16.mxu0 0
    %3222 = vmatmul.mubr.bf16.gmra.mxu0 %v3051
    %v3223 = vpop.f32.mrf.mxu0
    %v3224 = vadd.f32 0.0, %v3223
    %v3225 = vpop.f32.mrf.mxu0
    %v3226 = vpop.f32.mrf.mxu0
    %v3227 = vadd.f32 0.0, %v3226
    %v3228 = vpop.f32.mrf.mxu0
    %3229 = vmatprep.mubr.bf16.mxu0 0
    %3230 = vmatmul.mubr.bf16.gmra.mxu0 %v3054
    %v3231 = vpop.f32.mrf.mxu0
    %v3232 = vadd.f32 0.0, %v3231
    %v3233 = vpop.f32.mrf.mxu0
    %v3234 = vpop.f32.mrf.mxu0
    %v3235 = vadd.f32 0.0, %v3234
    %v3236 = vpop.f32.mrf.mxu0
    %3237 = vmatprep.mubr.bf16.mxu0 0
    %3238 = vmatmul.mubr.bf16.gmra.mxu0 %v3057
    %v3239 = vpop.f32.mrf.mxu0
    %v3240 = vadd.f32 0.0, %v3239
    %v3241 = vpop.f32.mrf.mxu0
    %v3242 = vpop.f32.mrf.mxu0
    %v3243 = vadd.f32 0.0, %v3242
    %v3244 = vpop.f32.mrf.mxu0
    %3245 = vmatprep.mubr.bf16.mxu0 0
    %3246 = vmatmul.mubr.bf16.gmra.mxu0 %v3060
    %v3247 = vpop.f32.mrf.mxu0
    %v3248 = vadd.f32 0.0, %v3247
    %v3249 = vpop.f32.mrf.mxu0
    %v3250 = vpop.f32.mrf.mxu0
    %v3251 = vadd.f32 0.0, %v3250
    %v3252 = vpop.f32.mrf.mxu0
    %3253 = vmatprep.mubr.bf16.mxu0 0
    %3254 = vmatmul.mubr.bf16.gmra.mxu0 %v3063
    %v3255 = vpop.f32.mrf.mxu0
    %v3256 = vadd.f32 0.0, %v3255
    %v3257 = vpop.f32.mrf.mxu0
    %v3258 = vpop.f32.mrf.mxu0
    %v3259 = vadd.f32 0.0, %v3258
    %v3260 = vpop.f32.mrf.mxu0
    %3261 = vmatprep.mubr.bf16.mxu0 0
    %3262 = vmatmul.mubr.bf16.gmra.mxu0 %v3066
    %v3263 = vpop.f32.mrf.mxu0
    %v3264 = vadd.f32 0.0, %v3263
    %v3265 = vpop.f32.mrf.mxu0
    %v3266 = vpop.f32.mrf.mxu0
    %v3267 = vadd.f32 0.0, %v3266
    %v3268 = vpop.f32.mrf.mxu0
    %3269 = vmatprep.mubr.bf16.mxu0 0
    %3270 = vmatmul.mubr.bf16.gmra.mxu0 %v3069
    %v3271 = vpop.f32.mrf.mxu0
    %v3272 = vadd.f32 0.0, %v3271
    %v3273 = vpop.f32.mrf.mxu0
    %v3274 = vpop.f32.mrf.mxu0
    %v3275 = vadd.f32 0.0, %v3274
    %v3276 = vpop.f32.mrf.mxu0
    %3277 = vmatprep.mubr.bf16.mxu0 0
    %3278 = vmatmul.mubr.bf16.gmra.mxu0 %v3072
    %v3279 = vpop.f32.mrf.mxu0
    %v3280 = vadd.f32 0.0, %v3279
    %v3281 = vpop.f32.mrf.mxu0
    %v3282 = vpop.f32.mrf.mxu0
    %v3283 = vadd.f32 0.0, %v3282
    %v3284 = vpop.f32.mrf.mxu0
    %3285 = vmatprep.mubr.bf16.mxu0 0
    %3286 = vmatmul.mubr.bf16.gmra.mxu0 %v3075
    %v3287 = vpop.f32.mrf.mxu0
    %v3288 = vadd.f32 0.0, %v3287
    %v3289 = vpop.f32.mrf.mxu0
    %v3290 = vpop.f32.mrf.mxu0
    %v3291 = vadd.f32 0.0, %v3290
    %v3292 = vpop.f32.mrf.mxu0
    %3293 = vmatprep.mubr.bf16.mxu0 0
    %3294 = vmatmul.mubr.bf16.gmra.mxu0 %v3078
    %v3295 = vpop.f32.mrf.mxu0
    %v3296 = vadd.f32 0.0, %v3295
    %v3297 = vpop.f32.mrf.mxu0
    %v3298 = vpop.f32.mrf.mxu0
    %v3299 = vadd.f32 0.0, %v3298
    %v3300 = vpop.f32.mrf.mxu0
    %3301 = vmatprep.mubr.bf16.mxu0 0
    %3302 = vmatmul.mubr.bf16.gmra.mxu0 %v3081
    %v3303 = vpop.f32.mrf.mxu0
    %v3304 = vadd.f32 0.0, %v3303
    %v3305 = vpop.f32.mrf.mxu0
    %v3306 = vpop.f32.mrf.mxu0
    %v3307 = vadd.f32 0.0, %v3306
    %v3308 = vpop.f32.mrf.mxu0
    %3309 = vmatprep.mubr.bf16.mxu0 0
    %3310 = vmatmul.mubr.bf16.gmra.mxu0 %v3084
    %v3311 = vpop.f32.mrf.mxu0
    %v3312 = vadd.f32 0.0, %v3311
    %v3313 = vpop.f32.mrf.mxu0
    %v3314 = vpop.f32.mrf.mxu0
    %v3315 = vadd.f32 0.0, %v3314
    %v3316 = vpop.f32.mrf.mxu0
    %3317 = vmatprep.mubr.bf16.mxu0 0
    %3318 = vmatmul.mubr.bf16.gmra.mxu0 %v3087
    %v3319 = vpop.f32.mrf.mxu0
    %v3320 = vadd.f32 0.0, %v3319
    %v3321 = vpop.f32.mrf.mxu0
    %v3322 = vpop.f32.mrf.mxu0
    %v3323 = vadd.f32 0.0, %v3322
    %v3324 = vpop.f32.mrf.mxu0
    %3325 = vmatprep.mubr.bf16.mxu0 0
    %3326 = vmatmul.mubr.bf16.gmra.mxu0 %v3090
    %v3327 = vpop.f32.mrf.mxu0
    %v3328 = vadd.f32 0.0, %v3327
    %v3329 = vpop.f32.mrf.mxu0
    %v3330 = vpop.f32.mrf.mxu0
    %v3331 = vadd.f32 0.0, %v3330
    %v3332 = vpop.f32.mrf.mxu0
    %3333 = vmatprep.mubr.bf16.mxu0 0
    %3334 = vmatmul.mubr.bf16.gmra.mxu0 %v3093
    %v3335 = vpop.f32.mrf.mxu0
    %v3336 = vadd.f32 0.0, %v3335
    %v3337 = vpop.f32.mrf.mxu0
    %v3338 = vpop.f32.mrf.mxu0
    %v3339 = vadd.f32 0.0, %v3338
    %v3340 = vpop.f32.mrf.mxu0
    %3341 = vmatprep.mubr.bf16.mxu0 0
    %3342 = vmatmul.mubr.bf16.gmra.mxu0 %v3096
    %v3343 = vpop.f32.mrf.mxu0
    %v3344 = vadd.f32 0.0, %v3343
    %v3345 = vpop.f32.mrf.mxu0
    %v3346 = vpop.f32.mrf.mxu0
    %v3347 = vadd.f32 0.0, %v3346
    %v3348 = vpop.f32.mrf.mxu0
    %3349 = vmatprep.mubr.bf16.mxu0 0
    %3350 = vmatmul.mubr.bf16.gmra.mxu0 %v3099
    %v3351 = vpop.f32.mrf.mxu0
    %v3352 = vadd.f32 0.0, %v3351
    %v3353 = vpop.f32.mrf.mxu0
    %v3354 = vpop.f32.mrf.mxu0
    %v3355 = vadd.f32 0.0, %v3354
    %v3356 = vpop.f32.mrf.mxu0
    %3357 = vmatprep.mubr.bf16.mxu0 0
    %3358 = vmatmul.mubr.bf16.gmra.mxu0 %v3102
    %v3359 = vpop.f32.mrf.mxu0
    %v3360 = vadd.f32 0.0, %v3359
    %v3361 = vpop.f32.mrf.mxu0
    %v3362 = vpop.f32.mrf.mxu0
    %v3363 = vadd.f32 0.0, %v3362
    %v3364 = vpop.f32.mrf.mxu0
    %3365 = vmatprep.mubr.bf16.mxu0 0
    %3366 = vmatmul.mubr.bf16.gmra.mxu0 %v3105
    %v3367 = vpop.f32.mrf.mxu0
    %v3368 = vadd.f32 0.0, %v3367
    %v3369 = vpop.f32.mrf.mxu0
    %v3370 = vpop.f32.mrf.mxu0
    %v3371 = vadd.f32 0.0, %v3370
    %v3372 = vpop.f32.mrf.mxu0
    %3373 = vmatprep.mubr.bf16.mxu0 0
    %3374 = vmatmul.mubr.bf16.gmra.mxu0 %v3108
    %v3375 = vpop.f32.mrf.mxu0
    %v3376 = vadd.f32 0.0, %v3375
    %v3377 = vpop.f32.mrf.mxu0
    %v3378 = vpop.f32.mrf.mxu0
    %v3379 = vadd.f32 0.0, %v3378
    %v3380 = vpop.f32.mrf.mxu0
    %3381 = vmatprep.mubr.bf16.mxu0 0
    %3382 = vmatmul.mubr.bf16.gmra.mxu0 %v3111
    %v3383 = vpop.f32.mrf.mxu0
    %v3384 = vadd.f32 0.0, %v3383
    %v3385 = vpop.f32.mrf.mxu0
    %v3386 = vpop.f32.mrf.mxu0
    %v3387 = vadd.f32 0.0, %v3386
    %v3388 = vpop.f32.mrf.mxu0
    %3389 = vmatprep.mubr.bf16.mxu0 0
    %3390 = vmatmul.mubr.bf16.gmra.mxu0 %v3114
    %v3391 = vpop.f32.mrf.mxu0
    %v3392 = vadd.f32 0.0, %v3391
    %v3393 = vpop.f32.mrf.mxu0
    %v3394 = vpop.f32.mrf.mxu0
    %v3395 = vadd.f32 0.0, %v3394
    %v3396 = vpop.f32.mrf.mxu0
    %3397 = vmatprep.mubr.bf16.mxu0 0
    %3398 = vmatmul.mubr.bf16.gmra.mxu0 %v3117
    %v3399 = vpop.f32.mrf.mxu0
    %v3400 = vadd.f32 0.0, %v3399
    %v3401 = vpop.f32.mrf.mxu0
    %v3402 = vpop.f32.mrf.mxu0
    %v3403 = vadd.f32 0.0, %v3402
    %v3404 = vpop.f32.mrf.mxu0
    %3405 = vmatprep.mubr.bf16.mxu0 0
    %3406 = vmatmul.mubr.bf16.gmra.mxu0 %v3120
    %v3407 = vpop.f32.mrf.mxu0
    %v3408 = vadd.f32 0.0, %v3407
    %v3409 = vpop.f32.mrf.mxu0
    %v3410 = vpop.f32.mrf.mxu0
    %v3411 = vadd.f32 0.0, %v3410
    %v3412 = vpop.f32.mrf.mxu0
    %3413 = vdwg.mxu0
    %v3414 = vadd.f32 %v2735, %v3160
    %v3415 = vadd.f32 %v2736, %v3163
    %v3416 = vadd.f32 %v2737, %v3168
    %v3417 = vadd.f32 %v2738, %v3171
    %v3418 = vadd.f32 %v2739, %v3176
    %v3419 = vadd.f32 %v2740, %v3179
    %v3420 = vadd.f32 %v2741, %v3184
    %v3421 = vadd.f32 %v2742, %v3187
    %v3422 = vadd.f32 %v2743, %v3192
    %v3423 = vadd.f32 %v2744, %v3195
    %v3424 = vadd.f32 %v2745, %v3200
    %v3425 = vadd.f32 %v2746, %v3203
    %v3426 = vadd.f32 %v2747, %v3208
    %v3427 = vadd.f32 %v2748, %v3211
    %v3428 = vadd.f32 %v2749, %v3216
    %v3429 = vadd.f32 %v2750, %v3219
    %v3430 = vadd.f32 %v2751, %v3224
    %v3431 = vadd.f32 %v2752, %v3227
    %v3432 = vadd.f32 %v2753, %v3232
    %v3433 = vadd.f32 %v2754, %v3235
    %v3434 = vadd.f32 %v2755, %v3240
    %v3435 = vadd.f32 %v2756, %v3243
    %v3436 = vadd.f32 %v2757, %v3248
    %v3437 = vadd.f32 %v2758, %v3251
    %v3438 = vadd.f32 %v2759, %v3256
    %v3439 = vadd.f32 %v2760, %v3259
    %v3440 = vadd.f32 %v2761, %v3264
    %v3441 = vadd.f32 %v2762, %v3267
    %v3442 = vadd.f32 %v2763, %v3272
    %v3443 = vadd.f32 %v2764, %v3275
    %v3444 = vadd.f32 %v2765, %v3280
    %v3445 = vadd.f32 %v2766, %v3283
    %v3446 = vadd.f32 %v2767, %v3288
    %v3447 = vadd.f32 %v2768, %v3291
    %v3448 = vadd.f32 %v2769, %v3296
    %v3449 = vadd.f32 %v2770, %v3299
    %v3450 = vadd.f32 %v2771, %v3304
    %v3451 = vadd.f32 %v2772, %v3307
    %v3452 = vadd.f32 %v2773, %v3312
    %v3453 = vadd.f32 %v2774, %v3315
    %v3454 = vadd.f32 %v2775, %v3320
    %v3455 = vadd.f32 %v2776, %v3323
    %v3456 = vadd.f32 %v2777, %v3328
    %v3457 = vadd.f32 %v2778, %v3331
    %v3458 = vadd.f32 %v2779, %v3336
    %v3459 = vadd.f32 %v2780, %v3339
    %v3460 = vadd.f32 %v2781, %v3344
    %v3461 = vadd.f32 %v2782, %v3347
    %v3462 = vadd.f32 %v2783, %v3352
    %v3463 = vadd.f32 %v2784, %v3355
    %v3464 = vadd.f32 %v2785, %v3360
    %v3465 = vadd.f32 %v2786, %v3363
    %v3466 = vadd.f32 %v2787, %v3368
    %v3467 = vadd.f32 %v2788, %v3371
    %v3468 = vadd.f32 %v2789, %v3376
    %v3469 = vadd.f32 %v2790, %v3379
    %v3470 = vadd.f32 %v2791, %v3384
    %v3471 = vadd.f32 %v2792, %v3387
    %v3472 = vadd.f32 %v2793, %v3392
    %v3473 = vadd.f32 %v2794, %v3395
    %v3474 = vadd.f32 %v2795, %v3400
    %v3475 = vadd.f32 %v2796, %v3403
    %v3476 = vadd.f32 %v2797, %v3408
    %v3477 = vadd.f32 %v2798, %v3411
    %v3478 = vld [vmem:[%s2799] sm:$0xf]
    %v3479 = vld [vmem:[%s2799 + $0x4] sm:$0xf]
    %v3480 = vld [vmem:[%s2799 + $0x8] sm:$0x1]
    %v3481 = vld [vmem:[%s2799 + $0xc] sm:$0xf]
    %v3482 = vld [vmem:[%s2799 + $0x10] sm:$0xf]
    %v3483 = vld [vmem:[%s2799 + $0x14] sm:$0x1]
    %v3484 = vld [vmem:[%s2799 + $0x18] sm:$0xf]
    %v3485 = vld [vmem:[%s2799 + $0x1c] sm:$0xf]
    %v3486 = vld [vmem:[%s2799 + $0x20] sm:$0x1]
    %v3487 = vld [vmem:[%s2799 + $0x24] sm:$0xf]
    %v3488 = vld [vmem:[%s2799 + $0x28] sm:$0xf]
    %v3489 = vld [vmem:[%s2799 + $0x2c] sm:$0x1]
    %v3490 = vld [vmem:[%s2799 + $0x30] sm:$0xf]
    %v3491 = vld [vmem:[%s2799 + $0x34] sm:$0xf]
    %v3492 = vld [vmem:[%s2799 + $0x38] sm:$0x1]
    %v3493 = vld [vmem:[%s2799 + $0x3c] sm:$0xf]
    %v3494 = vld [vmem:[%s2799 + $0x40] sm:$0xf]
    %v3495 = vld [vmem:[%s2799 + $0x44] sm:$0x1]
    %v3496 = vld [vmem:[%s2799 + $0x48] sm:$0xf]
    %v3497 = vld [vmem:[%s2799 + $0x4c] sm:$0xf]
    %v3498 = vld [vmem:[%s2799 + $0x50] sm:$0x1]
    %v3499 = vld [vmem:[%s2799 + $0x54] sm:$0xf]
    %v3500 = vld [vmem:[%s2799 + $0x58] sm:$0xf]
    %v3501 = vld [vmem:[%s2799 + $0x5c] sm:$0x1]
    %v3502 = vld [vmem:[%s2799 + $0x60] sm:$0xf]
    %v3503 = vld [vmem:[%s2799 + $0x64] sm:$0xf]
    %v3504 = vld [vmem:[%s2799 + $0x68] sm:$0x1]
    %v3505 = vld [vmem:[%s2799 + $0x6c] sm:$0xf]
    %v3506 = vld [vmem:[%s2799 + $0x70] sm:$0xf]
    %v3507 = vld [vmem:[%s2799 + $0x74] sm:$0x1]
    %v3508 = vld [vmem:[%s2799 + $0x78] sm:$0xf]
    %v3509 = vld [vmem:[%s2799 + $0x7c] sm:$0xf]
    %v3510 = vld [vmem:[%s2799 + $0x80] sm:$0x1]
    %v3511 = vld [vmem:[%s2799 + $0x84] sm:$0xf]
    %v3512 = vld [vmem:[%s2799 + $0x88] sm:$0xf]
    %v3513 = vld [vmem:[%s2799 + $0x8c] sm:$0x1]
    %v3514 = vld [vmem:[%s2799 + $0x90] sm:$0xf]
    %v3515 = vld [vmem:[%s2799 + $0x94] sm:$0xf]
    %v3516 = vld [vmem:[%s2799 + $0x98] sm:$0x1]
    %v3517 = vld [vmem:[%s2799 + $0x9c] sm:$0xf]
    %v3518 = vld [vmem:[%s2799 + $0xa0] sm:$0xf]
    %v3519 = vld [vmem:[%s2799 + $0xa4] sm:$0x1]
    %v3520 = vld [vmem:[%s2799 + $0xa8] sm:$0xf]
    %v3521 = vld [vmem:[%s2799 + $0xac] sm:$0xf]
    %v3522 = vld [vmem:[%s2799 + $0xb0] sm:$0x1]
    %v3523 = vld [vmem:[%s2799 + $0xb4] sm:$0xf]
    %v3524 = vld [vmem:[%s2799 + $0xb8] sm:$0xf]
    %v3525 = vld [vmem:[%s2799 + $0xbc] sm:$0x1]
    %v3526 = vld [vmem:[%s2799 + $0xd8] sm:$0xf]
    %v3527 = vld [vmem:[%s2799 + $0xdc] sm:$0xf]
    %v3528 = vld [vmem:[%s2799 + $0xe0] sm:$0x1]
    %v3529 = vld [vmem:[%s2799 + $0xe4] sm:$0xf]
    %v3530 = vld [vmem:[%s2799 + $0xe8] sm:$0xf]
    %v3531 = vld [vmem:[%s2799 + $0xec] sm:$0x1]
    %v3532 = vld [vmem:[%s2799 + $0xf0] sm:$0xf]
    %v3533 = vld [vmem:[%s2799 + $0xf4] sm:$0xf]
    %v3534 = vld [vmem:[%s2799 + $0xf8] sm:$0x1]
    %v3535 = vld [vmem:[%s2799 + $0xfc] sm:$0xf]
    %v3536 = vld [vmem:[%s2799 + $0x100] sm:$0xf]
    %v3537 = vld [vmem:[%s2799 + $0x104] sm:$0x1]
    %v3538 = vld [vmem:[%s2799 + $0x108] sm:$0xf]
    %v3539 = vld [vmem:[%s2799 + $0x10c] sm:$0xf]
    %v3540 = vld [vmem:[%s2799 + $0x110] sm:$0x1]
    %v3541 = vld [vmem:[%s2799 + $0x114] sm:$0xf]
    %v3542 = vld [vmem:[%s2799 + $0x118] sm:$0xf]
    %v3543 = vld [vmem:[%s2799 + $0x11c] sm:$0x1]
    %v3544 = vld [vmem:[%s2799 + $0x120] sm:$0xf]
    %v3545 = vld [vmem:[%s2799 + $0x124] sm:$0xf]
    %v3546 = vld [vmem:[%s2799 + $0x128] sm:$0x1]
    %v3547 = vld [vmem:[%s2799 + $0x12c] sm:$0xf]
    %v3548 = vld [vmem:[%s2799 + $0x130] sm:$0xf]
    %v3549 = vld [vmem:[%s2799 + $0x134] sm:$0x1]
    %v3550 = vld [vmem:[%s2799 + $0x138] sm:$0xf]
    %v3551 = vld [vmem:[%s2799 + $0x13c] sm:$0xf]
    %v3552 = vld [vmem:[%s2799 + $0x140] sm:$0x1]
    %v3553 = vld [vmem:[%s2799 + $0x144] sm:$0xf]
    %v3554 = vld [vmem:[%s2799 + $0x148] sm:$0xf]
    %v3555 = vld [vmem:[%s2799 + $0x14c] sm:$0x1]
    %v3556 = vld [vmem:[%s2799 + $0x150] sm:$0xf]
    %v3557 = vld [vmem:[%s2799 + $0x154] sm:$0xf]
    %v3558 = vld [vmem:[%s2799 + $0x158] sm:$0x1]
    %v3559 = vld [vmem:[%s2799 + $0x15c] sm:$0xf]
    %v3560 = vld [vmem:[%s2799 + $0x160] sm:$0xf]
    %v3561 = vld [vmem:[%s2799 + $0x164] sm:$0x1]
    %v3562 = vld [vmem:[%s2799 + $0x168] sm:$0xf]
    %v3563 = vld [vmem:[%s2799 + $0x16c] sm:$0xf]
    %v3564 = vld [vmem:[%s2799 + $0x170] sm:$0x1]
    %v3565 = vld [vmem:[%s2799 + $0x174] sm:$0xf]
    %v3566 = vld [vmem:[%s2799 + $0x178] sm:$0xf]
    %v3567 = vld [vmem:[%s2799 + $0x17c] sm:$0x1]
    %v3568 = vld [vmem:[%s2799 + $0x180] sm:$0xf]
    %v3569 = vld [vmem:[%s2799 + $0x184] sm:$0xf]
    %v3570 = vld [vmem:[%s2799 + $0x188] sm:$0x1]
    %v3571 = vld [vmem:[%s2799 + $0x18c] sm:$0xf]
    %v3572 = vld [vmem:[%s2799 + $0x190] sm:$0xf]
    %v3573 = vld [vmem:[%s2799 + $0x194] sm:$0x1]
    %v3575 = vshrl.u32 %v3478, 16
    %v3577 = vrot.slane %v3575, 4
    %v3578 = vshll.u32 %v3478, 16
    %v3580 = vrot.slane %v3578, 5
    %v3581 = vor.u32 %v3577, %v3580
    %v3582 = vrot.slane %v3581, 4
    %v3584 = vshll.u32 %v3479, 16
    %v3586 = vrot.slane %v3584, 5
    %v3587 = vsel %vm121, %v3582, %v3586
    %v3588 = vshrl.u32 %v3479, 16
    %v3590 = vrot.slane %v3588, 4
    %v3591 = vor.u32 %v3590, %v3586
    %v3592 = vrot.slane %v3591, 4
    %v3594 = vshll.u32 %v3480, 16
    %v3596 = vrot.slane %v3594, 5
    %v3597 = vsel %vm121, %v3592, %v3596
    %v3599 = vshrl.u32 %v3481, 16
    %v3601 = vrot.slane %v3599, 4
    %v3602 = vshll.u32 %v3481, 16
    %v3604 = vrot.slane %v3602, 5
    %v3605 = vor.u32 %v3601, %v3604
    %v3606 = vrot.slane %v3605, 4
    %v3608 = vshll.u32 %v3482, 16
    %v3610 = vrot.slane %v3608, 5
    %v3611 = vsel %vm121, %v3606, %v3610
    %v3612 = vshrl.u32 %v3482, 16
    %v3614 = vrot.slane %v3612, 4
    %v3615 = vor.u32 %v3614, %v3610
    %v3616 = vrot.slane %v3615, 4
    %v3618 = vshll.u32 %v3483, 16
    %v3620 = vrot.slane %v3618, 5
    %v3621 = vsel %vm121, %v3616, %v3620
    %v3623 = vshrl.u32 %v3484, 16
    %v3625 = vrot.slane %v3623, 4
    %v3626 = vshll.u32 %v3484, 16
    %v3628 = vrot.slane %v3626, 5
    %v3629 = vor.u32 %v3625, %v3628
    %v3630 = vrot.slane %v3629, 4
    %v3632 = vshll.u32 %v3485, 16
    %v3634 = vrot.slane %v3632, 5
    %v3635 = vsel %vm121, %v3630, %v3634
    %v3636 = vshrl.u32 %v3485, 16
    %v3638 = vrot.slane %v3636, 4
    %v3639 = vor.u32 %v3638, %v3634
    %v3640 = vrot.slane %v3639, 4
    %v3642 = vshll.u32 %v3486, 16
    %v3644 = vrot.slane %v3642, 5
    %v3645 = vsel %vm121, %v3640, %v3644
    %v3647 = vshrl.u32 %v3487, 16
    %v3649 = vrot.slane %v3647, 4
    %v3650 = vshll.u32 %v3487, 16
    %v3652 = vrot.slane %v3650, 5
    %v3653 = vor.u32 %v3649, %v3652
    %v3654 = vrot.slane %v3653, 4
    %v3656 = vshll.u32 %v3488, 16
    %v3658 = vrot.slane %v3656, 5
    %v3659 = vsel %vm121, %v3654, %v3658
    %v3660 = vshrl.u32 %v3488, 16
    %v3662 = vrot.slane %v3660, 4
    %v3663 = vor.u32 %v3662, %v3658
    %v3664 = vrot.slane %v3663, 4
    %v3666 = vshll.u32 %v3489, 16
    %v3668 = vrot.slane %v3666, 5
    %v3669 = vsel %vm121, %v3664, %v3668
    %v3671 = vshrl.u32 %v3490, 16
    %v3673 = vrot.slane %v3671, 4
    %v3674 = vshll.u32 %v3490, 16
    %v3676 = vrot.slane %v3674, 5
    %v3677 = vor.u32 %v3673, %v3676
    %v3678 = vrot.slane %v3677, 4
    %v3680 = vshll.u32 %v3491, 16
    %v3682 = vrot.slane %v3680, 5
    %v3683 = vsel %vm121, %v3678, %v3682
    %v3684 = vshrl.u32 %v3491, 16
    %v3686 = vrot.slane %v3684, 4
    %v3687 = vor.u32 %v3686, %v3682
    %v3688 = vrot.slane %v3687, 4
    %v3690 = vshll.u32 %v3492, 16
    %v3692 = vrot.slane %v3690, 5
    %v3693 = vsel %vm121, %v3688, %v3692
    %v3695 = vshrl.u32 %v3493, 16
    %v3697 = vrot.slane %v3695, 4
    %v3698 = vshll.u32 %v3493, 16
    %v3700 = vrot.slane %v3698, 5
    %v3701 = vor.u32 %v3697, %v3700
    %v3702 = vrot.slane %v3701, 4
    %v3704 = vshll.u32 %v3494, 16
    %v3706 = vrot.slane %v3704, 5
    %v3707 = vsel %vm121, %v3702, %v3706
    %v3708 = vshrl.u32 %v3494, 16
    %v3710 = vrot.slane %v3708, 4
    %v3711 = vor.u32 %v3710, %v3706
    %v3712 = vrot.slane %v3711, 4
    %v3714 = vshll.u32 %v3495, 16
    %v3716 = vrot.slane %v3714, 5
    %v3717 = vsel %vm121, %v3712, %v3716
    %v3719 = vshrl.u32 %v3496, 16
    %v3721 = vrot.slane %v3719, 4
    %v3722 = vshll.u32 %v3496, 16
    %v3724 = vrot.slane %v3722, 5
    %v3725 = vor.u32 %v3721, %v3724
    %v3726 = vrot.slane %v3725, 4
    %v3728 = vshll.u32 %v3497, 16
    %v3730 = vrot.slane %v3728, 5
    %v3731 = vsel %vm121, %v3726, %v3730
    %v3732 = vshrl.u32 %v3497, 16
    %v3734 = vrot.slane %v3732, 4
    %v3735 = vor.u32 %v3734, %v3730
    %v3736 = vrot.slane %v3735, 4
    %v3738 = vshll.u32 %v3498, 16
    %v3740 = vrot.slane %v3738, 5
    %v3741 = vsel %vm121, %v3736, %v3740
    %v3743 = vshrl.u32 %v3499, 16
    %v3745 = vrot.slane %v3743, 4
    %v3746 = vshll.u32 %v3499, 16
    %v3748 = vrot.slane %v3746, 5
    %v3749 = vor.u32 %v3745, %v3748
    %v3750 = vrot.slane %v3749, 4
    %v3752 = vshll.u32 %v3500, 16
    %v3754 = vrot.slane %v3752, 5
    %v3755 = vsel %vm121, %v3750, %v3754
    %v3756 = vshrl.u32 %v3500, 16
    %v3758 = vrot.slane %v3756, 4
    %v3759 = vor.u32 %v3758, %v3754
    %v3760 = vrot.slane %v3759, 4
    %v3762 = vshll.u32 %v3501, 16
    %v3764 = vrot.slane %v3762, 5
    %v3765 = vsel %vm121, %v3760, %v3764
    %v3767 = vshrl.u32 %v3502, 16
    %v3769 = vrot.slane %v3767, 4
    %v3770 = vshll.u32 %v3502, 16
    %v3772 = vrot.slane %v3770, 5
    %v3773 = vor.u32 %v3769, %v3772
    %v3774 = vrot.slane %v3773, 4
    %v3776 = vshll.u32 %v3503, 16
    %v3778 = vrot.slane %v3776, 5
    %v3779 = vsel %vm121, %v3774, %v3778
    %v3780 = vshrl.u32 %v3503, 16
    %v3782 = vrot.slane %v3780, 4
    %v3783 = vor.u32 %v3782, %v3778
    %v3784 = vrot.slane %v3783, 4
    %v3786 = vshll.u32 %v3504, 16
    %v3788 = vrot.slane %v3786, 5
    %v3789 = vsel %vm121, %v3784, %v3788
    %v3791 = vshrl.u32 %v3505, 16
    %v3793 = vrot.slane %v3791, 4
    %v3794 = vshll.u32 %v3505, 16
    %v3796 = vrot.slane %v3794, 5
    %v3797 = vor.u32 %v3793, %v3796
    %v3798 = vrot.slane %v3797, 4
    %v3800 = vshll.u32 %v3506, 16
    %v3802 = vrot.slane %v3800, 5
    %v3803 = vsel %vm121, %v3798, %v3802
    %v3804 = vshrl.u32 %v3506, 16
    %v3806 = vrot.slane %v3804, 4
    %v3807 = vor.u32 %v3806, %v3802
    %v3808 = vrot.slane %v3807, 4
    %v3810 = vshll.u32 %v3507, 16
    %v3812 = vrot.slane %v3810, 5
    %v3813 = vsel %vm121, %v3808, %v3812
    %v3815 = vshrl.u32 %v3508, 16
    %v3817 = vrot.slane %v3815, 4
    %v3818 = vshll.u32 %v3508, 16
    %v3820 = vrot.slane %v3818, 5
    %v3821 = vor.u32 %v3817, %v3820
    %v3822 = vrot.slane %v3821, 4
    %v3824 = vshll.u32 %v3509, 16
    %v3826 = vrot.slane %v3824, 5
    %v3827 = vsel %vm121, %v3822, %v3826
    %v3828 = vshrl.u32 %v3509, 16
    %v3830 = vrot.slane %v3828, 4
    %v3831 = vor.u32 %v3830, %v3826
    %v3832 = vrot.slane %v3831, 4
    %v3834 = vshll.u32 %v3510, 16
    %v3836 = vrot.slane %v3834, 5
    %v3837 = vsel %vm121, %v3832, %v3836
    %v3839 = vshrl.u32 %v3511, 16
    %v3841 = vrot.slane %v3839, 4
    %v3842 = vshll.u32 %v3511, 16
    %v3844 = vrot.slane %v3842, 5
    %v3845 = vor.u32 %v3841, %v3844
    %v3846 = vrot.slane %v3845, 4
    %v3848 = vshll.u32 %v3512, 16
    %v3850 = vrot.slane %v3848, 5
    %v3851 = vsel %vm121, %v3846, %v3850
    %v3852 = vshrl.u32 %v3512, 16
    %v3854 = vrot.slane %v3852, 4
    %v3855 = vor.u32 %v3854, %v3850
    %v3856 = vrot.slane %v3855, 4
    %v3858 = vshll.u32 %v3513, 16
    %v3860 = vrot.slane %v3858, 5
    %v3861 = vsel %vm121, %v3856, %v3860
    %v3863 = vshrl.u32 %v3514, 16
    %v3865 = vrot.slane %v3863, 4
    %v3866 = vshll.u32 %v3514, 16
    %v3868 = vrot.slane %v3866, 5
    %v3869 = vor.u32 %v3865, %v3868
    %v3870 = vrot.slane %v3869, 4
    %v3872 = vshll.u32 %v3515, 16
    %v3874 = vrot.slane %v3872, 5
    %v3875 = vsel %vm121, %v3870, %v3874
    %v3876 = vshrl.u32 %v3515, 16
    %v3878 = vrot.slane %v3876, 4
    %v3879 = vor.u32 %v3878, %v3874
    %v3880 = vrot.slane %v3879, 4
    %v3882 = vshll.u32 %v3516, 16
    %v3884 = vrot.slane %v3882, 5
    %v3885 = vsel %vm121, %v3880, %v3884
    %v3887 = vshrl.u32 %v3517, 16
    %v3889 = vrot.slane %v3887, 4
    %v3890 = vshll.u32 %v3517, 16
    %v3892 = vrot.slane %v3890, 5
    %v3893 = vor.u32 %v3889, %v3892
    %v3894 = vrot.slane %v3893, 4
    %v3896 = vshll.u32 %v3518, 16
    %v3898 = vrot.slane %v3896, 5
    %v3899 = vsel %vm121, %v3894, %v3898
    %v3900 = vshrl.u32 %v3518, 16
    %v3902 = vrot.slane %v3900, 4
    %v3903 = vor.u32 %v3902, %v3898
    %v3904 = vrot.slane %v3903, 4
    %v3906 = vshll.u32 %v3519, 16
    %v3908 = vrot.slane %v3906, 5
    %v3909 = vsel %vm121, %v3904, %v3908
    %v3911 = vshrl.u32 %v3520, 16
    %v3913 = vrot.slane %v3911, 4
    %v3914 = vshll.u32 %v3520, 16
    %v3916 = vrot.slane %v3914, 5
    %v3917 = vor.u32 %v3913, %v3916
    %v3918 = vrot.slane %v3917, 4
    %v3920 = vshll.u32 %v3521, 16
    %v3922 = vrot.slane %v3920, 5
    %v3923 = vsel %vm121, %v3918, %v3922
    %v3924 = vshrl.u32 %v3521, 16
    %v3926 = vrot.slane %v3924, 4
    %v3927 = vor.u32 %v3926, %v3922
    %v3928 = vrot.slane %v3927, 4
    %v3930 = vshll.u32 %v3522, 16
    %v3932 = vrot.slane %v3930, 5
    %v3933 = vsel %vm121, %v3928, %v3932
    %v3935 = vshrl.u32 %v3523, 16
    %v3937 = vrot.slane %v3935, 4
    %v3938 = vshll.u32 %v3523, 16
    %v3940 = vrot.slane %v3938, 5
    %v3941 = vor.u32 %v3937, %v3940
    %v3942 = vrot.slane %v3941, 4
    %v3944 = vshll.u32 %v3524, 16
    %v3946 = vrot.slane %v3944, 5
    %v3947 = vsel %vm121, %v3942, %v3946
    %v3948 = vshrl.u32 %v3524, 16
    %v3950 = vrot.slane %v3948, 4
    %v3951 = vor.u32 %v3950, %v3946
    %v3952 = vrot.slane %v3951, 4
    %v3954 = vshll.u32 %v3525, 16
    %v3956 = vrot.slane %v3954, 5
    %v3957 = vsel %vm121, %v3952, %v3956
    %v3959 = vshrl.u32 %v3526, 16
    %v3961 = vrot.slane %v3959, 4
    %v3962 = vshll.u32 %v3526, 16
    %v3964 = vrot.slane %v3962, 5
    %v3965 = vor.u32 %v3961, %v3964
    %v3966 = vrot.slane %v3965, 4
    %v3968 = vshll.u32 %v3527, 16
    %v3970 = vrot.slane %v3968, 5
    %v3971 = vsel %vm121, %v3966, %v3970
    %v3972 = vshrl.u32 %v3527, 16
    %v3974 = vrot.slane %v3972, 4
    %v3975 = vor.u32 %v3974, %v3970
    %v3976 = vrot.slane %v3975, 4
    %v3978 = vshll.u32 %v3528, 16
    %v3980 = vrot.slane %v3978, 5
    %v3981 = vsel %vm121, %v3976, %v3980
    %v3983 = vshrl.u32 %v3529, 16
    %v3985 = vrot.slane %v3983, 4
    %v3986 = vshll.u32 %v3529, 16
    %v3988 = vrot.slane %v3986, 5
    %v3989 = vor.u32 %v3985, %v3988
    %v3990 = vrot.slane %v3989, 4
    %v3992 = vshll.u32 %v3530, 16
    %v3994 = vrot.slane %v3992, 5
    %v3995 = vsel %vm121, %v3990, %v3994
    %v3996 = vshrl.u32 %v3530, 16
    %v3998 = vrot.slane %v3996, 4
    %v3999 = vor.u32 %v3998, %v3994
    %v4000 = vrot.slane %v3999, 4
    %v4002 = vshll.u32 %v3531, 16
    %v4004 = vrot.slane %v4002, 5
    %v4005 = vsel %vm121, %v4000, %v4004
    %v4007 = vshrl.u32 %v3532, 16
    %v4009 = vrot.slane %v4007, 4
    %v4010 = vshll.u32 %v3532, 16
    %v4012 = vrot.slane %v4010, 5
    %v4013 = vor.u32 %v4009, %v4012
    %v4014 = vrot.slane %v4013, 4
    %v4016 = vshll.u32 %v3533, 16
    %v4018 = vrot.slane %v4016, 5
    %v4019 = vsel %vm121, %v4014, %v4018
    %v4020 = vshrl.u32 %v3533, 16
    %v4022 = vrot.slane %v4020, 4
    %v4023 = vor.u32 %v4022, %v4018
    %v4024 = vrot.slane %v4023, 4
    %v4026 = vshll.u32 %v3534, 16
    %v4028 = vrot.slane %v4026, 5
    %v4029 = vsel %vm121, %v4024, %v4028
    %v4031 = vshrl.u32 %v3535, 16
    %v4033 = vrot.slane %v4031, 4
    %v4034 = vshll.u32 %v3535, 16
    %v4036 = vrot.slane %v4034, 5
    %v4037 = vor.u32 %v4033, %v4036
    %v4038 = vrot.slane %v4037, 4
    %v4040 = vshll.u32 %v3536, 16
    %v4042 = vrot.slane %v4040, 5
    %v4043 = vsel %vm121, %v4038, %v4042
    %v4044 = vshrl.u32 %v3536, 16
    %v4046 = vrot.slane %v4044, 4
    %v4047 = vor.u32 %v4046, %v4042
    %v4048 = vrot.slane %v4047, 4
    %v4050 = vshll.u32 %v3537, 16
    %v4052 = vrot.slane %v4050, 5
    %v4053 = vsel %vm121, %v4048, %v4052
    %v4055 = vshrl.u32 %v3538, 16
    %v4057 = vrot.slane %v4055, 4
    %v4058 = vshll.u32 %v3538, 16
    %v4060 = vrot.slane %v4058, 5
    %v4061 = vor.u32 %v4057, %v4060
    %v4062 = vrot.slane %v4061, 4
    %v4064 = vshll.u32 %v3539, 16
    %v4066 = vrot.slane %v4064, 5
    %v4067 = vsel %vm121, %v4062, %v4066
    %v4068 = vshrl.u32 %v3539, 16
    %v4070 = vrot.slane %v4068, 4
    %v4071 = vor.u32 %v4070, %v4066
    %v4072 = vrot.slane %v4071, 4
    %v4074 = vshll.u32 %v3540, 16
    %v4076 = vrot.slane %v4074, 5
    %v4077 = vsel %vm121, %v4072, %v4076
    %v4079 = vshrl.u32 %v3541, 16
    %v4081 = vrot.slane %v4079, 4
    %v4082 = vshll.u32 %v3541, 16
    %v4084 = vrot.slane %v4082, 5
    %v4085 = vor.u32 %v4081, %v4084
    %v4086 = vrot.slane %v4085, 4
    %v4088 = vshll.u32 %v3542, 16
    %v4090 = vrot.slane %v4088, 5
    %v4091 = vsel %vm121, %v4086, %v4090
    %v4092 = vshrl.u32 %v3542, 16
    %v4094 = vrot.slane %v4092, 4
    %v4095 = vor.u32 %v4094, %v4090
    %v4096 = vrot.slane %v4095, 4
    %v4098 = vshll.u32 %v3543, 16
    %v4100 = vrot.slane %v4098, 5
    %v4101 = vsel %vm121, %v4096, %v4100
    %v4103 = vshrl.u32 %v3544, 16
    %v4105 = vrot.slane %v4103, 4
    %v4106 = vshll.u32 %v3544, 16
    %v4108 = vrot.slane %v4106, 5
    %v4109 = vor.u32 %v4105, %v4108
    %v4110 = vrot.slane %v4109, 4
    %v4112 = vshll.u32 %v3545, 16
    %v4114 = vrot.slane %v4112, 5
    %v4115 = vsel %vm121, %v4110, %v4114
    %v4116 = vshrl.u32 %v3545, 16
    %v4118 = vrot.slane %v4116, 4
    %v4119 = vor.u32 %v4118, %v4114
    %v4120 = vrot.slane %v4119, 4
    %v4122 = vshll.u32 %v3546, 16
    %v4124 = vrot.slane %v4122, 5
    %v4125 = vsel %vm121, %v4120, %v4124
    %v4127 = vshrl.u32 %v3547, 16
    %v4129 = vrot.slane %v4127, 4
    %v4130 = vshll.u32 %v3547, 16
    %v4132 = vrot.slane %v4130, 5
    %v4133 = vor.u32 %v4129, %v4132
    %v4134 = vrot.slane %v4133, 4
    %v4136 = vshll.u32 %v3548, 16
    %v4138 = vrot.slane %v4136, 5
    %v4139 = vsel %vm121, %v4134, %v4138
    %v4140 = vshrl.u32 %v3548, 16
    %v4142 = vrot.slane %v4140, 4
    %v4143 = vor.u32 %v4142, %v4138
    %v4144 = vrot.slane %v4143, 4
    %v4146 = vshll.u32 %v3549, 16
    %v4148 = vrot.slane %v4146, 5
    %v4149 = vsel %vm121, %v4144, %v4148
    %v4151 = vshrl.u32 %v3550, 16
    %v4153 = vrot.slane %v4151, 4
    %v4154 = vshll.u32 %v3550, 16
    %v4156 = vrot.slane %v4154, 5
    %v4157 = vor.u32 %v4153, %v4156
    %v4158 = vrot.slane %v4157, 4
    %v4160 = vshll.u32 %v3551, 16
    %v4162 = vrot.slane %v4160, 5
    %v4163 = vsel %vm121, %v4158, %v4162
    %v4164 = vshrl.u32 %v3551, 16
    %v4166 = vrot.slane %v4164, 4
    %v4167 = vor.u32 %v4166, %v4162
    %v4168 = vrot.slane %v4167, 4
    %v4170 = vshll.u32 %v3552, 16
    %v4172 = vrot.slane %v4170, 5
    %v4173 = vsel %vm121, %v4168, %v4172
    %v4175 = vshrl.u32 %v3553, 16
    %v4177 = vrot.slane %v4175, 4
    %v4178 = vshll.u32 %v3553, 16
    %v4180 = vrot.slane %v4178, 5
    %v4181 = vor.u32 %v4177, %v4180
    %v4182 = vrot.slane %v4181, 4
    %v4184 = vshll.u32 %v3554, 16
    %v4186 = vrot.slane %v4184, 5
    %v4187 = vsel %vm121, %v4182, %v4186
    %v4188 = vshrl.u32 %v3554, 16
    %v4190 = vrot.slane %v4188, 4
    %v4191 = vor.u32 %v4190, %v4186
    %v4192 = vrot.slane %v4191, 4
    %v4194 = vshll.u32 %v3555, 16
    %v4196 = vrot.slane %v4194, 5
    %v4197 = vsel %vm121, %v4192, %v4196
    %v4199 = vshrl.u32 %v3556, 16
    %v4201 = vrot.slane %v4199, 4
    %v4202 = vshll.u32 %v3556, 16
    %v4204 = vrot.slane %v4202, 5
    %v4205 = vor.u32 %v4201, %v4204
    %v4206 = vrot.slane %v4205, 4
    %v4208 = vshll.u32 %v3557, 16
    %v4210 = vrot.slane %v4208, 5
    %v4211 = vsel %vm121, %v4206, %v4210
    %v4212 = vshrl.u32 %v3557, 16
    %v4214 = vrot.slane %v4212, 4
    %v4215 = vor.u32 %v4214, %v4210
    %v4216 = vrot.slane %v4215, 4
    %v4218 = vshll.u32 %v3558, 16
    %v4220 = vrot.slane %v4218, 5
    %v4221 = vsel %vm121, %v4216, %v4220
    %v4223 = vshrl.u32 %v3559, 16
    %v4225 = vrot.slane %v4223, 4
    %v4226 = vshll.u32 %v3559, 16
    %v4228 = vrot.slane %v4226, 5
    %v4229 = vor.u32 %v4225, %v4228
    %v4230 = vrot.slane %v4229, 4
    %v4232 = vshll.u32 %v3560, 16
    %v4234 = vrot.slane %v4232, 5
    %v4235 = vsel %vm121, %v4230, %v4234
    %v4236 = vshrl.u32 %v3560, 16
    %v4238 = vrot.slane %v4236, 4
    %v4239 = vor.u32 %v4238, %v4234
    %v4240 = vrot.slane %v4239, 4
    %v4242 = vshll.u32 %v3561, 16
    %v4244 = vrot.slane %v4242, 5
    %v4245 = vsel %vm121, %v4240, %v4244
    %v4247 = vshrl.u32 %v3562, 16
    %v4249 = vrot.slane %v4247, 4
    %v4250 = vshll.u32 %v3562, 16
    %v4252 = vrot.slane %v4250, 5
    %v4253 = vor.u32 %v4249, %v4252
    %v4254 = vrot.slane %v4253, 4
    %v4256 = vshll.u32 %v3563, 16
    %v4258 = vrot.slane %v4256, 5
    %v4259 = vsel %vm121, %v4254, %v4258
    %v4260 = vshrl.u32 %v3563, 16
    %v4262 = vrot.slane %v4260, 4
    %v4263 = vor.u32 %v4262, %v4258
    %v4264 = vrot.slane %v4263, 4
    %v4266 = vshll.u32 %v3564, 16
    %v4268 = vrot.slane %v4266, 5
    %v4269 = vsel %vm121, %v4264, %v4268
    %v4271 = vshrl.u32 %v3565, 16
    %v4273 = vrot.slane %v4271, 4
    %v4274 = vshll.u32 %v3565, 16
    %v4276 = vrot.slane %v4274, 5
    %v4277 = vor.u32 %v4273, %v4276
    %v4278 = vrot.slane %v4277, 4
    %v4280 = vshll.u32 %v3566, 16
    %v4282 = vrot.slane %v4280, 5
    %v4283 = vsel %vm121, %v4278, %v4282
    %v4284 = vshrl.u32 %v3566, 16
    %v4286 = vrot.slane %v4284, 4
    %v4287 = vor.u32 %v4286, %v4282
    %v4288 = vrot.slane %v4287, 4
    %v4290 = vshll.u32 %v3567, 16
    %v4292 = vrot.slane %v4290, 5
    %v4293 = vsel %vm121, %v4288, %v4292
    %v4295 = vshrl.u32 %v3568, 16
    %v4297 = vrot.slane %v4295, 4
    %v4298 = vshll.u32 %v3568, 16
    %v4300 = vrot.slane %v4298, 5
    %v4301 = vor.u32 %v4297, %v4300
    %v4302 = vrot.slane %v4301, 4
    %v4304 = vshll.u32 %v3569, 16
    %v4306 = vrot.slane %v4304, 5
    %v4307 = vsel %vm121, %v4302, %v4306
    %v4308 = vshrl.u32 %v3569, 16
    %v4310 = vrot.slane %v4308, 4
    %v4311 = vor.u32 %v4310, %v4306
    %v4312 = vrot.slane %v4311, 4
    %v4314 = vshll.u32 %v3570, 16
    %v4316 = vrot.slane %v4314, 5
    %v4317 = vsel %vm121, %v4312, %v4316
    %v4319 = vshrl.u32 %v3571, 16
    %v4321 = vrot.slane %v4319, 4
    %v4322 = vshll.u32 %v3571, 16
    %v4324 = vrot.slane %v4322, 5
    %v4325 = vor.u32 %v4321, %v4324
    %v4326 = vrot.slane %v4325, 4
    %v4328 = vshll.u32 %v3572, 16
    %v4330 = vrot.slane %v4328, 5
    %v4331 = vsel %vm121, %v4326, %v4330
    %v4332 = vshrl.u32 %v3572, 16
    %v4334 = vrot.slane %v4332, 4
    %v4335 = vor.u32 %v4334, %v4330
    %v4336 = vrot.slane %v4335, 4
    %v4338 = vshll.u32 %v3573, 16
    %v4340 = vrot.slane %v4338, 5
    %v4341 = vsel %vm121, %v4336, %v4340
    %s4342 = scalar_lea.vmem %s1, 8
    %v4343 = vld [vmem:[%s4342] sm:$0x3]
    %v4344 = vunpack.c.l.b16 %v3587
    %v4345 = vunpack.c.l.b16 %v3597
    %v4346 = vunpack.c.l.b16 %v3611
    %v4347 = vunpack.c.l.b16 %v3621
    %v4348 = vunpack.c.l.b16 %v3635
    %v4349 = vunpack.c.l.b16 %v3645
    %v4350 = vunpack.c.l.b16 %v3659
    %v4351 = vunpack.c.l.b16 %v3669
    %v4352 = vunpack.c.l.b16 %v3683
    %v4353 = vunpack.c.l.b16 %v3693
    %v4354 = vunpack.c.l.b16 %v3707
    %v4355 = vunpack.c.l.b16 %v3717
    %v4356 = vunpack.c.l.b16 %v3731
    %v4357 = vunpack.c.l.b16 %v3741
    %v4358 = vunpack.c.l.b16 %v3755
    %v4359 = vunpack.c.l.b16 %v3765
    %v4360 = vunpack.c.l.b16 %v3779
    %v4361 = vunpack.c.l.b16 %v3789
    %v4362 = vunpack.c.l.b16 %v3803
    %v4363 = vunpack.c.l.b16 %v3813
    %v4364 = vunpack.c.l.b16 %v3827
    %v4365 = vunpack.c.l.b16 %v3837
    %v4366 = vunpack.c.l.b16 %v3851
    %v4367 = vunpack.c.l.b16 %v3861
    %v4368 = vunpack.c.l.b16 %v3875
    %v4369 = vunpack.c.l.b16 %v3885
    %v4370 = vunpack.c.l.b16 %v3899
    %v4371 = vunpack.c.l.b16 %v3909
    %v4372 = vunpack.c.l.b16 %v3923
    %v4373 = vunpack.c.l.b16 %v3933
    %v4374 = vunpack.c.l.b16 %v3947
    %v4375 = vunpack.c.l.b16 %v3957
    %v4376 = vunpack.c.l.b16 %v3971
    %v4377 = vunpack.c.l.b16 %v3981
    %v4378 = vunpack.c.l.b16 %v3995
    %v4379 = vunpack.c.l.b16 %v4005
    %v4380 = vunpack.c.l.b16 %v4019
    %v4381 = vunpack.c.l.b16 %v4029
    %v4382 = vunpack.c.l.b16 %v4043
    %v4383 = vunpack.c.l.b16 %v4053
    %v4384 = vunpack.c.l.b16 %v4067
    %v4385 = vunpack.c.l.b16 %v4077
    %v4386 = vunpack.c.l.b16 %v4091
    %v4387 = vunpack.c.l.b16 %v4101
    %v4388 = vunpack.c.l.b16 %v4115
    %v4389 = vunpack.c.l.b16 %v4125
    %v4390 = vunpack.c.l.b16 %v4139
    %v4391 = vunpack.c.l.b16 %v4149
    %v4392 = vunpack.c.l.b16 %v4163
    %v4393 = vunpack.c.l.b16 %v4173
    %v4394 = vunpack.c.l.b16 %v4187
    %v4395 = vunpack.c.l.b16 %v4197
    %v4396 = vunpack.c.l.b16 %v4211
    %v4397 = vunpack.c.l.b16 %v4221
    %v4398 = vunpack.c.l.b16 %v4235
    %v4399 = vunpack.c.l.b16 %v4245
    %v4400 = vunpack.c.l.b16 %v4259
    %v4401 = vunpack.c.l.b16 %v4269
    %v4402 = vunpack.c.l.b16 %v4283
    %v4403 = vunpack.c.l.b16 %v4293
    %v4404 = vunpack.c.l.b16 %v4307
    %v4405 = vunpack.c.l.b16 %v4317
    %v4406 = vunpack.c.l.b16 %v4331
    %v4407 = vunpack.c.l.b16 %v4341
    %v4408 = vpack.c.b16 %v4345, %v4344
    %v4409 = vpack.c.b16 %v4347, %v4346
    %v4410 = vpack.c.b16 %v4349, %v4348
    %v4411 = vpack.c.b16 %v4351, %v4350
    %v4412 = vpack.c.b16 %v4353, %v4352
    %v4413 = vpack.c.b16 %v4355, %v4354
    %v4414 = vpack.c.b16 %v4357, %v4356
    %v4415 = vpack.c.b16 %v4359, %v4358
    %v4416 = vpack.c.b16 %v4361, %v4360
    %v4417 = vpack.c.b16 %v4363, %v4362
    %v4418 = vpack.c.b16 %v4365, %v4364
    %v4419 = vpack.c.b16 %v4367, %v4366
    %v4420 = vpack.c.b16 %v4369, %v4368
    %v4421 = vpack.c.b16 %v4371, %v4370
    %v4422 = vpack.c.b16 %v4373, %v4372
    %v4423 = vpack.c.b16 %v4375, %v4374
    %v4424 = vpack.c.b16 %v4377, %v4376
    %v4425 = vpack.c.b16 %v4379, %v4378
    %v4426 = vpack.c.b16 %v4381, %v4380
    %v4427 = vpack.c.b16 %v4383, %v4382
    %v4428 = vpack.c.b16 %v4385, %v4384
    %v4429 = vpack.c.b16 %v4387, %v4386
    %v4430 = vpack.c.b16 %v4389, %v4388
    %v4431 = vpack.c.b16 %v4391, %v4390
    %v4432 = vpack.c.b16 %v4393, %v4392
    %v4433 = vpack.c.b16 %v4395, %v4394
    %v4434 = vpack.c.b16 %v4397, %v4396
    %v4435 = vpack.c.b16 %v4399, %v4398
    %v4436 = vpack.c.b16 %v4401, %v4400
    %v4437 = vpack.c.b16 %v4403, %v4402
    %v4438 = vpack.c.b16 %v4405, %v4404
    %v4439 = vpack.c.b16 %v4407, %v4406
    %v4441 = vsel %vm988, %v4408, 0
    %v4444 = vsel %vm988, %v4409, 0
    %v4447 = vsel %vm988, %v4410, 0
    %v4450 = vsel %vm988, %v4411, 0
    %v4453 = vsel %vm988, %v4412, 0
    %v4456 = vsel %vm988, %v4413, 0
    %v4459 = vsel %vm988, %v4414, 0
    %v4462 = vsel %vm988, %v4415, 0
    %v4465 = vsel %vm988, %v4416, 0
    %v4468 = vsel %vm988, %v4417, 0
    %v4471 = vsel %vm988, %v4418, 0
    %v4474 = vsel %vm988, %v4419, 0
    %v4477 = vsel %vm988, %v4420, 0
    %v4480 = vsel %vm988, %v4421, 0
    %v4483 = vsel %vm988, %v4422, 0
    %v4486 = vsel %vm988, %v4423, 0
    %v4489 = vsel %vm988, %v4424, 0
    %v4492 = vsel %vm988, %v4425, 0
    %v4495 = vsel %vm988, %v4426, 0
    %v4498 = vsel %vm988, %v4427, 0
    %v4501 = vsel %vm988, %v4428, 0
    %v4504 = vsel %vm988, %v4429, 0
    %v4507 = vsel %vm988, %v4430, 0
    %v4510 = vsel %vm988, %v4431, 0
    %v4513 = vsel %vm988, %v4432, 0
    %v4516 = vsel %vm988, %v4433, 0
    %v4519 = vsel %vm988, %v4434, 0
    %v4522 = vsel %vm988, %v4435, 0
    %v4525 = vsel %vm988, %v4436, 0
    %v4528 = vsel %vm988, %v4437, 0
    %v4531 = vsel %vm988, %v4438, 0
    %v4534 = vsel %vm988, %v4439, 0
    %v4537 = vsel %vm1085, %v4343, 0
    %4539 = vmatprep.subr.bf16.mxu0 0
    %4540 = vmatpush1.bf16.msra.mxu0 0
    %4541 = vmatprep.subr.bf16.mxu0 0
    %4542 = vmatpush1.bf16.msra.mxu0 0
    %4543 = vmatprep.subr.bf16.mxu0 0
    %4544 = vmatpush1.bf16.msra.mxu0 0
    %4545 = vmatprep.subr.bf16.mxu0 0
    %4546 = vmatpush1.bf16.msra.mxu0 0
    %4547 = vmatprep.subr.bf16.mxu0 0
    %4548 = vmatpush1.bf16.msra.mxu0 0
    %4549 = vmatprep.subr.bf16.mxu0 0
    %4550 = vmatpush1.bf16.msra.mxu0 0
    %4551 = vmatprep.subr.bf16.mxu0 0
    %4552 = vmatpush1.bf16.msra.mxu0 0
    %4553 = vmatprep.subr.bf16.mxu0 0
    %4554 = vmatpush1.bf16.msra.mxu0 %v4537
    %4555 = vmatprep.subr.bf16.mxu0 0
    %4556 = vmatpush2.bf16.msra.mxu0 0
    %4557 = vmatprep.subr.bf16.mxu0 0
    %4558 = vmatpush2.bf16.msra.mxu0 0
    %4559 = vmatprep.subr.bf16.mxu0 0
    %4560 = vmatpush2.bf16.msra.mxu0 0
    %4561 = vmatprep.subr.bf16.mxu0 0
    %4562 = vmatpush2.bf16.msra.mxu0 0
    %4563 = vmatprep.subr.bf16.mxu0 0
    %4564 = vmatpush2.bf16.msra.mxu0 0
    %4565 = vmatprep.subr.bf16.mxu0 0
    %4566 = vmatpush2.bf16.msra.mxu0 0
    %4567 = vmatprep.subr.bf16.mxu0 0
    %4568 = vmatpush2.bf16.msra.mxu0 0
    %4569 = vmatprep.subr.bf16.mxu0 0
    %4570 = vmatpush2.bf16.msra.mxu0 0
    %4571 = vmatprep.mubr.bf16.mxu0 0
    %4572 = vmatmul.mubr.bf16.gmra.mxu0 %v4441
    %v4573 = vpop.f32.mrf.mxu0
    %v4574 = vadd.f32 0.0, %v4573
    %v4575 = vpop.f32.mrf.mxu0
    %v4576 = vpop.f32.mrf.mxu0
    %v4577 = vadd.f32 0.0, %v4576
    %v4578 = vpop.f32.mrf.mxu0
    %4579 = vmatprep.mubr.bf16.mxu0 0
    %4580 = vmatmul.mubr.bf16.gmra.mxu0 %v4444
    %v4581 = vpop.f32.mrf.mxu0
    %v4582 = vadd.f32 0.0, %v4581
    %v4583 = vpop.f32.mrf.mxu0
    %v4584 = vpop.f32.mrf.mxu0
    %v4585 = vadd.f32 0.0, %v4584
    %v4586 = vpop.f32.mrf.mxu0
    %4587 = vmatprep.mubr.bf16.mxu0 0
    %4588 = vmatmul.mubr.bf16.gmra.mxu0 %v4447
    %v4589 = vpop.f32.mrf.mxu0
    %v4590 = vadd.f32 0.0, %v4589
    %v4591 = vpop.f32.mrf.mxu0
    %v4592 = vpop.f32.mrf.mxu0
    %v4593 = vadd.f32 0.0, %v4592
    %v4594 = vpop.f32.mrf.mxu0
    %4595 = vmatprep.mubr.bf16.mxu0 0
    %4596 = vmatmul.mubr.bf16.gmra.mxu0 %v4450
    %v4597 = vpop.f32.mrf.mxu0
    %v4598 = vadd.f32 0.0, %v4597
    %v4599 = vpop.f32.mrf.mxu0
    %v4600 = vpop.f32.mrf.mxu0
    %v4601 = vadd.f32 0.0, %v4600
    %v4602 = vpop.f32.mrf.mxu0
    %4603 = vmatprep.mubr.bf16.mxu0 0
    %4604 = vmatmul.mubr.bf16.gmra.mxu0 %v4453
    %v4605 = vpop.f32.mrf.mxu0
    %v4606 = vadd.f32 0.0, %v4605
    %v4607 = vpop.f32.mrf.mxu0
    %v4608 = vpop.f32.mrf.mxu0
    %v4609 = vadd.f32 0.0, %v4608
    %v4610 = vpop.f32.mrf.mxu0
    %4611 = vmatprep.mubr.bf16.mxu0 0
    %4612 = vmatmul.mubr.bf16.gmra.mxu0 %v4456
    %v4613 = vpop.f32.mrf.mxu0
    %v4614 = vadd.f32 0.0, %v4613
    %v4615 = vpop.f32.mrf.mxu0
    %v4616 = vpop.f32.mrf.mxu0
    %v4617 = vadd.f32 0.0, %v4616
    %v4618 = vpop.f32.mrf.mxu0
    %4619 = vmatprep.mubr.bf16.mxu0 0
    %4620 = vmatmul.mubr.bf16.gmra.mxu0 %v4459
    %v4621 = vpop.f32.mrf.mxu0
    %v4622 = vadd.f32 0.0, %v4621
    %v4623 = vpop.f32.mrf.mxu0
    %v4624 = vpop.f32.mrf.mxu0
    %v4625 = vadd.f32 0.0, %v4624
    %v4626 = vpop.f32.mrf.mxu0
    %4627 = vmatprep.mubr.bf16.mxu0 0
    %4628 = vmatmul.mubr.bf16.gmra.mxu0 %v4462
    %v4629 = vpop.f32.mrf.mxu0
    %v4630 = vadd.f32 0.0, %v4629
    %v4631 = vpop.f32.mrf.mxu0
    %v4632 = vpop.f32.mrf.mxu0
    %v4633 = vadd.f32 0.0, %v4632
    %v4634 = vpop.f32.mrf.mxu0
    %4635 = vmatprep.mubr.bf16.mxu0 0
    %4636 = vmatmul.mubr.bf16.gmra.mxu0 %v4465
    %v4637 = vpop.f32.mrf.mxu0
    %v4638 = vadd.f32 0.0, %v4637
    %v4639 = vpop.f32.mrf.mxu0
    %v4640 = vpop.f32.mrf.mxu0
    %v4641 = vadd.f32 0.0, %v4640
    %v4642 = vpop.f32.mrf.mxu0
    %4643 = vmatprep.mubr.bf16.mxu0 0
    %4644 = vmatmul.mubr.bf16.gmra.mxu0 %v4468
    %v4645 = vpop.f32.mrf.mxu0
    %v4646 = vadd.f32 0.0, %v4645
    %v4647 = vpop.f32.mrf.mxu0
    %v4648 = vpop.f32.mrf.mxu0
    %v4649 = vadd.f32 0.0, %v4648
    %v4650 = vpop.f32.mrf.mxu0
    %4651 = vmatprep.mubr.bf16.mxu0 0
    %4652 = vmatmul.mubr.bf16.gmra.mxu0 %v4471
    %v4653 = vpop.f32.mrf.mxu0
    %v4654 = vadd.f32 0.0, %v4653
    %v4655 = vpop.f32.mrf.mxu0
    %v4656 = vpop.f32.mrf.mxu0
    %v4657 = vadd.f32 0.0, %v4656
    %v4658 = vpop.f32.mrf.mxu0
    %4659 = vmatprep.mubr.bf16.mxu0 0
    %4660 = vmatmul.mubr.bf16.gmra.mxu0 %v4474
    %v4661 = vpop.f32.mrf.mxu0
    %v4662 = vadd.f32 0.0, %v4661
    %v4663 = vpop.f32.mrf.mxu0
    %v4664 = vpop.f32.mrf.mxu0
    %v4665 = vadd.f32 0.0, %v4664
    %v4666 = vpop.f32.mrf.mxu0
    %4667 = vmatprep.mubr.bf16.mxu0 0
    %4668 = vmatmul.mubr.bf16.gmra.mxu0 %v4477
    %v4669 = vpop.f32.mrf.mxu0
    %v4670 = vadd.f32 0.0, %v4669
    %v4671 = vpop.f32.mrf.mxu0
    %v4672 = vpop.f32.mrf.mxu0
    %v4673 = vadd.f32 0.0, %v4672
    %v4674 = vpop.f32.mrf.mxu0
    %4675 = vmatprep.mubr.bf16.mxu0 0
    %4676 = vmatmul.mubr.bf16.gmra.mxu0 %v4480
    %v4677 = vpop.f32.mrf.mxu0
    %v4678 = vadd.f32 0.0, %v4677
    %v4679 = vpop.f32.mrf.mxu0
    %v4680 = vpop.f32.mrf.mxu0
    %v4681 = vadd.f32 0.0, %v4680
    %v4682 = vpop.f32.mrf.mxu0
    %4683 = vmatprep.mubr.bf16.mxu0 0
    %4684 = vmatmul.mubr.bf16.gmra.mxu0 %v4483
    %v4685 = vpop.f32.mrf.mxu0
    %v4686 = vadd.f32 0.0, %v4685
    %v4687 = vpop.f32.mrf.mxu0
    %v4688 = vpop.f32.mrf.mxu0
    %v4689 = vadd.f32 0.0, %v4688
    %v4690 = vpop.f32.mrf.mxu0
    %4691 = vmatprep.mubr.bf16.mxu0 0
    %4692 = vmatmul.mubr.bf16.gmra.mxu0 %v4486
    %v4693 = vpop.f32.mrf.mxu0
    %v4694 = vadd.f32 0.0, %v4693
    %v4695 = vpop.f32.mrf.mxu0
    %v4696 = vpop.f32.mrf.mxu0
    %v4697 = vadd.f32 0.0, %v4696
    %v4698 = vpop.f32.mrf.mxu0
    %4699 = vmatprep.mubr.bf16.mxu0 0
    %4700 = vmatmul.mubr.bf16.gmra.mxu0 %v4489
    %v4701 = vpop.f32.mrf.mxu0
    %v4702 = vadd.f32 0.0, %v4701
    %v4703 = vpop.f32.mrf.mxu0
    %v4704 = vpop.f32.mrf.mxu0
    %v4705 = vadd.f32 0.0, %v4704
    %v4706 = vpop.f32.mrf.mxu0
    %4707 = vmatprep.mubr.bf16.mxu0 0
    %4708 = vmatmul.mubr.bf16.gmra.mxu0 %v4492
    %v4709 = vpop.f32.mrf.mxu0
    %v4710 = vadd.f32 0.0, %v4709
    %v4711 = vpop.f32.mrf.mxu0
    %v4712 = vpop.f32.mrf.mxu0
    %v4713 = vadd.f32 0.0, %v4712
    %v4714 = vpop.f32.mrf.mxu0
    %4715 = vmatprep.mubr.bf16.mxu0 0
    %4716 = vmatmul.mubr.bf16.gmra.mxu0 %v4495
    %v4717 = vpop.f32.mrf.mxu0
    %v4718 = vadd.f32 0.0, %v4717
    %v4719 = vpop.f32.mrf.mxu0
    %v4720 = vpop.f32.mrf.mxu0
    %v4721 = vadd.f32 0.0, %v4720
    %v4722 = vpop.f32.mrf.mxu0
    %4723 = vmatprep.mubr.bf16.mxu0 0
    %4724 = vmatmul.mubr.bf16.gmra.mxu0 %v4498
    %v4725 = vpop.f32.mrf.mxu0
    %v4726 = vadd.f32 0.0, %v4725
    %v4727 = vpop.f32.mrf.mxu0
    %v4728 = vpop.f32.mrf.mxu0
    %v4729 = vadd.f32 0.0, %v4728
    %v4730 = vpop.f32.mrf.mxu0
    %4731 = vmatprep.mubr.bf16.mxu0 0
    %4732 = vmatmul.mubr.bf16.gmra.mxu0 %v4501
    %v4733 = vpop.f32.mrf.mxu0
    %v4734 = vadd.f32 0.0, %v4733
    %v4735 = vpop.f32.mrf.mxu0
    %v4736 = vpop.f32.mrf.mxu0
    %v4737 = vadd.f32 0.0, %v4736
    %v4738 = vpop.f32.mrf.mxu0
    %4739 = vmatprep.mubr.bf16.mxu0 0
    %4740 = vmatmul.mubr.bf16.gmra.mxu0 %v4504
    %v4741 = vpop.f32.mrf.mxu0
    %v4742 = vadd.f32 0.0, %v4741
    %v4743 = vpop.f32.mrf.mxu0
    %v4744 = vpop.f32.mrf.mxu0
    %v4745 = vadd.f32 0.0, %v4744
    %v4746 = vpop.f32.mrf.mxu0
    %4747 = vmatprep.mubr.bf16.mxu0 0
    %4748 = vmatmul.mubr.bf16.gmra.mxu0 %v4507
    %v4749 = vpop.f32.mrf.mxu0
    %v4750 = vadd.f32 0.0, %v4749
    %v4751 = vpop.f32.mrf.mxu0
    %v4752 = vpop.f32.mrf.mxu0
    %v4753 = vadd.f32 0.0, %v4752
    %v4754 = vpop.f32.mrf.mxu0
    %4755 = vmatprep.mubr.bf16.mxu0 0
    %4756 = vmatmul.mubr.bf16.gmra.mxu0 %v4510
    %v4757 = vpop.f32.mrf.mxu0
    %v4758 = vadd.f32 0.0, %v4757
    %v4759 = vpop.f32.mrf.mxu0
    %v4760 = vpop.f32.mrf.mxu0
    %v4761 = vadd.f32 0.0, %v4760
    %v4762 = vpop.f32.mrf.mxu0
    %4763 = vmatprep.mubr.bf16.mxu0 0
    %4764 = vmatmul.mubr.bf16.gmra.mxu0 %v4513
    %v4765 = vpop.f32.mrf.mxu0
    %v4766 = vadd.f32 0.0, %v4765
    %v4767 = vpop.f32.mrf.mxu0
    %v4768 = vpop.f32.mrf.mxu0
    %v4769 = vadd.f32 0.0, %v4768
    %v4770 = vpop.f32.mrf.mxu0
    %4771 = vmatprep.mubr.bf16.mxu0 0
    %4772 = vmatmul.mubr.bf16.gmra.mxu0 %v4516
    %v4773 = vpop.f32.mrf.mxu0
    %v4774 = vadd.f32 0.0, %v4773
    %v4775 = vpop.f32.mrf.mxu0
    %v4776 = vpop.f32.mrf.mxu0
    %v4777 = vadd.f32 0.0, %v4776
    %v4778 = vpop.f32.mrf.mxu0
    %4779 = vmatprep.mubr.bf16.mxu0 0
    %4780 = vmatmul.mubr.bf16.gmra.mxu0 %v4519
    %v4781 = vpop.f32.mrf.mxu0
    %v4782 = vadd.f32 0.0, %v4781
    %v4783 = vpop.f32.mrf.mxu0
    %v4784 = vpop.f32.mrf.mxu0
    %v4785 = vadd.f32 0.0, %v4784
    %v4786 = vpop.f32.mrf.mxu0
    %4787 = vmatprep.mubr.bf16.mxu0 0
    %4788 = vmatmul.mubr.bf16.gmra.mxu0 %v4522
    %v4789 = vpop.f32.mrf.mxu0
    %v4790 = vadd.f32 0.0, %v4789
    %v4791 = vpop.f32.mrf.mxu0
    %v4792 = vpop.f32.mrf.mxu0
    %v4793 = vadd.f32 0.0, %v4792
    %v4794 = vpop.f32.mrf.mxu0
    %4795 = vmatprep.mubr.bf16.mxu0 0
    %4796 = vmatmul.mubr.bf16.gmra.mxu0 %v4525
    %v4797 = vpop.f32.mrf.mxu0
    %v4798 = vadd.f32 0.0, %v4797
    %v4799 = vpop.f32.mrf.mxu0
    %v4800 = vpop.f32.mrf.mxu0
    %v4801 = vadd.f32 0.0, %v4800
    %v4802 = vpop.f32.mrf.mxu0
    %4803 = vmatprep.mubr.bf16.mxu0 0
    %4804 = vmatmul.mubr.bf16.gmra.mxu0 %v4528
    %v4805 = vpop.f32.mrf.mxu0
    %v4806 = vadd.f32 0.0, %v4805
    %v4807 = vpop.f32.mrf.mxu0
    %v4808 = vpop.f32.mrf.mxu0
    %v4809 = vadd.f32 0.0, %v4808
    %v4810 = vpop.f32.mrf.mxu0
    %4811 = vmatprep.mubr.bf16.mxu0 0
    %4812 = vmatmul.mubr.bf16.gmra.mxu0 %v4531
    %v4813 = vpop.f32.mrf.mxu0
    %v4814 = vadd.f32 0.0, %v4813
    %v4815 = vpop.f32.mrf.mxu0
    %v4816 = vpop.f32.mrf.mxu0
    %v4817 = vadd.f32 0.0, %v4816
    %v4818 = vpop.f32.mrf.mxu0
    %4819 = vmatprep.mubr.bf16.mxu0 0
    %4820 = vmatmul.mubr.bf16.gmra.mxu0 %v4534
    %v4821 = vpop.f32.mrf.mxu0
    %v4822 = vadd.f32 0.0, %v4821
    %v4823 = vpop.f32.mrf.mxu0
    %v4824 = vpop.f32.mrf.mxu0
    %v4825 = vadd.f32 0.0, %v4824
    %v4826 = vpop.f32.mrf.mxu0
    %4827 = vdwg.mxu0
    %v4828 = vadd.f32 %v3414, %v4574
    %v4829 = vadd.f32 %v3415, %v4577
    %v4830 = vadd.f32 %v3416, %v4582
    %v4831 = vadd.f32 %v3417, %v4585
    %v4832 = vadd.f32 %v3418, %v4590
    %v4833 = vadd.f32 %v3419, %v4593
    %v4834 = vadd.f32 %v3420, %v4598
    %v4835 = vadd.f32 %v3421, %v4601
    %v4836 = vadd.f32 %v3422, %v4606
    %v4837 = vadd.f32 %v3423, %v4609
    %v4838 = vadd.f32 %v3424, %v4614
    %v4839 = vadd.f32 %v3425, %v4617
    %v4840 = vadd.f32 %v3426, %v4622
    %v4841 = vadd.f32 %v3427, %v4625
    %v4842 = vadd.f32 %v3428, %v4630
    %v4843 = vadd.f32 %v3429, %v4633
    %v4844 = vadd.f32 %v3430, %v4638
    %v4845 = vadd.f32 %v3431, %v4641
    %v4846 = vadd.f32 %v3432, %v4646
    %v4847 = vadd.f32 %v3433, %v4649
    %v4848 = vadd.f32 %v3434, %v4654
    %v4849 = vadd.f32 %v3435, %v4657
    %v4850 = vadd.f32 %v3436, %v4662
    %v4851 = vadd.f32 %v3437, %v4665
    %v4852 = vadd.f32 %v3438, %v4670
    %v4853 = vadd.f32 %v3439, %v4673
    %v4854 = vadd.f32 %v3440, %v4678
    %v4855 = vadd.f32 %v3441, %v4681
    %v4856 = vadd.f32 %v3442, %v4686
    %v4857 = vadd.f32 %v3443, %v4689
    %v4858 = vadd.f32 %v3444, %v4694
    %v4859 = vadd.f32 %v3445, %v4697
    %v4860 = vadd.f32 %v3446, %v4702
    %v4861 = vadd.f32 %v3447, %v4705
    %v4862 = vadd.f32 %v3448, %v4710
    %v4863 = vadd.f32 %v3449, %v4713
    %v4864 = vadd.f32 %v3450, %v4718
    %v4865 = vadd.f32 %v3451, %v4721
    %v4866 = vadd.f32 %v3452, %v4726
    %v4867 = vadd.f32 %v3453, %v4729
    %v4868 = vadd.f32 %v3454, %v4734
    %v4869 = vadd.f32 %v3455, %v4737
    %v4870 = vadd.f32 %v3456, %v4742
    %v4871 = vadd.f32 %v3457, %v4745
    %v4872 = vadd.f32 %v3458, %v4750
    %v4873 = vadd.f32 %v3459, %v4753
    %v4874 = vadd.f32 %v3460, %v4758
    %v4875 = vadd.f32 %v3461, %v4761
    %v4876 = vadd.f32 %v3462, %v4766
    %v4877 = vadd.f32 %v3463, %v4769
    %v4878 = vadd.f32 %v3464, %v4774
    %v4879 = vadd.f32 %v3465, %v4777
    %v4880 = vadd.f32 %v3466, %v4782
    %v4881 = vadd.f32 %v3467, %v4785
    %v4882 = vadd.f32 %v3468, %v4790
    %v4883 = vadd.f32 %v3469, %v4793
    %v4884 = vadd.f32 %v3470, %v4798
    %v4885 = vadd.f32 %v3471, %v4801
    %v4886 = vadd.f32 %v3472, %v4806
    %v4887 = vadd.f32 %v3473, %v4809
    %v4888 = vadd.f32 %v3474, %v4814
    %v4889 = vadd.f32 %v3475, %v4817
    %v4890 = vadd.f32 %v3476, %v4822
    %v4891 = vadd.f32 %v3477, %v4825
    %v4892 = vld [vmem:[%s2799] sm:$0xe]
    %v4893 = vld [vmem:[%s2799 + $0xc] sm:$0xe]
    %v4894 = vld [vmem:[%s2799 + $0x18] sm:$0xe]
    %v4895 = vld [vmem:[%s2799 + $0x24] sm:$0xe]
    %v4896 = vld [vmem:[%s2799 + $0x30] sm:$0xe]
    %v4897 = vld [vmem:[%s2799 + $0x3c] sm:$0xe]
    %v4898 = vld [vmem:[%s2799 + $0x48] sm:$0xe]
    %v4899 = vld [vmem:[%s2799 + $0x54] sm:$0xe]
    %v4900 = vld [vmem:[%s2799 + $0x60] sm:$0xe]
    %v4901 = vld [vmem:[%s2799 + $0x6c] sm:$0xe]
    %v4902 = vld [vmem:[%s2799 + $0x78] sm:$0xe]
    %v4903 = vld [vmem:[%s2799 + $0x84] sm:$0xe]
    %v4904 = vld [vmem:[%s2799 + $0x90] sm:$0xe]
    %v4905 = vld [vmem:[%s2799 + $0x9c] sm:$0xe]
    %v4906 = vld [vmem:[%s2799 + $0xa8] sm:$0xe]
    %v4907 = vld [vmem:[%s2799 + $0xb4] sm:$0xe]
    %v4908 = vld [vmem:[%s2799 + $0xd8] sm:$0xe]
    %v4909 = vld [vmem:[%s2799 + $0xe4] sm:$0xe]
    %v4910 = vld [vmem:[%s2799 + $0xf0] sm:$0xe]
    %v4911 = vld [vmem:[%s2799 + $0xfc] sm:$0xe]
    %v4912 = vld [vmem:[%s2799 + $0x108] sm:$0xe]
    %v4913 = vld [vmem:[%s2799 + $0x114] sm:$0xe]
    %v4914 = vld [vmem:[%s2799 + $0x120] sm:$0xe]
    %v4915 = vld [vmem:[%s2799 + $0x12c] sm:$0xe]
    %v4916 = vld [vmem:[%s2799 + $0x138] sm:$0xe]
    %v4917 = vld [vmem:[%s2799 + $0x144] sm:$0xe]
    %v4918 = vld [vmem:[%s2799 + $0x150] sm:$0xe]
    %v4919 = vld [vmem:[%s2799 + $0x15c] sm:$0xe]
    %v4920 = vld [vmem:[%s2799 + $0x168] sm:$0xe]
    %v4921 = vld [vmem:[%s2799 + $0x174] sm:$0xe]
    %v4922 = vld [vmem:[%s2799 + $0x180] sm:$0xe]
    %v4923 = vld [vmem:[%s2799 + $0x18c] sm:$0xe]
    %v5020 = vrot.slane %v4892, 5
    %v5021 = vrot.slane %v5020, 4
    %v5022 = vrot.slane %v3479, 5
    %v5023 = vsel %vm2024, %v5021, %v5022
    %v5024 = vrot.slane %v5022, 4
    %v5025 = vrot.slane %v3480, 5
    %v5026 = vsel %vm2024, %v5024, %v5025
    %v5027 = vrot.slane %v4893, 5
    %v5028 = vrot.slane %v5027, 4
    %v5029 = vrot.slane %v3482, 5
    %v5030 = vsel %vm2024, %v5028, %v5029
    %v5031 = vrot.slane %v5029, 4
    %v5032 = vrot.slane %v3483, 5
    %v5033 = vsel %vm2024, %v5031, %v5032
    %v5034 = vrot.slane %v4894, 5
    %v5035 = vrot.slane %v5034, 4
    %v5036 = vrot.slane %v3485, 5
    %v5037 = vsel %vm2024, %v5035, %v5036
    %v5038 = vrot.slane %v5036, 4
    %v5039 = vrot.slane %v3486, 5
    %v5040 = vsel %vm2024, %v5038, %v5039
    %v5041 = vrot.slane %v4895, 5
    %v5042 = vrot.slane %v5041, 4
    %v5043 = vrot.slane %v3488, 5
    %v5044 = vsel %vm2024, %v5042, %v5043
    %v5045 = vrot.slane %v5043, 4
    %v5046 = vrot.slane %v3489, 5
    %v5047 = vsel %vm2024, %v5045, %v5046
    %v5048 = vrot.slane %v4896, 5
    %v5049 = vrot.slane %v5048, 4
    %v5050 = vrot.slane %v3491, 5
    %v5051 = vsel %vm2024, %v5049, %v5050
    %v5052 = vrot.slane %v5050, 4
    %v5053 = vrot.slane %v3492, 5
    %v5054 = vsel %vm2024, %v5052, %v5053
    %v5055 = vrot.slane %v4897, 5
    %v5056 = vrot.slane %v5055, 4
    %v5057 = vrot.slane %v3494, 5
    %v5058 = vsel %vm2024, %v5056, %v5057
    %v5059 = vrot.slane %v5057, 4
    %v5060 = vrot.slane %v3495, 5
    %v5061 = vsel %vm2024, %v5059, %v5060
    %v5062 = vrot.slane %v4898, 5
    %v5063 = vrot.slane %v5062, 4
    %v5064 = vrot.slane %v3497, 5
    %v5065 = vsel %vm2024, %v5063, %v5064
    %v5066 = vrot.slane %v5064, 4
    %v5067 = vrot.slane %v3498, 5
    %v5068 = vsel %vm2024, %v5066, %v5067
    %v5069 = vrot.slane %v4899, 5
    %v5070 = vrot.slane %v5069, 4
    %v5071 = vrot.slane %v3500, 5
    %v5072 = vsel %vm2024, %v5070, %v5071
    %v5073 = vrot.slane %v5071, 4
    %v5074 = vrot.slane %v3501, 5
    %v5075 = vsel %vm2024, %v5073, %v5074
    %v5076 = vrot.slane %v4900, 5
    %v5077 = vrot.slane %v5076, 4
    %v5078 = vrot.slane %v3503, 5
    %v5079 = vsel %vm2024, %v5077, %v5078
    %v5080 = vrot.slane %v5078, 4
    %v5081 = vrot.slane %v3504, 5
    %v5082 = vsel %vm2024, %v5080, %v5081
    %v5083 = vrot.slane %v4901, 5
    %v5084 = vrot.slane %v5083, 4
    %v5085 = vrot.slane %v3506, 5
    %v5086 = vsel %vm2024, %v5084, %v5085
    %v5087 = vrot.slane %v5085, 4
    %v5088 = vrot.slane %v3507, 5
    %v5089 = vsel %vm2024, %v5087, %v5088
    %v5090 = vrot.slane %v4902, 5
    %v5091 = vrot.slane %v5090, 4
    %v5092 = vrot.slane %v3509, 5
    %v5093 = vsel %vm2024, %v5091, %v5092
    %v5094 = vrot.slane %v5092, 4
    %v5095 = vrot.slane %v3510, 5
    %v5096 = vsel %vm2024, %v5094, %v5095
    %v5097 = vrot.slane %v4903, 5
    %v5098 = vrot.slane %v5097, 4
    %v5099 = vrot.slane %v3512, 5
    %v5100 = vsel %vm2024, %v5098, %v5099
    %v5101 = vrot.slane %v5099, 4
    %v5102 = vrot.slane %v3513, 5
    %v5103 = vsel %vm2024, %v5101, %v5102
    %v5104 = vrot.slane %v4904, 5
    %v5105 = vrot.slane %v5104, 4
    %v5106 = vrot.slane %v3515, 5
    %v5107 = vsel %vm2024, %v5105, %v5106
    %v5108 = vrot.slane %v5106, 4
    %v5109 = vrot.slane %v3516, 5
    %v5110 = vsel %vm2024, %v5108, %v5109
    %v5111 = vrot.slane %v4905, 5
    %v5112 = vrot.slane %v5111, 4
    %v5113 = vrot.slane %v3518, 5
    %v5114 = vsel %vm2024, %v5112, %v5113
    %v5115 = vrot.slane %v5113, 4
    %v5116 = vrot.slane %v3519, 5
    %v5117 = vsel %vm2024, %v5115, %v5116
    %v5118 = vrot.slane %v4906, 5
    %v5119 = vrot.slane %v5118, 4
    %v5120 = vrot.slane %v3521, 5
    %v5121 = vsel %vm2024, %v5119, %v5120
    %v5122 = vrot.slane %v5120, 4
    %v5123 = vrot.slane %v3522, 5
    %v5124 = vsel %vm2024, %v5122, %v5123
    %v5125 = vrot.slane %v4907, 5
    %v5126 = vrot.slane %v5125, 4
    %v5127 = vrot.slane %v3524, 5
    %v5128 = vsel %vm2024, %v5126, %v5127
    %v5129 = vrot.slane %v5127, 4
    %v5130 = vrot.slane %v3525, 5
    %v5131 = vsel %vm2024, %v5129, %v5130
    %v5132 = vrot.slane %v4908, 5
    %v5133 = vrot.slane %v5132, 4
    %v5134 = vrot.slane %v3527, 5
    %v5135 = vsel %vm2024, %v5133, %v5134
    %v5136 = vrot.slane %v5134, 4
    %v5137 = vrot.slane %v3528, 5
    %v5138 = vsel %vm2024, %v5136, %v5137
    %v5139 = vrot.slane %v4909, 5
    %v5140 = vrot.slane %v5139, 4
    %v5141 = vrot.slane %v3530, 5
    %v5142 = vsel %vm2024, %v5140, %v5141
    %v5143 = vrot.slane %v5141, 4
    %v5144 = vrot.slane %v3531, 5
    %v5145 = vsel %vm2024, %v5143, %v5144
    %v5146 = vrot.slane %v4910, 5
    %v5147 = vrot.slane %v5146, 4
    %v5148 = vrot.slane %v3533, 5
    %v5149 = vsel %vm2024, %v5147, %v5148
    %v5150 = vrot.slane %v5148, 4
    %v5151 = vrot.slane %v3534, 5
    %v5152 = vsel %vm2024, %v5150, %v5151
    %v5153 = vrot.slane %v4911, 5
    %v5154 = vrot.slane %v5153, 4
    %v5155 = vrot.slane %v3536, 5
    %v5156 = vsel %vm2024, %v5154, %v5155
    %v5157 = vrot.slane %v5155, 4
    %v5158 = vrot.slane %v3537, 5
    %v5159 = vsel %vm2024, %v5157, %v5158
    %v5160 = vrot.slane %v4912, 5
    %v5161 = vrot.slane %v5160, 4
    %v5162 = vrot.slane %v3539, 5
    %v5163 = vsel %vm2024, %v5161, %v5162
    %v5164 = vrot.slane %v5162, 4
    %v5165 = vrot.slane %v3540, 5
    %v5166 = vsel %vm2024, %v5164, %v5165
    %v5167 = vrot.slane %v4913, 5
    %v5168 = vrot.slane %v5167, 4
    %v5169 = vrot.slane %v3542, 5
    %v5170 = vsel %vm2024, %v5168, %v5169
    %v5171 = vrot.slane %v5169, 4
    %v5172 = vrot.slane %v3543, 5
    %v5173 = vsel %vm2024, %v5171, %v5172
    %v5174 = vrot.slane %v4914, 5
    %v5175 = vrot.slane %v5174, 4
    %v5176 = vrot.slane %v3545, 5
    %v5177 = vsel %vm2024, %v5175, %v5176
    %v5178 = vrot.slane %v5176, 4
    %v5179 = vrot.slane %v3546, 5
    %v5180 = vsel %vm2024, %v5178, %v5179
    %v5181 = vrot.slane %v4915, 5
    %v5182 = vrot.slane %v5181, 4
    %v5183 = vrot.slane %v3548, 5
    %v5184 = vsel %vm2024, %v5182, %v5183
    %v5185 = vrot.slane %v5183, 4
    %v5186 = vrot.slane %v3549, 5
    %v5187 = vsel %vm2024, %v5185, %v5186
    %v5188 = vrot.slane %v4916, 5
    %v5189 = vrot.slane %v5188, 4
    %v5190 = vrot.slane %v3551, 5
    %v5191 = vsel %vm2024, %v5189, %v5190
    %v5192 = vrot.slane %v5190, 4
    %v5193 = vrot.slane %v3552, 5
    %v5194 = vsel %vm2024, %v5192, %v5193
    %v5195 = vrot.slane %v4917, 5
    %v5196 = vrot.slane %v5195, 4
    %v5197 = vrot.slane %v3554, 5
    %v5198 = vsel %vm2024, %v5196, %v5197
    %v5199 = vrot.slane %v5197, 4
    %v5200 = vrot.slane %v3555, 5
    %v5201 = vsel %vm2024, %v5199, %v5200
    %v5202 = vrot.slane %v4918, 5
    %v5203 = vrot.slane %v5202, 4
    %v5204 = vrot.slane %v3557, 5
    %v5205 = vsel %vm2024, %v5203, %v5204
    %v5206 = vrot.slane %v5204, 4
    %v5207 = vrot.slane %v3558, 5
    %v5208 = vsel %vm2024, %v5206, %v5207
    %v5209 = vrot.slane %v4919, 5
    %v5210 = vrot.slane %v5209, 4
    %v5211 = vrot.slane %v3560, 5
    %v5212 = vsel %vm2024, %v5210, %v5211
    %v5213 = vrot.slane %v5211, 4
    %v5214 = vrot.slane %v3561, 5
    %v5215 = vsel %vm2024, %v5213, %v5214
    %v5216 = vrot.slane %v4920, 5
    %v5217 = vrot.slane %v5216, 4
    %v5218 = vrot.slane %v3563, 5
    %v5219 = vsel %vm2024, %v5217, %v5218
    %v5220 = vrot.slane %v5218, 4
    %v5221 = vrot.slane %v3564, 5
    %v5222 = vsel %vm2024, %v5220, %v5221
    %v5223 = vrot.slane %v4921, 5
    %v5224 = vrot.slane %v5223, 4
    %v5225 = vrot.slane %v3566, 5
    %v5226 = vsel %vm2024, %v5224, %v5225
    %v5227 = vrot.slane %v5225, 4
    %v5228 = vrot.slane %v3567, 5
    %v5229 = vsel %vm2024, %v5227, %v5228
    %v5230 = vrot.slane %v4922, 5
    %v5231 = vrot.slane %v5230, 4
    %v5232 = vrot.slane %v3569, 5
    %v5233 = vsel %vm2024, %v5231, %v5232
    %v5234 = vrot.slane %v5232, 4
    %v5235 = vrot.slane %v3570, 5
    %v5236 = vsel %vm2024, %v5234, %v5235
    %v5237 = vrot.slane %v4923, 5
    %v5238 = vrot.slane %v5237, 4
    %v5239 = vrot.slane %v3572, 5
    %v5240 = vsel %vm2024, %v5238, %v5239
    %v5241 = vrot.slane %v5239, 4
    %v5242 = vrot.slane %v3573, 5
    %v5243 = vsel %vm2024, %v5241, %v5242
    %s5244 = scalar_lea.vmem %s1, 10
    %v5245 = vld [vmem:[%s5244] sm:$0x3]
    %v5246 = vunpack.c.l.b16 %v5023
    %v5247 = vunpack.c.l.b16 %v5026
    %v5248 = vunpack.c.l.b16 %v5030
    %v5249 = vunpack.c.l.b16 %v5033
    %v5250 = vunpack.c.l.b16 %v5037
    %v5251 = vunpack.c.l.b16 %v5040
    %v5252 = vunpack.c.l.b16 %v5044
    %v5253 = vunpack.c.l.b16 %v5047
    %v5254 = vunpack.c.l.b16 %v5051
    %v5255 = vunpack.c.l.b16 %v5054
    %v5256 = vunpack.c.l.b16 %v5058
    %v5257 = vunpack.c.l.b16 %v5061
    %v5258 = vunpack.c.l.b16 %v5065
    %v5259 = vunpack.c.l.b16 %v5068
    %v5260 = vunpack.c.l.b16 %v5072
    %v5261 = vunpack.c.l.b16 %v5075
    %v5262 = vunpack.c.l.b16 %v5079
    %v5263 = vunpack.c.l.b16 %v5082
    %v5264 = vunpack.c.l.b16 %v5086
    %v5265 = vunpack.c.l.b16 %v5089
    %v5266 = vunpack.c.l.b16 %v5093
    %v5267 = vunpack.c.l.b16 %v5096
    %v5268 = vunpack.c.l.b16 %v5100
    %v5269 = vunpack.c.l.b16 %v5103
    %v5270 = vunpack.c.l.b16 %v5107
    %v5271 = vunpack.c.l.b16 %v5110
    %v5272 = vunpack.c.l.b16 %v5114
    %v5273 = vunpack.c.l.b16 %v5117
    %v5274 = vunpack.c.l.b16 %v5121
    %v5275 = vunpack.c.l.b16 %v5124
    %v5276 = vunpack.c.l.b16 %v5128
    %v5277 = vunpack.c.l.b16 %v5131
    %v5278 = vunpack.c.l.b16 %v5135
    %v5279 = vunpack.c.l.b16 %v5138
    %v5280 = vunpack.c.l.b16 %v5142
    %v5281 = vunpack.c.l.b16 %v5145
    %v5282 = vunpack.c.l.b16 %v5149
    %v5283 = vunpack.c.l.b16 %v5152
    %v5284 = vunpack.c.l.b16 %v5156
    %v5285 = vunpack.c.l.b16 %v5159
    %v5286 = vunpack.c.l.b16 %v5163
    %v5287 = vunpack.c.l.b16 %v5166
    %v5288 = vunpack.c.l.b16 %v5170
    %v5289 = vunpack.c.l.b16 %v5173
    %v5290 = vunpack.c.l.b16 %v5177
    %v5291 = vunpack.c.l.b16 %v5180
    %v5292 = vunpack.c.l.b16 %v5184
    %v5293 = vunpack.c.l.b16 %v5187
    %v5294 = vunpack.c.l.b16 %v5191
    %v5295 = vunpack.c.l.b16 %v5194
    %v5296 = vunpack.c.l.b16 %v5198
    %v5297 = vunpack.c.l.b16 %v5201
    %v5298 = vunpack.c.l.b16 %v5205
    %v5299 = vunpack.c.l.b16 %v5208
    %v5300 = vunpack.c.l.b16 %v5212
    %v5301 = vunpack.c.l.b16 %v5215
    %v5302 = vunpack.c.l.b16 %v5219
    %v5303 = vunpack.c.l.b16 %v5222
    %v5304 = vunpack.c.l.b16 %v5226
    %v5305 = vunpack.c.l.b16 %v5229
    %v5306 = vunpack.c.l.b16 %v5233
    %v5307 = vunpack.c.l.b16 %v5236
    %v5308 = vunpack.c.l.b16 %v5240
    %v5309 = vunpack.c.l.b16 %v5243
    %v5310 = vpack.c.b16 %v5247, %v5246
    %v5311 = vpack.c.b16 %v5249, %v5248
    %v5312 = vpack.c.b16 %v5251, %v5250
    %v5313 = vpack.c.b16 %v5253, %v5252
    %v5314 = vpack.c.b16 %v5255, %v5254
    %v5315 = vpack.c.b16 %v5257, %v5256
    %v5316 = vpack.c.b16 %v5259, %v5258
    %v5317 = vpack.c.b16 %v5261, %v5260
    %v5318 = vpack.c.b16 %v5263, %v5262
    %v5319 = vpack.c.b16 %v5265, %v5264
    %v5320 = vpack.c.b16 %v5267, %v5266
    %v5321 = vpack.c.b16 %v5269, %v5268
    %v5322 = vpack.c.b16 %v5271, %v5270
    %v5323 = vpack.c.b16 %v5273, %v5272
    %v5324 = vpack.c.b16 %v5275, %v5274
    %v5325 = vpack.c.b16 %v5277, %v5276
    %v5326 = vpack.c.b16 %v5279, %v5278
    %v5327 = vpack.c.b16 %v5281, %v5280
    %v5328 = vpack.c.b16 %v5283, %v5282
    %v5329 = vpack.c.b16 %v5285, %v5284
    %v5330 = vpack.c.b16 %v5287, %v5286
    %v5331 = vpack.c.b16 %v5289, %v5288
    %v5332 = vpack.c.b16 %v5291, %v5290
    %v5333 = vpack.c.b16 %v5293, %v5292
    %v5334 = vpack.c.b16 %v5295, %v5294
    %v5335 = vpack.c.b16 %v5297, %v5296
    %v5336 = vpack.c.b16 %v5299, %v5298
    %v5337 = vpack.c.b16 %v5301, %v5300
    %v5338 = vpack.c.b16 %v5303, %v5302
    %v5339 = vpack.c.b16 %v5305, %v5304
    %v5340 = vpack.c.b16 %v5307, %v5306
    %v5341 = vpack.c.b16 %v5309, %v5308
    %v5343 = vsel %vm988, %v5310, 0
    %v5346 = vsel %vm988, %v5311, 0
    %v5349 = vsel %vm988, %v5312, 0
    %v5352 = vsel %vm988, %v5313, 0
    %v5355 = vsel %vm988, %v5314, 0
    %v5358 = vsel %vm988, %v5315, 0
    %v5361 = vsel %vm988, %v5316, 0
    %v5364 = vsel %vm988, %v5317, 0
    %v5367 = vsel %vm988, %v5318, 0
    %v5370 = vsel %vm988, %v5319, 0
    %v5373 = vsel %vm988, %v5320, 0
    %v5376 = vsel %vm988, %v5321, 0
    %v5379 = vsel %vm988, %v5322, 0
    %v5382 = vsel %vm988, %v5323, 0
    %v5385 = vsel %vm988, %v5324, 0
    %v5388 = vsel %vm988, %v5325, 0
    %v5391 = vsel %vm988, %v5326, 0
    %v5394 = vsel %vm988, %v5327, 0
    %v5397 = vsel %vm988, %v5328, 0
    %v5400 = vsel %vm988, %v5329, 0
    %v5403 = vsel %vm988, %v5330, 0
    %v5406 = vsel %vm988, %v5331, 0
    %v5409 = vsel %vm988, %v5332, 0
    %v5412 = vsel %vm988, %v5333, 0
    %v5415 = vsel %vm988, %v5334, 0
    %v5418 = vsel %vm988, %v5335, 0
    %v5421 = vsel %vm988, %v5336, 0
    %v5424 = vsel %vm988, %v5337, 0
    %v5427 = vsel %vm988, %v5338, 0
    %v5430 = vsel %vm988, %v5339, 0
    %v5433 = vsel %vm988, %v5340, 0
    %v5436 = vsel %vm988, %v5341, 0
    %v5439 = vsel %vm1085, %v5245, 0
    %5441 = vmatprep.subr.bf16.mxu0 0
    %5442 = vmatpush1.bf16.msra.mxu0 0
    %5443 = vmatprep.subr.bf16.mxu0 0
    %5444 = vmatpush1.bf16.msra.mxu0 0
    %5445 = vmatprep.subr.bf16.mxu0 0
    %5446 = vmatpush1.bf16.msra.mxu0 0
    %5447 = vmatprep.subr.bf16.mxu0 0
    %5448 = vmatpush1.bf16.msra.mxu0 0
    %5449 = vmatprep.subr.bf16.mxu0 0
    %5450 = vmatpush1.bf16.msra.mxu0 0
    %5451 = vmatprep.subr.bf16.mxu0 0
    %5452 = vmatpush1.bf16.msra.mxu0 0
    %5453 = vmatprep.subr.bf16.mxu0 0
    %5454 = vmatpush1.bf16.msra.mxu0 0
    %5455 = vmatprep.subr.bf16.mxu0 0
    %5456 = vmatpush1.bf16.msra.mxu0 %v5439
    %5457 = vmatprep.subr.bf16.mxu0 0
    %5458 = vmatpush2.bf16.msra.mxu0 0
    %5459 = vmatprep.subr.bf16.mxu0 0
    %5460 = vmatpush2.bf16.msra.mxu0 0
    %5461 = vmatprep.subr.bf16.mxu0 0
    %5462 = vmatpush2.bf16.msra.mxu0 0
    %5463 = vmatprep.subr.bf16.mxu0 0
    %5464 = vmatpush2.bf16.msra.mxu0 0
    %5465 = vmatprep.subr.bf16.mxu0 0
    %5466 = vmatpush2.bf16.msra.mxu0 0
    %5467 = vmatprep.subr.bf16.mxu0 0
    %5468 = vmatpush2.bf16.msra.mxu0 0
    %5469 = vmatprep.subr.bf16.mxu0 0
    %5470 = vmatpush2.bf16.msra.mxu0 0
    %5471 = vmatprep.subr.bf16.mxu0 0
    %5472 = vmatpush2.bf16.msra.mxu0 0
    %5473 = vmatprep.mubr.bf16.mxu0 0
    %5474 = vmatmul.mubr.bf16.gmra.mxu0 %v5343
    %v5475 = vpop.f32.mrf.mxu0
    %v5476 = vadd.f32 0.0, %v5475
    %v5477 = vpop.f32.mrf.mxu0
    %v5478 = vpop.f32.mrf.mxu0
    %v5479 = vadd.f32 0.0, %v5478
    %v5480 = vpop.f32.mrf.mxu0
    %5481 = vmatprep.mubr.bf16.mxu0 0
    %5482 = vmatmul.mubr.bf16.gmra.mxu0 %v5346
    %v5483 = vpop.f32.mrf.mxu0
    %v5484 = vadd.f32 0.0, %v5483
    %v5485 = vpop.f32.mrf.mxu0
    %v5486 = vpop.f32.mrf.mxu0
    %v5487 = vadd.f32 0.0, %v5486
    %v5488 = vpop.f32.mrf.mxu0
    %5489 = vmatprep.mubr.bf16.mxu0 0
    %5490 = vmatmul.mubr.bf16.gmra.mxu0 %v5349
    %v5491 = vpop.f32.mrf.mxu0
    %v5492 = vadd.f32 0.0, %v5491
    %v5493 = vpop.f32.mrf.mxu0
    %v5494 = vpop.f32.mrf.mxu0
    %v5495 = vadd.f32 0.0, %v5494
    %v5496 = vpop.f32.mrf.mxu0
    %5497 = vmatprep.mubr.bf16.mxu0 0
    %5498 = vmatmul.mubr.bf16.gmra.mxu0 %v5352
    %v5499 = vpop.f32.mrf.mxu0
    %v5500 = vadd.f32 0.0, %v5499
    %v5501 = vpop.f32.mrf.mxu0
    %v5502 = vpop.f32.mrf.mxu0
    %v5503 = vadd.f32 0.0, %v5502
    %v5504 = vpop.f32.mrf.mxu0
    %5505 = vmatprep.mubr.bf16.mxu0 0
    %5506 = vmatmul.mubr.bf16.gmra.mxu0 %v5355
    %v5507 = vpop.f32.mrf.mxu0
    %v5508 = vadd.f32 0.0, %v5507
    %v5509 = vpop.f32.mrf.mxu0
    %v5510 = vpop.f32.mrf.mxu0
    %v5511 = vadd.f32 0.0, %v5510
    %v5512 = vpop.f32.mrf.mxu0
    %5513 = vmatprep.mubr.bf16.mxu0 0
    %5514 = vmatmul.mubr.bf16.gmra.mxu0 %v5358
    %v5515 = vpop.f32.mrf.mxu0
    %v5516 = vadd.f32 0.0, %v5515
    %v5517 = vpop.f32.mrf.mxu0
    %v5518 = vpop.f32.mrf.mxu0
    %v5519 = vadd.f32 0.0, %v5518
    %v5520 = vpop.f32.mrf.mxu0
    %5521 = vmatprep.mubr.bf16.mxu0 0
    %5522 = vmatmul.mubr.bf16.gmra.mxu0 %v5361
    %v5523 = vpop.f32.mrf.mxu0
    %v5524 = vadd.f32 0.0, %v5523
    %v5525 = vpop.f32.mrf.mxu0
    %v5526 = vpop.f32.mrf.mxu0
    %v5527 = vadd.f32 0.0, %v5526
    %v5528 = vpop.f32.mrf.mxu0
    %5529 = vmatprep.mubr.bf16.mxu0 0
    %5530 = vmatmul.mubr.bf16.gmra.mxu0 %v5364
    %v5531 = vpop.f32.mrf.mxu0
    %v5532 = vadd.f32 0.0, %v5531
    %v5533 = vpop.f32.mrf.mxu0
    %v5534 = vpop.f32.mrf.mxu0
    %v5535 = vadd.f32 0.0, %v5534
    %v5536 = vpop.f32.mrf.mxu0
    %5537 = vmatprep.mubr.bf16.mxu0 0
    %5538 = vmatmul.mubr.bf16.gmra.mxu0 %v5367
    %v5539 = vpop.f32.mrf.mxu0
    %v5540 = vadd.f32 0.0, %v5539
    %v5541 = vpop.f32.mrf.mxu0
    %v5542 = vpop.f32.mrf.mxu0
    %v5543 = vadd.f32 0.0, %v5542
    %v5544 = vpop.f32.mrf.mxu0
    %5545 = vmatprep.mubr.bf16.mxu0 0
    %5546 = vmatmul.mubr.bf16.gmra.mxu0 %v5370
    %v5547 = vpop.f32.mrf.mxu0
    %v5548 = vadd.f32 0.0, %v5547
    %v5549 = vpop.f32.mrf.mxu0
    %v5550 = vpop.f32.mrf.mxu0
    %v5551 = vadd.f32 0.0, %v5550
    %v5552 = vpop.f32.mrf.mxu0
    %5553 = vmatprep.mubr.bf16.mxu0 0
    %5554 = vmatmul.mubr.bf16.gmra.mxu0 %v5373
    %v5555 = vpop.f32.mrf.mxu0
    %v5556 = vadd.f32 0.0, %v5555
    %v5557 = vpop.f32.mrf.mxu0
    %v5558 = vpop.f32.mrf.mxu0
    %v5559 = vadd.f32 0.0, %v5558
    %v5560 = vpop.f32.mrf.mxu0
    %5561 = vmatprep.mubr.bf16.mxu0 0
    %5562 = vmatmul.mubr.bf16.gmra.mxu0 %v5376
    %v5563 = vpop.f32.mrf.mxu0
    %v5564 = vadd.f32 0.0, %v5563
    %v5565 = vpop.f32.mrf.mxu0
    %v5566 = vpop.f32.mrf.mxu0
    %v5567 = vadd.f32 0.0, %v5566
    %v5568 = vpop.f32.mrf.mxu0
    %5569 = vmatprep.mubr.bf16.mxu0 0
    %5570 = vmatmul.mubr.bf16.gmra.mxu0 %v5379
    %v5571 = vpop.f32.mrf.mxu0
    %v5572 = vadd.f32 0.0, %v5571
    %v5573 = vpop.f32.mrf.mxu0
    %v5574 = vpop.f32.mrf.mxu0
    %v5575 = vadd.f32 0.0, %v5574
    %v5576 = vpop.f32.mrf.mxu0
    %5577 = vmatprep.mubr.bf16.mxu0 0
    %5578 = vmatmul.mubr.bf16.gmra.mxu0 %v5382
    %v5579 = vpop.f32.mrf.mxu0
    %v5580 = vadd.f32 0.0, %v5579
    %v5581 = vpop.f32.mrf.mxu0
    %v5582 = vpop.f32.mrf.mxu0
    %v5583 = vadd.f32 0.0, %v5582
    %v5584 = vpop.f32.mrf.mxu0
    %5585 = vmatprep.mubr.bf16.mxu0 0
    %5586 = vmatmul.mubr.bf16.gmra.mxu0 %v5385
    %v5587 = vpop.f32.mrf.mxu0
    %v5588 = vadd.f32 0.0, %v5587
    %v5589 = vpop.f32.mrf.mxu0
    %v5590 = vpop.f32.mrf.mxu0
    %v5591 = vadd.f32 0.0, %v5590
    %v5592 = vpop.f32.mrf.mxu0
    %5593 = vmatprep.mubr.bf16.mxu0 0
    %5594 = vmatmul.mubr.bf16.gmra.mxu0 %v5388
    %v5595 = vpop.f32.mrf.mxu0
    %v5596 = vadd.f32 0.0, %v5595
    %v5597 = vpop.f32.mrf.mxu0
    %v5598 = vpop.f32.mrf.mxu0
    %v5599 = vadd.f32 0.0, %v5598
    %v5600 = vpop.f32.mrf.mxu0
    %5601 = vmatprep.mubr.bf16.mxu0 0
    %5602 = vmatmul.mubr.bf16.gmra.mxu0 %v5391
    %v5603 = vpop.f32.mrf.mxu0
    %v5604 = vadd.f32 0.0, %v5603
    %v5605 = vpop.f32.mrf.mxu0
    %v5606 = vpop.f32.mrf.mxu0
    %v5607 = vadd.f32 0.0, %v5606
    %v5608 = vpop.f32.mrf.mxu0
    %5609 = vmatprep.mubr.bf16.mxu0 0
    %5610 = vmatmul.mubr.bf16.gmra.mxu0 %v5394
    %v5611 = vpop.f32.mrf.mxu0
    %v5612 = vadd.f32 0.0, %v5611
    %v5613 = vpop.f32.mrf.mxu0
    %v5614 = vpop.f32.mrf.mxu0
    %v5615 = vadd.f32 0.0, %v5614
    %v5616 = vpop.f32.mrf.mxu0
    %5617 = vmatprep.mubr.bf16.mxu0 0
    %5618 = vmatmul.mubr.bf16.gmra.mxu0 %v5397
    %v5619 = vpop.f32.mrf.mxu0
    %v5620 = vadd.f32 0.0, %v5619
    %v5621 = vpop.f32.mrf.mxu0
    %v5622 = vpop.f32.mrf.mxu0
    %v5623 = vadd.f32 0.0, %v5622
    %v5624 = vpop.f32.mrf.mxu0
    %5625 = vmatprep.mubr.bf16.mxu0 0
    %5626 = vmatmul.mubr.bf16.gmra.mxu0 %v5400
    %v5627 = vpop.f32.mrf.mxu0
    %v5628 = vadd.f32 0.0, %v5627
    %v5629 = vpop.f32.mrf.mxu0
    %v5630 = vpop.f32.mrf.mxu0
    %v5631 = vadd.f32 0.0, %v5630
    %v5632 = vpop.f32.mrf.mxu0
    %5633 = vmatprep.mubr.bf16.mxu0 0
    %5634 = vmatmul.mubr.bf16.gmra.mxu0 %v5403
    %v5635 = vpop.f32.mrf.mxu0
    %v5636 = vadd.f32 0.0, %v5635
    %v5637 = vpop.f32.mrf.mxu0
    %v5638 = vpop.f32.mrf.mxu0
    %v5639 = vadd.f32 0.0, %v5638
    %v5640 = vpop.f32.mrf.mxu0
    %5641 = vmatprep.mubr.bf16.mxu0 0
    %5642 = vmatmul.mubr.bf16.gmra.mxu0 %v5406
    %v5643 = vpop.f32.mrf.mxu0
    %v5644 = vadd.f32 0.0, %v5643
    %v5645 = vpop.f32.mrf.mxu0
    %v5646 = vpop.f32.mrf.mxu0
    %v5647 = vadd.f32 0.0, %v5646
    %v5648 = vpop.f32.mrf.mxu0
    %5649 = vmatprep.mubr.bf16.mxu0 0
    %5650 = vmatmul.mubr.bf16.gmra.mxu0 %v5409
    %v5651 = vpop.f32.mrf.mxu0
    %v5652 = vadd.f32 0.0, %v5651
    %v5653 = vpop.f32.mrf.mxu0
    %v5654 = vpop.f32.mrf.mxu0
    %v5655 = vadd.f32 0.0, %v5654
    %v5656 = vpop.f32.mrf.mxu0
    %5657 = vmatprep.mubr.bf16.mxu0 0
    %5658 = vmatmul.mubr.bf16.gmra.mxu0 %v5412
    %v5659 = vpop.f32.mrf.mxu0
    %v5660 = vadd.f32 0.0, %v5659
    %v5661 = vpop.f32.mrf.mxu0
    %v5662 = vpop.f32.mrf.mxu0
    %v5663 = vadd.f32 0.0, %v5662
    %v5664 = vpop.f32.mrf.mxu0
    %5665 = vmatprep.mubr.bf16.mxu0 0
    %5666 = vmatmul.mubr.bf16.gmra.mxu0 %v5415
    %v5667 = vpop.f32.mrf.mxu0
    %v5668 = vadd.f32 0.0, %v5667
    %v5669 = vpop.f32.mrf.mxu0
    %v5670 = vpop.f32.mrf.mxu0
    %v5671 = vadd.f32 0.0, %v5670
    %v5672 = vpop.f32.mrf.mxu0
    %5673 = vmatprep.mubr.bf16.mxu0 0
    %5674 = vmatmul.mubr.bf16.gmra.mxu0 %v5418
    %v5675 = vpop.f32.mrf.mxu0
    %v5676 = vadd.f32 0.0, %v5675
    %v5677 = vpop.f32.mrf.mxu0
    %v5678 = vpop.f32.mrf.mxu0
    %v5679 = vadd.f32 0.0, %v5678
    %v5680 = vpop.f32.mrf.mxu0
    %5681 = vmatprep.mubr.bf16.mxu0 0
    %5682 = vmatmul.mubr.bf16.gmra.mxu0 %v5421
    %v5683 = vpop.f32.mrf.mxu0
    %v5684 = vadd.f32 0.0, %v5683
    %v5685 = vpop.f32.mrf.mxu0
    %v5686 = vpop.f32.mrf.mxu0
    %v5687 = vadd.f32 0.0, %v5686
    %v5688 = vpop.f32.mrf.mxu0
    %5689 = vmatprep.mubr.bf16.mxu0 0
    %5690 = vmatmul.mubr.bf16.gmra.mxu0 %v5424
    %v5691 = vpop.f32.mrf.mxu0
    %v5692 = vadd.f32 0.0, %v5691
    %v5693 = vpop.f32.mrf.mxu0
    %v5694 = vpop.f32.mrf.mxu0
    %v5695 = vadd.f32 0.0, %v5694
    %v5696 = vpop.f32.mrf.mxu0
    %5697 = vmatprep.mubr.bf16.mxu0 0
    %5698 = vmatmul.mubr.bf16.gmra.mxu0 %v5427
    %v5699 = vpop.f32.mrf.mxu0
    %v5700 = vadd.f32 0.0, %v5699
    %v5701 = vpop.f32.mrf.mxu0
    %v5702 = vpop.f32.mrf.mxu0
    %v5703 = vadd.f32 0.0, %v5702
    %v5704 = vpop.f32.mrf.mxu0
    %5705 = vmatprep.mubr.bf16.mxu0 0
    %5706 = vmatmul.mubr.bf16.gmra.mxu0 %v5430
    %v5707 = vpop.f32.mrf.mxu0
    %v5708 = vadd.f32 0.0, %v5707
    %v5709 = vpop.f32.mrf.mxu0
    %v5710 = vpop.f32.mrf.mxu0
    %v5711 = vadd.f32 0.0, %v5710
    %v5712 = vpop.f32.mrf.mxu0
    %5713 = vmatprep.mubr.bf16.mxu0 0
    %5714 = vmatmul.mubr.bf16.gmra.mxu0 %v5433
    %v5715 = vpop.f32.mrf.mxu0
    %v5716 = vadd.f32 0.0, %v5715
    %v5717 = vpop.f32.mrf.mxu0
    %v5718 = vpop.f32.mrf.mxu0
    %v5719 = vadd.f32 0.0, %v5718
    %v5720 = vpop.f32.mrf.mxu0
    %5721 = vmatprep.mubr.bf16.mxu0 0
    %5722 = vmatmul.mubr.bf16.gmra.mxu0 %v5436
    %v5723 = vpop.f32.mrf.mxu0
    %v5724 = vadd.f32 0.0, %v5723
    %v5725 = vpop.f32.mrf.mxu0
    %v5726 = vpop.f32.mrf.mxu0
    %v5727 = vadd.f32 0.0, %v5726
    %v5728 = vpop.f32.mrf.mxu0
    %5729 = vdwg.mxu0
    %v5730 = vadd.f32 %v4828, %v5476
    %v5731 = vadd.f32 %v4829, %v5479
    %v5732 = vadd.f32 %v4830, %v5484
    %v5733 = vadd.f32 %v4831, %v5487
    %v5734 = vadd.f32 %v4832, %v5492
    %v5735 = vadd.f32 %v4833, %v5495
    %v5736 = vadd.f32 %v4834, %v5500
    %v5737 = vadd.f32 %v4835, %v5503
    %v5738 = vadd.f32 %v4836, %v5508
    %v5739 = vadd.f32 %v4837, %v5511
    %v5740 = vadd.f32 %v4838, %v5516
    %v5741 = vadd.f32 %v4839, %v5519
    %v5742 = vadd.f32 %v4840, %v5524
    %v5743 = vadd.f32 %v4841, %v5527
    %v5744 = vadd.f32 %v4842, %v5532
    %v5745 = vadd.f32 %v4843, %v5535
    %v5746 = vadd.f32 %v4844, %v5540
    %v5747 = vadd.f32 %v4845, %v5543
    %v5748 = vadd.f32 %v4846, %v5548
    %v5749 = vadd.f32 %v4847, %v5551
    %v5750 = vadd.f32 %v4848, %v5556
    %v5751 = vadd.f32 %v4849, %v5559
    %v5752 = vadd.f32 %v4850, %v5564
    %v5753 = vadd.f32 %v4851, %v5567
    %v5754 = vadd.f32 %v4852, %v5572
    %v5755 = vadd.f32 %v4853, %v5575
    %v5756 = vadd.f32 %v4854, %v5580
    %v5757 = vadd.f32 %v4855, %v5583
    %v5758 = vadd.f32 %v4856, %v5588
    %v5759 = vadd.f32 %v4857, %v5591
    %v5760 = vadd.f32 %v4858, %v5596
    %v5761 = vadd.f32 %v4859, %v5599
    %v5762 = vadd.f32 %v4860, %v5604
    %v5763 = vadd.f32 %v4861, %v5607
    %v5764 = vadd.f32 %v4862, %v5612
    %v5765 = vadd.f32 %v4863, %v5615
    %v5766 = vadd.f32 %v4864, %v5620
    %v5767 = vadd.f32 %v4865, %v5623
    %v5768 = vadd.f32 %v4866, %v5628
    %v5769 = vadd.f32 %v4867, %v5631
    %v5770 = vadd.f32 %v4868, %v5636
    %v5771 = vadd.f32 %v4869, %v5639
    %v5772 = vadd.f32 %v4870, %v5644
    %v5773 = vadd.f32 %v4871, %v5647
    %v5774 = vadd.f32 %v4872, %v5652
    %v5775 = vadd.f32 %v4873, %v5655
    %v5776 = vadd.f32 %v4874, %v5660
    %v5777 = vadd.f32 %v4875, %v5663
    %v5778 = vadd.f32 %v4876, %v5668
    %v5779 = vadd.f32 %v4877, %v5671
    %v5780 = vadd.f32 %v4878, %v5676
    %v5781 = vadd.f32 %v4879, %v5679
    %v5782 = vadd.f32 %v4880, %v5684
    %v5783 = vadd.f32 %v4881, %v5687
    %v5784 = vadd.f32 %v4882, %v5692
    %v5785 = vadd.f32 %v4883, %v5695
    %v5786 = vadd.f32 %v4884, %v5700
    %v5787 = vadd.f32 %v4885, %v5703
    %v5788 = vadd.f32 %v4886, %v5708
    %v5789 = vadd.f32 %v4887, %v5711
    %v5790 = vadd.f32 %v4888, %v5716
    %v5791 = vadd.f32 %v4889, %v5719
    %v5792 = vadd.f32 %v4890, %v5724
    %v5793 = vadd.f32 %v4891, %v5727
    %s5794 = scalar_lea.vmem %s0, 24
    %v5795 = vld [vmem:[%s5794] sm:$0xf]
    %v5796 = vld [vmem:[%s5794 + $0x4] sm:$0xf]
    %v5797 = vld [vmem:[%s5794 + $0xc] sm:$0xf]
    %v5798 = vld [vmem:[%s5794 + $0x10] sm:$0xf]
    %v5799 = vld [vmem:[%s5794 + $0x18] sm:$0xf]
    %v5800 = vld [vmem:[%s5794 + $0x1c] sm:$0xf]
    %v5801 = vld [vmem:[%s5794 + $0x24] sm:$0xf]
    %v5802 = vld [vmem:[%s5794 + $0x28] sm:$0xf]
    %v5803 = vld [vmem:[%s5794 + $0x30] sm:$0xf]
    %v5804 = vld [vmem:[%s5794 + $0x34] sm:$0xf]
    %v5805 = vld [vmem:[%s5794 + $0x3c] sm:$0xf]
    %v5806 = vld [vmem:[%s5794 + $0x40] sm:$0xf]
    %v5807 = vld [vmem:[%s5794 + $0x48] sm:$0xf]
    %v5808 = vld [vmem:[%s5794 + $0x4c] sm:$0xf]
    %v5809 = vld [vmem:[%s5794 + $0x54] sm:$0xf]
    %v5810 = vld [vmem:[%s5794 + $0x58] sm:$0xf]
    %v5811 = vld [vmem:[%s5794 + $0x60] sm:$0xf]
    %v5812 = vld [vmem:[%s5794 + $0x64] sm:$0xf]
    %v5813 = vld [vmem:[%s5794 + $0x6c] sm:$0xf]
    %v5814 = vld [vmem:[%s5794 + $0x70] sm:$0xf]
    %v5815 = vld [vmem:[%s5794 + $0x78] sm:$0xf]
    %v5816 = vld [vmem:[%s5794 + $0x7c] sm:$0xf]
    %v5817 = vld [vmem:[%s5794 + $0x84] sm:$0xf]
    %v5818 = vld [vmem:[%s5794 + $0x88] sm:$0xf]
    %v5819 = vld [vmem:[%s5794 + $0x90] sm:$0xf]
    %v5820 = vld [vmem:[%s5794 + $0x94] sm:$0xf]
    %v5821 = vld [vmem:[%s5794 + $0x9c] sm:$0xf]
    %v5822 = vld [vmem:[%s5794 + $0xa0] sm:$0xf]
    %v5823 = vld [vmem:[%s5794 + $0xa8] sm:$0xf]
    %v5824 = vld [vmem:[%s5794 + $0xac] sm:$0xf]
    %v5825 = vld [vmem:[%s5794 + $0xb4] sm:$0xf]
    %v5826 = vld [vmem:[%s5794 + $0xb8] sm:$0xf]
    %v5827 = vld [vmem:[%s5794 + $0xd8] sm:$0xf]
    %v5828 = vld [vmem:[%s5794 + $0xdc] sm:$0xf]
    %v5829 = vld [vmem:[%s5794 + $0xe4] sm:$0xf]
    %v5830 = vld [vmem:[%s5794 + $0xe8] sm:$0xf]
    %v5831 = vld [vmem:[%s5794 + $0xf0] sm:$0xf]
    %v5832 = vld [vmem:[%s5794 + $0xf4] sm:$0xf]
    %v5833 = vld [vmem:[%s5794 + $0xfc] sm:$0xf]
    %v5834 = vld [vmem:[%s5794 + $0x100] sm:$0xf]
    %v5835 = vld [vmem:[%s5794 + $0x108] sm:$0xf]
    %v5836 = vld [vmem:[%s5794 + $0x10c] sm:$0xf]
    %v5837 = vld [vmem:[%s5794 + $0x114] sm:$0xf]
    %v5838 = vld [vmem:[%s5794 + $0x118] sm:$0xf]
    %v5839 = vld [vmem:[%s5794 + $0x120] sm:$0xf]
    %v5840 = vld [vmem:[%s5794 + $0x124] sm:$0xf]
    %v5841 = vld [vmem:[%s5794 + $0x12c] sm:$0xf]
    %v5842 = vld [vmem:[%s5794 + $0x130] sm:$0xf]
    %v5843 = vld [vmem:[%s5794 + $0x138] sm:$0xf]
    %v5844 = vld [vmem:[%s5794 + $0x13c] sm:$0xf]
    %v5845 = vld [vmem:[%s5794 + $0x144] sm:$0xf]
    %v5846 = vld [vmem:[%s5794 + $0x148] sm:$0xf]
    %v5847 = vld [vmem:[%s5794 + $0x150] sm:$0xf]
    %v5848 = vld [vmem:[%s5794 + $0x154] sm:$0xf]
    %v5849 = vld [vmem:[%s5794 + $0x15c] sm:$0xf]
    %v5850 = vld [vmem:[%s5794 + $0x160] sm:$0xf]
    %v5851 = vld [vmem:[%s5794 + $0x168] sm:$0xf]
    %v5852 = vld [vmem:[%s5794 + $0x16c] sm:$0xf]
    %v5853 = vld [vmem:[%s5794 + $0x174] sm:$0xf]
    %v5854 = vld [vmem:[%s5794 + $0x178] sm:$0xf]
    %v5855 = vld [vmem:[%s5794 + $0x180] sm:$0xf]
    %v5856 = vld [vmem:[%s5794 + $0x184] sm:$0xf]
    %v5857 = vld [vmem:[%s5794 + $0x18c] sm:$0xf]
    %v5858 = vld [vmem:[%s5794 + $0x190] sm:$0xf]
    %s5859 = scalar_lea.vmem %s1, 12
    %v5860 = vld [vmem:[%s5859] sm:$0x3]
    %v5925 = vunpack.c.l.b16 %v5795
    %v5926 = vunpack.c.l.b16 %v5796
    %v5927 = vunpack.c.l.b16 %v5797
    %v5928 = vunpack.c.l.b16 %v5798
    %v5929 = vunpack.c.l.b16 %v5799
    %v5930 = vunpack.c.l.b16 %v5800
    %v5931 = vunpack.c.l.b16 %v5801
    %v5932 = vunpack.c.l.b16 %v5802
    %v5933 = vunpack.c.l.b16 %v5803
    %v5934 = vunpack.c.l.b16 %v5804
    %v5935 = vunpack.c.l.b16 %v5805
    %v5936 = vunpack.c.l.b16 %v5806
    %v5937 = vunpack.c.l.b16 %v5807
    %v5938 = vunpack.c.l.b16 %v5808
    %v5939 = vunpack.c.l.b16 %v5809
    %v5940 = vunpack.c.l.b16 %v5810
    %v5941 = vunpack.c.l.b16 %v5811
    %v5942 = vunpack.c.l.b16 %v5812
    %v5943 = vunpack.c.l.b16 %v5813
    %v5944 = vunpack.c.l.b16 %v5814
    %v5945 = vunpack.c.l.b16 %v5815
    %v5946 = vunpack.c.l.b16 %v5816
    %v5947 = vunpack.c.l.b16 %v5817
    %v5948 = vunpack.c.l.b16 %v5818
    %v5949 = vunpack.c.l.b16 %v5819
    %v5950 = vunpack.c.l.b16 %v5820
    %v5951 = vunpack.c.l.b16 %v5821
    %v5952 = vunpack.c.l.b16 %v5822
    %v5953 = vunpack.c.l.b16 %v5823
    %v5954 = vunpack.c.l.b16 %v5824
    %v5955 = vunpack.c.l.b16 %v5825
    %v5956 = vunpack.c.l.b16 %v5826
    %v5957 = vunpack.c.l.b16 %v5827
    %v5958 = vunpack.c.l.b16 %v5828
    %v5959 = vunpack.c.l.b16 %v5829
    %v5960 = vunpack.c.l.b16 %v5830
    %v5961 = vunpack.c.l.b16 %v5831
    %v5962 = vunpack.c.l.b16 %v5832
    %v5963 = vunpack.c.l.b16 %v5833
    %v5964 = vunpack.c.l.b16 %v5834
    %v5965 = vunpack.c.l.b16 %v5835
    %v5966 = vunpack.c.l.b16 %v5836
    %v5967 = vunpack.c.l.b16 %v5837
    %v5968 = vunpack.c.l.b16 %v5838
    %v5969 = vunpack.c.l.b16 %v5839
    %v5970 = vunpack.c.l.b16 %v5840
    %v5971 = vunpack.c.l.b16 %v5841
    %v5972 = vunpack.c.l.b16 %v5842
    %v5973 = vunpack.c.l.b16 %v5843
    %v5974 = vunpack.c.l.b16 %v5844
    %v5975 = vunpack.c.l.b16 %v5845
    %v5976 = vunpack.c.l.b16 %v5846
    %v5977 = vunpack.c.l.b16 %v5847
    %v5978 = vunpack.c.l.b16 %v5848
    %v5979 = vunpack.c.l.b16 %v5849
    %v5980 = vunpack.c.l.b16 %v5850
    %v5981 = vunpack.c.l.b16 %v5851
    %v5982 = vunpack.c.l.b16 %v5852
    %v5983 = vunpack.c.l.b16 %v5853
    %v5984 = vunpack.c.l.b16 %v5854
    %v5985 = vunpack.c.l.b16 %v5855
    %v5986 = vunpack.c.l.b16 %v5856
    %v5987 = vunpack.c.l.b16 %v5857
    %v5988 = vunpack.c.l.b16 %v5858
    %v5989 = vpack.c.b16 %v5926, %v5925
    %v5990 = vpack.c.b16 %v5928, %v5927
    %v5991 = vpack.c.b16 %v5930, %v5929
    %v5992 = vpack.c.b16 %v5932, %v5931
    %v5993 = vpack.c.b16 %v5934, %v5933
    %v5994 = vpack.c.b16 %v5936, %v5935
    %v5995 = vpack.c.b16 %v5938, %v5937
    %v5996 = vpack.c.b16 %v5940, %v5939
    %v5997 = vpack.c.b16 %v5942, %v5941
    %v5998 = vpack.c.b16 %v5944, %v5943
    %v5999 = vpack.c.b16 %v5946, %v5945
    %v6000 = vpack.c.b16 %v5948, %v5947
    %v6001 = vpack.c.b16 %v5950, %v5949
    %v6002 = vpack.c.b16 %v5952, %v5951
    %v6003 = vpack.c.b16 %v5954, %v5953
    %v6004 = vpack.c.b16 %v5956, %v5955
    %v6005 = vpack.c.b16 %v5958, %v5957
    %v6006 = vpack.c.b16 %v5960, %v5959
    %v6007 = vpack.c.b16 %v5962, %v5961
    %v6008 = vpack.c.b16 %v5964, %v5963
    %v6009 = vpack.c.b16 %v5966, %v5965
    %v6010 = vpack.c.b16 %v5968, %v5967
    %v6011 = vpack.c.b16 %v5970, %v5969
    %v6012 = vpack.c.b16 %v5972, %v5971
    %v6013 = vpack.c.b16 %v5974, %v5973
    %v6014 = vpack.c.b16 %v5976, %v5975
    %v6015 = vpack.c.b16 %v5978, %v5977
    %v6016 = vpack.c.b16 %v5980, %v5979
    %v6017 = vpack.c.b16 %v5982, %v5981
    %v6018 = vpack.c.b16 %v5984, %v5983
    %v6019 = vpack.c.b16 %v5986, %v5985
    %v6020 = vpack.c.b16 %v5988, %v5987
    %v6022 = vsel %vm988, %v5989, 0
    %v6025 = vsel %vm988, %v5990, 0
    %v6028 = vsel %vm988, %v5991, 0
    %v6031 = vsel %vm988, %v5992, 0
    %v6034 = vsel %vm988, %v5993, 0
    %v6037 = vsel %vm988, %v5994, 0
    %v6040 = vsel %vm988, %v5995, 0
    %v6043 = vsel %vm988, %v5996, 0
    %v6046 = vsel %vm988, %v5997, 0
    %v6049 = vsel %vm988, %v5998, 0
    %v6052 = vsel %vm988, %v5999, 0
    %v6055 = vsel %vm988, %v6000, 0
    %v6058 = vsel %vm988, %v6001, 0
    %v6061 = vsel %vm988, %v6002, 0
    %v6064 = vsel %vm988, %v6003, 0
    %v6067 = vsel %vm988, %v6004, 0
    %v6070 = vsel %vm988, %v6005, 0
    %v6073 = vsel %vm988, %v6006, 0
    %v6076 = vsel %vm988, %v6007, 0
    %v6079 = vsel %vm988, %v6008, 0
    %v6082 = vsel %vm988, %v6009, 0
    %v6085 = vsel %vm988, %v6010, 0
    %v6088 = vsel %vm988, %v6011, 0
    %v6091 = vsel %vm988, %v6012, 0
    %v6094 = vsel %vm988, %v6013, 0
    %v6097 = vsel %vm988, %v6014, 0
    %v6100 = vsel %vm988, %v6015, 0
    %v6103 = vsel %vm988, %v6016, 0
    %v6106 = vsel %vm988, %v6017, 0
    %v6109 = vsel %vm988, %v6018, 0
    %v6112 = vsel %vm988, %v6019, 0
    %v6115 = vsel %vm988, %v6020, 0
    %v6118 = vsel %vm1085, %v5860, 0
    %6120 = vmatprep.subr.bf16.mxu0 0
    %6121 = vmatpush1.bf16.msra.mxu0 0
    %6122 = vmatprep.subr.bf16.mxu0 0
    %6123 = vmatpush1.bf16.msra.mxu0 0
    %6124 = vmatprep.subr.bf16.mxu0 0
    %6125 = vmatpush1.bf16.msra.mxu0 0
    %6126 = vmatprep.subr.bf16.mxu0 0
    %6127 = vmatpush1.bf16.msra.mxu0 0
    %6128 = vmatprep.subr.bf16.mxu0 0
    %6129 = vmatpush1.bf16.msra.mxu0 0
    %6130 = vmatprep.subr.bf16.mxu0 0
    %6131 = vmatpush1.bf16.msra.mxu0 0
    %6132 = vmatprep.subr.bf16.mxu0 0
    %6133 = vmatpush1.bf16.msra.mxu0 0
    %6134 = vmatprep.subr.bf16.mxu0 0
    %6135 = vmatpush1.bf16.msra.mxu0 %v6118
    %6136 = vmatprep.subr.bf16.mxu0 0
    %6137 = vmatpush2.bf16.msra.mxu0 0
    %6138 = vmatprep.subr.bf16.mxu0 0
    %6139 = vmatpush2.bf16.msra.mxu0 0
    %6140 = vmatprep.subr.bf16.mxu0 0
    %6141 = vmatpush2.bf16.msra.mxu0 0
    %6142 = vmatprep.subr.bf16.mxu0 0
    %6143 = vmatpush2.bf16.msra.mxu0 0
    %6144 = vmatprep.subr.bf16.mxu0 0
    %6145 = vmatpush2.bf16.msra.mxu0 0
    %6146 = vmatprep.subr.bf16.mxu0 0
    %6147 = vmatpush2.bf16.msra.mxu0 0
    %6148 = vmatprep.subr.bf16.mxu0 0
    %6149 = vmatpush2.bf16.msra.mxu0 0
    %6150 = vmatprep.subr.bf16.mxu0 0
    %6151 = vmatpush2.bf16.msra.mxu0 0
    %6152 = vmatprep.mubr.bf16.mxu0 0
    %6153 = vmatmul.mubr.bf16.gmra.mxu0 %v6022
    %v6154 = vpop.f32.mrf.mxu0
    %v6155 = vadd.f32 0.0, %v6154
    %v6156 = vpop.f32.mrf.mxu0
    %v6157 = vpop.f32.mrf.mxu0
    %v6158 = vadd.f32 0.0, %v6157
    %v6159 = vpop.f32.mrf.mxu0
    %6160 = vmatprep.mubr.bf16.mxu0 0
    %6161 = vmatmul.mubr.bf16.gmra.mxu0 %v6025
    %v6162 = vpop.f32.mrf.mxu0
    %v6163 = vadd.f32 0.0, %v6162
    %v6164 = vpop.f32.mrf.mxu0
    %v6165 = vpop.f32.mrf.mxu0
    %v6166 = vadd.f32 0.0, %v6165
    %v6167 = vpop.f32.mrf.mxu0
    %6168 = vmatprep.mubr.bf16.mxu0 0
    %6169 = vmatmul.mubr.bf16.gmra.mxu0 %v6028
    %v6170 = vpop.f32.mrf.mxu0
    %v6171 = vadd.f32 0.0, %v6170
    %v6172 = vpop.f32.mrf.mxu0
    %v6173 = vpop.f32.mrf.mxu0
    %v6174 = vadd.f32 0.0, %v6173
    %v6175 = vpop.f32.mrf.mxu0
    %6176 = vmatprep.mubr.bf16.mxu0 0
    %6177 = vmatmul.mubr.bf16.gmra.mxu0 %v6031
    %v6178 = vpop.f32.mrf.mxu0
    %v6179 = vadd.f32 0.0, %v6178
    %v6180 = vpop.f32.mrf.mxu0
    %v6181 = vpop.f32.mrf.mxu0
    %v6182 = vadd.f32 0.0, %v6181
    %v6183 = vpop.f32.mrf.mxu0
    %6184 = vmatprep.mubr.bf16.mxu0 0
    %6185 = vmatmul.mubr.bf16.gmra.mxu0 %v6034
    %v6186 = vpop.f32.mrf.mxu0
    %v6187 = vadd.f32 0.0, %v6186
    %v6188 = vpop.f32.mrf.mxu0
    %v6189 = vpop.f32.mrf.mxu0
    %v6190 = vadd.f32 0.0, %v6189
    %v6191 = vpop.f32.mrf.mxu0
    %6192 = vmatprep.mubr.bf16.mxu0 0
    %6193 = vmatmul.mubr.bf16.gmra.mxu0 %v6037
    %v6194 = vpop.f32.mrf.mxu0
    %v6195 = vadd.f32 0.0, %v6194
    %v6196 = vpop.f32.mrf.mxu0
    %v6197 = vpop.f32.mrf.mxu0
    %v6198 = vadd.f32 0.0, %v6197
    %v6199 = vpop.f32.mrf.mxu0
    %6200 = vmatprep.mubr.bf16.mxu0 0
    %6201 = vmatmul.mubr.bf16.gmra.mxu0 %v6040
    %v6202 = vpop.f32.mrf.mxu0
    %v6203 = vadd.f32 0.0, %v6202
    %v6204 = vpop.f32.mrf.mxu0
    %v6205 = vpop.f32.mrf.mxu0
    %v6206 = vadd.f32 0.0, %v6205
    %v6207 = vpop.f32.mrf.mxu0
    %6208 = vmatprep.mubr.bf16.mxu0 0
    %6209 = vmatmul.mubr.bf16.gmra.mxu0 %v6043
    %v6210 = vpop.f32.mrf.mxu0
    %v6211 = vadd.f32 0.0, %v6210
    %v6212 = vpop.f32.mrf.mxu0
    %v6213 = vpop.f32.mrf.mxu0
    %v6214 = vadd.f32 0.0, %v6213
    %v6215 = vpop.f32.mrf.mxu0
    %6216 = vmatprep.mubr.bf16.mxu0 0
    %6217 = vmatmul.mubr.bf16.gmra.mxu0 %v6046
    %v6218 = vpop.f32.mrf.mxu0
    %v6219 = vadd.f32 0.0, %v6218
    %v6220 = vpop.f32.mrf.mxu0
    %v6221 = vpop.f32.mrf.mxu0
    %v6222 = vadd.f32 0.0, %v6221
    %v6223 = vpop.f32.mrf.mxu0
    %6224 = vmatprep.mubr.bf16.mxu0 0
    %6225 = vmatmul.mubr.bf16.gmra.mxu0 %v6049
    %v6226 = vpop.f32.mrf.mxu0
    %v6227 = vadd.f32 0.0, %v6226
    %v6228 = vpop.f32.mrf.mxu0
    %v6229 = vpop.f32.mrf.mxu0
    %v6230 = vadd.f32 0.0, %v6229
    %v6231 = vpop.f32.mrf.mxu0
    %6232 = vmatprep.mubr.bf16.mxu0 0
    %6233 = vmatmul.mubr.bf16.gmra.mxu0 %v6052
    %v6234 = vpop.f32.mrf.mxu0
    %v6235 = vadd.f32 0.0, %v6234
    %v6236 = vpop.f32.mrf.mxu0
    %v6237 = vpop.f32.mrf.mxu0
    %v6238 = vadd.f32 0.0, %v6237
    %v6239 = vpop.f32.mrf.mxu0
    %6240 = vmatprep.mubr.bf16.mxu0 0
    %6241 = vmatmul.mubr.bf16.gmra.mxu0 %v6055
    %v6242 = vpop.f32.mrf.mxu0
    %v6243 = vadd.f32 0.0, %v6242
    %v6244 = vpop.f32.mrf.mxu0
    %v6245 = vpop.f32.mrf.mxu0
    %v6246 = vadd.f32 0.0, %v6245
    %v6247 = vpop.f32.mrf.mxu0
    %6248 = vmatprep.mubr.bf16.mxu0 0
    %6249 = vmatmul.mubr.bf16.gmra.mxu0 %v6058
    %v6250 = vpop.f32.mrf.mxu0
    %v6251 = vadd.f32 0.0, %v6250
    %v6252 = vpop.f32.mrf.mxu0
    %v6253 = vpop.f32.mrf.mxu0
    %v6254 = vadd.f32 0.0, %v6253
    %v6255 = vpop.f32.mrf.mxu0
    %6256 = vmatprep.mubr.bf16.mxu0 0
    %6257 = vmatmul.mubr.bf16.gmra.mxu0 %v6061
    %v6258 = vpop.f32.mrf.mxu0
    %v6259 = vadd.f32 0.0, %v6258
    %v6260 = vpop.f32.mrf.mxu0
    %v6261 = vpop.f32.mrf.mxu0
    %v6262 = vadd.f32 0.0, %v6261
    %v6263 = vpop.f32.mrf.mxu0
    %6264 = vmatprep.mubr.bf16.mxu0 0
    %6265 = vmatmul.mubr.bf16.gmra.mxu0 %v6064
    %v6266 = vpop.f32.mrf.mxu0
    %v6267 = vadd.f32 0.0, %v6266
    %v6268 = vpop.f32.mrf.mxu0
    %v6269 = vpop.f32.mrf.mxu0
    %v6270 = vadd.f32 0.0, %v6269
    %v6271 = vpop.f32.mrf.mxu0
    %6272 = vmatprep.mubr.bf16.mxu0 0
    %6273 = vmatmul.mubr.bf16.gmra.mxu0 %v6067
    %v6274 = vpop.f32.mrf.mxu0
    %v6275 = vadd.f32 0.0, %v6274
    %v6276 = vpop.f32.mrf.mxu0
    %v6277 = vpop.f32.mrf.mxu0
    %v6278 = vadd.f32 0.0, %v6277
    %v6279 = vpop.f32.mrf.mxu0
    %6280 = vmatprep.mubr.bf16.mxu0 0
    %6281 = vmatmul.mubr.bf16.gmra.mxu0 %v6070
    %v6282 = vpop.f32.mrf.mxu0
    %v6283 = vadd.f32 0.0, %v6282
    %v6284 = vpop.f32.mrf.mxu0
    %v6285 = vpop.f32.mrf.mxu0
    %v6286 = vadd.f32 0.0, %v6285
    %v6287 = vpop.f32.mrf.mxu0
    %6288 = vmatprep.mubr.bf16.mxu0 0
    %6289 = vmatmul.mubr.bf16.gmra.mxu0 %v6073
    %v6290 = vpop.f32.mrf.mxu0
    %v6291 = vadd.f32 0.0, %v6290
    %v6292 = vpop.f32.mrf.mxu0
    %v6293 = vpop.f32.mrf.mxu0
    %v6294 = vadd.f32 0.0, %v6293
    %v6295 = vpop.f32.mrf.mxu0
    %6296 = vmatprep.mubr.bf16.mxu0 0
    %6297 = vmatmul.mubr.bf16.gmra.mxu0 %v6076
    %v6298 = vpop.f32.mrf.mxu0
    %v6299 = vadd.f32 0.0, %v6298
    %v6300 = vpop.f32.mrf.mxu0
    %v6301 = vpop.f32.mrf.mxu0
    %v6302 = vadd.f32 0.0, %v6301
    %v6303 = vpop.f32.mrf.mxu0
    %6304 = vmatprep.mubr.bf16.mxu0 0
    %6305 = vmatmul.mubr.bf16.gmra.mxu0 %v6079
    %v6306 = vpop.f32.mrf.mxu0
    %v6307 = vadd.f32 0.0, %v6306
    %v6308 = vpop.f32.mrf.mxu0
    %v6309 = vpop.f32.mrf.mxu0
    %v6310 = vadd.f32 0.0, %v6309
    %v6311 = vpop.f32.mrf.mxu0
    %6312 = vmatprep.mubr.bf16.mxu0 0
    %6313 = vmatmul.mubr.bf16.gmra.mxu0 %v6082
    %v6314 = vpop.f32.mrf.mxu0
    %v6315 = vadd.f32 0.0, %v6314
    %v6316 = vpop.f32.mrf.mxu0
    %v6317 = vpop.f32.mrf.mxu0
    %v6318 = vadd.f32 0.0, %v6317
    %v6319 = vpop.f32.mrf.mxu0
    %6320 = vmatprep.mubr.bf16.mxu0 0
    %6321 = vmatmul.mubr.bf16.gmra.mxu0 %v6085
    %v6322 = vpop.f32.mrf.mxu0
    %v6323 = vadd.f32 0.0, %v6322
    %v6324 = vpop.f32.mrf.mxu0
    %v6325 = vpop.f32.mrf.mxu0
    %v6326 = vadd.f32 0.0, %v6325
    %v6327 = vpop.f32.mrf.mxu0
    %6328 = vmatprep.mubr.bf16.mxu0 0
    %6329 = vmatmul.mubr.bf16.gmra.mxu0 %v6088
    %v6330 = vpop.f32.mrf.mxu0
    %v6331 = vadd.f32 0.0, %v6330
    %v6332 = vpop.f32.mrf.mxu0
    %v6333 = vpop.f32.mrf.mxu0
    %v6334 = vadd.f32 0.0, %v6333
    %v6335 = vpop.f32.mrf.mxu0
    %6336 = vmatprep.mubr.bf16.mxu0 0
    %6337 = vmatmul.mubr.bf16.gmra.mxu0 %v6091
    %v6338 = vpop.f32.mrf.mxu0
    %v6339 = vadd.f32 0.0, %v6338
    %v6340 = vpop.f32.mrf.mxu0
    %v6341 = vpop.f32.mrf.mxu0
    %v6342 = vadd.f32 0.0, %v6341
    %v6343 = vpop.f32.mrf.mxu0
    %6344 = vmatprep.mubr.bf16.mxu0 0
    %6345 = vmatmul.mubr.bf16.gmra.mxu0 %v6094
    %v6346 = vpop.f32.mrf.mxu0
    %v6347 = vadd.f32 0.0, %v6346
    %v6348 = vpop.f32.mrf.mxu0
    %v6349 = vpop.f32.mrf.mxu0
    %v6350 = vadd.f32 0.0, %v6349
    %v6351 = vpop.f32.mrf.mxu0
    %6352 = vmatprep.mubr.bf16.mxu0 0
    %6353 = vmatmul.mubr.bf16.gmra.mxu0 %v6097
    %v6354 = vpop.f32.mrf.mxu0
    %v6355 = vadd.f32 0.0, %v6354
    %v6356 = vpop.f32.mrf.mxu0
    %v6357 = vpop.f32.mrf.mxu0
    %v6358 = vadd.f32 0.0, %v6357
    %v6359 = vpop.f32.mrf.mxu0
    %6360 = vmatprep.mubr.bf16.mxu0 0
    %6361 = vmatmul.mubr.bf16.gmra.mxu0 %v6100
    %v6362 = vpop.f32.mrf.mxu0
    %v6363 = vadd.f32 0.0, %v6362
    %v6364 = vpop.f32.mrf.mxu0
    %v6365 = vpop.f32.mrf.mxu0
    %v6366 = vadd.f32 0.0, %v6365
    %v6367 = vpop.f32.mrf.mxu0
    %6368 = vmatprep.mubr.bf16.mxu0 0
    %6369 = vmatmul.mubr.bf16.gmra.mxu0 %v6103
    %v6370 = vpop.f32.mrf.mxu0
    %v6371 = vadd.f32 0.0, %v6370
    %v6372 = vpop.f32.mrf.mxu0
    %v6373 = vpop.f32.mrf.mxu0
    %v6374 = vadd.f32 0.0, %v6373
    %v6375 = vpop.f32.mrf.mxu0
    %6376 = vmatprep.mubr.bf16.mxu0 0
    %6377 = vmatmul.mubr.bf16.gmra.mxu0 %v6106
    %v6378 = vpop.f32.mrf.mxu0
    %v6379 = vadd.f32 0.0, %v6378
    %v6380 = vpop.f32.mrf.mxu0
    %v6381 = vpop.f32.mrf.mxu0
    %v6382 = vadd.f32 0.0, %v6381
    %v6383 = vpop.f32.mrf.mxu0
    %6384 = vmatprep.mubr.bf16.mxu0 0
    %6385 = vmatmul.mubr.bf16.gmra.mxu0 %v6109
    %v6386 = vpop.f32.mrf.mxu0
    %v6387 = vadd.f32 0.0, %v6386
    %v6388 = vpop.f32.mrf.mxu0
    %v6389 = vpop.f32.mrf.mxu0
    %v6390 = vadd.f32 0.0, %v6389
    %v6391 = vpop.f32.mrf.mxu0
    %6392 = vmatprep.mubr.bf16.mxu0 0
    %6393 = vmatmul.mubr.bf16.gmra.mxu0 %v6112
    %v6394 = vpop.f32.mrf.mxu0
    %v6395 = vadd.f32 0.0, %v6394
    %v6396 = vpop.f32.mrf.mxu0
    %v6397 = vpop.f32.mrf.mxu0
    %v6398 = vadd.f32 0.0, %v6397
    %v6399 = vpop.f32.mrf.mxu0
    %6400 = vmatprep.mubr.bf16.mxu0 0
    %6401 = vmatmul.mubr.bf16.gmra.mxu0 %v6115
    %v6402 = vpop.f32.mrf.mxu0
    %v6403 = vadd.f32 0.0, %v6402
    %v6404 = vpop.f32.mrf.mxu0
    %v6405 = vpop.f32.mrf.mxu0
    %v6406 = vadd.f32 0.0, %v6405
    %v6407 = vpop.f32.mrf.mxu0
    %6408 = vdwg.mxu0
    %v6409 = vadd.f32 %v5730, %v6155
    %v6410 = vadd.f32 %v5731, %v6158
    %v6411 = vadd.f32 %v5732, %v6163
    %v6412 = vadd.f32 %v5733, %v6166
    %v6413 = vadd.f32 %v5734, %v6171
    %v6414 = vadd.f32 %v5735, %v6174
    %v6415 = vadd.f32 %v5736, %v6179
    %v6416 = vadd.f32 %v5737, %v6182
    %v6417 = vadd.f32 %v5738, %v6187
    %v6418 = vadd.f32 %v5739, %v6190
    %v6419 = vadd.f32 %v5740, %v6195
    %v6420 = vadd.f32 %v5741, %v6198
    %v6421 = vadd.f32 %v5742, %v6203
    %v6422 = vadd.f32 %v5743, %v6206
    %v6423 = vadd.f32 %v5744, %v6211
    %v6424 = vadd.f32 %v5745, %v6214
    %v6425 = vadd.f32 %v5746, %v6219
    %v6426 = vadd.f32 %v5747, %v6222
    %v6427 = vadd.f32 %v5748, %v6227
    %v6428 = vadd.f32 %v5749, %v6230
    %v6429 = vadd.f32 %v5750, %v6235
    %v6430 = vadd.f32 %v5751, %v6238
    %v6431 = vadd.f32 %v5752, %v6243
    %v6432 = vadd.f32 %v5753, %v6246
    %v6433 = vadd.f32 %v5754, %v6251
    %v6434 = vadd.f32 %v5755, %v6254
    %v6435 = vadd.f32 %v5756, %v6259
    %v6436 = vadd.f32 %v5757, %v6262
    %v6437 = vadd.f32 %v5758, %v6267
    %v6438 = vadd.f32 %v5759, %v6270
    %v6439 = vadd.f32 %v5760, %v6275
    %v6440 = vadd.f32 %v5761, %v6278
    %v6441 = vadd.f32 %v5762, %v6283
    %v6442 = vadd.f32 %v5763, %v6286
    %v6443 = vadd.f32 %v5764, %v6291
    %v6444 = vadd.f32 %v5765, %v6294
    %v6445 = vadd.f32 %v5766, %v6299
    %v6446 = vadd.f32 %v5767, %v6302
    %v6447 = vadd.f32 %v5768, %v6307
    %v6448 = vadd.f32 %v5769, %v6310
    %v6449 = vadd.f32 %v5770, %v6315
    %v6450 = vadd.f32 %v5771, %v6318
    %v6451 = vadd.f32 %v5772, %v6323
    %v6452 = vadd.f32 %v5773, %v6326
    %v6453 = vadd.f32 %v5774, %v6331
    %v6454 = vadd.f32 %v5775, %v6334
    %v6455 = vadd.f32 %v5776, %v6339
    %v6456 = vadd.f32 %v5777, %v6342
    %v6457 = vadd.f32 %v5778, %v6347
    %v6458 = vadd.f32 %v5779, %v6350
    %v6459 = vadd.f32 %v5780, %v6355
    %v6460 = vadd.f32 %v5781, %v6358
    %v6461 = vadd.f32 %v5782, %v6363
    %v6462 = vadd.f32 %v5783, %v6366
    %v6463 = vadd.f32 %v5784, %v6371
    %v6464 = vadd.f32 %v5785, %v6374
    %v6465 = vadd.f32 %v5786, %v6379
    %v6466 = vadd.f32 %v5787, %v6382
    %v6467 = vadd.f32 %v5788, %v6387
    %v6468 = vadd.f32 %v5789, %v6390
    %v6469 = vadd.f32 %v5790, %v6395
    %v6470 = vadd.f32 %v5791, %v6398
    %v6471 = vadd.f32 %v5792, %v6403
    %v6472 = vadd.f32 %v5793, %v6406
    %v6473 = vld [vmem:[%s5794] sm:$0xf]
    %v6474 = vld [vmem:[%s5794 + $0x4] sm:$0xf]
    %v6475 = vld [vmem:[%s5794 + $0x8] sm:$0x1]
    %v6476 = vld [vmem:[%s5794 + $0xc] sm:$0xf]
    %v6477 = vld [vmem:[%s5794 + $0x10] sm:$0xf]
    %v6478 = vld [vmem:[%s5794 + $0x14] sm:$0x1]
    %v6479 = vld [vmem:[%s5794 + $0x18] sm:$0xf]
    %v6480 = vld [vmem:[%s5794 + $0x1c] sm:$0xf]
    %v6481 = vld [vmem:[%s5794 + $0x20] sm:$0x1]
    %v6482 = vld [vmem:[%s5794 + $0x24] sm:$0xf]
    %v6483 = vld [vmem:[%s5794 + $0x28] sm:$0xf]
    %v6484 = vld [vmem:[%s5794 + $0x2c] sm:$0x1]
    %v6485 = vld [vmem:[%s5794 + $0x30] sm:$0xf]
    %v6486 = vld [vmem:[%s5794 + $0x34] sm:$0xf]
    %v6487 = vld [vmem:[%s5794 + $0x38] sm:$0x1]
    %v6488 = vld [vmem:[%s5794 + $0x3c] sm:$0xf]
    %v6489 = vld [vmem:[%s5794 + $0x40] sm:$0xf]
    %v6490 = vld [vmem:[%s5794 + $0x44] sm:$0x1]
    %v6491 = vld [vmem:[%s5794 + $0x48] sm:$0xf]
    %v6492 = vld [vmem:[%s5794 + $0x4c] sm:$0xf]
    %v6493 = vld [vmem:[%s5794 + $0x50] sm:$0x1]
    %v6494 = vld [vmem:[%s5794 + $0x54] sm:$0xf]
    %v6495 = vld [vmem:[%s5794 + $0x58] sm:$0xf]
    %v6496 = vld [vmem:[%s5794 + $0x5c] sm:$0x1]
    %v6497 = vld [vmem:[%s5794 + $0x60] sm:$0xf]
    %v6498 = vld [vmem:[%s5794 + $0x64] sm:$0xf]
    %v6499 = vld [vmem:[%s5794 + $0x68] sm:$0x1]
    %v6500 = vld [vmem:[%s5794 + $0x6c] sm:$0xf]
    %v6501 = vld [vmem:[%s5794 + $0x70] sm:$0xf]
    %v6502 = vld [vmem:[%s5794 + $0x74] sm:$0x1]
    %v6503 = vld [vmem:[%s5794 + $0x78] sm:$0xf]
    %v6504 = vld [vmem:[%s5794 + $0x7c] sm:$0xf]
    %v6505 = vld [vmem:[%s5794 + $0x80] sm:$0x1]
    %v6506 = vld [vmem:[%s5794 + $0x84] sm:$0xf]
    %v6507 = vld [vmem:[%s5794 + $0x88] sm:$0xf]
    %v6508 = vld [vmem:[%s5794 + $0x8c] sm:$0x1]
    %v6509 = vld [vmem:[%s5794 + $0x90] sm:$0xf]
    %v6510 = vld [vmem:[%s5794 + $0x94] sm:$0xf]
    %v6511 = vld [vmem:[%s5794 + $0x98] sm:$0x1]
    %v6512 = vld [vmem:[%s5794 + $0x9c] sm:$0xf]
    %v6513 = vld [vmem:[%s5794 + $0xa0] sm:$0xf]
    %v6514 = vld [vmem:[%s5794 + $0xa4] sm:$0x1]
    %v6515 = vld [vmem:[%s5794 + $0xa8] sm:$0xf]
    %v6516 = vld [vmem:[%s5794 + $0xac] sm:$0xf]
    %v6517 = vld [vmem:[%s5794 + $0xb0] sm:$0x1]
    %v6518 = vld [vmem:[%s5794 + $0xb4] sm:$0xf]
    %v6519 = vld [vmem:[%s5794 + $0xb8] sm:$0xf]
    %v6520 = vld [vmem:[%s5794 + $0xbc] sm:$0x1]
    %v6521 = vld [vmem:[%s5794 + $0xd8] sm:$0xf]
    %v6522 = vld [vmem:[%s5794 + $0xdc] sm:$0xf]
    %v6523 = vld [vmem:[%s5794 + $0xe0] sm:$0x1]
    %v6524 = vld [vmem:[%s5794 + $0xe4] sm:$0xf]
    %v6525 = vld [vmem:[%s5794 + $0xe8] sm:$0xf]
    %v6526 = vld [vmem:[%s5794 + $0xec] sm:$0x1]
    %v6527 = vld [vmem:[%s5794 + $0xf0] sm:$0xf]
    %v6528 = vld [vmem:[%s5794 + $0xf4] sm:$0xf]
    %v6529 = vld [vmem:[%s5794 + $0xf8] sm:$0x1]
    %v6530 = vld [vmem:[%s5794 + $0xfc] sm:$0xf]
    %v6531 = vld [vmem:[%s5794 + $0x100] sm:$0xf]
    %v6532 = vld [vmem:[%s5794 + $0x104] sm:$0x1]
    %v6533 = vld [vmem:[%s5794 + $0x108] sm:$0xf]
    %v6534 = vld [vmem:[%s5794 + $0x10c] sm:$0xf]
    %v6535 = vld [vmem:[%s5794 + $0x110] sm:$0x1]
    %v6536 = vld [vmem:[%s5794 + $0x114] sm:$0xf]
    %v6537 = vld [vmem:[%s5794 + $0x118] sm:$0xf]
    %v6538 = vld [vmem:[%s5794 + $0x11c] sm:$0x1]
    %v6539 = vld [vmem:[%s5794 + $0x120] sm:$0xf]
    %v6540 = vld [vmem:[%s5794 + $0x124] sm:$0xf]
    %v6541 = vld [vmem:[%s5794 + $0x128] sm:$0x1]
    %v6542 = vld [vmem:[%s5794 + $0x12c] sm:$0xf]
    %v6543 = vld [vmem:[%s5794 + $0x130] sm:$0xf]
    %v6544 = vld [vmem:[%s5794 + $0x134] sm:$0x1]
    %v6545 = vld [vmem:[%s5794 + $0x138] sm:$0xf]
    %v6546 = vld [vmem:[%s5794 + $0x13c] sm:$0xf]
    %v6547 = vld [vmem:[%s5794 + $0x140] sm:$0x1]
    %v6548 = vld [vmem:[%s5794 + $0x144] sm:$0xf]
    %v6549 = vld [vmem:[%s5794 + $0x148] sm:$0xf]
    %v6550 = vld [vmem:[%s5794 + $0x14c] sm:$0x1]
    %v6551 = vld [vmem:[%s5794 + $0x150] sm:$0xf]
    %v6552 = vld [vmem:[%s5794 + $0x154] sm:$0xf]
    %v6553 = vld [vmem:[%s5794 + $0x158] sm:$0x1]
    %v6554 = vld [vmem:[%s5794 + $0x15c] sm:$0xf]
    %v6555 = vld [vmem:[%s5794 + $0x160] sm:$0xf]
    %v6556 = vld [vmem:[%s5794 + $0x164] sm:$0x1]
    %v6557 = vld [vmem:[%s5794 + $0x168] sm:$0xf]
    %v6558 = vld [vmem:[%s5794 + $0x16c] sm:$0xf]
    %v6559 = vld [vmem:[%s5794 + $0x170] sm:$0x1]
    %v6560 = vld [vmem:[%s5794 + $0x174] sm:$0xf]
    %v6561 = vld [vmem:[%s5794 + $0x178] sm:$0xf]
    %v6562 = vld [vmem:[%s5794 + $0x17c] sm:$0x1]
    %v6563 = vld [vmem:[%s5794 + $0x180] sm:$0xf]
    %v6564 = vld [vmem:[%s5794 + $0x184] sm:$0xf]
    %v6565 = vld [vmem:[%s5794 + $0x188] sm:$0x1]
    %v6566 = vld [vmem:[%s5794 + $0x18c] sm:$0xf]
    %v6567 = vld [vmem:[%s5794 + $0x190] sm:$0xf]
    %v6568 = vld [vmem:[%s5794 + $0x194] sm:$0x1]
    %v6570 = vshrl.u32 %v6473, 16
    %v6572 = vrot.slane %v6570, 4
    %v6573 = vshll.u32 %v6473, 16
    %v6575 = vrot.slane %v6573, 5
    %v6576 = vor.u32 %v6572, %v6575
    %v6577 = vrot.slane %v6576, 4
    %v6579 = vshll.u32 %v6474, 16
    %v6581 = vrot.slane %v6579, 5
    %v6582 = vsel %vm121, %v6577, %v6581
    %v6583 = vshrl.u32 %v6474, 16
    %v6585 = vrot.slane %v6583, 4
    %v6586 = vor.u32 %v6585, %v6581
    %v6587 = vrot.slane %v6586, 4
    %v6589 = vshll.u32 %v6475, 16
    %v6591 = vrot.slane %v6589, 5
    %v6592 = vsel %vm121, %v6587, %v6591
    %v6594 = vshrl.u32 %v6476, 16
    %v6596 = vrot.slane %v6594, 4
    %v6597 = vshll.u32 %v6476, 16
    %v6599 = vrot.slane %v6597, 5
    %v6600 = vor.u32 %v6596, %v6599
    %v6601 = vrot.slane %v6600, 4
    %v6603 = vshll.u32 %v6477, 16
    %v6605 = vrot.slane %v6603, 5
    %v6606 = vsel %vm121, %v6601, %v6605
    %v6607 = vshrl.u32 %v6477, 16
    %v6609 = vrot.slane %v6607, 4
    %v6610 = vor.u32 %v6609, %v6605
    %v6611 = vrot.slane %v6610, 4
    %v6613 = vshll.u32 %v6478, 16
    %v6615 = vrot.slane %v6613, 5
    %v6616 = vsel %vm121, %v6611, %v6615
    %v6618 = vshrl.u32 %v6479, 16
    %v6620 = vrot.slane %v6618, 4
    %v6621 = vshll.u32 %v6479, 16
    %v6623 = vrot.slane %v6621, 5
    %v6624 = vor.u32 %v6620, %v6623
    %v6625 = vrot.slane %v6624, 4
    %v6627 = vshll.u32 %v6480, 16
    %v6629 = vrot.slane %v6627, 5
    %v6630 = vsel %vm121, %v6625, %v6629
    %v6631 = vshrl.u32 %v6480, 16
    %v6633 = vrot.slane %v6631, 4
    %v6634 = vor.u32 %v6633, %v6629
    %v6635 = vrot.slane %v6634, 4
    %v6637 = vshll.u32 %v6481, 16
    %v6639 = vrot.slane %v6637, 5
    %v6640 = vsel %vm121, %v6635, %v6639
    %v6642 = vshrl.u32 %v6482, 16
    %v6644 = vrot.slane %v6642, 4
    %v6645 = vshll.u32 %v6482, 16
    %v6647 = vrot.slane %v6645, 5
    %v6648 = vor.u32 %v6644, %v6647
    %v6649 = vrot.slane %v6648, 4
    %v6651 = vshll.u32 %v6483, 16
    %v6653 = vrot.slane %v6651, 5
    %v6654 = vsel %vm121, %v6649, %v6653
    %v6655 = vshrl.u32 %v6483, 16
    %v6657 = vrot.slane %v6655, 4
    %v6658 = vor.u32 %v6657, %v6653
    %v6659 = vrot.slane %v6658, 4
    %v6661 = vshll.u32 %v6484, 16
    %v6663 = vrot.slane %v6661, 5
    %v6664 = vsel %vm121, %v6659, %v6663
    %v6666 = vshrl.u32 %v6485, 16
    %v6668 = vrot.slane %v6666, 4
    %v6669 = vshll.u32 %v6485, 16
    %v6671 = vrot.slane %v6669, 5
    %v6672 = vor.u32 %v6668, %v6671
    %v6673 = vrot.slane %v6672, 4
    %v6675 = vshll.u32 %v6486, 16
    %v6677 = vrot.slane %v6675, 5
    %v6678 = vsel %vm121, %v6673, %v6677
    %v6679 = vshrl.u32 %v6486, 16
    %v6681 = vrot.slane %v6679, 4
    %v6682 = vor.u32 %v6681, %v6677
    %v6683 = vrot.slane %v6682, 4
    %v6685 = vshll.u32 %v6487, 16
    %v6687 = vrot.slane %v6685, 5
    %v6688 = vsel %vm121, %v6683, %v6687
    %v6690 = vshrl.u32 %v6488, 16
    %v6692 = vrot.slane %v6690, 4
    %v6693 = vshll.u32 %v6488, 16
    %v6695 = vrot.slane %v6693, 5
    %v6696 = vor.u32 %v6692, %v6695
    %v6697 = vrot.slane %v6696, 4
    %v6699 = vshll.u32 %v6489, 16
    %v6701 = vrot.slane %v6699, 5
    %v6702 = vsel %vm121, %v6697, %v6701
    %v6703 = vshrl.u32 %v6489, 16
    %v6705 = vrot.slane %v6703, 4
    %v6706 = vor.u32 %v6705, %v6701
    %v6707 = vrot.slane %v6706, 4
    %v6709 = vshll.u32 %v6490, 16
    %v6711 = vrot.slane %v6709, 5
    %v6712 = vsel %vm121, %v6707, %v6711
    %v6714 = vshrl.u32 %v6491, 16
    %v6716 = vrot.slane %v6714, 4
    %v6717 = vshll.u32 %v6491, 16
    %v6719 = vrot.slane %v6717, 5
    %v6720 = vor.u32 %v6716, %v6719
    %v6721 = vrot.slane %v6720, 4
    %v6723 = vshll.u32 %v6492, 16
    %v6725 = vrot.slane %v6723, 5
    %v6726 = vsel %vm121, %v6721, %v6725
    %v6727 = vshrl.u32 %v6492, 16
    %v6729 = vrot.slane %v6727, 4
    %v6730 = vor.u32 %v6729, %v6725
    %v6731 = vrot.slane %v6730, 4
    %v6733 = vshll.u32 %v6493, 16
    %v6735 = vrot.slane %v6733, 5
    %v6736 = vsel %vm121, %v6731, %v6735
    %v6738 = vshrl.u32 %v6494, 16
    %v6740 = vrot.slane %v6738, 4
    %v6741 = vshll.u32 %v6494, 16
    %v6743 = vrot.slane %v6741, 5
    %v6744 = vor.u32 %v6740, %v6743
    %v6745 = vrot.slane %v6744, 4
    %v6747 = vshll.u32 %v6495, 16
    %v6749 = vrot.slane %v6747, 5
    %v6750 = vsel %vm121, %v6745, %v6749
    %v6751 = vshrl.u32 %v6495, 16
    %v6753 = vrot.slane %v6751, 4
    %v6754 = vor.u32 %v6753, %v6749
    %v6755 = vrot.slane %v6754, 4
    %v6757 = vshll.u32 %v6496, 16
    %v6759 = vrot.slane %v6757, 5
    %v6760 = vsel %vm121, %v6755, %v6759
    %v6762 = vshrl.u32 %v6497, 16
    %v6764 = vrot.slane %v6762, 4
    %v6765 = vshll.u32 %v6497, 16
    %v6767 = vrot.slane %v6765, 5
    %v6768 = vor.u32 %v6764, %v6767
    %v6769 = vrot.slane %v6768, 4
    %v6771 = vshll.u32 %v6498, 16
    %v6773 = vrot.slane %v6771, 5
    %v6774 = vsel %vm121, %v6769, %v6773
    %v6775 = vshrl.u32 %v6498, 16
    %v6777 = vrot.slane %v6775, 4
    %v6778 = vor.u32 %v6777, %v6773
    %v6779 = vrot.slane %v6778, 4
    %v6781 = vshll.u32 %v6499, 16
    %v6783 = vrot.slane %v6781, 5
    %v6784 = vsel %vm121, %v6779, %v6783
    %v6786 = vshrl.u32 %v6500, 16
    %v6788 = vrot.slane %v6786, 4
    %v6789 = vshll.u32 %v6500, 16
    %v6791 = vrot.slane %v6789, 5
    %v6792 = vor.u32 %v6788, %v6791
    %v6793 = vrot.slane %v6792, 4
    %v6795 = vshll.u32 %v6501, 16
    %v6797 = vrot.slane %v6795, 5
    %v6798 = vsel %vm121, %v6793, %v6797
    %v6799 = vshrl.u32 %v6501, 16
    %v6801 = vrot.slane %v6799, 4
    %v6802 = vor.u32 %v6801, %v6797
    %v6803 = vrot.slane %v6802, 4
    %v6805 = vshll.u32 %v6502, 16
    %v6807 = vrot.slane %v6805, 5
    %v6808 = vsel %vm121, %v6803, %v6807
    %v6810 = vshrl.u32 %v6503, 16
    %v6812 = vrot.slane %v6810, 4
    %v6813 = vshll.u32 %v6503, 16
    %v6815 = vrot.slane %v6813, 5
    %v6816 = vor.u32 %v6812, %v6815
    %v6817 = vrot.slane %v6816, 4
    %v6819 = vshll.u32 %v6504, 16
    %v6821 = vrot.slane %v6819, 5
    %v6822 = vsel %vm121, %v6817, %v6821
    %v6823 = vshrl.u32 %v6504, 16
    %v6825 = vrot.slane %v6823, 4
    %v6826 = vor.u32 %v6825, %v6821
    %v6827 = vrot.slane %v6826, 4
    %v6829 = vshll.u32 %v6505, 16
    %v6831 = vrot.slane %v6829, 5
    %v6832 = vsel %vm121, %v6827, %v6831
    %v6834 = vshrl.u32 %v6506, 16
    %v6836 = vrot.slane %v6834, 4
    %v6837 = vshll.u32 %v6506, 16
    %v6839 = vrot.slane %v6837, 5
    %v6840 = vor.u32 %v6836, %v6839
    %v6841 = vrot.slane %v6840, 4
    %v6843 = vshll.u32 %v6507, 16
    %v6845 = vrot.slane %v6843, 5
    %v6846 = vsel %vm121, %v6841, %v6845
    %v6847 = vshrl.u32 %v6507, 16
    %v6849 = vrot.slane %v6847, 4
    %v6850 = vor.u32 %v6849, %v6845
    %v6851 = vrot.slane %v6850, 4
    %v6853 = vshll.u32 %v6508, 16
    %v6855 = vrot.slane %v6853, 5
    %v6856 = vsel %vm121, %v6851, %v6855
    %v6858 = vshrl.u32 %v6509, 16
    %v6860 = vrot.slane %v6858, 4
    %v6861 = vshll.u32 %v6509, 16
    %v6863 = vrot.slane %v6861, 5
    %v6864 = vor.u32 %v6860, %v6863
    %v6865 = vrot.slane %v6864, 4
    %v6867 = vshll.u32 %v6510, 16
    %v6869 = vrot.slane %v6867, 5
    %v6870 = vsel %vm121, %v6865, %v6869
    %v6871 = vshrl.u32 %v6510, 16
    %v6873 = vrot.slane %v6871, 4
    %v6874 = vor.u32 %v6873, %v6869
    %v6875 = vrot.slane %v6874, 4
    %v6877 = vshll.u32 %v6511, 16
    %v6879 = vrot.slane %v6877, 5
    %v6880 = vsel %vm121, %v6875, %v6879
    %v6882 = vshrl.u32 %v6512, 16
    %v6884 = vrot.slane %v6882, 4
    %v6885 = vshll.u32 %v6512, 16
    %v6887 = vrot.slane %v6885, 5
    %v6888 = vor.u32 %v6884, %v6887
    %v6889 = vrot.slane %v6888, 4
    %v6891 = vshll.u32 %v6513, 16
    %v6893 = vrot.slane %v6891, 5
    %v6894 = vsel %vm121, %v6889, %v6893
    %v6895 = vshrl.u32 %v6513, 16
    %v6897 = vrot.slane %v6895, 4
    %v6898 = vor.u32 %v6897, %v6893
    %v6899 = vrot.slane %v6898, 4
    %v6901 = vshll.u32 %v6514, 16
    %v6903 = vrot.slane %v6901, 5
    %v6904 = vsel %vm121, %v6899, %v6903
    %v6906 = vshrl.u32 %v6515, 16
    %v6908 = vrot.slane %v6906, 4
    %v6909 = vshll.u32 %v6515, 16
    %v6911 = vrot.slane %v6909, 5
    %v6912 = vor.u32 %v6908, %v6911
    %v6913 = vrot.slane %v6912, 4
    %v6915 = vshll.u32 %v6516, 16
    %v6917 = vrot.slane %v6915, 5
    %v6918 = vsel %vm121, %v6913, %v6917
    %v6919 = vshrl.u32 %v6516, 16
    %v6921 = vrot.slane %v6919, 4
    %v6922 = vor.u32 %v6921, %v6917
    %v6923 = vrot.slane %v6922, 4
    %v6925 = vshll.u32 %v6517, 16
    %v6927 = vrot.slane %v6925, 5
    %v6928 = vsel %vm121, %v6923, %v6927
    %v6930 = vshrl.u32 %v6518, 16
    %v6932 = vrot.slane %v6930, 4
    %v6933 = vshll.u32 %v6518, 16
    %v6935 = vrot.slane %v6933, 5
    %v6936 = vor.u32 %v6932, %v6935
    %v6937 = vrot.slane %v6936, 4
    %v6939 = vshll.u32 %v6519, 16
    %v6941 = vrot.slane %v6939, 5
    %v6942 = vsel %vm121, %v6937, %v6941
    %v6943 = vshrl.u32 %v6519, 16
    %v6945 = vrot.slane %v6943, 4
    %v6946 = vor.u32 %v6945, %v6941
    %v6947 = vrot.slane %v6946, 4
    %v6949 = vshll.u32 %v6520, 16
    %v6951 = vrot.slane %v6949, 5
    %v6952 = vsel %vm121, %v6947, %v6951
    %v6954 = vshrl.u32 %v6521, 16
    %v6956 = vrot.slane %v6954, 4
    %v6957 = vshll.u32 %v6521, 16
    %v6959 = vrot.slane %v6957, 5
    %v6960 = vor.u32 %v6956, %v6959
    %v6961 = vrot.slane %v6960, 4
    %v6963 = vshll.u32 %v6522, 16
    %v6965 = vrot.slane %v6963, 5
    %v6966 = vsel %vm121, %v6961, %v6965
    %v6967 = vshrl.u32 %v6522, 16
    %v6969 = vrot.slane %v6967, 4
    %v6970 = vor.u32 %v6969, %v6965
    %v6971 = vrot.slane %v6970, 4
    %v6973 = vshll.u32 %v6523, 16
    %v6975 = vrot.slane %v6973, 5
    %v6976 = vsel %vm121, %v6971, %v6975
    %v6978 = vshrl.u32 %v6524, 16
    %v6980 = vrot.slane %v6978, 4
    %v6981 = vshll.u32 %v6524, 16
    %v6983 = vrot.slane %v6981, 5
    %v6984 = vor.u32 %v6980, %v6983
    %v6985 = vrot.slane %v6984, 4
    %v6987 = vshll.u32 %v6525, 16
    %v6989 = vrot.slane %v6987, 5
    %v6990 = vsel %vm121, %v6985, %v6989
    %v6991 = vshrl.u32 %v6525, 16
    %v6993 = vrot.slane %v6991, 4
    %v6994 = vor.u32 %v6993, %v6989
    %v6995 = vrot.slane %v6994, 4
    %v6997 = vshll.u32 %v6526, 16
    %v6999 = vrot.slane %v6997, 5
    %v7000 = vsel %vm121, %v6995, %v6999
    %v7002 = vshrl.u32 %v6527, 16
    %v7004 = vrot.slane %v7002, 4
    %v7005 = vshll.u32 %v6527, 16
    %v7007 = vrot.slane %v7005, 5
    %v7008 = vor.u32 %v7004, %v7007
    %v7009 = vrot.slane %v7008, 4
    %v7011 = vshll.u32 %v6528, 16
    %v7013 = vrot.slane %v7011, 5
    %v7014 = vsel %vm121, %v7009, %v7013
    %v7015 = vshrl.u32 %v6528, 16
    %v7017 = vrot.slane %v7015, 4
    %v7018 = vor.u32 %v7017, %v7013
    %v7019 = vrot.slane %v7018, 4
    %v7021 = vshll.u32 %v6529, 16
    %v7023 = vrot.slane %v7021, 5
    %v7024 = vsel %vm121, %v7019, %v7023
    %v7026 = vshrl.u32 %v6530, 16
    %v7028 = vrot.slane %v7026, 4
    %v7029 = vshll.u32 %v6530, 16
    %v7031 = vrot.slane %v7029, 5
    %v7032 = vor.u32 %v7028, %v7031
    %v7033 = vrot.slane %v7032, 4
    %v7035 = vshll.u32 %v6531, 16
    %v7037 = vrot.slane %v7035, 5
    %v7038 = vsel %vm121, %v7033, %v7037
    %v7039 = vshrl.u32 %v6531, 16
    %v7041 = vrot.slane %v7039, 4
    %v7042 = vor.u32 %v7041, %v7037
    %v7043 = vrot.slane %v7042, 4
    %v7045 = vshll.u32 %v6532, 16
    %v7047 = vrot.slane %v7045, 5
    %v7048 = vsel %vm121, %v7043, %v7047
    %v7050 = vshrl.u32 %v6533, 16
    %v7052 = vrot.slane %v7050, 4
    %v7053 = vshll.u32 %v6533, 16
    %v7055 = vrot.slane %v7053, 5
    %v7056 = vor.u32 %v7052, %v7055
    %v7057 = vrot.slane %v7056, 4
    %v7059 = vshll.u32 %v6534, 16
    %v7061 = vrot.slane %v7059, 5
    %v7062 = vsel %vm121, %v7057, %v7061
    %v7063 = vshrl.u32 %v6534, 16
    %v7065 = vrot.slane %v7063, 4
    %v7066 = vor.u32 %v7065, %v7061
    %v7067 = vrot.slane %v7066, 4
    %v7069 = vshll.u32 %v6535, 16
    %v7071 = vrot.slane %v7069, 5
    %v7072 = vsel %vm121, %v7067, %v7071
    %v7074 = vshrl.u32 %v6536, 16
    %v7076 = vrot.slane %v7074, 4
    %v7077 = vshll.u32 %v6536, 16
    %v7079 = vrot.slane %v7077, 5
    %v7080 = vor.u32 %v7076, %v7079
    %v7081 = vrot.slane %v7080, 4
    %v7083 = vshll.u32 %v6537, 16
    %v7085 = vrot.slane %v7083, 5
    %v7086 = vsel %vm121, %v7081, %v7085
    %v7087 = vshrl.u32 %v6537, 16
    %v7089 = vrot.slane %v7087, 4
    %v7090 = vor.u32 %v7089, %v7085
    %v7091 = vrot.slane %v7090, 4
    %v7093 = vshll.u32 %v6538, 16
    %v7095 = vrot.slane %v7093, 5
    %v7096 = vsel %vm121, %v7091, %v7095
    %v7098 = vshrl.u32 %v6539, 16
    %v7100 = vrot.slane %v7098, 4
    %v7101 = vshll.u32 %v6539, 16
    %v7103 = vrot.slane %v7101, 5
    %v7104 = vor.u32 %v7100, %v7103
    %v7105 = vrot.slane %v7104, 4
    %v7107 = vshll.u32 %v6540, 16
    %v7109 = vrot.slane %v7107, 5
    %v7110 = vsel %vm121, %v7105, %v7109
    %v7111 = vshrl.u32 %v6540, 16
    %v7113 = vrot.slane %v7111, 4
    %v7114 = vor.u32 %v7113, %v7109
    %v7115 = vrot.slane %v7114, 4
    %v7117 = vshll.u32 %v6541, 16
    %v7119 = vrot.slane %v7117, 5
    %v7120 = vsel %vm121, %v7115, %v7119
    %v7122 = vshrl.u32 %v6542, 16
    %v7124 = vrot.slane %v7122, 4
    %v7125 = vshll.u32 %v6542, 16
    %v7127 = vrot.slane %v7125, 5
    %v7128 = vor.u32 %v7124, %v7127
    %v7129 = vrot.slane %v7128, 4
    %v7131 = vshll.u32 %v6543, 16
    %v7133 = vrot.slane %v7131, 5
    %v7134 = vsel %vm121, %v7129, %v7133
    %v7135 = vshrl.u32 %v6543, 16
    %v7137 = vrot.slane %v7135, 4
    %v7138 = vor.u32 %v7137, %v7133
    %v7139 = vrot.slane %v7138, 4
    %v7141 = vshll.u32 %v6544, 16
    %v7143 = vrot.slane %v7141, 5
    %v7144 = vsel %vm121, %v7139, %v7143
    %v7146 = vshrl.u32 %v6545, 16
    %v7148 = vrot.slane %v7146, 4
    %v7149 = vshll.u32 %v6545, 16
    %v7151 = vrot.slane %v7149, 5
    %v7152 = vor.u32 %v7148, %v7151
    %v7153 = vrot.slane %v7152, 4
    %v7155 = vshll.u32 %v6546, 16
    %v7157 = vrot.slane %v7155, 5
    %v7158 = vsel %vm121, %v7153, %v7157
    %v7159 = vshrl.u32 %v6546, 16
    %v7161 = vrot.slane %v7159, 4
    %v7162 = vor.u32 %v7161, %v7157
    %v7163 = vrot.slane %v7162, 4
    %v7165 = vshll.u32 %v6547, 16
    %v7167 = vrot.slane %v7165, 5
    %v7168 = vsel %vm121, %v7163, %v7167
    %v7170 = vshrl.u32 %v6548, 16
    %v7172 = vrot.slane %v7170, 4
    %v7173 = vshll.u32 %v6548, 16
    %v7175 = vrot.slane %v7173, 5
    %v7176 = vor.u32 %v7172, %v7175
    %v7177 = vrot.slane %v7176, 4
    %v7179 = vshll.u32 %v6549, 16
    %v7181 = vrot.slane %v7179, 5
    %v7182 = vsel %vm121, %v7177, %v7181
    %v7183 = vshrl.u32 %v6549, 16
    %v7185 = vrot.slane %v7183, 4
    %v7186 = vor.u32 %v7185, %v7181
    %v7187 = vrot.slane %v7186, 4
    %v7189 = vshll.u32 %v6550, 16
    %v7191 = vrot.slane %v7189, 5
    %v7192 = vsel %vm121, %v7187, %v7191
    %v7194 = vshrl.u32 %v6551, 16
    %v7196 = vrot.slane %v7194, 4
    %v7197 = vshll.u32 %v6551, 16
    %v7199 = vrot.slane %v7197, 5
    %v7200 = vor.u32 %v7196, %v7199
    %v7201 = vrot.slane %v7200, 4
    %v7203 = vshll.u32 %v6552, 16
    %v7205 = vrot.slane %v7203, 5
    %v7206 = vsel %vm121, %v7201, %v7205
    %v7207 = vshrl.u32 %v6552, 16
    %v7209 = vrot.slane %v7207, 4
    %v7210 = vor.u32 %v7209, %v7205
    %v7211 = vrot.slane %v7210, 4
    %v7213 = vshll.u32 %v6553, 16
    %v7215 = vrot.slane %v7213, 5
    %v7216 = vsel %vm121, %v7211, %v7215
    %v7218 = vshrl.u32 %v6554, 16
    %v7220 = vrot.slane %v7218, 4
    %v7221 = vshll.u32 %v6554, 16
    %v7223 = vrot.slane %v7221, 5
    %v7224 = vor.u32 %v7220, %v7223
    %v7225 = vrot.slane %v7224, 4
    %v7227 = vshll.u32 %v6555, 16
    %v7229 = vrot.slane %v7227, 5
    %v7230 = vsel %vm121, %v7225, %v7229
    %v7231 = vshrl.u32 %v6555, 16
    %v7233 = vrot.slane %v7231, 4
    %v7234 = vor.u32 %v7233, %v7229
    %v7235 = vrot.slane %v7234, 4
    %v7237 = vshll.u32 %v6556, 16
    %v7239 = vrot.slane %v7237, 5
    %v7240 = vsel %vm121, %v7235, %v7239
    %v7242 = vshrl.u32 %v6557, 16
    %v7244 = vrot.slane %v7242, 4
    %v7245 = vshll.u32 %v6557, 16
    %v7247 = vrot.slane %v7245, 5
    %v7248 = vor.u32 %v7244, %v7247
    %v7249 = vrot.slane %v7248, 4
    %v7251 = vshll.u32 %v6558, 16
    %v7253 = vrot.slane %v7251, 5
    %v7254 = vsel %vm121, %v7249, %v7253
    %v7255 = vshrl.u32 %v6558, 16
    %v7257 = vrot.slane %v7255, 4
    %v7258 = vor.u32 %v7257, %v7253
    %v7259 = vrot.slane %v7258, 4
    %v7261 = vshll.u32 %v6559, 16
    %v7263 = vrot.slane %v7261, 5
    %v7264 = vsel %vm121, %v7259, %v7263
    %v7266 = vshrl.u32 %v6560, 16
    %v7268 = vrot.slane %v7266, 4
    %v7269 = vshll.u32 %v6560, 16
    %v7271 = vrot.slane %v7269, 5
    %v7272 = vor.u32 %v7268, %v7271
    %v7273 = vrot.slane %v7272, 4
    %v7275 = vshll.u32 %v6561, 16
    %v7277 = vrot.slane %v7275, 5
    %v7278 = vsel %vm121, %v7273, %v7277
    %v7279 = vshrl.u32 %v6561, 16
    %v7281 = vrot.slane %v7279, 4
    %v7282 = vor.u32 %v7281, %v7277
    %v7283 = vrot.slane %v7282, 4
    %v7285 = vshll.u32 %v6562, 16
    %v7287 = vrot.slane %v7285, 5
    %v7288 = vsel %vm121, %v7283, %v7287
    %v7290 = vshrl.u32 %v6563, 16
    %v7292 = vrot.slane %v7290, 4
    %v7293 = vshll.u32 %v6563, 16
    %v7295 = vrot.slane %v7293, 5
    %v7296 = vor.u32 %v7292, %v7295
    %v7297 = vrot.slane %v7296, 4
    %v7299 = vshll.u32 %v6564, 16
    %v7301 = vrot.slane %v7299, 5
    %v7302 = vsel %vm121, %v7297, %v7301
    %v7303 = vshrl.u32 %v6564, 16
    %v7305 = vrot.slane %v7303, 4
    %v7306 = vor.u32 %v7305, %v7301
    %v7307 = vrot.slane %v7306, 4
    %v7309 = vshll.u32 %v6565, 16
    %v7311 = vrot.slane %v7309, 5
    %v7312 = vsel %vm121, %v7307, %v7311
    %v7314 = vshrl.u32 %v6566, 16
    %v7316 = vrot.slane %v7314, 4
    %v7317 = vshll.u32 %v6566, 16
    %v7319 = vrot.slane %v7317, 5
    %v7320 = vor.u32 %v7316, %v7319
    %v7321 = vrot.slane %v7320, 4
    %v7323 = vshll.u32 %v6567, 16
    %v7325 = vrot.slane %v7323, 5
    %v7326 = vsel %vm121, %v7321, %v7325
    %v7327 = vshrl.u32 %v6567, 16
    %v7329 = vrot.slane %v7327, 4
    %v7330 = vor.u32 %v7329, %v7325
    %v7331 = vrot.slane %v7330, 4
    %v7333 = vshll.u32 %v6568, 16
    %v7335 = vrot.slane %v7333, 5
    %v7336 = vsel %vm121, %v7331, %v7335
    %s7337 = scalar_lea.vmem %s1, 14
    %v7338 = vld [vmem:[%s7337] sm:$0x3]
    %v7339 = vunpack.c.l.b16 %v6582
    %v7340 = vunpack.c.l.b16 %v6592
    %v7341 = vunpack.c.l.b16 %v6606
    %v7342 = vunpack.c.l.b16 %v6616
    %v7343 = vunpack.c.l.b16 %v6630
    %v7344 = vunpack.c.l.b16 %v6640
    %v7345 = vunpack.c.l.b16 %v6654
    %v7346 = vunpack.c.l.b16 %v6664
    %v7347 = vunpack.c.l.b16 %v6678
    %v7348 = vunpack.c.l.b16 %v6688
    %v7349 = vunpack.c.l.b16 %v6702
    %v7350 = vunpack.c.l.b16 %v6712
    %v7351 = vunpack.c.l.b16 %v6726
    %v7352 = vunpack.c.l.b16 %v6736
    %v7353 = vunpack.c.l.b16 %v6750
    %v7354 = vunpack.c.l.b16 %v6760
    %v7355 = vunpack.c.l.b16 %v6774
    %v7356 = vunpack.c.l.b16 %v6784
    %v7357 = vunpack.c.l.b16 %v6798
    %v7358 = vunpack.c.l.b16 %v6808
    %v7359 = vunpack.c.l.b16 %v6822
    %v7360 = vunpack.c.l.b16 %v6832
    %v7361 = vunpack.c.l.b16 %v6846
    %v7362 = vunpack.c.l.b16 %v6856
    %v7363 = vunpack.c.l.b16 %v6870
    %v7364 = vunpack.c.l.b16 %v6880
    %v7365 = vunpack.c.l.b16 %v6894
    %v7366 = vunpack.c.l.b16 %v6904
    %v7367 = vunpack.c.l.b16 %v6918
    %v7368 = vunpack.c.l.b16 %v6928
    %v7369 = vunpack.c.l.b16 %v6942
    %v7370 = vunpack.c.l.b16 %v6952
    %v7371 = vunpack.c.l.b16 %v6966
    %v7372 = vunpack.c.l.b16 %v6976
    %v7373 = vunpack.c.l.b16 %v6990
    %v7374 = vunpack.c.l.b16 %v7000
    %v7375 = vunpack.c.l.b16 %v7014
    %v7376 = vunpack.c.l.b16 %v7024
    %v7377 = vunpack.c.l.b16 %v7038
    %v7378 = vunpack.c.l.b16 %v7048
    %v7379 = vunpack.c.l.b16 %v7062
    %v7380 = vunpack.c.l.b16 %v7072
    %v7381 = vunpack.c.l.b16 %v7086
    %v7382 = vunpack.c.l.b16 %v7096
    %v7383 = vunpack.c.l.b16 %v7110
    %v7384 = vunpack.c.l.b16 %v7120
    %v7385 = vunpack.c.l.b16 %v7134
    %v7386 = vunpack.c.l.b16 %v7144
    %v7387 = vunpack.c.l.b16 %v7158
    %v7388 = vunpack.c.l.b16 %v7168
    %v7389 = vunpack.c.l.b16 %v7182
    %v7390 = vunpack.c.l.b16 %v7192
    %v7391 = vunpack.c.l.b16 %v7206
    %v7392 = vunpack.c.l.b16 %v7216
    %v7393 = vunpack.c.l.b16 %v7230
    %v7394 = vunpack.c.l.b16 %v7240
    %v7395 = vunpack.c.l.b16 %v7254
    %v7396 = vunpack.c.l.b16 %v7264
    %v7397 = vunpack.c.l.b16 %v7278
    %v7398 = vunpack.c.l.b16 %v7288
    %v7399 = vunpack.c.l.b16 %v7302
    %v7400 = vunpack.c.l.b16 %v7312
    %v7401 = vunpack.c.l.b16 %v7326
    %v7402 = vunpack.c.l.b16 %v7336
    %v7403 = vpack.c.b16 %v7340, %v7339
    %v7404 = vpack.c.b16 %v7342, %v7341
    %v7405 = vpack.c.b16 %v7344, %v7343
    %v7406 = vpack.c.b16 %v7346, %v7345
    %v7407 = vpack.c.b16 %v7348, %v7347
    %v7408 = vpack.c.b16 %v7350, %v7349
    %v7409 = vpack.c.b16 %v7352, %v7351
    %v7410 = vpack.c.b16 %v7354, %v7353
    %v7411 = vpack.c.b16 %v7356, %v7355
    %v7412 = vpack.c.b16 %v7358, %v7357
    %v7413 = vpack.c.b16 %v7360, %v7359
    %v7414 = vpack.c.b16 %v7362, %v7361
    %v7415 = vpack.c.b16 %v7364, %v7363
    %v7416 = vpack.c.b16 %v7366, %v7365
    %v7417 = vpack.c.b16 %v7368, %v7367
    %v7418 = vpack.c.b16 %v7370, %v7369
    %v7419 = vpack.c.b16 %v7372, %v7371
    %v7420 = vpack.c.b16 %v7374, %v7373
    %v7421 = vpack.c.b16 %v7376, %v7375
    %v7422 = vpack.c.b16 %v7378, %v7377
    %v7423 = vpack.c.b16 %v7380, %v7379
    %v7424 = vpack.c.b16 %v7382, %v7381
    %v7425 = vpack.c.b16 %v7384, %v7383
    %v7426 = vpack.c.b16 %v7386, %v7385
    %v7427 = vpack.c.b16 %v7388, %v7387
    %v7428 = vpack.c.b16 %v7390, %v7389
    %v7429 = vpack.c.b16 %v7392, %v7391
    %v7430 = vpack.c.b16 %v7394, %v7393
    %v7431 = vpack.c.b16 %v7396, %v7395
    %v7432 = vpack.c.b16 %v7398, %v7397
    %v7433 = vpack.c.b16 %v7400, %v7399
    %v7434 = vpack.c.b16 %v7402, %v7401
    %v7436 = vsel %vm988, %v7403, 0
    %v7439 = vsel %vm988, %v7404, 0
    %v7442 = vsel %vm988, %v7405, 0
    %v7445 = vsel %vm988, %v7406, 0
    %v7448 = vsel %vm988, %v7407, 0
    %v7451 = vsel %vm988, %v7408, 0
    %v7454 = vsel %vm988, %v7409, 0
    %v7457 = vsel %vm988, %v7410, 0
    %v7460 = vsel %vm988, %v7411, 0
    %v7463 = vsel %vm988, %v7412, 0
    %v7466 = vsel %vm988, %v7413, 0
    %v7469 = vsel %vm988, %v7414, 0
    %v7472 = vsel %vm988, %v7415, 0
    %v7475 = vsel %vm988, %v7416, 0
    %v7478 = vsel %vm988, %v7417, 0
    %v7481 = vsel %vm988, %v7418, 0
    %v7484 = vsel %vm988, %v7419, 0
    %v7487 = vsel %vm988, %v7420, 0
    %v7490 = vsel %vm988, %v7421, 0
    %v7493 = vsel %vm988, %v7422, 0
    %v7496 = vsel %vm988, %v7423, 0
    %v7499 = vsel %vm988, %v7424, 0
    %v7502 = vsel %vm988, %v7425, 0
    %v7505 = vsel %vm988, %v7426, 0
    %v7508 = vsel %vm988, %v7427, 0
    %v7511 = vsel %vm988, %v7428, 0
    %v7514 = vsel %vm988, %v7429, 0
    %v7517 = vsel %vm988, %v7430, 0
    %v7520 = vsel %vm988, %v7431, 0
    %v7523 = vsel %vm988, %v7432, 0
    %v7526 = vsel %vm988, %v7433, 0
    %v7529 = vsel %vm988, %v7434, 0
    %v7532 = vsel %vm1085, %v7338, 0
    %7534 = vmatprep.subr.bf16.mxu0 0
    %7535 = vmatpush1.bf16.msra.mxu0 0
    %7536 = vmatprep.subr.bf16.mxu0 0
    %7537 = vmatpush1.bf16.msra.mxu0 0
    %7538 = vmatprep.subr.bf16.mxu0 0
    %7539 = vmatpush1.bf16.msra.mxu0 0
    %7540 = vmatprep.subr.bf16.mxu0 0
    %7541 = vmatpush1.bf16.msra.mxu0 0
    %7542 = vmatprep.subr.bf16.mxu0 0
    %7543 = vmatpush1.bf16.msra.mxu0 0
    %7544 = vmatprep.subr.bf16.mxu0 0
    %7545 = vmatpush1.bf16.msra.mxu0 0
    %7546 = vmatprep.subr.bf16.mxu0 0
    %7547 = vmatpush1.bf16.msra.mxu0 0
    %7548 = vmatprep.subr.bf16.mxu0 0
    %7549 = vmatpush1.bf16.msra.mxu0 %v7532
    %7550 = vmatprep.subr.bf16.mxu0 0
    %7551 = vmatpush2.bf16.msra.mxu0 0
    %7552 = vmatprep.subr.bf16.mxu0 0
    %7553 = vmatpush2.bf16.msra.mxu0 0
    %7554 = vmatprep.subr.bf16.mxu0 0
    %7555 = vmatpush2.bf16.msra.mxu0 0
    %7556 = vmatprep.subr.bf16.mxu0 0
    %7557 = vmatpush2.bf16.msra.mxu0 0
    %7558 = vmatprep.subr.bf16.mxu0 0
    %7559 = vmatpush2.bf16.msra.mxu0 0
    %7560 = vmatprep.subr.bf16.mxu0 0
    %7561 = vmatpush2.bf16.msra.mxu0 0
    %7562 = vmatprep.subr.bf16.mxu0 0
    %7563 = vmatpush2.bf16.msra.mxu0 0
    %7564 = vmatprep.subr.bf16.mxu0 0
    %7565 = vmatpush2.bf16.msra.mxu0 0
    %7566 = vmatprep.mubr.bf16.mxu0 0
    %7567 = vmatmul.mubr.bf16.gmra.mxu0 %v7436
    %v7568 = vpop.f32.mrf.mxu0
    %v7569 = vadd.f32 0.0, %v7568
    %v7570 = vpop.f32.mrf.mxu0
    %v7571 = vpop.f32.mrf.mxu0
    %v7572 = vadd.f32 0.0, %v7571
    %v7573 = vpop.f32.mrf.mxu0
    %7574 = vmatprep.mubr.bf16.mxu0 0
    %7575 = vmatmul.mubr.bf16.gmra.mxu0 %v7439
    %v7576 = vpop.f32.mrf.mxu0
    %v7577 = vadd.f32 0.0, %v7576
    %v7578 = vpop.f32.mrf.mxu0
    %v7579 = vpop.f32.mrf.mxu0
    %v7580 = vadd.f32 0.0, %v7579
    %v7581 = vpop.f32.mrf.mxu0
    %7582 = vmatprep.mubr.bf16.mxu0 0
    %7583 = vmatmul.mubr.bf16.gmra.mxu0 %v7442
    %v7584 = vpop.f32.mrf.mxu0
    %v7585 = vadd.f32 0.0, %v7584
    %v7586 = vpop.f32.mrf.mxu0
    %v7587 = vpop.f32.mrf.mxu0
    %v7588 = vadd.f32 0.0, %v7587
    %v7589 = vpop.f32.mrf.mxu0
    %7590 = vmatprep.mubr.bf16.mxu0 0
    %7591 = vmatmul.mubr.bf16.gmra.mxu0 %v7445
    %v7592 = vpop.f32.mrf.mxu0
    %v7593 = vadd.f32 0.0, %v7592
    %v7594 = vpop.f32.mrf.mxu0
    %v7595 = vpop.f32.mrf.mxu0
    %v7596 = vadd.f32 0.0, %v7595
    %v7597 = vpop.f32.mrf.mxu0
    %7598 = vmatprep.mubr.bf16.mxu0 0
    %7599 = vmatmul.mubr.bf16.gmra.mxu0 %v7448
    %v7600 = vpop.f32.mrf.mxu0
    %v7601 = vadd.f32 0.0, %v7600
    %v7602 = vpop.f32.mrf.mxu0
    %v7603 = vpop.f32.mrf.mxu0
    %v7604 = vadd.f32 0.0, %v7603
    %v7605 = vpop.f32.mrf.mxu0
    %7606 = vmatprep.mubr.bf16.mxu0 0
    %7607 = vmatmul.mubr.bf16.gmra.mxu0 %v7451
    %v7608 = vpop.f32.mrf.mxu0
    %v7609 = vadd.f32 0.0, %v7608
    %v7610 = vpop.f32.mrf.mxu0
    %v7611 = vpop.f32.mrf.mxu0
    %v7612 = vadd.f32 0.0, %v7611
    %v7613 = vpop.f32.mrf.mxu0
    %7614 = vmatprep.mubr.bf16.mxu0 0
    %7615 = vmatmul.mubr.bf16.gmra.mxu0 %v7454
    %v7616 = vpop.f32.mrf.mxu0
    %v7617 = vadd.f32 0.0, %v7616
    %v7618 = vpop.f32.mrf.mxu0
    %v7619 = vpop.f32.mrf.mxu0
    %v7620 = vadd.f32 0.0, %v7619
    %v7621 = vpop.f32.mrf.mxu0
    %7622 = vmatprep.mubr.bf16.mxu0 0
    %7623 = vmatmul.mubr.bf16.gmra.mxu0 %v7457
    %v7624 = vpop.f32.mrf.mxu0
    %v7625 = vadd.f32 0.0, %v7624
    %v7626 = vpop.f32.mrf.mxu0
    %v7627 = vpop.f32.mrf.mxu0
    %v7628 = vadd.f32 0.0, %v7627
    %v7629 = vpop.f32.mrf.mxu0
    %7630 = vmatprep.mubr.bf16.mxu0 0
    %7631 = vmatmul.mubr.bf16.gmra.mxu0 %v7460
    %v7632 = vpop.f32.mrf.mxu0
    %v7633 = vadd.f32 0.0, %v7632
    %v7634 = vpop.f32.mrf.mxu0
    %v7635 = vpop.f32.mrf.mxu0
    %v7636 = vadd.f32 0.0, %v7635
    %v7637 = vpop.f32.mrf.mxu0
    %7638 = vmatprep.mubr.bf16.mxu0 0
    %7639 = vmatmul.mubr.bf16.gmra.mxu0 %v7463
    %v7640 = vpop.f32.mrf.mxu0
    %v7641 = vadd.f32 0.0, %v7640
    %v7642 = vpop.f32.mrf.mxu0
    %v7643 = vpop.f32.mrf.mxu0
    %v7644 = vadd.f32 0.0, %v7643
    %v7645 = vpop.f32.mrf.mxu0
    %7646 = vmatprep.mubr.bf16.mxu0 0
    %7647 = vmatmul.mubr.bf16.gmra.mxu0 %v7466
    %v7648 = vpop.f32.mrf.mxu0
    %v7649 = vadd.f32 0.0, %v7648
    %v7650 = vpop.f32.mrf.mxu0
    %v7651 = vpop.f32.mrf.mxu0
    %v7652 = vadd.f32 0.0, %v7651
    %v7653 = vpop.f32.mrf.mxu0
    %7654 = vmatprep.mubr.bf16.mxu0 0
    %7655 = vmatmul.mubr.bf16.gmra.mxu0 %v7469
    %v7656 = vpop.f32.mrf.mxu0
    %v7657 = vadd.f32 0.0, %v7656
    %v7658 = vpop.f32.mrf.mxu0
    %v7659 = vpop.f32.mrf.mxu0
    %v7660 = vadd.f32 0.0, %v7659
    %v7661 = vpop.f32.mrf.mxu0
    %7662 = vmatprep.mubr.bf16.mxu0 0
    %7663 = vmatmul.mubr.bf16.gmra.mxu0 %v7472
    %v7664 = vpop.f32.mrf.mxu0
    %v7665 = vadd.f32 0.0, %v7664
    %v7666 = vpop.f32.mrf.mxu0
    %v7667 = vpop.f32.mrf.mxu0
    %v7668 = vadd.f32 0.0, %v7667
    %v7669 = vpop.f32.mrf.mxu0
    %7670 = vmatprep.mubr.bf16.mxu0 0
    %7671 = vmatmul.mubr.bf16.gmra.mxu0 %v7475
    %v7672 = vpop.f32.mrf.mxu0
    %v7673 = vadd.f32 0.0, %v7672
    %v7674 = vpop.f32.mrf.mxu0
    %v7675 = vpop.f32.mrf.mxu0
    %v7676 = vadd.f32 0.0, %v7675
    %v7677 = vpop.f32.mrf.mxu0
    %7678 = vmatprep.mubr.bf16.mxu0 0
    %7679 = vmatmul.mubr.bf16.gmra.mxu0 %v7478
    %v7680 = vpop.f32.mrf.mxu0
    %v7681 = vadd.f32 0.0, %v7680
    %v7682 = vpop.f32.mrf.mxu0
    %v7683 = vpop.f32.mrf.mxu0
    %v7684 = vadd.f32 0.0, %v7683
    %v7685 = vpop.f32.mrf.mxu0
    %7686 = vmatprep.mubr.bf16.mxu0 0
    %7687 = vmatmul.mubr.bf16.gmra.mxu0 %v7481
    %v7688 = vpop.f32.mrf.mxu0
    %v7689 = vadd.f32 0.0, %v7688
    %v7690 = vpop.f32.mrf.mxu0
    %v7691 = vpop.f32.mrf.mxu0
    %v7692 = vadd.f32 0.0, %v7691
    %v7693 = vpop.f32.mrf.mxu0
    %7694 = vmatprep.mubr.bf16.mxu0 0
    %7695 = vmatmul.mubr.bf16.gmra.mxu0 %v7484
    %v7696 = vpop.f32.mrf.mxu0
    %v7697 = vadd.f32 0.0, %v7696
    %v7698 = vpop.f32.mrf.mxu0
    %v7699 = vpop.f32.mrf.mxu0
    %v7700 = vadd.f32 0.0, %v7699
    %v7701 = vpop.f32.mrf.mxu0
    %7702 = vmatprep.mubr.bf16.mxu0 0
    %7703 = vmatmul.mubr.bf16.gmra.mxu0 %v7487
    %v7704 = vpop.f32.mrf.mxu0
    %v7705 = vadd.f32 0.0, %v7704
    %v7706 = vpop.f32.mrf.mxu0
    %v7707 = vpop.f32.mrf.mxu0
    %v7708 = vadd.f32 0.0, %v7707
    %v7709 = vpop.f32.mrf.mxu0
    %7710 = vmatprep.mubr.bf16.mxu0 0
    %7711 = vmatmul.mubr.bf16.gmra.mxu0 %v7490
    %v7712 = vpop.f32.mrf.mxu0
    %v7713 = vadd.f32 0.0, %v7712
    %v7714 = vpop.f32.mrf.mxu0
    %v7715 = vpop.f32.mrf.mxu0
    %v7716 = vadd.f32 0.0, %v7715
    %v7717 = vpop.f32.mrf.mxu0
    %7718 = vmatprep.mubr.bf16.mxu0 0
    %7719 = vmatmul.mubr.bf16.gmra.mxu0 %v7493
    %v7720 = vpop.f32.mrf.mxu0
    %v7721 = vadd.f32 0.0, %v7720
    %v7722 = vpop.f32.mrf.mxu0
    %v7723 = vpop.f32.mrf.mxu0
    %v7724 = vadd.f32 0.0, %v7723
    %v7725 = vpop.f32.mrf.mxu0
    %7726 = vmatprep.mubr.bf16.mxu0 0
    %7727 = vmatmul.mubr.bf16.gmra.mxu0 %v7496
    %v7728 = vpop.f32.mrf.mxu0
    %v7729 = vadd.f32 0.0, %v7728
    %v7730 = vpop.f32.mrf.mxu0
    %v7731 = vpop.f32.mrf.mxu0
    %v7732 = vadd.f32 0.0, %v7731
    %v7733 = vpop.f32.mrf.mxu0
    %7734 = vmatprep.mubr.bf16.mxu0 0
    %7735 = vmatmul.mubr.bf16.gmra.mxu0 %v7499
    %v7736 = vpop.f32.mrf.mxu0
    %v7737 = vadd.f32 0.0, %v7736
    %v7738 = vpop.f32.mrf.mxu0
    %v7739 = vpop.f32.mrf.mxu0
    %v7740 = vadd.f32 0.0, %v7739
    %v7741 = vpop.f32.mrf.mxu0
    %7742 = vmatprep.mubr.bf16.mxu0 0
    %7743 = vmatmul.mubr.bf16.gmra.mxu0 %v7502
    %v7744 = vpop.f32.mrf.mxu0
    %v7745 = vadd.f32 0.0, %v7744
    %v7746 = vpop.f32.mrf.mxu0
    %v7747 = vpop.f32.mrf.mxu0
    %v7748 = vadd.f32 0.0, %v7747
    %v7749 = vpop.f32.mrf.mxu0
    %7750 = vmatprep.mubr.bf16.mxu0 0
    %7751 = vmatmul.mubr.bf16.gmra.mxu0 %v7505
    %v7752 = vpop.f32.mrf.mxu0
    %v7753 = vadd.f32 0.0, %v7752
    %v7754 = vpop.f32.mrf.mxu0
    %v7755 = vpop.f32.mrf.mxu0
    %v7756 = vadd.f32 0.0, %v7755
    %v7757 = vpop.f32.mrf.mxu0
    %7758 = vmatprep.mubr.bf16.mxu0 0
    %7759 = vmatmul.mubr.bf16.gmra.mxu0 %v7508
    %v7760 = vpop.f32.mrf.mxu0
    %v7761 = vadd.f32 0.0, %v7760
    %v7762 = vpop.f32.mrf.mxu0
    %v7763 = vpop.f32.mrf.mxu0
    %v7764 = vadd.f32 0.0, %v7763
    %v7765 = vpop.f32.mrf.mxu0
    %7766 = vmatprep.mubr.bf16.mxu0 0
    %7767 = vmatmul.mubr.bf16.gmra.mxu0 %v7511
    %v7768 = vpop.f32.mrf.mxu0
    %v7769 = vadd.f32 0.0, %v7768
    %v7770 = vpop.f32.mrf.mxu0
    %v7771 = vpop.f32.mrf.mxu0
    %v7772 = vadd.f32 0.0, %v7771
    %v7773 = vpop.f32.mrf.mxu0
    %7774 = vmatprep.mubr.bf16.mxu0 0
    %7775 = vmatmul.mubr.bf16.gmra.mxu0 %v7514
    %v7776 = vpop.f32.mrf.mxu0
    %v7777 = vadd.f32 0.0, %v7776
    %v7778 = vpop.f32.mrf.mxu0
    %v7779 = vpop.f32.mrf.mxu0
    %v7780 = vadd.f32 0.0, %v7779
    %v7781 = vpop.f32.mrf.mxu0
    %7782 = vmatprep.mubr.bf16.mxu0 0
    %7783 = vmatmul.mubr.bf16.gmra.mxu0 %v7517
    %v7784 = vpop.f32.mrf.mxu0
    %v7785 = vadd.f32 0.0, %v7784
    %v7786 = vpop.f32.mrf.mxu0
    %v7787 = vpop.f32.mrf.mxu0
    %v7788 = vadd.f32 0.0, %v7787
    %v7789 = vpop.f32.mrf.mxu0
    %7790 = vmatprep.mubr.bf16.mxu0 0
    %7791 = vmatmul.mubr.bf16.gmra.mxu0 %v7520
    %v7792 = vpop.f32.mrf.mxu0
    %v7793 = vadd.f32 0.0, %v7792
    %v7794 = vpop.f32.mrf.mxu0
    %v7795 = vpop.f32.mrf.mxu0
    %v7796 = vadd.f32 0.0, %v7795
    %v7797 = vpop.f32.mrf.mxu0
    %7798 = vmatprep.mubr.bf16.mxu0 0
    %7799 = vmatmul.mubr.bf16.gmra.mxu0 %v7523
    %v7800 = vpop.f32.mrf.mxu0
    %v7801 = vadd.f32 0.0, %v7800
    %v7802 = vpop.f32.mrf.mxu0
    %v7803 = vpop.f32.mrf.mxu0
    %v7804 = vadd.f32 0.0, %v7803
    %v7805 = vpop.f32.mrf.mxu0
    %7806 = vmatprep.mubr.bf16.mxu0 0
    %7807 = vmatmul.mubr.bf16.gmra.mxu0 %v7526
    %v7808 = vpop.f32.mrf.mxu0
    %v7809 = vadd.f32 0.0, %v7808
    %v7810 = vpop.f32.mrf.mxu0
    %v7811 = vpop.f32.mrf.mxu0
    %v7812 = vadd.f32 0.0, %v7811
    %v7813 = vpop.f32.mrf.mxu0
    %7814 = vmatprep.mubr.bf16.mxu0 0
    %7815 = vmatmul.mubr.bf16.gmra.mxu0 %v7529
    %v7816 = vpop.f32.mrf.mxu0
    %v7817 = vadd.f32 0.0, %v7816
    %v7818 = vpop.f32.mrf.mxu0
    %v7819 = vpop.f32.mrf.mxu0
    %v7820 = vadd.f32 0.0, %v7819
    %v7821 = vpop.f32.mrf.mxu0
    %7822 = vdwg.mxu0
    %v7823 = vadd.f32 %v6409, %v7569
    %v7824 = vadd.f32 %v6410, %v7572
    %v7825 = vadd.f32 %v6411, %v7577
    %v7826 = vadd.f32 %v6412, %v7580
    %v7827 = vadd.f32 %v6413, %v7585
    %v7828 = vadd.f32 %v6414, %v7588
    %v7829 = vadd.f32 %v6415, %v7593
    %v7830 = vadd.f32 %v6416, %v7596
    %v7831 = vadd.f32 %v6417, %v7601
    %v7832 = vadd.f32 %v6418, %v7604
    %v7833 = vadd.f32 %v6419, %v7609
    %v7834 = vadd.f32 %v6420, %v7612
    %v7835 = vadd.f32 %v6421, %v7617
    %v7836 = vadd.f32 %v6422, %v7620
    %v7837 = vadd.f32 %v6423, %v7625
    %v7838 = vadd.f32 %v6424, %v7628
    %v7839 = vadd.f32 %v6425, %v7633
    %v7840 = vadd.f32 %v6426, %v7636
    %v7841 = vadd.f32 %v6427, %v7641
    %v7842 = vadd.f32 %v6428, %v7644
    %v7843 = vadd.f32 %v6429, %v7649
    %v7844 = vadd.f32 %v6430, %v7652
    %v7845 = vadd.f32 %v6431, %v7657
    %v7846 = vadd.f32 %v6432, %v7660
    %v7847 = vadd.f32 %v6433, %v7665
    %v7848 = vadd.f32 %v6434, %v7668
    %v7849 = vadd.f32 %v6435, %v7673
    %v7850 = vadd.f32 %v6436, %v7676
    %v7851 = vadd.f32 %v6437, %v7681
    %v7852 = vadd.f32 %v6438, %v7684
    %v7853 = vadd.f32 %v6439, %v7689
    %v7854 = vadd.f32 %v6440, %v7692
    %v7855 = vadd.f32 %v6441, %v7697
    %v7856 = vadd.f32 %v6442, %v7700
    %v7857 = vadd.f32 %v6443, %v7705
    %v7858 = vadd.f32 %v6444, %v7708
    %v7859 = vadd.f32 %v6445, %v7713
    %v7860 = vadd.f32 %v6446, %v7716
    %v7861 = vadd.f32 %v6447, %v7721
    %v7862 = vadd.f32 %v6448, %v7724
    %v7863 = vadd.f32 %v6449, %v7729
    %v7864 = vadd.f32 %v6450, %v7732
    %v7865 = vadd.f32 %v6451, %v7737
    %v7866 = vadd.f32 %v6452, %v7740
    %v7867 = vadd.f32 %v6453, %v7745
    %v7868 = vadd.f32 %v6454, %v7748
    %v7869 = vadd.f32 %v6455, %v7753
    %v7870 = vadd.f32 %v6456, %v7756
    %v7871 = vadd.f32 %v6457, %v7761
    %v7872 = vadd.f32 %v6458, %v7764
    %v7873 = vadd.f32 %v6459, %v7769
    %v7874 = vadd.f32 %v6460, %v7772
    %v7875 = vadd.f32 %v6461, %v7777
    %v7876 = vadd.f32 %v6462, %v7780
    %v7877 = vadd.f32 %v6463, %v7785
    %v7878 = vadd.f32 %v6464, %v7788
    %v7879 = vadd.f32 %v6465, %v7793
    %v7880 = vadd.f32 %v6466, %v7796
    %v7881 = vadd.f32 %v6467, %v7801
    %v7882 = vadd.f32 %v6468, %v7804
    %v7883 = vadd.f32 %v6469, %v7809
    %v7884 = vadd.f32 %v6470, %v7812
    %v7885 = vadd.f32 %v6471, %v7817
    %v7886 = vadd.f32 %v6472, %v7820
    %v7887 = vld [vmem:[%s5794] sm:$0xe]
    %v7888 = vld [vmem:[%s5794 + $0xc] sm:$0xe]
    %v7889 = vld [vmem:[%s5794 + $0x18] sm:$0xe]
    %v7890 = vld [vmem:[%s5794 + $0x24] sm:$0xe]
    %v7891 = vld [vmem:[%s5794 + $0x30] sm:$0xe]
    %v7892 = vld [vmem:[%s5794 + $0x3c] sm:$0xe]
    %v7893 = vld [vmem:[%s5794 + $0x48] sm:$0xe]
    %v7894 = vld [vmem:[%s5794 + $0x54] sm:$0xe]
    %v7895 = vld [vmem:[%s5794 + $0x60] sm:$0xe]
    %v7896 = vld [vmem:[%s5794 + $0x6c] sm:$0xe]
    %v7897 = vld [vmem:[%s5794 + $0x78] sm:$0xe]
    %v7898 = vld [vmem:[%s5794 + $0x84] sm:$0xe]
    %v7899 = vld [vmem:[%s5794 + $0x90] sm:$0xe]
    %v7900 = vld [vmem:[%s5794 + $0x9c] sm:$0xe]
    %v7901 = vld [vmem:[%s5794 + $0xa8] sm:$0xe]
    %v7902 = vld [vmem:[%s5794 + $0xb4] sm:$0xe]
    %v7903 = vld [vmem:[%s5794 + $0xd8] sm:$0xe]
    %v7904 = vld [vmem:[%s5794 + $0xe4] sm:$0xe]
    %v7905 = vld [vmem:[%s5794 + $0xf0] sm:$0xe]
    %v7906 = vld [vmem:[%s5794 + $0xfc] sm:$0xe]
    %v7907 = vld [vmem:[%s5794 + $0x108] sm:$0xe]
    %v7908 = vld [vmem:[%s5794 + $0x114] sm:$0xe]
    %v7909 = vld [vmem:[%s5794 + $0x120] sm:$0xe]
    %v7910 = vld [vmem:[%s5794 + $0x12c] sm:$0xe]
    %v7911 = vld [vmem:[%s5794 + $0x138] sm:$0xe]
    %v7912 = vld [vmem:[%s5794 + $0x144] sm:$0xe]
    %v7913 = vld [vmem:[%s5794 + $0x150] sm:$0xe]
    %v7914 = vld [vmem:[%s5794 + $0x15c] sm:$0xe]
    %v7915 = vld [vmem:[%s5794 + $0x168] sm:$0xe]
    %v7916 = vld [vmem:[%s5794 + $0x174] sm:$0xe]
    %v7917 = vld [vmem:[%s5794 + $0x180] sm:$0xe]
    %v7918 = vld [vmem:[%s5794 + $0x18c] sm:$0xe]
    %v8015 = vrot.slane %v7887, 5
    %v8016 = vrot.slane %v8015, 4
    %v8017 = vrot.slane %v6474, 5
    %v8018 = vsel %vm2024, %v8016, %v8017
    %v8019 = vrot.slane %v8017, 4
    %v8020 = vrot.slane %v6475, 5
    %v8021 = vsel %vm2024, %v8019, %v8020
    %v8022 = vrot.slane %v7888, 5
    %v8023 = vrot.slane %v8022, 4
    %v8024 = vrot.slane %v6477, 5
    %v8025 = vsel %vm2024, %v8023, %v8024
    %v8026 = vrot.slane %v8024, 4
    %v8027 = vrot.slane %v6478, 5
    %v8028 = vsel %vm2024, %v8026, %v8027
    %v8029 = vrot.slane %v7889, 5
    %v8030 = vrot.slane %v8029, 4
    %v8031 = vrot.slane %v6480, 5
    %v8032 = vsel %vm2024, %v8030, %v8031
    %v8033 = vrot.slane %v8031, 4
    %v8034 = vrot.slane %v6481, 5
    %v8035 = vsel %vm2024, %v8033, %v8034
    %v8036 = vrot.slane %v7890, 5
    %v8037 = vrot.slane %v8036, 4
    %v8038 = vrot.slane %v6483, 5
    %v8039 = vsel %vm2024, %v8037, %v8038
    %v8040 = vrot.slane %v8038, 4
    %v8041 = vrot.slane %v6484, 5
    %v8042 = vsel %vm2024, %v8040, %v8041
    %v8043 = vrot.slane %v7891, 5
    %v8044 = vrot.slane %v8043, 4
    %v8045 = vrot.slane %v6486, 5
    %v8046 = vsel %vm2024, %v8044, %v8045
    %v8047 = vrot.slane %v8045, 4
    %v8048 = vrot.slane %v6487, 5
    %v8049 = vsel %vm2024, %v8047, %v8048
    %v8050 = vrot.slane %v7892, 5
    %v8051 = vrot.slane %v8050, 4
    %v8052 = vrot.slane %v6489, 5
    %v8053 = vsel %vm2024, %v8051, %v8052
    %v8054 = vrot.slane %v8052, 4
    %v8055 = vrot.slane %v6490, 5
    %v8056 = vsel %vm2024, %v8054, %v8055
    %v8057 = vrot.slane %v7893, 5
    %v8058 = vrot.slane %v8057, 4
    %v8059 = vrot.slane %v6492, 5
    %v8060 = vsel %vm2024, %v8058, %v8059
    %v8061 = vrot.slane %v8059, 4
    %v8062 = vrot.slane %v6493, 5
    %v8063 = vsel %vm2024, %v8061, %v8062
    %v8064 = vrot.slane %v7894, 5
    %v8065 = vrot.slane %v8064, 4
    %v8066 = vrot.slane %v6495, 5
    %v8067 = vsel %vm2024, %v8065, %v8066
    %v8068 = vrot.slane %v8066, 4
    %v8069 = vrot.slane %v6496, 5
    %v8070 = vsel %vm2024, %v8068, %v8069
    %v8071 = vrot.slane %v7895, 5
    %v8072 = vrot.slane %v8071, 4
    %v8073 = vrot.slane %v6498, 5
    %v8074 = vsel %vm2024, %v8072, %v8073
    %v8075 = vrot.slane %v8073, 4
    %v8076 = vrot.slane %v6499, 5
    %v8077 = vsel %vm2024, %v8075, %v8076
    %v8078 = vrot.slane %v7896, 5
    %v8079 = vrot.slane %v8078, 4
    %v8080 = vrot.slane %v6501, 5
    %v8081 = vsel %vm2024, %v8079, %v8080
    %v8082 = vrot.slane %v8080, 4
    %v8083 = vrot.slane %v6502, 5
    %v8084 = vsel %vm2024, %v8082, %v8083
    %v8085 = vrot.slane %v7897, 5
    %v8086 = vrot.slane %v8085, 4
    %v8087 = vrot.slane %v6504, 5
    %v8088 = vsel %vm2024, %v8086, %v8087
    %v8089 = vrot.slane %v8087, 4
    %v8090 = vrot.slane %v6505, 5
    %v8091 = vsel %vm2024, %v8089, %v8090
    %v8092 = vrot.slane %v7898, 5
    %v8093 = vrot.slane %v8092, 4
    %v8094 = vrot.slane %v6507, 5
    %v8095 = vsel %vm2024, %v8093, %v8094
    %v8096 = vrot.slane %v8094, 4
    %v8097 = vrot.slane %v6508, 5
    %v8098 = vsel %vm2024, %v8096, %v8097
    %v8099 = vrot.slane %v7899, 5
    %v8100 = vrot.slane %v8099, 4
    %v8101 = vrot.slane %v6510, 5
    %v8102 = vsel %vm2024, %v8100, %v8101
    %v8103 = vrot.slane %v8101, 4
    %v8104 = vrot.slane %v6511, 5
    %v8105 = vsel %vm2024, %v8103, %v8104
    %v8106 = vrot.slane %v7900, 5
    %v8107 = vrot.slane %v8106, 4
    %v8108 = vrot.slane %v6513, 5
    %v8109 = vsel %vm2024, %v8107, %v8108
    %v8110 = vrot.slane %v8108, 4
    %v8111 = vrot.slane %v6514, 5
    %v8112 = vsel %vm2024, %v8110, %v8111
    %v8113 = vrot.slane %v7901, 5
    %v8114 = vrot.slane %v8113, 4
    %v8115 = vrot.slane %v6516, 5
    %v8116 = vsel %vm2024, %v8114, %v8115
    %v8117 = vrot.slane %v8115, 4
    %v8118 = vrot.slane %v6517, 5
    %v8119 = vsel %vm2024, %v8117, %v8118
    %v8120 = vrot.slane %v7902, 5
    %v8121 = vrot.slane %v8120, 4
    %v8122 = vrot.slane %v6519, 5
    %v8123 = vsel %vm2024, %v8121, %v8122
    %v8124 = vrot.slane %v8122, 4
    %v8125 = vrot.slane %v6520, 5
    %v8126 = vsel %vm2024, %v8124, %v8125
    %v8127 = vrot.slane %v7903, 5
    %v8128 = vrot.slane %v8127, 4
    %v8129 = vrot.slane %v6522, 5
    %v8130 = vsel %vm2024, %v8128, %v8129
    %v8131 = vrot.slane %v8129, 4
    %v8132 = vrot.slane %v6523, 5
    %v8133 = vsel %vm2024, %v8131, %v8132
    %v8134 = vrot.slane %v7904, 5
    %v8135 = vrot.slane %v8134, 4
    %v8136 = vrot.slane %v6525, 5
    %v8137 = vsel %vm2024, %v8135, %v8136
    %v8138 = vrot.slane %v8136, 4
    %v8139 = vrot.slane %v6526, 5
    %v8140 = vsel %vm2024, %v8138, %v8139
    %v8141 = vrot.slane %v7905, 5
    %v8142 = vrot.slane %v8141, 4
    %v8143 = vrot.slane %v6528, 5
    %v8144 = vsel %vm2024, %v8142, %v8143
    %v8145 = vrot.slane %v8143, 4
    %v8146 = vrot.slane %v6529, 5
    %v8147 = vsel %vm2024, %v8145, %v8146
    %v8148 = vrot.slane %v7906, 5
    %v8149 = vrot.slane %v8148, 4
    %v8150 = vrot.slane %v6531, 5
    %v8151 = vsel %vm2024, %v8149, %v8150
    %v8152 = vrot.slane %v8150, 4
    %v8153 = vrot.slane %v6532, 5
    %v8154 = vsel %vm2024, %v8152, %v8153
    %v8155 = vrot.slane %v7907, 5
    %v8156 = vrot.slane %v8155, 4
    %v8157 = vrot.slane %v6534, 5
    %v8158 = vsel %vm2024, %v8156, %v8157
    %v8159 = vrot.slane %v8157, 4
    %v8160 = vrot.slane %v6535, 5
    %v8161 = vsel %vm2024, %v8159, %v8160
    %v8162 = vrot.slane %v7908, 5
    %v8163 = vrot.slane %v8162, 4
    %v8164 = vrot.slane %v6537, 5
    %v8165 = vsel %vm2024, %v8163, %v8164
    %v8166 = vrot.slane %v8164, 4
    %v8167 = vrot.slane %v6538, 5
    %v8168 = vsel %vm2024, %v8166, %v8167
    %v8169 = vrot.slane %v7909, 5
    %v8170 = vrot.slane %v8169, 4
    %v8171 = vrot.slane %v6540, 5
    %v8172 = vsel %vm2024, %v8170, %v8171
    %v8173 = vrot.slane %v8171, 4
    %v8174 = vrot.slane %v6541, 5
    %v8175 = vsel %vm2024, %v8173, %v8174
    %v8176 = vrot.slane %v7910, 5
    %v8177 = vrot.slane %v8176, 4
    %v8178 = vrot.slane %v6543, 5
    %v8179 = vsel %vm2024, %v8177, %v8178
    %v8180 = vrot.slane %v8178, 4
    %v8181 = vrot.slane %v6544, 5
    %v8182 = vsel %vm2024, %v8180, %v8181
    %v8183 = vrot.slane %v7911, 5
    %v8184 = vrot.slane %v8183, 4
    %v8185 = vrot.slane %v6546, 5
    %v8186 = vsel %vm2024, %v8184, %v8185
    %v8187 = vrot.slane %v8185, 4
    %v8188 = vrot.slane %v6547, 5
    %v8189 = vsel %vm2024, %v8187, %v8188
    %v8190 = vrot.slane %v7912, 5
    %v8191 = vrot.slane %v8190, 4
    %v8192 = vrot.slane %v6549, 5
    %v8193 = vsel %vm2024, %v8191, %v8192
    %v8194 = vrot.slane %v8192, 4
    %v8195 = vrot.slane %v6550, 5
    %v8196 = vsel %vm2024, %v8194, %v8195
    %v8197 = vrot.slane %v7913, 5
    %v8198 = vrot.slane %v8197, 4
    %v8199 = vrot.slane %v6552, 5
    %v8200 = vsel %vm2024, %v8198, %v8199
    %v8201 = vrot.slane %v8199, 4
    %v8202 = vrot.slane %v6553, 5
    %v8203 = vsel %vm2024, %v8201, %v8202
    %v8204 = vrot.slane %v7914, 5
    %v8205 = vrot.slane %v8204, 4
    %v8206 = vrot.slane %v6555, 5
    %v8207 = vsel %vm2024, %v8205, %v8206
    %v8208 = vrot.slane %v8206, 4
    %v8209 = vrot.slane %v6556, 5
    %v8210 = vsel %vm2024, %v8208, %v8209
    %v8211 = vrot.slane %v7915, 5
    %v8212 = vrot.slane %v8211, 4
    %v8213 = vrot.slane %v6558, 5
    %v8214 = vsel %vm2024, %v8212, %v8213
    %v8215 = vrot.slane %v8213, 4
    %v8216 = vrot.slane %v6559, 5
    %v8217 = vsel %vm2024, %v8215, %v8216
    %v8218 = vrot.slane %v7916, 5
    %v8219 = vrot.slane %v8218, 4
    %v8220 = vrot.slane %v6561, 5
    %v8221 = vsel %vm2024, %v8219, %v8220
    %v8222 = vrot.slane %v8220, 4
    %v8223 = vrot.slane %v6562, 5
    %v8224 = vsel %vm2024, %v8222, %v8223
    %v8225 = vrot.slane %v7917, 5
    %v8226 = vrot.slane %v8225, 4
    %v8227 = vrot.slane %v6564, 5
    %v8228 = vsel %vm2024, %v8226, %v8227
    %v8229 = vrot.slane %v8227, 4
    %v8230 = vrot.slane %v6565, 5
    %v8231 = vsel %vm2024, %v8229, %v8230
    %v8232 = vrot.slane %v7918, 5
    %v8233 = vrot.slane %v8232, 4
    %v8234 = vrot.slane %v6567, 5
    %v8235 = vsel %vm2024, %v8233, %v8234
    %v8236 = vrot.slane %v8234, 4
    %v8237 = vrot.slane %v6568, 5
    %v8238 = vsel %vm2024, %v8236, %v8237
    %s8239 = scalar_lea.vmem %s1, 16
    %v8240 = vld [vmem:[%s8239] sm:$0x3]
    %v8241 = vunpack.c.l.b16 %v8018
    %v8242 = vunpack.c.l.b16 %v8021
    %v8243 = vunpack.c.l.b16 %v8025
    %v8244 = vunpack.c.l.b16 %v8028
    %v8245 = vunpack.c.l.b16 %v8032
    %v8246 = vunpack.c.l.b16 %v8035
    %v8247 = vunpack.c.l.b16 %v8039
    %v8248 = vunpack.c.l.b16 %v8042
    %v8249 = vunpack.c.l.b16 %v8046
    %v8250 = vunpack.c.l.b16 %v8049
    %v8251 = vunpack.c.l.b16 %v8053
    %v8252 = vunpack.c.l.b16 %v8056
    %v8253 = vunpack.c.l.b16 %v8060
    %v8254 = vunpack.c.l.b16 %v8063
    %v8255 = vunpack.c.l.b16 %v8067
    %v8256 = vunpack.c.l.b16 %v8070
    %v8257 = vunpack.c.l.b16 %v8074
    %v8258 = vunpack.c.l.b16 %v8077
    %v8259 = vunpack.c.l.b16 %v8081
    %v8260 = vunpack.c.l.b16 %v8084
    %v8261 = vunpack.c.l.b16 %v8088
    %v8262 = vunpack.c.l.b16 %v8091
    %v8263 = vunpack.c.l.b16 %v8095
    %v8264 = vunpack.c.l.b16 %v8098
    %v8265 = vunpack.c.l.b16 %v8102
    %v8266 = vunpack.c.l.b16 %v8105
    %v8267 = vunpack.c.l.b16 %v8109
    %v8268 = vunpack.c.l.b16 %v8112
    %v8269 = vunpack.c.l.b16 %v8116
    %v8270 = vunpack.c.l.b16 %v8119
    %v8271 = vunpack.c.l.b16 %v8123
    %v8272 = vunpack.c.l.b16 %v8126
    %v8273 = vunpack.c.l.b16 %v8130
    %v8274 = vunpack.c.l.b16 %v8133
    %v8275 = vunpack.c.l.b16 %v8137
    %v8276 = vunpack.c.l.b16 %v8140
    %v8277 = vunpack.c.l.b16 %v8144
    %v8278 = vunpack.c.l.b16 %v8147
    %v8279 = vunpack.c.l.b16 %v8151
    %v8280 = vunpack.c.l.b16 %v8154
    %v8281 = vunpack.c.l.b16 %v8158
    %v8282 = vunpack.c.l.b16 %v8161
    %v8283 = vunpack.c.l.b16 %v8165
    %v8284 = vunpack.c.l.b16 %v8168
    %v8285 = vunpack.c.l.b16 %v8172
    %v8286 = vunpack.c.l.b16 %v8175
    %v8287 = vunpack.c.l.b16 %v8179
    %v8288 = vunpack.c.l.b16 %v8182
    %v8289 = vunpack.c.l.b16 %v8186
    %v8290 = vunpack.c.l.b16 %v8189
    %v8291 = vunpack.c.l.b16 %v8193
    %v8292 = vunpack.c.l.b16 %v8196
    %v8293 = vunpack.c.l.b16 %v8200
    %v8294 = vunpack.c.l.b16 %v8203
    %v8295 = vunpack.c.l.b16 %v8207
    %v8296 = vunpack.c.l.b16 %v8210
    %v8297 = vunpack.c.l.b16 %v8214
    %v8298 = vunpack.c.l.b16 %v8217
    %v8299 = vunpack.c.l.b16 %v8221
    %v8300 = vunpack.c.l.b16 %v8224
    %v8301 = vunpack.c.l.b16 %v8228
    %v8302 = vunpack.c.l.b16 %v8231
    %v8303 = vunpack.c.l.b16 %v8235
    %v8304 = vunpack.c.l.b16 %v8238
    %v8305 = vpack.c.b16 %v8242, %v8241
    %v8306 = vpack.c.b16 %v8244, %v8243
    %v8307 = vpack.c.b16 %v8246, %v8245
    %v8308 = vpack.c.b16 %v8248, %v8247
    %v8309 = vpack.c.b16 %v8250, %v8249
    %v8310 = vpack.c.b16 %v8252, %v8251
    %v8311 = vpack.c.b16 %v8254, %v8253
    %v8312 = vpack.c.b16 %v8256, %v8255
    %v8313 = vpack.c.b16 %v8258, %v8257
    %v8314 = vpack.c.b16 %v8260, %v8259
    %v8315 = vpack.c.b16 %v8262, %v8261
    %v8316 = vpack.c.b16 %v8264, %v8263
    %v8317 = vpack.c.b16 %v8266, %v8265
    %v8318 = vpack.c.b16 %v8268, %v8267
    %v8319 = vpack.c.b16 %v8270, %v8269
    %v8320 = vpack.c.b16 %v8272, %v8271
    %v8321 = vpack.c.b16 %v8274, %v8273
    %v8322 = vpack.c.b16 %v8276, %v8275
    %v8323 = vpack.c.b16 %v8278, %v8277
    %v8324 = vpack.c.b16 %v8280, %v8279
    %v8325 = vpack.c.b16 %v8282, %v8281
    %v8326 = vpack.c.b16 %v8284, %v8283
    %v8327 = vpack.c.b16 %v8286, %v8285
    %v8328 = vpack.c.b16 %v8288, %v8287
    %v8329 = vpack.c.b16 %v8290, %v8289
    %v8330 = vpack.c.b16 %v8292, %v8291
    %v8331 = vpack.c.b16 %v8294, %v8293
    %v8332 = vpack.c.b16 %v8296, %v8295
    %v8333 = vpack.c.b16 %v8298, %v8297
    %v8334 = vpack.c.b16 %v8300, %v8299
    %v8335 = vpack.c.b16 %v8302, %v8301
    %v8336 = vpack.c.b16 %v8304, %v8303
    %v8338 = vsel %vm988, %v8305, 0
    %v8341 = vsel %vm988, %v8306, 0
    %v8344 = vsel %vm988, %v8307, 0
    %v8347 = vsel %vm988, %v8308, 0
    %v8350 = vsel %vm988, %v8309, 0
    %v8353 = vsel %vm988, %v8310, 0
    %v8356 = vsel %vm988, %v8311, 0
    %v8359 = vsel %vm988, %v8312, 0
    %v8362 = vsel %vm988, %v8313, 0
    %v8365 = vsel %vm988, %v8314, 0
    %v8368 = vsel %vm988, %v8315, 0
    %v8371 = vsel %vm988, %v8316, 0
    %v8374 = vsel %vm988, %v8317, 0
    %v8377 = vsel %vm988, %v8318, 0
    %v8380 = vsel %vm988, %v8319, 0
    %v8383 = vsel %vm988, %v8320, 0
    %v8386 = vsel %vm988, %v8321, 0
    %v8389 = vsel %vm988, %v8322, 0
    %v8392 = vsel %vm988, %v8323, 0
    %v8395 = vsel %vm988, %v8324, 0
    %v8398 = vsel %vm988, %v8325, 0
    %v8401 = vsel %vm988, %v8326, 0
    %v8404 = vsel %vm988, %v8327, 0
    %v8407 = vsel %vm988, %v8328, 0
    %v8410 = vsel %vm988, %v8329, 0
    %v8413 = vsel %vm988, %v8330, 0
    %v8416 = vsel %vm988, %v8331, 0
    %v8419 = vsel %vm988, %v8332, 0
    %v8422 = vsel %vm988, %v8333, 0
    %v8425 = vsel %vm988, %v8334, 0
    %v8428 = vsel %vm988, %v8335, 0
    %v8431 = vsel %vm988, %v8336, 0
    %v8434 = vsel %vm1085, %v8240, 0
    %8436 = vmatprep.subr.bf16.mxu0 0
    %8437 = vmatpush1.bf16.msra.mxu0 0
    %8438 = vmatprep.subr.bf16.mxu0 0
    %8439 = vmatpush1.bf16.msra.mxu0 0
    %8440 = vmatprep.subr.bf16.mxu0 0
    %8441 = vmatpush1.bf16.msra.mxu0 0
    %8442 = vmatprep.subr.bf16.mxu0 0
    %8443 = vmatpush1.bf16.msra.mxu0 0
    %8444 = vmatprep.subr.bf16.mxu0 0
    %8445 = vmatpush1.bf16.msra.mxu0 0
    %8446 = vmatprep.subr.bf16.mxu0 0
    %8447 = vmatpush1.bf16.msra.mxu0 0
    %8448 = vmatprep.subr.bf16.mxu0 0
    %8449 = vmatpush1.bf16.msra.mxu0 0
    %8450 = vmatprep.subr.bf16.mxu0 0
    %8451 = vmatpush1.bf16.msra.mxu0 %v8434
    %8452 = vmatprep.subr.bf16.mxu0 0
    %8453 = vmatpush2.bf16.msra.mxu0 0
    %8454 = vmatprep.subr.bf16.mxu0 0
    %8455 = vmatpush2.bf16.msra.mxu0 0
    %8456 = vmatprep.subr.bf16.mxu0 0
    %8457 = vmatpush2.bf16.msra.mxu0 0
    %8458 = vmatprep.subr.bf16.mxu0 0
    %8459 = vmatpush2.bf16.msra.mxu0 0
    %8460 = vmatprep.subr.bf16.mxu0 0
    %8461 = vmatpush2.bf16.msra.mxu0 0
    %8462 = vmatprep.subr.bf16.mxu0 0
    %8463 = vmatpush2.bf16.msra.mxu0 0
    %8464 = vmatprep.subr.bf16.mxu0 0
    %8465 = vmatpush2.bf16.msra.mxu0 0
    %8466 = vmatprep.subr.bf16.mxu0 0
    %8467 = vmatpush2.bf16.msra.mxu0 0
    %8468 = vmatprep.mubr.bf16.mxu0 0
    %8469 = vmatmul.mubr.bf16.gmra.mxu0 %v8338
    %v8470 = vpop.f32.mrf.mxu0
    %v8471 = vadd.f32 0.0, %v8470
    %v8472 = vpop.f32.mrf.mxu0
    %v8473 = vpop.f32.mrf.mxu0
    %v8474 = vadd.f32 0.0, %v8473
    %v8475 = vpop.f32.mrf.mxu0
    %8476 = vmatprep.mubr.bf16.mxu0 0
    %8477 = vmatmul.mubr.bf16.gmra.mxu0 %v8341
    %v8478 = vpop.f32.mrf.mxu0
    %v8479 = vadd.f32 0.0, %v8478
    %v8480 = vpop.f32.mrf.mxu0
    %v8481 = vpop.f32.mrf.mxu0
    %v8482 = vadd.f32 0.0, %v8481
    %v8483 = vpop.f32.mrf.mxu0
    %8484 = vmatprep.mubr.bf16.mxu0 0
    %8485 = vmatmul.mubr.bf16.gmra.mxu0 %v8344
    %v8486 = vpop.f32.mrf.mxu0
    %v8487 = vadd.f32 0.0, %v8486
    %v8488 = vpop.f32.mrf.mxu0
    %v8489 = vpop.f32.mrf.mxu0
    %v8490 = vadd.f32 0.0, %v8489
    %v8491 = vpop.f32.mrf.mxu0
    %8492 = vmatprep.mubr.bf16.mxu0 0
    %8493 = vmatmul.mubr.bf16.gmra.mxu0 %v8347
    %v8494 = vpop.f32.mrf.mxu0
    %v8495 = vadd.f32 0.0, %v8494
    %v8496 = vpop.f32.mrf.mxu0
    %v8497 = vpop.f32.mrf.mxu0
    %v8498 = vadd.f32 0.0, %v8497
    %v8499 = vpop.f32.mrf.mxu0
    %8500 = vmatprep.mubr.bf16.mxu0 0
    %8501 = vmatmul.mubr.bf16.gmra.mxu0 %v8350
    %v8502 = vpop.f32.mrf.mxu0
    %v8503 = vadd.f32 0.0, %v8502
    %v8504 = vpop.f32.mrf.mxu0
    %v8505 = vpop.f32.mrf.mxu0
    %v8506 = vadd.f32 0.0, %v8505
    %v8507 = vpop.f32.mrf.mxu0
    %8508 = vmatprep.mubr.bf16.mxu0 0
    %8509 = vmatmul.mubr.bf16.gmra.mxu0 %v8353
    %v8510 = vpop.f32.mrf.mxu0
    %v8511 = vadd.f32 0.0, %v8510
    %v8512 = vpop.f32.mrf.mxu0
    %v8513 = vpop.f32.mrf.mxu0
    %v8514 = vadd.f32 0.0, %v8513
    %v8515 = vpop.f32.mrf.mxu0
    %8516 = vmatprep.mubr.bf16.mxu0 0
    %8517 = vmatmul.mubr.bf16.gmra.mxu0 %v8356
    %v8518 = vpop.f32.mrf.mxu0
    %v8519 = vadd.f32 0.0, %v8518
    %v8520 = vpop.f32.mrf.mxu0
    %v8521 = vpop.f32.mrf.mxu0
    %v8522 = vadd.f32 0.0, %v8521
    %v8523 = vpop.f32.mrf.mxu0
    %8524 = vmatprep.mubr.bf16.mxu0 0
    %8525 = vmatmul.mubr.bf16.gmra.mxu0 %v8359
    %v8526 = vpop.f32.mrf.mxu0
    %v8527 = vadd.f32 0.0, %v8526
    %v8528 = vpop.f32.mrf.mxu0
    %v8529 = vpop.f32.mrf.mxu0
    %v8530 = vadd.f32 0.0, %v8529
    %v8531 = vpop.f32.mrf.mxu0
    %8532 = vmatprep.mubr.bf16.mxu0 0
    %8533 = vmatmul.mubr.bf16.gmra.mxu0 %v8362
    %v8534 = vpop.f32.mrf.mxu0
    %v8535 = vadd.f32 0.0, %v8534
    %v8536 = vpop.f32.mrf.mxu0
    %v8537 = vpop.f32.mrf.mxu0
    %v8538 = vadd.f32 0.0, %v8537
    %v8539 = vpop.f32.mrf.mxu0
    %8540 = vmatprep.mubr.bf16.mxu0 0
    %8541 = vmatmul.mubr.bf16.gmra.mxu0 %v8365
    %v8542 = vpop.f32.mrf.mxu0
    %v8543 = vadd.f32 0.0, %v8542
    %v8544 = vpop.f32.mrf.mxu0
    %v8545 = vpop.f32.mrf.mxu0
    %v8546 = vadd.f32 0.0, %v8545
    %v8547 = vpop.f32.mrf.mxu0
    %8548 = vmatprep.mubr.bf16.mxu0 0
    %8549 = vmatmul.mubr.bf16.gmra.mxu0 %v8368
    %v8550 = vpop.f32.mrf.mxu0
    %v8551 = vadd.f32 0.0, %v8550
    %v8552 = vpop.f32.mrf.mxu0
    %v8553 = vpop.f32.mrf.mxu0
    %v8554 = vadd.f32 0.0, %v8553
    %v8555 = vpop.f32.mrf.mxu0
    %8556 = vmatprep.mubr.bf16.mxu0 0
    %8557 = vmatmul.mubr.bf16.gmra.mxu0 %v8371
    %v8558 = vpop.f32.mrf.mxu0
    %v8559 = vadd.f32 0.0, %v8558
    %v8560 = vpop.f32.mrf.mxu0
    %v8561 = vpop.f32.mrf.mxu0
    %v8562 = vadd.f32 0.0, %v8561
    %v8563 = vpop.f32.mrf.mxu0
    %8564 = vmatprep.mubr.bf16.mxu0 0
    %8565 = vmatmul.mubr.bf16.gmra.mxu0 %v8374
    %v8566 = vpop.f32.mrf.mxu0
    %v8567 = vadd.f32 0.0, %v8566
    %v8568 = vpop.f32.mrf.mxu0
    %v8569 = vpop.f32.mrf.mxu0
    %v8570 = vadd.f32 0.0, %v8569
    %v8571 = vpop.f32.mrf.mxu0
    %8572 = vmatprep.mubr.bf16.mxu0 0
    %8573 = vmatmul.mubr.bf16.gmra.mxu0 %v8377
    %v8574 = vpop.f32.mrf.mxu0
    %v8575 = vadd.f32 0.0, %v8574
    %v8576 = vpop.f32.mrf.mxu0
    %v8577 = vpop.f32.mrf.mxu0
    %v8578 = vadd.f32 0.0, %v8577
    %v8579 = vpop.f32.mrf.mxu0
    %8580 = vmatprep.mubr.bf16.mxu0 0
    %8581 = vmatmul.mubr.bf16.gmra.mxu0 %v8380
    %v8582 = vpop.f32.mrf.mxu0
    %v8583 = vadd.f32 0.0, %v8582
    %v8584 = vpop.f32.mrf.mxu0
    %v8585 = vpop.f32.mrf.mxu0
    %v8586 = vadd.f32 0.0, %v8585
    %v8587 = vpop.f32.mrf.mxu0
    %8588 = vmatprep.mubr.bf16.mxu0 0
    %8589 = vmatmul.mubr.bf16.gmra.mxu0 %v8383
    %v8590 = vpop.f32.mrf.mxu0
    %v8591 = vadd.f32 0.0, %v8590
    %v8592 = vpop.f32.mrf.mxu0
    %v8593 = vpop.f32.mrf.mxu0
    %v8594 = vadd.f32 0.0, %v8593
    %v8595 = vpop.f32.mrf.mxu0
    %8596 = vmatprep.mubr.bf16.mxu0 0
    %8597 = vmatmul.mubr.bf16.gmra.mxu0 %v8386
    %v8598 = vpop.f32.mrf.mxu0
    %v8599 = vadd.f32 0.0, %v8598
    %v8600 = vpop.f32.mrf.mxu0
    %v8601 = vpop.f32.mrf.mxu0
    %v8602 = vadd.f32 0.0, %v8601
    %v8603 = vpop.f32.mrf.mxu0
    %8604 = vmatprep.mubr.bf16.mxu0 0
    %8605 = vmatmul.mubr.bf16.gmra.mxu0 %v8389
    %v8606 = vpop.f32.mrf.mxu0
    %v8607 = vadd.f32 0.0, %v8606
    %v8608 = vpop.f32.mrf.mxu0
    %v8609 = vpop.f32.mrf.mxu0
    %v8610 = vadd.f32 0.0, %v8609
    %v8611 = vpop.f32.mrf.mxu0
    %8612 = vmatprep.mubr.bf16.mxu0 0
    %8613 = vmatmul.mubr.bf16.gmra.mxu0 %v8392
    %v8614 = vpop.f32.mrf.mxu0
    %v8615 = vadd.f32 0.0, %v8614
    %v8616 = vpop.f32.mrf.mxu0
    %v8617 = vpop.f32.mrf.mxu0
    %v8618 = vadd.f32 0.0, %v8617
    %v8619 = vpop.f32.mrf.mxu0
    %8620 = vmatprep.mubr.bf16.mxu0 0
    %8621 = vmatmul.mubr.bf16.gmra.mxu0 %v8395
    %v8622 = vpop.f32.mrf.mxu0
    %v8623 = vadd.f32 0.0, %v8622
    %v8624 = vpop.f32.mrf.mxu0
    %v8625 = vpop.f32.mrf.mxu0
    %v8626 = vadd.f32 0.0, %v8625
    %v8627 = vpop.f32.mrf.mxu0
    %8628 = vmatprep.mubr.bf16.mxu0 0
    %8629 = vmatmul.mubr.bf16.gmra.mxu0 %v8398
    %v8630 = vpop.f32.mrf.mxu0
    %v8631 = vadd.f32 0.0, %v8630
    %v8632 = vpop.f32.mrf.mxu0
    %v8633 = vpop.f32.mrf.mxu0
    %v8634 = vadd.f32 0.0, %v8633
    %v8635 = vpop.f32.mrf.mxu0
    %8636 = vmatprep.mubr.bf16.mxu0 0
    %8637 = vmatmul.mubr.bf16.gmra.mxu0 %v8401
    %v8638 = vpop.f32.mrf.mxu0
    %v8639 = vadd.f32 0.0, %v8638
    %v8640 = vpop.f32.mrf.mxu0
    %v8641 = vpop.f32.mrf.mxu0
    %v8642 = vadd.f32 0.0, %v8641
    %v8643 = vpop.f32.mrf.mxu0
    %8644 = vmatprep.mubr.bf16.mxu0 0
    %8645 = vmatmul.mubr.bf16.gmra.mxu0 %v8404
    %v8646 = vpop.f32.mrf.mxu0
    %v8647 = vadd.f32 0.0, %v8646
    %v8648 = vpop.f32.mrf.mxu0
    %v8649 = vpop.f32.mrf.mxu0
    %v8650 = vadd.f32 0.0, %v8649
    %v8651 = vpop.f32.mrf.mxu0
    %8652 = vmatprep.mubr.bf16.mxu0 0
    %8653 = vmatmul.mubr.bf16.gmra.mxu0 %v8407
    %v8654 = vpop.f32.mrf.mxu0
    %v8655 = vadd.f32 0.0, %v8654
    %v8656 = vpop.f32.mrf.mxu0
    %v8657 = vpop.f32.mrf.mxu0
    %v8658 = vadd.f32 0.0, %v8657
    %v8659 = vpop.f32.mrf.mxu0
    %8660 = vmatprep.mubr.bf16.mxu0 0
    %8661 = vmatmul.mubr.bf16.gmra.mxu0 %v8410
    %v8662 = vpop.f32.mrf.mxu0
    %v8663 = vadd.f32 0.0, %v8662
    %v8664 = vpop.f32.mrf.mxu0
    %v8665 = vpop.f32.mrf.mxu0
    %v8666 = vadd.f32 0.0, %v8665
    %v8667 = vpop.f32.mrf.mxu0
    %8668 = vmatprep.mubr.bf16.mxu0 0
    %8669 = vmatmul.mubr.bf16.gmra.mxu0 %v8413
    %v8670 = vpop.f32.mrf.mxu0
    %v8671 = vadd.f32 0.0, %v8670
    %v8672 = vpop.f32.mrf.mxu0
    %v8673 = vpop.f32.mrf.mxu0
    %v8674 = vadd.f32 0.0, %v8673
    %v8675 = vpop.f32.mrf.mxu0
    %8676 = vmatprep.mubr.bf16.mxu0 0
    %8677 = vmatmul.mubr.bf16.gmra.mxu0 %v8416
    %v8678 = vpop.f32.mrf.mxu0
    %v8679 = vadd.f32 0.0, %v8678
    %v8680 = vpop.f32.mrf.mxu0
    %v8681 = vpop.f32.mrf.mxu0
    %v8682 = vadd.f32 0.0, %v8681
    %v8683 = vpop.f32.mrf.mxu0
    %8684 = vmatprep.mubr.bf16.mxu0 0
    %8685 = vmatmul.mubr.bf16.gmra.mxu0 %v8419
    %v8686 = vpop.f32.mrf.mxu0
    %v8687 = vadd.f32 0.0, %v8686
    %v8688 = vpop.f32.mrf.mxu0
    %v8689 = vpop.f32.mrf.mxu0
    %v8690 = vadd.f32 0.0, %v8689
    %v8691 = vpop.f32.mrf.mxu0
    %8692 = vmatprep.mubr.bf16.mxu0 0
    %8693 = vmatmul.mubr.bf16.gmra.mxu0 %v8422
    %v8694 = vpop.f32.mrf.mxu0
    %v8695 = vadd.f32 0.0, %v8694
    %v8696 = vpop.f32.mrf.mxu0
    %v8697 = vpop.f32.mrf.mxu0
    %v8698 = vadd.f32 0.0, %v8697
    %v8699 = vpop.f32.mrf.mxu0
    %8700 = vmatprep.mubr.bf16.mxu0 0
    %8701 = vmatmul.mubr.bf16.gmra.mxu0 %v8425
    %v8702 = vpop.f32.mrf.mxu0
    %v8703 = vadd.f32 0.0, %v8702
    %v8704 = vpop.f32.mrf.mxu0
    %v8705 = vpop.f32.mrf.mxu0
    %v8706 = vadd.f32 0.0, %v8705
    %v8707 = vpop.f32.mrf.mxu0
    %8708 = vmatprep.mubr.bf16.mxu0 0
    %8709 = vmatmul.mubr.bf16.gmra.mxu0 %v8428
    %v8710 = vpop.f32.mrf.mxu0
    %v8711 = vadd.f32 0.0, %v8710
    %v8712 = vpop.f32.mrf.mxu0
    %v8713 = vpop.f32.mrf.mxu0
    %v8714 = vadd.f32 0.0, %v8713
    %v8715 = vpop.f32.mrf.mxu0
    %8716 = vmatprep.mubr.bf16.mxu0 0
    %8717 = vmatmul.mubr.bf16.gmra.mxu0 %v8431
    %v8718 = vpop.f32.mrf.mxu0
    %v8719 = vadd.f32 0.0, %v8718
    %v8720 = vpop.f32.mrf.mxu0
    %v8721 = vpop.f32.mrf.mxu0
    %v8722 = vadd.f32 0.0, %v8721
    %v8723 = vpop.f32.mrf.mxu0
    %8724 = vdwg.mxu0
    %v8725 = vadd.f32 %v7823, %v8471
    %v8726 = vadd.f32 %v7824, %v8474
    %v8727 = vadd.f32 %v7825, %v8479
    %v8728 = vadd.f32 %v7826, %v8482
    %v8729 = vadd.f32 %v7827, %v8487
    %v8730 = vadd.f32 %v7828, %v8490
    %v8731 = vadd.f32 %v7829, %v8495
    %v8732 = vadd.f32 %v7830, %v8498
    %v8733 = vadd.f32 %v7831, %v8503
    %v8734 = vadd.f32 %v7832, %v8506
    %v8735 = vadd.f32 %v7833, %v8511
    %v8736 = vadd.f32 %v7834, %v8514
    %v8737 = vadd.f32 %v7835, %v8519
    %v8738 = vadd.f32 %v7836, %v8522
    %v8739 = vadd.f32 %v7837, %v8527
    %v8740 = vadd.f32 %v7838, %v8530
    %v8741 = vadd.f32 %v7839, %v8535
    %v8742 = vadd.f32 %v7840, %v8538
    %v8743 = vadd.f32 %v7841, %v8543
    %v8744 = vadd.f32 %v7842, %v8546
    %v8745 = vadd.f32 %v7843, %v8551
    %v8746 = vadd.f32 %v7844, %v8554
    %v8747 = vadd.f32 %v7845, %v8559
    %v8748 = vadd.f32 %v7846, %v8562
    %v8749 = vadd.f32 %v7847, %v8567
    %v8750 = vadd.f32 %v7848, %v8570
    %v8751 = vadd.f32 %v7849, %v8575
    %v8752 = vadd.f32 %v7850, %v8578
    %v8753 = vadd.f32 %v7851, %v8583
    %v8754 = vadd.f32 %v7852, %v8586
    %v8755 = vadd.f32 %v7853, %v8591
    %v8756 = vadd.f32 %v7854, %v8594
    %v8757 = vadd.f32 %v7855, %v8599
    %v8758 = vadd.f32 %v7856, %v8602
    %v8759 = vadd.f32 %v7857, %v8607
    %v8760 = vadd.f32 %v7858, %v8610
    %v8761 = vadd.f32 %v7859, %v8615
    %v8762 = vadd.f32 %v7860, %v8618
    %v8763 = vadd.f32 %v7861, %v8623
    %v8764 = vadd.f32 %v7862, %v8626
    %v8765 = vadd.f32 %v7863, %v8631
    %v8766 = vadd.f32 %v7864, %v8634
    %v8767 = vadd.f32 %v7865, %v8639
    %v8768 = vadd.f32 %v7866, %v8642
    %v8769 = vadd.f32 %v7867, %v8647
    %v8770 = vadd.f32 %v7868, %v8650
    %v8771 = vadd.f32 %v7869, %v8655
    %v8772 = vadd.f32 %v7870, %v8658
    %v8773 = vadd.f32 %v7871, %v8663
    %v8774 = vadd.f32 %v7872, %v8666
    %v8775 = vadd.f32 %v7873, %v8671
    %v8776 = vadd.f32 %v7874, %v8674
    %v8777 = vadd.f32 %v7875, %v8679
    %v8778 = vadd.f32 %v7876, %v8682
    %v8779 = vadd.f32 %v7877, %v8687
    %v8780 = vadd.f32 %v7878, %v8690
    %v8781 = vadd.f32 %v7879, %v8695
    %v8782 = vadd.f32 %v7880, %v8698
    %v8783 = vadd.f32 %v7881, %v8703
    %v8784 = vadd.f32 %v7882, %v8706
    %v8785 = vadd.f32 %v7883, %v8711
    %v8786 = vadd.f32 %v7884, %v8714
    %v8787 = vadd.f32 %v7885, %v8719
    %v8788 = vadd.f32 %v7886, %v8722
    %v8789 = vld [vmem:[%s2] sm:$0x1]
    %v8791 = vlaneseq
    %v8792 = vshrl.u32 %v8791, 7
    %v8793 = vsub.s32 0, %v8792
    %v8794 = vrot.slane %v8789, %v8793
    %v8796 = vadd.f32 %v8725, %v8794
    %v8797 = vadd.f32 %v8726, %v8794
    %v8798 = vadd.f32 %v8727, %v8794
    %v8799 = vadd.f32 %v8728, %v8794
    %v8800 = vadd.f32 %v8729, %v8794
    %v8801 = vadd.f32 %v8730, %v8794
    %v8802 = vadd.f32 %v8731, %v8794
    %v8803 = vadd.f32 %v8732, %v8794
    %v8804 = vadd.f32 %v8733, %v8794
    %v8805 = vadd.f32 %v8734, %v8794
    %v8806 = vadd.f32 %v8735, %v8794
    %v8807 = vadd.f32 %v8736, %v8794
    %v8808 = vadd.f32 %v8737, %v8794
    %v8809 = vadd.f32 %v8738, %v8794
    %v8810 = vadd.f32 %v8739, %v8794
    %v8811 = vadd.f32 %v8740, %v8794
    %v8812 = vadd.f32 %v8741, %v8794
    %v8813 = vadd.f32 %v8742, %v8794
    %v8814 = vadd.f32 %v8743, %v8794
    %v8815 = vadd.f32 %v8744, %v8794
    %v8816 = vadd.f32 %v8745, %v8794
    %v8817 = vadd.f32 %v8746, %v8794
    %v8818 = vadd.f32 %v8747, %v8794
    %v8819 = vadd.f32 %v8748, %v8794
    %v8820 = vadd.f32 %v8749, %v8794
    %v8821 = vadd.f32 %v8750, %v8794
    %v8822 = vadd.f32 %v8751, %v8794
    %v8823 = vadd.f32 %v8752, %v8794
    %v8824 = vadd.f32 %v8753, %v8794
    %v8825 = vadd.f32 %v8754, %v8794
    %v8826 = vadd.f32 %v8755, %v8794
    %v8827 = vadd.f32 %v8756, %v8794
    %v8828 = vadd.f32 %v8757, %v8794
    %v8829 = vadd.f32 %v8758, %v8794
    %v8830 = vadd.f32 %v8759, %v8794
    %v8831 = vadd.f32 %v8760, %v8794
    %v8832 = vadd.f32 %v8761, %v8794
    %v8833 = vadd.f32 %v8762, %v8794
    %v8834 = vadd.f32 %v8763, %v8794
    %v8835 = vadd.f32 %v8764, %v8794
    %v8836 = vadd.f32 %v8765, %v8794
    %v8837 = vadd.f32 %v8766, %v8794
    %v8838 = vadd.f32 %v8767, %v8794
    %v8839 = vadd.f32 %v8768, %v8794
    %v8840 = vadd.f32 %v8769, %v8794
    %v8841 = vadd.f32 %v8770, %v8794
    %v8842 = vadd.f32 %v8771, %v8794
    %v8843 = vadd.f32 %v8772, %v8794
    %v8844 = vadd.f32 %v8773, %v8794
    %v8845 = vadd.f32 %v8774, %v8794
    %v8846 = vadd.f32 %v8775, %v8794
    %v8847 = vadd.f32 %v8776, %v8794
    %v8848 = vadd.f32 %v8777, %v8794
    %v8849 = vadd.f32 %v8778, %v8794
    %v8850 = vadd.f32 %v8779, %v8794
    %v8851 = vadd.f32 %v8780, %v8794
    %v8852 = vadd.f32 %v8781, %v8794
    %v8853 = vadd.f32 %v8782, %v8794
    %v8854 = vadd.f32 %v8783, %v8794
    %v8855 = vadd.f32 %v8784, %v8794
    %v8856 = vadd.f32 %v8785, %v8794
    %v8857 = vadd.f32 %v8786, %v8794
    %v8858 = vadd.f32 %v8787, %v8794
    %v8859 = vadd.f32 %v8788, %v8794
    %v8860 = vmax.f32 %v8796, 0.0
    %v8861 = vmax.f32 %v8797, 0.0
    %v8862 = vmax.f32 %v8798, 0.0
    %v8863 = vmax.f32 %v8799, 0.0
    %v8864 = vmax.f32 %v8800, 0.0
    %v8865 = vmax.f32 %v8801, 0.0
    %v8866 = vmax.f32 %v8802, 0.0
    %v8867 = vmax.f32 %v8803, 0.0
    %v8868 = vmax.f32 %v8804, 0.0
    %v8869 = vmax.f32 %v8805, 0.0
    %v8870 = vmax.f32 %v8806, 0.0
    %v8871 = vmax.f32 %v8807, 0.0
    %v8872 = vmax.f32 %v8808, 0.0
    %v8873 = vmax.f32 %v8809, 0.0
    %v8874 = vmax.f32 %v8810, 0.0
    %v8875 = vmax.f32 %v8811, 0.0
    %v8876 = vmax.f32 %v8812, 0.0
    %v8877 = vmax.f32 %v8813, 0.0
    %v8878 = vmax.f32 %v8814, 0.0
    %v8879 = vmax.f32 %v8815, 0.0
    %v8880 = vmax.f32 %v8816, 0.0
    %v8881 = vmax.f32 %v8817, 0.0
    %v8882 = vmax.f32 %v8818, 0.0
    %v8883 = vmax.f32 %v8819, 0.0
    %v8884 = vmax.f32 %v8820, 0.0
    %v8885 = vmax.f32 %v8821, 0.0
    %v8886 = vmax.f32 %v8822, 0.0
    %v8887 = vmax.f32 %v8823, 0.0
    %v8888 = vmax.f32 %v8824, 0.0
    %v8889 = vmax.f32 %v8825, 0.0
    %v8890 = vmax.f32 %v8826, 0.0
    %v8891 = vmax.f32 %v8827, 0.0
    %v8892 = vmax.f32 %v8828, 0.0
    %v8893 = vmax.f32 %v8829, 0.0
    %v8894 = vmax.f32 %v8830, 0.0
    %v8895 = vmax.f32 %v8831, 0.0
    %v8896 = vmax.f32 %v8832, 0.0
    %v8897 = vmax.f32 %v8833, 0.0
    %v8898 = vmax.f32 %v8834, 0.0
    %v8899 = vmax.f32 %v8835, 0.0
    %v8900 = vmax.f32 %v8836, 0.0
    %v8901 = vmax.f32 %v8837, 0.0
    %v8902 = vmax.f32 %v8838, 0.0
    %v8903 = vmax.f32 %v8839, 0.0
    %v8904 = vmax.f32 %v8840, 0.0
    %v8905 = vmax.f32 %v8841, 0.0
    %v8906 = vmax.f32 %v8842, 0.0
    %v8907 = vmax.f32 %v8843, 0.0
    %v8908 = vmax.f32 %v8844, 0.0
    %v8909 = vmax.f32 %v8845, 0.0
    %v8910 = vmax.f32 %v8846, 0.0
    %v8911 = vmax.f32 %v8847, 0.0
    %v8912 = vmax.f32 %v8848, 0.0
    %v8913 = vmax.f32 %v8849, 0.0
    %v8914 = vmax.f32 %v8850, 0.0
    %v8915 = vmax.f32 %v8851, 0.0
    %v8916 = vmax.f32 %v8852, 0.0
    %v8917 = vmax.f32 %v8853, 0.0
    %v8918 = vmax.f32 %v8854, 0.0
    %v8919 = vmax.f32 %v8855, 0.0
    %v8920 = vmax.f32 %v8856, 0.0
    %v8921 = vmax.f32 %v8857, 0.0
    %v8922 = vmax.f32 %v8858, 0.0
    %v8923 = vmax.f32 %v8859, 0.0
    %vm8924 = vcmask 261120
    %v8925 = vsel %vm8924, %v8860, 0.0
    %v8926 = vsel %vm8924, %v8861, 0.0
    %v8927 = vadd.f32 %v8925, %v8926
    %v8928 = vsel %vm8924, %v8862, 0.0
    %v8929 = vadd.f32 %v8927, %v8928
    %v8930 = vsel %vm8924, %v8863, 0.0
    %v8931 = vadd.f32 %v8929, %v8930
    %v8932 = vsel %vm8924, %v8864, 0.0
    %v8933 = vadd.f32 %v8931, %v8932
    %v8934 = vsel %vm8924, %v8865, 0.0
    %v8935 = vadd.f32 %v8933, %v8934
    %v8936 = vsel %vm8924, %v8866, 0.0
    %v8937 = vadd.f32 %v8935, %v8936
    %v8938 = vsel %vm8924, %v8867, 0.0
    %v8939 = vadd.f32 %v8937, %v8938
    %v8940 = vsel %vm8924, %v8868, 0.0
    %v8941 = vadd.f32 %v8939, %v8940
    %v8942 = vsel %vm8924, %v8869, 0.0
    %v8943 = vadd.f32 %v8941, %v8942
    %v8944 = vsel %vm8924, %v8870, 0.0
    %v8945 = vadd.f32 %v8943, %v8944
    %v8946 = vsel %vm8924, %v8871, 0.0
    %v8947 = vadd.f32 %v8945, %v8946
    %v8948 = vsel %vm8924, %v8872, 0.0
    %v8949 = vadd.f32 %v8947, %v8948
    %v8950 = vsel %vm8924, %v8873, 0.0
    %v8951 = vadd.f32 %v8949, %v8950
    %v8952 = vsel %vm8924, %v8874, 0.0
    %v8953 = vadd.f32 %v8951, %v8952
    %v8954 = vsel %vm8924, %v8875, 0.0
    %v8955 = vadd.f32 %v8953, %v8954
    %v8956 = vsel %vm8924, %v8876, 0.0
    %v8957 = vadd.f32 %v8955, %v8956
    %v8958 = vsel %vm8924, %v8877, 0.0
    %v8959 = vadd.f32 %v8957, %v8958
    %v8960 = vsel %vm8924, %v8878, 0.0
    %v8961 = vadd.f32 %v8959, %v8960
    %v8962 = vsel %vm8924, %v8879, 0.0
    %v8963 = vadd.f32 %v8961, %v8962
    %v8964 = vsel %vm8924, %v8880, 0.0
    %v8965 = vadd.f32 %v8963, %v8964
    %v8966 = vsel %vm8924, %v8881, 0.0
    %v8967 = vadd.f32 %v8965, %v8966
    %v8968 = vsel %vm8924, %v8882, 0.0
    %v8969 = vadd.f32 %v8967, %v8968
    %v8970 = vsel %vm8924, %v8883, 0.0
    %v8971 = vadd.f32 %v8969, %v8970
    %v8972 = vsel %vm8924, %v8884, 0.0
    %v8973 = vadd.f32 %v8971, %v8972
    %v8974 = vsel %vm8924, %v8885, 0.0
    %v8975 = vadd.f32 %v8973, %v8974
    %v8976 = vsel %vm8924, %v8886, 0.0
    %v8977 = vadd.f32 %v8975, %v8976
    %v8978 = vsel %vm8924, %v8887, 0.0
    %v8979 = vadd.f32 %v8977, %v8978
    %v8980 = vsel %vm8924, %v8888, 0.0
    %v8981 = vadd.f32 %v8979, %v8980
    %v8982 = vsel %vm8924, %v8889, 0.0
    %v8983 = vadd.f32 %v8981, %v8982
    %v8984 = vsel %vm8924, %v8890, 0.0
    %v8985 = vadd.f32 %v8983, %v8984
    %v8986 = vsel %vm8924, %v8891, 0.0
    %v8987 = vadd.f32 %v8985, %v8986
    %v8988 = vrot.slane %v8987, 4
    %v8989 = vadd.f32 %v8987, %v8988
    %v8990 = vrot.slane %v8989, 2
    %v8991 = vadd.f32 %v8989, %v8990
    %v8992 = vrot.slane %v8991, 1
    %v8993 = vadd.f32 %v8991, %v8992
    %v8994 = vsel %vm8924, %v8892, 0.0
    %v8995 = vsel %vm8924, %v8893, 0.0
    %v8996 = vadd.f32 %v8994, %v8995
    %v8997 = vsel %vm8924, %v8894, 0.0
    %v8998 = vadd.f32 %v8996, %v8997
    %v8999 = vsel %vm8924, %v8895, 0.0
    %v9000 = vadd.f32 %v8998, %v8999
    %v9001 = vsel %vm8924, %v8896, 0.0
    %v9002 = vadd.f32 %v9000, %v9001
    %v9003 = vsel %vm8924, %v8897, 0.0
    %v9004 = vadd.f32 %v9002, %v9003
    %v9005 = vsel %vm8924, %v8898, 0.0
    %v9006 = vadd.f32 %v9004, %v9005
    %v9007 = vsel %vm8924, %v8899, 0.0
    %v9008 = vadd.f32 %v9006, %v9007
    %v9009 = vsel %vm8924, %v8900, 0.0
    %v9010 = vadd.f32 %v9008, %v9009
    %v9011 = vsel %vm8924, %v8901, 0.0
    %v9012 = vadd.f32 %v9010, %v9011
    %v9013 = vsel %vm8924, %v8902, 0.0
    %v9014 = vadd.f32 %v9012, %v9013
    %v9015 = vsel %vm8924, %v8903, 0.0
    %v9016 = vadd.f32 %v9014, %v9015
    %v9017 = vsel %vm8924, %v8904, 0.0
    %v9018 = vadd.f32 %v9016, %v9017
    %v9019 = vsel %vm8924, %v8905, 0.0
    %v9020 = vadd.f32 %v9018, %v9019
    %v9021 = vsel %vm8924, %v8906, 0.0
    %v9022 = vadd.f32 %v9020, %v9021
    %v9023 = vsel %vm8924, %v8907, 0.0
    %v9024 = vadd.f32 %v9022, %v9023
    %v9025 = vsel %vm8924, %v8908, 0.0
    %v9026 = vadd.f32 %v9024, %v9025
    %v9027 = vsel %vm8924, %v8909, 0.0
    %v9028 = vadd.f32 %v9026, %v9027
    %v9029 = vsel %vm8924, %v8910, 0.0
    %v9030 = vadd.f32 %v9028, %v9029
    %v9031 = vsel %vm8924, %v8911, 0.0
    %v9032 = vadd.f32 %v9030, %v9031
    %v9033 = vsel %vm8924, %v8912, 0.0
    %v9034 = vadd.f32 %v9032, %v9033
    %v9035 = vsel %vm8924, %v8913, 0.0
    %v9036 = vadd.f32 %v9034, %v9035
    %v9037 = vsel %vm8924, %v8914, 0.0
    %v9038 = vadd.f32 %v9036, %v9037
    %v9039 = vsel %vm8924, %v8915, 0.0
    %v9040 = vadd.f32 %v9038, %v9039
    %v9041 = vsel %vm8924, %v8916, 0.0
    %v9042 = vadd.f32 %v9040, %v9041
    %v9043 = vsel %vm8924, %v8917, 0.0
    %v9044 = vadd.f32 %v9042, %v9043
    %v9045 = vsel %vm8924, %v8918, 0.0
    %v9046 = vadd.f32 %v9044, %v9045
    %v9047 = vsel %vm8924, %v8919, 0.0
    %v9048 = vadd.f32 %v9046, %v9047
    %v9049 = vsel %vm8924, %v8920, 0.0
    %v9050 = vadd.f32 %v9048, %v9049
    %v9051 = vsel %vm8924, %v8921, 0.0
    %v9052 = vadd.f32 %v9050, %v9051
    %v9053 = vsel %vm8924, %v8922, 0.0
    %v9054 = vadd.f32 %v9052, %v9053
    %v9055 = vsel %vm8924, %v8923, 0.0
    %v9056 = vadd.f32 %v9054, %v9055
    %v9057 = vrot.slane %v9056, 4
    %v9058 = vadd.f32 %v9056, %v9057
    %v9059 = vrot.slane %v9058, 2
    %v9060 = vadd.f32 %v9058, %v9059
    %v9061 = vrot.slane %v9060, 1
    %v9062 = vadd.f32 %v9060, %v9061
    %v9063 = vmul.f32 %v8993, 0.00390625
    %v9064 = vmul.f32 %v9062, 0.00390625
    %v9065 = vld [vmem:[%s3] sm:$0xff]
    %v9066 = vld [vmem:[%s3 + $0x8] sm:$0xff]
    %v9067 = vld [vmem:[%s3 + $0x10] sm:$0xff]
    %v9068 = vld [vmem:[%s3 + $0x18] sm:$0xff]
    %v9069 = vld [vmem:[%s4] sm:$0x1]
    %v9071 = vlaneseq
    %v9072 = vshrl.u32 %v9071, 7
    %v9073 = vsub.s32 0, %v9072
    %v9074 = vrot.slane %v9069, %v9073
    %vm9078 = vcmask 1041409
    %v9079 = vsel %vm9078, %v9064, %v9063
    %v9080 = vsel %vm8924, %v9079, 0
    %9082 = vmatprep.subr.mxu0 0.0
    %9083 = vmatpush1.msra.mxu0 0.0
    %9084 = vmatprep.subr.mxu0 0.0
    %9085 = vmatpush1.msra.mxu0 0.0
    %9086 = vmatprep.subr.mxu0 0.0
    %9087 = vmatpush1.msra.mxu0 0.0
    %9088 = vmatprep.subr.mxu0 0.0
    %9089 = vmatpush1.msra.mxu0 0.0
    %9090 = vmatprep.subr.mxu0 0.0
    %9091 = vmatpush1.msra.mxu0 0.0
    %9092 = vmatprep.subr.mxu0 0.0
    %9093 = vmatpush1.msra.mxu0 0.0
    %9094 = vmatprep.subr.mxu0 0.0
    %9095 = vmatpush1.msra.mxu0 0.0
    %9096 = vmatprep.subr.mxu0 0.0
    %9097 = vmatpush1.msra.mxu0 0.0
    %9098 = vmatprep.subr.mxu0 0.0
    %9099 = vmatpush1.msra.mxu0 0.0
    %9100 = vmatprep.subr.mxu0 0.0
    %9101 = vmatpush1.msra.mxu0 0.0
    %9102 = vmatprep.subr.mxu0 0.0
    %9103 = vmatpush1.msra.mxu0 0.0
    %9104 = vmatprep.subr.mxu0 0.0
    %9105 = vmatpush1.msra.mxu0 0.0
    %9106 = vmatprep.subr.mxu0 0.0
    %9107 = vmatpush1.msra.mxu0 %v9068
    %9108 = vmatprep.subr.mxu0 0.0
    %9109 = vmatpush1.msra.mxu0 %v9067
    %9110 = vmatprep.subr.mxu0 0.0
    %9111 = vmatpush1.msra.mxu0 %v9066
    %9112 = vmatprep.subr.mxu0 0.0
    %9113 = vmatpush1.msra.mxu0 %v9065
    %9114 = vmatprep.subr.mxu0 0.0
    %9115 = vmatpush2.msra.mxu0 0.0
    %9116 = vmatprep.subr.mxu0 0.0
    %9117 = vmatpush2.msra.mxu0 0.0
    %9118 = vmatprep.subr.mxu0 0.0
    %9119 = vmatpush2.msra.mxu0 0.0
    %9120 = vmatprep.subr.mxu0 0.0
    %9121 = vmatpush2.msra.mxu0 0.0
    %9122 = vmatprep.subr.mxu0 0.0
    %9123 = vmatpush2.msra.mxu0 0.0
    %9124 = vmatprep.subr.mxu0 0.0
    %9125 = vmatpush2.msra.mxu0 0.0
    %9126 = vmatprep.subr.mxu0 0.0
    %9127 = vmatpush2.msra.mxu0 0.0
    %9128 = vmatprep.subr.mxu0 0.0
    %9129 = vmatpush2.msra.mxu0 0.0
    %9130 = vmatprep.subr.mxu0 0.0
    %9131 = vmatpush2.msra.mxu0 0.0
    %9132 = vmatprep.subr.mxu0 0.0
    %9133 = vmatpush2.msra.mxu0 0.0
    %9134 = vmatprep.subr.mxu0 0.0
    %9135 = vmatpush2.msra.mxu0 0.0
    %9136 = vmatprep.subr.mxu0 0.0
    %9137 = vmatpush2.msra.mxu0 0.0
    %9138 = vmatprep.subr.mxu0 0.0
    %9139 = vmatpush2.msra.mxu0 0.0
    %9140 = vmatprep.subr.mxu0 0.0
    %9141 = vmatpush2.msra.mxu0 0.0
    %9142 = vmatprep.subr.mxu0 0.0
    %9143 = vmatpush2.msra.mxu0 0.0
    %9144 = vmatprep.subr.mxu0 0.0
    %9145 = vmatpush2.msra.mxu0 0.0
    %9146 = vmatprep.mubr.f32.mxu0 0.0
    %9147 = vmatmul.mubr.f32.gmra.mxu0 %v9080
    %v9148 = vpop.f32.mrf.mxu0
    %v9149 = vadd.f32 %v9074, %v9148
    %v9150 = vpop.f32.mrf.mxu0
    %9151 = vdwg.mxu0
    %9152 = vst [vmem:[#allocation2] sm:$0x3] %v9149
    // Predicated region
    $region22: #{tpu_custom_call.1} parent=1 // pred_check
      _
    $region23: #{tpu_custom_call.1} parent=1 // pred_check_branch
      %9154 = sbr.rel (0) target = $region25
    $region24: #{tpu_custom_call.1} parent=1 // pred_region
      %s9156 = ssub.s32 32, 32
      %9157 = vsyncadd [#allocation3], %s9156
      %s9159 = sshll.u32 [#allocation2], 4
      %s9160 = int_to_ptr.vmem [resolvable:$true] %s9159
      %9162 = dma.vmem_to_hbm [thread:$0]  %s9160, 32, %s5, [#allocation3]
    $region25: #{tpu_custom_call.1} parent=1 // pred_fallthru
      _
    // Predicated region
    $region26: #{tpu_custom_call.1} parent=1 // pred_check
      _
    $region27: #{tpu_custom_call.1} parent=1 // pred_check_branch
      %9164 = sbr.rel (0) target = $region29
    $region28: #{tpu_custom_call.1} parent=1 // pred_region
      %9165 = dma.done [#allocation3], 32
    $region29: #{tpu_custom_call.1} parent=1 // pred_fallthru
      _
    %9166 = vsyncpa [#allocation3], 1

</llo_original>
